<compile_context>
chip_gen: v7x
topology: tpu7x:2x2x1
jax: 0.10.0
libtpu: 0.0.40
codegen_flags: <defaults>
</compile_context>

<pallas_src>
import functools
import math

import jax
import jax.numpy as jnp
import numpy as np
from jax.experimental import pallas as pl
from jax.experimental.pallas import tpu as pltpu

_LOG_SQRT_2PI = 0.5 * math.log(2.0 * math.pi)


# ----------------------------------------------------------------------------
# Precomputed 0/1 shift matrix implementing a zero-padded 3x3 neighborhood
# gather on the flattened (H*W) spatial axis:
#   (x @ S)[c, k*HW + j] = x[c, neighbor_k(j)]  (0 outside the image)
# ----------------------------------------------------------------------------
@functools.lru_cache(maxsize=None)
def _shift_matrix_np(H, W):
    HW = H * W
    S = np.zeros((HW, 9 * HW), np.float32)
    for kh in range(3):
        for kw in range(3):
            k = kh * 3 + kw
            dh, dw = kh - 1, kw - 1
            for h in range(H):
                hh = h + dh
                if not (0 <= hh < H):
                    continue
                for w in range(W):
                    ww = w + dw
                    if not (0 <= ww < W):
                        continue
                    S[hh * W + ww, k * HW + h * W + w] = 1.0
    return S


# ----------------------------------------------------------------------------
# Fused kernel: one batch element per grid step.
# ----------------------------------------------------------------------------
def _fused_kernel(px_ref, qx_ref, eps_ref, s_ref,
                  wp_ref, bp_ref, wq_ref, bq_ref, wo_ref, bo_ref,
                  out_ref, z_ref, pp_ref, qp_ref, klel_ref, klsp_ref, sc_ref):
    cv = z_ref.shape[1]
    HW = z_ref.shape[2]

    def conv3x3(x, w_taps_ref, b_ref):
        # x: (cin, HW); w_taps_ref: (9, cout, cin); b_ref: (cout, 1)
        cout = w_taps_ref.shape[1]
        # im2col via one lane-dense matmul: (cin, HW) @ (HW, 9*HW) -> (cin, 9*HW)
        xs_all = jnp.dot(x, s_ref[...], preferred_element_type=jnp.float32)
        acc = jnp.zeros((cout, HW), jnp.float32)
        for k in range(9):
            xs = xs_all[:, k * HW:(k + 1) * HW]          # 128-aligned lane slice
            acc = acc + jnp.dot(w_taps_ref[k], xs,
                                preferred_element_type=jnp.float32)
        return acc + b_ref[...]                           # (cout,1) lane-broadcast

    pp = conv3x3(px_ref[0], wp_ref, bp_ref)               # (2*cv, HW) p_params
    qp = conv3x3(qx_ref[0], wq_ref, bq_ref)               # (2*cv, HW) q_params

    p_mu, p_lv = pp[:cv], pp[cv:]
    q_mu, q_lv_raw = qp[:cv], qp[cv:]
    q_lv = jnp.minimum(q_lv_raw, 20.0)                    # torch.clip(q_lv, max=20)

    # z ~ q (reparameterized sample)
    q_std = 1e-10 + jnp.exp(0.5 * q_lv)
    z = q_mu + q_std * eps_ref[0]

    # log-probs computed from log-variance directly (no log / divide on EUP).
    inv_p_var = jnp.exp(-p_lv)
    inv_q_var = jnp.exp(-q_lv)
    log_p_std = 0.5 * p_lv
    log_q_std = 0.5 * q_lv

    dzp = z - p_mu
    dzq = z - q_mu
    lp_p = -0.5 * dzp * dzp * inv_p_var - log_p_std - _LOG_SQRT_2PI
    lp_q = -0.5 * dzq * dzq * inv_q_var - log_q_std - _LOG_SQRT_2PI

    # analytical KL(q || p) — used for kl_spatial
    dmu = q_mu - p_mu
    kl_an = (log_p_std - log_q_std
             + 0.5 * (q_std * q_std + dmu * dmu) * inv_p_var - 0.5)

    # one-sample MC KL (kl_normal_mc): p log-variance clipped at 20
    clip = p_lv > 20.0
    inv_p_var_c = jnp.where(clip, float(np.exp(-20.0)), inv_p_var)
    log_p_std_c = jnp.where(clip, 10.0, log_p_std)
    lp_pc = -0.5 * dzp * dzp * inv_p_var_c - log_p_std_c - _LOG_SQRT_2PI
    kl_el = lp_q - lp_pc

    out = conv3x3(z, wo_ref, bo_ref)                      # (c_out, HW)

    # Lane-dense stores.
    out_ref[0] = out
    z_ref[0] = z
    pp_ref[0] = pp
    qp_ref[0] = qp
    klel_ref[0] = kl_el
    klsp_ref[0] = jnp.sum(kl_an, axis=0, keepdims=True)   # (1, HW) sum over C

    # Merge the three per-sample scalars into one dense 128-lane store.
    lane = jax.lax.broadcasted_iota(jnp.int32, (1, 128), 1)
    sc = (jnp.where(lane == 0, jnp.sum(lp_p), 0.0)
          + jnp.where(lane == 1, jnp.sum(lp_q), 0.0)
          + jnp.where(lane == 2, jnp.sum(kl_el), 0.0))
    sc_ref[0] = sc


# ----------------------------------------------------------------------------
# Wrapper mirroring NormalStochasticBlock2d.forward (default-path flags).
# Accepts / returns NCHW; only free reshapes happen outside the kernel.
# ----------------------------------------------------------------------------
def normal_stochastic_block_2d(p_x, q_x, eps, params):
    N, c_in, H, W = p_x.shape
    cv = eps.shape[1]
    c_out = params["w_out"].shape[0]
    HW = H * W
    c2 = 2 * cv

    px = p_x.reshape(N, c_in, HW)
    qx = q_x.reshape(N, c_in, HW)
    ef = eps.reshape(N, cv, HW)

    s = jnp.asarray(_shift_matrix_np(H, W))               # (HW, 9*HW)

    def taps(w):  # (cout, cin, 3, 3) -> (9, cout, cin), k = kh*3 + kw
        return jnp.transpose(w, (2, 3, 0, 1)).reshape(9, w.shape[0], w.shape[1])

    wp = taps(params["w_in_p"]); bp = params["b_in_p"].reshape(-1, 1)
    wq = taps(params["w_in_q"]); bq = params["b_in_q"].reshape(-1, 1)
    wo = taps(params["w_out"]);  bo = params["b_out"].reshape(-1, 1)

    out_shapes = (
        jax.ShapeDtypeStruct((N, c_out, HW), jnp.float32),   # out
        jax.ShapeDtypeStruct((N, cv, HW), jnp.float32),      # z
        jax.ShapeDtypeStruct((N, c2, HW), jnp.float32),      # p_params
        jax.ShapeDtypeStruct((N, c2, HW), jnp.float32),      # q_params
        jax.ShapeDtypeStruct((N, cv, HW), jnp.float32),      # kl_elementwise
        jax.ShapeDtypeStruct((N, 1, HW), jnp.float32),       # kl_spatial
        jax.ShapeDtypeStruct((N, 1, 128), jnp.float32),      # [lp_p, lp_q, kl_sw]
    )

    def batch_spec(c):
        return pl.BlockSpec((1, c, HW), lambda n: (n, 0, 0))

    def full3(a, b, c):
        return pl.BlockSpec((a, b, c), lambda n: (0, 0, 0))

    def full2(a, b):
        return pl.BlockSpec((a, b), lambda n: (0, 0))

    outs = pl.pallas_call(
        _fused_kernel,
        out_shape=out_shapes,
        grid_spec=pltpu.PrefetchScalarGridSpec(
            num_scalar_prefetch=0,
            grid=(N,),
            in_specs=[
                batch_spec(c_in),            # p_x
                batch_spec(c_in),            # q_x
                batch_spec(cv),              # eps
                full2(HW, 9 * HW),           # shift matrix (shared)
                full3(9, c2, c_in), full2(c2, 1),       # conv_in_p
                full3(9, c2, c_in), full2(c2, 1),       # conv_in_q
                full3(9, c_out, cv), full2(c_out, 1),   # conv_out
            ],
            out_specs=[
                batch_spec(c_out),
                batch_spec(cv),
                batch_spec(c2),
                batch_spec(c2),
                batch_spec(cv),
                pl.BlockSpec((1, 1, HW), lambda n: (n, 0, 0)),
                pl.BlockSpec((1, 1, 128), lambda n: (n, 0, 0)),
            ],
        ),
        compiler_params=pltpu.CompilerParams(dimension_semantics=("parallel",)),
    )(px, qx, ef, s, wp, bp, wq, bq, wo, bo)

    out, z, pp, qp, kl_el, kl_sp, sc = outs
    data = {
        "z": z.reshape(N, cv, H, W),
        "p_params": pp.reshape(N, c2, H, W),
        "q_params": qp.reshape(N, c2, H, W),
        "logprob_p": sc[:, 0, 0],
        "logprob_q": sc[:, 0, 1],
        "kl_elementwise": kl_el.reshape(N, cv, H, W),
        "kl_samplewise": sc[:, 0, 2],
        "kl_spatial": kl_sp.reshape(N, H, W),
    }
    return out.reshape(N, c_out, H, W), data


# ----------------------------------------------------------------------------
# Pure-JAX reference (NCHW, mirrors the PyTorch code) for verification.
# ----------------------------------------------------------------------------
def reference_forward(p_x, q_x, eps, params):
    def conv(x, w, b):
        y = jax.lax.conv_general_dilated(
            x, w, (1, 1), "SAME", dimension_numbers=("NCHW", "OIHW", "NCHW"))
        return y + b.reshape(1, -1, 1, 1)

    pp = conv(p_x, params["w_in_p"], params["b_in_p"])
    qp = conv(q_x, params["w_in_q"], params["b_in_q"])
    cv = pp.shape[1] // 2
    p_mu, p_lv = pp[:, :cv], pp[:, cv:]
    q_mu, q_lv = qp[:, :cv], jnp.minimum(qp[:, cv:], 20.0)
    p_std = 1e-10 + jnp.exp(p_lv / 2)
    q_std = 1e-10 + jnp.exp(q_lv / 2)
    z = q_mu + q_std * eps
    out = conv(z, params["w_out"], params["b_out"])

    def log_prob(mu, std, x):
        return -((x - mu) ** 2) / (2 * std * std) - jnp.log(std) - _LOG_SQRT_2PI

    lp_p = log_prob(p_mu, p_std, z).sum((1, 2, 3))
    lp_q = log_prob(q_mu, q_std, z).sum((1, 2, 3))
    kl_an = (jnp.log(p_std / q_std)
             + (q_std ** 2 + (q_mu - p_mu) ** 2) / (2 * p_std ** 2) - 0.5)
    p_lv_c = jnp.minimum(p_lv, 20.0)
    p_std_c = 1e-10 + jnp.exp(p_lv_c / 2)
    kl_el = log_prob(q_mu, q_std, z) - log_prob(p_mu, p_std_c, z)
    return out, {
        "z": z, "p_params": pp, "q_params": qp,
        "logprob_p": lp_p, "logprob_q": lp_q,
        "kl_elementwise": kl_el, "kl_samplewise": kl_el.sum((1, 2, 3)),
        "kl_spatial": kl_an.sum(1),
    }


if __name__ == "__main__":
    N, c_in, c_vars, c_out, H, W = 2, 4, 4, 4, 16, 16
    key = jax.random.PRNGKey(0)
    ks = jax.random.split(key, 9)

    params = {
        "w_in_p": 0.1 * jax.random.normal(ks[0], (2 * c_vars, c_in, 3, 3), jnp.float32),
        "b_in_p": 0.1 * jax.random.normal(ks[1], (2 * c_vars,), jnp.float32),
        "w_in_q": 0.1 * jax.random.normal(ks[2], (2 * c_vars, c_in, 3, 3), jnp.float32),
        "b_in_q": 0.1 * jax.random.normal(ks[3], (2 * c_vars,), jnp.float32),
        "w_out": 0.1 * jax.random.normal(ks[4], (c_out, c_vars, 3, 3), jnp.float32),
        "b_out": 0.1 * jax.random.normal(ks[5], (c_out,), jnp.float32),
    }
    p_x = jax.random.normal(ks[6], (N, c_in, H, W), jnp.float32)
    q_x = jax.random.normal(ks[7], (N, c_in, H, W), jnp.float32)
    eps = jax.random.normal(ks[8], (N, c_vars, H, W), jnp.float32)

    fwd = jax.jit(functools.partial(normal_stochastic_block_2d, params=params))
    out, data = fwd(p_x, q_x, eps)
    jax.block_until_ready(out)

    ref_out, ref_data = reference_forward(p_x, q_x, eps, params)
    np.testing.assert_allclose(np.asarray(out), np.asarray(ref_out), rtol=1e-4, atol=1e-4)
    for name in ["z", "p_params", "q_params", "kl_elementwise", "kl_spatial"]:
        np.testing.assert_allclose(np.asarray(data[name]), np.asarray(ref_data[name]),
                                   rtol=1e-4, atol=1e-4)
    for name in ["logprob_p", "logprob_q", "kl_samplewise"]:
        np.testing.assert_allclose(np.asarray(data[name]), np.asarray(ref_data[name]),
                                   rtol=1e-3, atol=1e-3)

    print("KERNEL_OK")
</pallas_src>

<mosaic_0001>
module attributes {stable_mosaic.version = 11 : i64} {
  func.func @_fused_kernel(%arg0: i32, %arg1: memref<1x4x256xf32, #tpu.memory_space<vmem>>, %arg2: memref<1x4x256xf32, #tpu.memory_space<vmem>>, %arg3: memref<1x4x256xf32, #tpu.memory_space<vmem>>, %arg4: memref<256x2304xf32, #tpu.memory_space<vmem>>, %arg5: memref<9x8x4xf32, #tpu.memory_space<vmem>>, %arg6: memref<8x1xf32, #tpu.memory_space<vmem>>, %arg7: memref<9x8x4xf32, #tpu.memory_space<vmem>>, %arg8: memref<8x1xf32, #tpu.memory_space<vmem>>, %arg9: memref<9x4x4xf32, #tpu.memory_space<vmem>>, %arg10: memref<4x1xf32, #tpu.memory_space<vmem>>, %arg11: memref<1x4x256xf32, #tpu.memory_space<vmem>>, %arg12: memref<1x4x256xf32, #tpu.memory_space<vmem>>, %arg13: memref<1x8x256xf32, #tpu.memory_space<vmem>>, %arg14: memref<1x8x256xf32, #tpu.memory_space<vmem>>, %arg15: memref<1x4x256xf32, #tpu.memory_space<vmem>>, %arg16: memref<1x1x256xf32, #tpu.memory_space<vmem>>, %arg17: memref<1x1x128xf32, #tpu.memory_space<vmem>>) attributes {dimension_semantics = [#tpu.dimension_semantics<parallel>], iteration_bounds = array<i64: 2>, scalar_prefetch = 0 : i64, scratch_operands = 0 : i64, tpu.core_type = #tpu.core_type<tc>, window_params = [{transform_indices = @transform_0, window_bounds = array<i64: 1, 4, 256>}, {transform_indices = @transform_1, window_bounds = array<i64: 1, 4, 256>}, {transform_indices = @transform_2, window_bounds = array<i64: 1, 4, 256>}, {pipeline_mode = #tpu.pipeline_mode<synchronous>, transform_indices = @transform_3, window_bounds = array<i64: 256, 2304>}, {pipeline_mode = #tpu.pipeline_mode<synchronous>, transform_indices = @transform_4, window_bounds = array<i64: 9, 8, 4>}, {pipeline_mode = #tpu.pipeline_mode<synchronous>, transform_indices = @transform_5, window_bounds = array<i64: 8, 1>}, {pipeline_mode = #tpu.pipeline_mode<synchronous>, transform_indices = @transform_6, window_bounds = array<i64: 9, 8, 4>}, {pipeline_mode = #tpu.pipeline_mode<synchronous>, transform_indices = @transform_7, window_bounds = array<i64: 8, 1>}, {pipeline_mode = #tpu.pipeline_mode<synchronous>, transform_indices = @transform_8, window_bounds = array<i64: 9, 4, 4>}, {pipeline_mode = #tpu.pipeline_mode<synchronous>, transform_indices = @transform_9, window_bounds = array<i64: 4, 1>}, {transform_indices = @transform_10, window_bounds = array<i64: 1, 4, 256>}, {transform_indices = @transform_11, window_bounds = array<i64: 1, 4, 256>}, {transform_indices = @transform_12, window_bounds = array<i64: 1, 8, 256>}, {transform_indices = @transform_13, window_bounds = array<i64: 1, 8, 256>}, {transform_indices = @transform_14, window_bounds = array<i64: 1, 4, 256>}, {transform_indices = @transform_15, window_bounds = array<i64: 1, 1, 256>}, {transform_indices = @transform_16, window_bounds = array<i64: 1, 1, 128>}]} {
    %c0 = arith.constant 0 : index
    %c0_0 = arith.constant 0 : index
    %c0_1 = arith.constant 0 : index
    %0 = vector.load %arg1[%c0, %c0_0, %c0_1] : memref<1x4x256xf32, #tpu.memory_space<vmem>>, vector<1x4x256xf32>
    %1 = vector.shape_cast %0 : vector<1x4x256xf32> to vector<4x256xf32>
    %c0_2 = arith.constant 0 : index
    %c0_3 = arith.constant 0 : index
    %2 = vector.load %arg4[%c0_2, %c0_3] : memref<256x2304xf32, #tpu.memory_space<vmem>>, vector<256x2304xf32>
    %cst = arith.constant dense<0.000000e+00> : vector<4x2304xf32>
    %3 = tpu.matmul %1, %2, %cst {dimension_numbers = #tpu.dot_dimension_numbers<[1], [0], [0], [1], [0, 0, 1, 1], [], []>} : vector<4x256xf32>, vector<256x2304xf32>, vector<4x2304xf32> -> vector<4x2304xf32>
    %cst_4 = arith.constant 0.000000e+00 : f32
    %4 = vector.broadcast %cst_4 : f32 to vector<8x256xf32>
    %5 = vector.extract_strided_slice %3 {offsets = [0, 0], sizes = [4, 256], strides = [1, 1]} : vector<4x2304xf32> to vector<4x256xf32>
    %c0_5 = arith.constant 0 : index
    %c0_6 = arith.constant 0 : index
    %c0_7 = arith.constant 0 : index
    %6 = vector.load %arg5[%c0_5, %c0_6, %c0_7] : memref<9x8x4xf32, #tpu.memory_space<vmem>>, vector<1x8x4xf32>
    %7 = vector.shape_cast %6 : vector<1x8x4xf32> to vector<8x4xf32>
    %cst_8 = arith.constant dense<0.000000e+00> : vector<8x256xf32>
    %8 = tpu.matmul %7, %5, %cst_8 {dimension_numbers = #tpu.dot_dimension_numbers<[1], [0], [0], [1], [0, 0, 1, 1], [], []>} : vector<8x4xf32>, vector<4x256xf32>, vector<8x256xf32> -> vector<8x256xf32>
    %9 = arith.addf %4, %8 : vector<8x256xf32>
    %10 = vector.extract_strided_slice %3 {offsets = [0, 256], sizes = [4, 256], strides = [1, 1]} : vector<4x2304xf32> to vector<4x256xf32>
    %c1 = arith.constant 1 : index
    %c0_9 = arith.constant 0 : index
    %c0_10 = arith.constant 0 : index
    %11 = vector.load %arg5[%c1, %c0_9, %c0_10] : memref<9x8x4xf32, #tpu.memory_space<vmem>>, vector<1x8x4xf32>
    %12 = vector.shape_cast %11 : vector<1x8x4xf32> to vector<8x4xf32>
    %cst_11 = arith.constant dense<0.000000e+00> : vector<8x256xf32>
    %13 = tpu.matmul %12, %10, %cst_11 {dimension_numbers = #tpu.dot_dimension_numbers<[1], [0], [0], [1], [0, 0, 1, 1], [], []>} : vector<8x4xf32>, vector<4x256xf32>, vector<8x256xf32> -> vector<8x256xf32>
    %14 = arith.addf %9, %13 : vector<8x256xf32>
    %15 = vector.extract_strided_slice %3 {offsets = [0, 512], sizes = [4, 256], strides = [1, 1]} : vector<4x2304xf32> to vector<4x256xf32>
    %c2 = arith.constant 2 : index
    %c0_12 = arith.constant 0 : index
    %c0_13 = arith.constant 0 : index
    %16 = vector.load %arg5[%c2, %c0_12, %c0_13] : memref<9x8x4xf32, #tpu.memory_space<vmem>>, vector<1x8x4xf32>
    %17 = vector.shape_cast %16 : vector<1x8x4xf32> to vector<8x4xf32>
    %cst_14 = arith.constant dense<0.000000e+00> : vector<8x256xf32>
    %18 = tpu.matmul %17, %15, %cst_14 {dimension_numbers = #tpu.dot_dimension_numbers<[1], [0], [0], [1], [0, 0, 1, 1], [], []>} : vector<8x4xf32>, vector<4x256xf32>, vector<8x256xf32> -> vector<8x256xf32>
    %19 = arith.addf %14, %18 : vector<8x256xf32>
    %20 = vector.extract_strided_slice %3 {offsets = [0, 768], sizes = [4, 256], strides = [1, 1]} : vector<4x2304xf32> to vector<4x256xf32>
    %c3 = arith.constant 3 : index
    %c0_15 = arith.constant 0 : index
    %c0_16 = arith.constant 0 : index
    %21 = vector.load %arg5[%c3, %c0_15, %c0_16] : memref<9x8x4xf32, #tpu.memory_space<vmem>>, vector<1x8x4xf32>
    %22 = vector.shape_cast %21 : vector<1x8x4xf32> to vector<8x4xf32>
    %cst_17 = arith.constant dense<0.000000e+00> : vector<8x256xf32>
    %23 = tpu.matmul %22, %20, %cst_17 {dimension_numbers = #tpu.dot_dimension_numbers<[1], [0], [0], [1], [0, 0, 1, 1], [], []>} : vector<8x4xf32>, vector<4x256xf32>, vector<8x256xf32> -> vector<8x256xf32>
    %24 = arith.addf %19, %23 : vector<8x256xf32>
    %25 = vector.extract_strided_slice %3 {offsets = [0, 1024], sizes = [4, 256], strides = [1, 1]} : vector<4x2304xf32> to vector<4x256xf32>
    %c4 = arith.constant 4 : index
    %c0_18 = arith.constant 0 : index
    %c0_19 = arith.constant 0 : index
    %26 = vector.load %arg5[%c4, %c0_18, %c0_19] : memref<9x8x4xf32, #tpu.memory_space<vmem>>, vector<1x8x4xf32>
    %27 = vector.shape_cast %26 : vector<1x8x4xf32> to vector<8x4xf32>
    %cst_20 = arith.constant dense<0.000000e+00> : vector<8x256xf32>
    %28 = tpu.matmul %27, %25, %cst_20 {dimension_numbers = #tpu.dot_dimension_numbers<[1], [0], [0], [1], [0, 0, 1, 1], [], []>} : vector<8x4xf32>, vector<4x256xf32>, vector<8x256xf32> -> vector<8x256xf32>
    %29 = arith.addf %24, %28 : vector<8x256xf32>
    %30 = vector.extract_strided_slice %3 {offsets = [0, 1280], sizes = [4, 256], strides = [1, 1]} : vector<4x2304xf32> to vector<4x256xf32>
    %c5 = arith.constant 5 : index
    %c0_21 = arith.constant 0 : index
    %c0_22 = arith.constant 0 : index
    %31 = vector.load %arg5[%c5, %c0_21, %c0_22] : memref<9x8x4xf32, #tpu.memory_space<vmem>>, vector<1x8x4xf32>
    %32 = vector.shape_cast %31 : vector<1x8x4xf32> to vector<8x4xf32>
    %cst_23 = arith.constant dense<0.000000e+00> : vector<8x256xf32>
    %33 = tpu.matmul %32, %30, %cst_23 {dimension_numbers = #tpu.dot_dimension_numbers<[1], [0], [0], [1], [0, 0, 1, 1], [], []>} : vector<8x4xf32>, vector<4x256xf32>, vector<8x256xf32> -> vector<8x256xf32>
    %34 = arith.addf %29, %33 : vector<8x256xf32>
    %35 = vector.extract_strided_slice %3 {offsets = [0, 1536], sizes = [4, 256], strides = [1, 1]} : vector<4x2304xf32> to vector<4x256xf32>
    %c6 = arith.constant 6 : index
    %c0_24 = arith.constant 0 : index
    %c0_25 = arith.constant 0 : index
    %36 = vector.load %arg5[%c6, %c0_24, %c0_25] : memref<9x8x4xf32, #tpu.memory_space<vmem>>, vector<1x8x4xf32>
    %37 = vector.shape_cast %36 : vector<1x8x4xf32> to vector<8x4xf32>
    %cst_26 = arith.constant dense<0.000000e+00> : vector<8x256xf32>
    %38 = tpu.matmul %37, %35, %cst_26 {dimension_numbers = #tpu.dot_dimension_numbers<[1], [0], [0], [1], [0, 0, 1, 1], [], []>} : vector<8x4xf32>, vector<4x256xf32>, vector<8x256xf32> -> vector<8x256xf32>
    %39 = arith.addf %34, %38 : vector<8x256xf32>
    %40 = vector.extract_strided_slice %3 {offsets = [0, 1792], sizes = [4, 256], strides = [1, 1]} : vector<4x2304xf32> to vector<4x256xf32>
    %c7 = arith.constant 7 : index
    %c0_27 = arith.constant 0 : index
    %c0_28 = arith.constant 0 : index
    %41 = vector.load %arg5[%c7, %c0_27, %c0_28] : memref<9x8x4xf32, #tpu.memory_space<vmem>>, vector<1x8x4xf32>
    %42 = vector.shape_cast %41 : vector<1x8x4xf32> to vector<8x4xf32>
    %cst_29 = arith.constant dense<0.000000e+00> : vector<8x256xf32>
    %43 = tpu.matmul %42, %40, %cst_29 {dimension_numbers = #tpu.dot_dimension_numbers<[1], [0], [0], [1], [0, 0, 1, 1], [], []>} : vector<8x4xf32>, vector<4x256xf32>, vector<8x256xf32> -> vector<8x256xf32>
    %44 = arith.addf %39, %43 : vector<8x256xf32>
    %45 = vector.extract_strided_slice %3 {offsets = [0, 2048], sizes = [4, 256], strides = [1, 1]} : vector<4x2304xf32> to vector<4x256xf32>
    %c8 = arith.constant 8 : index
    %c0_30 = arith.constant 0 : index
    %c0_31 = arith.constant 0 : index
    %46 = vector.load %arg5[%c8, %c0_30, %c0_31] : memref<9x8x4xf32, #tpu.memory_space<vmem>>, vector<1x8x4xf32>
    %47 = vector.shape_cast %46 : vector<1x8x4xf32> to vector<8x4xf32>
    %cst_32 = arith.constant dense<0.000000e+00> : vector<8x256xf32>
    %48 = tpu.matmul %47, %45, %cst_32 {dimension_numbers = #tpu.dot_dimension_numbers<[1], [0], [0], [1], [0, 0, 1, 1], [], []>} : vector<8x4xf32>, vector<4x256xf32>, vector<8x256xf32> -> vector<8x256xf32>
    %49 = arith.addf %44, %48 : vector<8x256xf32>
    %c0_33 = arith.constant 0 : index
    %c0_34 = arith.constant 0 : index
    %50 = vector.load %arg6[%c0_33, %c0_34] : memref<8x1xf32, #tpu.memory_space<vmem>>, vector<8x1xf32>
    %51 = vector.broadcast %50 : vector<8x1xf32> to vector<8x256xf32>
    %52 = arith.addf %49, %51 : vector<8x256xf32>
    %c0_35 = arith.constant 0 : index
    %c0_36 = arith.constant 0 : index
    %c0_37 = arith.constant 0 : index
    %53 = vector.load %arg2[%c0_35, %c0_36, %c0_37] : memref<1x4x256xf32, #tpu.memory_space<vmem>>, vector<1x4x256xf32>
    %54 = vector.shape_cast %53 : vector<1x4x256xf32> to vector<4x256xf32>
    %c0_38 = arith.constant 0 : index
    %c0_39 = arith.constant 0 : index
    %55 = vector.load %arg4[%c0_38, %c0_39] : memref<256x2304xf32, #tpu.memory_space<vmem>>, vector<256x2304xf32>
    %cst_40 = arith.constant dense<0.000000e+00> : vector<4x2304xf32>
    %56 = tpu.matmul %54, %55, %cst_40 {dimension_numbers = #tpu.dot_dimension_numbers<[1], [0], [0], [1], [0, 0, 1, 1], [], []>} : vector<4x256xf32>, vector<256x2304xf32>, vector<4x2304xf32> -> vector<4x2304xf32>
    %cst_41 = arith.constant 0.000000e+00 : f32
    %57 = vector.broadcast %cst_41 : f32 to vector<8x256xf32>
    %58 = vector.extract_strided_slice %56 {offsets = [0, 0], sizes = [4, 256], strides = [1, 1]} : vector<4x2304xf32> to vector<4x256xf32>
    %c0_42 = arith.constant 0 : index
    %c0_43 = arith.constant 0 : index
    %c0_44 = arith.constant 0 : index
    %59 = vector.load %arg7[%c0_42, %c0_43, %c0_44] : memref<9x8x4xf32, #tpu.memory_space<vmem>>, vector<1x8x4xf32>
    %60 = vector.shape_cast %59 : vector<1x8x4xf32> to vector<8x4xf32>
    %cst_45 = arith.constant dense<0.000000e+00> : vector<8x256xf32>
    %61 = tpu.matmul %60, %58, %cst_45 {dimension_numbers = #tpu.dot_dimension_numbers<[1], [0], [0], [1], [0, 0, 1, 1], [], []>} : vector<8x4xf32>, vector<4x256xf32>, vector<8x256xf32> -> vector<8x256xf32>
    %62 = arith.addf %57, %61 : vector<8x256xf32>
    %63 = vector.extract_strided_slice %56 {offsets = [0, 256], sizes = [4, 256], strides = [1, 1]} : vector<4x2304xf32> to vector<4x256xf32>
    %c1_46 = arith.constant 1 : index
    %c0_47 = arith.constant 0 : index
    %c0_48 = arith.constant 0 : index
    %64 = vector.load %arg7[%c1_46, %c0_47, %c0_48] : memref<9x8x4xf32, #tpu.memory_space<vmem>>, vector<1x8x4xf32>
    %65 = vector.shape_cast %64 : vector<1x8x4xf32> to vector<8x4xf32>
    %cst_49 = arith.constant dense<0.000000e+00> : vector<8x256xf32>
    %66 = tpu.matmul %65, %63, %cst_49 {dimension_numbers = #tpu.dot_dimension_numbers<[1], [0], [0], [1], [0, 0, 1, 1], [], []>} : vector<8x4xf32>, vector<4x256xf32>, vector<8x256xf32> -> vector<8x256xf32>
    %67 = arith.addf %62, %66 : vector<8x256xf32>
    %68 = vector.extract_strided_slice %56 {offsets = [0, 512], sizes = [4, 256], strides = [1, 1]} : vector<4x2304xf32> to vector<4x256xf32>
    %c2_50 = arith.constant 2 : index
    %c0_51 = arith.constant 0 : index
    %c0_52 = arith.constant 0 : index
    %69 = vector.load %arg7[%c2_50, %c0_51, %c0_52] : memref<9x8x4xf32, #tpu.memory_space<vmem>>, vector<1x8x4xf32>
    %70 = vector.shape_cast %69 : vector<1x8x4xf32> to vector<8x4xf32>
    %cst_53 = arith.constant dense<0.000000e+00> : vector<8x256xf32>
    %71 = tpu.matmul %70, %68, %cst_53 {dimension_numbers = #tpu.dot_dimension_numbers<[1], [0], [0], [1], [0, 0, 1, 1], [], []>} : vector<8x4xf32>, vector<4x256xf32>, vector<8x256xf32> -> vector<8x256xf32>
    %72 = arith.addf %67, %71 : vector<8x256xf32>
    %73 = vector.extract_strided_slice %56 {offsets = [0, 768], sizes = [4, 256], strides = [1, 1]} : vector<4x2304xf32> to vector<4x256xf32>
    %c3_54 = arith.constant 3 : index
    %c0_55 = arith.constant 0 : index
    %c0_56 = arith.constant 0 : index
    %74 = vector.load %arg7[%c3_54, %c0_55, %c0_56] : memref<9x8x4xf32, #tpu.memory_space<vmem>>, vector<1x8x4xf32>
    %75 = vector.shape_cast %74 : vector<1x8x4xf32> to vector<8x4xf32>
    %cst_57 = arith.constant dense<0.000000e+00> : vector<8x256xf32>
    %76 = tpu.matmul %75, %73, %cst_57 {dimension_numbers = #tpu.dot_dimension_numbers<[1], [0], [0], [1], [0, 0, 1, 1], [], []>} : vector<8x4xf32>, vector<4x256xf32>, vector<8x256xf32> -> vector<8x256xf32>
    %77 = arith.addf %72, %76 : vector<8x256xf32>
    %78 = vector.extract_strided_slice %56 {offsets = [0, 1024], sizes = [4, 256], strides = [1, 1]} : vector<4x2304xf32> to vector<4x256xf32>
    %c4_58 = arith.constant 4 : index
    %c0_59 = arith.constant 0 : index
    %c0_60 = arith.constant 0 : index
    %79 = vector.load %arg7[%c4_58, %c0_59, %c0_60] : memref<9x8x4xf32, #tpu.memory_space<vmem>>, vector<1x8x4xf32>
    %80 = vector.shape_cast %79 : vector<1x8x4xf32> to vector<8x4xf32>
    %cst_61 = arith.constant dense<0.000000e+00> : vector<8x256xf32>
    %81 = tpu.matmul %80, %78, %cst_61 {dimension_numbers = #tpu.dot_dimension_numbers<[1], [0], [0], [1], [0, 0, 1, 1], [], []>} : vector<8x4xf32>, vector<4x256xf32>, vector<8x256xf32> -> vector<8x256xf32>
    %82 = arith.addf %77, %81 : vector<8x256xf32>
    %83 = vector.extract_strided_slice %56 {offsets = [0, 1280], sizes = [4, 256], strides = [1, 1]} : vector<4x2304xf32> to vector<4x256xf32>
    %c5_62 = arith.constant 5 : index
    %c0_63 = arith.constant 0 : index
    %c0_64 = arith.constant 0 : index
    %84 = vector.load %arg7[%c5_62, %c0_63, %c0_64] : memref<9x8x4xf32, #tpu.memory_space<vmem>>, vector<1x8x4xf32>
    %85 = vector.shape_cast %84 : vector<1x8x4xf32> to vector<8x4xf32>
    %cst_65 = arith.constant dense<0.000000e+00> : vector<8x256xf32>
    %86 = tpu.matmul %85, %83, %cst_65 {dimension_numbers = #tpu.dot_dimension_numbers<[1], [0], [0], [1], [0, 0, 1, 1], [], []>} : vector<8x4xf32>, vector<4x256xf32>, vector<8x256xf32> -> vector<8x256xf32>
    %87 = arith.addf %82, %86 : vector<8x256xf32>
    %88 = vector.extract_strided_slice %56 {offsets = [0, 1536], sizes = [4, 256], strides = [1, 1]} : vector<4x2304xf32> to vector<4x256xf32>
    %c6_66 = arith.constant 6 : index
    %c0_67 = arith.constant 0 : index
    %c0_68 = arith.constant 0 : index
    %89 = vector.load %arg7[%c6_66, %c0_67, %c0_68] : memref<9x8x4xf32, #tpu.memory_space<vmem>>, vector<1x8x4xf32>
    %90 = vector.shape_cast %89 : vector<1x8x4xf32> to vector<8x4xf32>
    %cst_69 = arith.constant dense<0.000000e+00> : vector<8x256xf32>
    %91 = tpu.matmul %90, %88, %cst_69 {dimension_numbers = #tpu.dot_dimension_numbers<[1], [0], [0], [1], [0, 0, 1, 1], [], []>} : vector<8x4xf32>, vector<4x256xf32>, vector<8x256xf32> -> vector<8x256xf32>
    %92 = arith.addf %87, %91 : vector<8x256xf32>
    %93 = vector.extract_strided_slice %56 {offsets = [0, 1792], sizes = [4, 256], strides = [1, 1]} : vector<4x2304xf32> to vector<4x256xf32>
    %c7_70 = arith.constant 7 : index
    %c0_71 = arith.constant 0 : index
    %c0_72 = arith.constant 0 : index
    %94 = vector.load %arg7[%c7_70, %c0_71, %c0_72] : memref<9x8x4xf32, #tpu.memory_space<vmem>>, vector<1x8x4xf32>
    %95 = vector.shape_cast %94 : vector<1x8x4xf32> to vector<8x4xf32>
    %cst_73 = arith.constant dense<0.000000e+00> : vector<8x256xf32>
    %96 = tpu.matmul %95, %93, %cst_73 {dimension_numbers = #tpu.dot_dimension_numbers<[1], [0], [0], [1], [0, 0, 1, 1], [], []>} : vector<8x4xf32>, vector<4x256xf32>, vector<8x256xf32> -> vector<8x256xf32>
    %97 = arith.addf %92, %96 : vector<8x256xf32>
    %98 = vector.extract_strided_slice %56 {offsets = [0, 2048], sizes = [4, 256], strides = [1, 1]} : vector<4x2304xf32> to vector<4x256xf32>
    %c8_74 = arith.constant 8 : index
    %c0_75 = arith.constant 0 : index
    %c0_76 = arith.constant 0 : index
    %99 = vector.load %arg7[%c8_74, %c0_75, %c0_76] : memref<9x8x4xf32, #tpu.memory_space<vmem>>, vector<1x8x4xf32>
    %100 = vector.shape_cast %99 : vector<1x8x4xf32> to vector<8x4xf32>
    %cst_77 = arith.constant dense<0.000000e+00> : vector<8x256xf32>
    %101 = tpu.matmul %100, %98, %cst_77 {dimension_numbers = #tpu.dot_dimension_numbers<[1], [0], [0], [1], [0, 0, 1, 1], [], []>} : vector<8x4xf32>, vector<4x256xf32>, vector<8x256xf32> -> vector<8x256xf32>
    %102 = arith.addf %97, %101 : vector<8x256xf32>
    %c0_78 = arith.constant 0 : index
    %c0_79 = arith.constant 0 : index
    %103 = vector.load %arg8[%c0_78, %c0_79] : memref<8x1xf32, #tpu.memory_space<vmem>>, vector<8x1xf32>
    %104 = vector.broadcast %103 : vector<8x1xf32> to vector<8x256xf32>
    %105 = arith.addf %102, %104 : vector<8x256xf32>
    %106 = vector.extract_strided_slice %52 {offsets = [0, 0], sizes = [4, 256], strides = [1, 1]} : vector<8x256xf32> to vector<4x256xf32>
    %107 = vector.extract_strided_slice %52 {offsets = [4, 0], sizes = [4, 256], strides = [1, 1]} : vector<8x256xf32> to vector<4x256xf32>
    %108 = vector.extract_strided_slice %105 {offsets = [0, 0], sizes = [4, 256], strides = [1, 1]} : vector<8x256xf32> to vector<4x256xf32>
    %109 = vector.extract_strided_slice %105 {offsets = [4, 0], sizes = [4, 256], strides = [1, 1]} : vector<8x256xf32> to vector<4x256xf32>
    %cst_80 = arith.constant 2.000000e+01 : f32
    %110 = vector.broadcast %cst_80 : f32 to vector<4x256xf32>
    %111 = arith.minimumf %109, %110 : vector<4x256xf32>
    %cst_81 = arith.constant 5.000000e-01 : f32
    %112 = vector.broadcast %cst_81 : f32 to vector<4x256xf32>
    %113 = arith.mulf %112, %111 : vector<4x256xf32>
    %114 = math.exp %113 : vector<4x256xf32>
    %cst_82 = arith.constant 1.000000e-10 : f32
    %115 = vector.broadcast %cst_82 : f32 to vector<4x256xf32>
    %116 = arith.addf %115, %114 : vector<4x256xf32>
    %c0_83 = arith.constant 0 : index
    %c0_84 = arith.constant 0 : index
    %c0_85 = arith.constant 0 : index
    %117 = vector.load %arg3[%c0_83, %c0_84, %c0_85] : memref<1x4x256xf32, #tpu.memory_space<vmem>>, vector<1x4x256xf32>
    %118 = vector.shape_cast %117 : vector<1x4x256xf32> to vector<4x256xf32>
    %119 = arith.mulf %116, %118 : vector<4x256xf32>
    %120 = arith.addf %108, %119 : vector<4x256xf32>
    %cst_86 = arith.constant 0.000000e+00 : f32
    %121 = vector.broadcast %cst_86 : f32 to vector<4x256xf32>
    %122 = arith.subf %121, %107 : vector<4x256xf32>
    %123 = math.exp %122 : vector<4x256xf32>
    %cst_87 = arith.constant 0.000000e+00 : f32
    %124 = vector.broadcast %cst_87 : f32 to vector<4x256xf32>
    %125 = arith.subf %124, %111 : vector<4x256xf32>
    %126 = math.exp %125 : vector<4x256xf32>
    %cst_88 = arith.constant 5.000000e-01 : f32
    %127 = vector.broadcast %cst_88 : f32 to vector<4x256xf32>
    %128 = arith.mulf %127, %107 : vector<4x256xf32>
    %cst_89 = arith.constant 5.000000e-01 : f32
    %129 = vector.broadcast %cst_89 : f32 to vector<4x256xf32>
    %130 = arith.mulf %129, %111 : vector<4x256xf32>
    %131 = arith.subf %120, %106 : vector<4x256xf32>
    %132 = arith.subf %120, %108 : vector<4x256xf32>
    %cst_90 = arith.constant -5.000000e-01 : f32
    %133 = vector.broadcast %cst_90 : f32 to vector<4x256xf32>
    %134 = arith.mulf %133, %131 : vector<4x256xf32>
    %135 = arith.mulf %134, %131 : vector<4x256xf32>
    %136 = arith.mulf %135, %123 : vector<4x256xf32>
    %137 = arith.subf %136, %128 : vector<4x256xf32>
    %cst_91 = arith.constant 0.918938517 : f32
    %138 = vector.broadcast %cst_91 : f32 to vector<4x256xf32>
    %139 = arith.subf %137, %138 : vector<4x256xf32>
    %cst_92 = arith.constant -5.000000e-01 : f32
    %140 = vector.broadcast %cst_92 : f32 to vector<4x256xf32>
    %141 = arith.mulf %140, %132 : vector<4x256xf32>
    %142 = arith.mulf %141, %132 : vector<4x256xf32>
    %143 = arith.mulf %142, %126 : vector<4x256xf32>
    %144 = arith.subf %143, %130 : vector<4x256xf32>
    %cst_93 = arith.constant 0.918938517 : f32
    %145 = vector.broadcast %cst_93 : f32 to vector<4x256xf32>
    %146 = arith.subf %144, %145 : vector<4x256xf32>
    %147 = arith.subf %108, %106 : vector<4x256xf32>
    %148 = arith.subf %128, %130 : vector<4x256xf32>
    %149 = arith.mulf %116, %116 : vector<4x256xf32>
    %150 = arith.mulf %147, %147 : vector<4x256xf32>
    %151 = arith.addf %149, %150 : vector<4x256xf32>
    %cst_94 = arith.constant 5.000000e-01 : f32
    %152 = vector.broadcast %cst_94 : f32 to vector<4x256xf32>
    %153 = arith.mulf %152, %151 : vector<4x256xf32>
    %154 = arith.mulf %153, %123 : vector<4x256xf32>
    %155 = arith.addf %148, %154 : vector<4x256xf32>
    %cst_95 = arith.constant 5.000000e-01 : f32
    %156 = vector.broadcast %cst_95 : f32 to vector<4x256xf32>
    %157 = arith.subf %155, %156 : vector<4x256xf32>
    %cst_96 = arith.constant 2.000000e+01 : f32
    %158 = vector.broadcast %cst_96 : f32 to vector<4x256xf32>
    %159 = arith.cmpf ogt, %107, %158 : vector<4x256xf32>
    %cst_97 = arith.constant 2.06115369E-9 : f32
    %160 = vector.broadcast %cst_97 : f32 to vector<4x256xf32>
    %161 = arith.select %159, %160, %123 : vector<4x256xi1>, vector<4x256xf32>
    %cst_98 = arith.constant 1.000000e+01 : f32
    %162 = vector.broadcast %cst_98 : f32 to vector<4x256xf32>
    %163 = arith.select %159, %162, %128 : vector<4x256xi1>, vector<4x256xf32>
    %cst_99 = arith.constant -5.000000e-01 : f32
    %164 = vector.broadcast %cst_99 : f32 to vector<4x256xf32>
    %165 = arith.mulf %164, %131 : vector<4x256xf32>
    %166 = arith.mulf %165, %131 : vector<4x256xf32>
    %167 = arith.mulf %166, %161 : vector<4x256xf32>
    %168 = arith.subf %167, %163 : vector<4x256xf32>
    %cst_100 = arith.constant 0.918938517 : f32
    %169 = vector.broadcast %cst_100 : f32 to vector<4x256xf32>
    %170 = arith.subf %168, %169 : vector<4x256xf32>
    %171 = arith.subf %146, %170 : vector<4x256xf32>
    %c0_101 = arith.constant 0 : index
    %c0_102 = arith.constant 0 : index
    %172 = vector.load %arg4[%c0_101, %c0_102] : memref<256x2304xf32, #tpu.memory_space<vmem>>, vector<256x2304xf32>
    %cst_103 = arith.constant dense<0.000000e+00> : vector<4x2304xf32>
    %173 = tpu.matmul %120, %172, %cst_103 {dimension_numbers = #tpu.dot_dimension_numbers<[1], [0], [0], [1], [0, 0, 1, 1], [], []>} : vector<4x256xf32>, vector<256x2304xf32>, vector<4x2304xf32> -> vector<4x2304xf32>
    %cst_104 = arith.constant 0.000000e+00 : f32
    %174 = vector.broadcast %cst_104 : f32 to vector<4x256xf32>
    %175 = vector.extract_strided_slice %173 {offsets = [0, 0], sizes = [4, 256], strides = [1, 1]} : vector<4x2304xf32> to vector<4x256xf32>
    %c0_105 = arith.constant 0 : index
    %c0_106 = arith.constant 0 : index
    %c0_107 = arith.constant 0 : index
    %176 = vector.load %arg9[%c0_105, %c0_106, %c0_107] : memref<9x4x4xf32, #tpu.memory_space<vmem>>, vector<1x4x4xf32>
    %177 = vector.shape_cast %176 : vector<1x4x4xf32> to vector<4x4xf32>
    %cst_108 = arith.constant dense<0.000000e+00> : vector<4x256xf32>
    %178 = tpu.matmul %177, %175, %cst_108 {dimension_numbers = #tpu.dot_dimension_numbers<[1], [0], [0], [1], [0, 0, 1, 1], [], []>} : vector<4x4xf32>, vector<4x256xf32>, vector<4x256xf32> -> vector<4x256xf32>
    %179 = arith.addf %174, %178 : vector<4x256xf32>
    %180 = vector.extract_strided_slice %173 {offsets = [0, 256], sizes = [4, 256], strides = [1, 1]} : vector<4x2304xf32> to vector<4x256xf32>
    %c1_109 = arith.constant 1 : index
    %c0_110 = arith.constant 0 : index
    %c0_111 = arith.constant 0 : index
    %181 = vector.load %arg9[%c1_109, %c0_110, %c0_111] : memref<9x4x4xf32, #tpu.memory_space<vmem>>, vector<1x4x4xf32>
    %182 = vector.shape_cast %181 : vector<1x4x4xf32> to vector<4x4xf32>
    %cst_112 = arith.constant dense<0.000000e+00> : vector<4x256xf32>
    %183 = tpu.matmul %182, %180, %cst_112 {dimension_numbers = #tpu.dot_dimension_numbers<[1], [0], [0], [1], [0, 0, 1, 1], [], []>} : vector<4x4xf32>, vector<4x256xf32>, vector<4x256xf32> -> vector<4x256xf32>
    %184 = arith.addf %179, %183 : vector<4x256xf32>
    %185 = vector.extract_strided_slice %173 {offsets = [0, 512], sizes = [4, 256], strides = [1, 1]} : vector<4x2304xf32> to vector<4x256xf32>
    %c2_113 = arith.constant 2 : index
    %c0_114 = arith.constant 0 : index
    %c0_115 = arith.constant 0 : index
    %186 = vector.load %arg9[%c2_113, %c0_114, %c0_115] : memref<9x4x4xf32, #tpu.memory_space<vmem>>, vector<1x4x4xf32>
    %187 = vector.shape_cast %186 : vector<1x4x4xf32> to vector<4x4xf32>
    %cst_116 = arith.constant dense<0.000000e+00> : vector<4x256xf32>
    %188 = tpu.matmul %187, %185, %cst_116 {dimension_numbers = #tpu.dot_dimension_numbers<[1], [0], [0], [1], [0, 0, 1, 1], [], []>} : vector<4x4xf32>, vector<4x256xf32>, vector<4x256xf32> -> vector<4x256xf32>
    %189 = arith.addf %184, %188 : vector<4x256xf32>
    %190 = vector.extract_strided_slice %173 {offsets = [0, 768], sizes = [4, 256], strides = [1, 1]} : vector<4x2304xf32> to vector<4x256xf32>
    %c3_117 = arith.constant 3 : index
    %c0_118 = arith.constant 0 : index
    %c0_119 = arith.constant 0 : index
    %191 = vector.load %arg9[%c3_117, %c0_118, %c0_119] : memref<9x4x4xf32, #tpu.memory_space<vmem>>, vector<1x4x4xf32>
    %192 = vector.shape_cast %191 : vector<1x4x4xf32> to vector<4x4xf32>
    %cst_120 = arith.constant dense<0.000000e+00> : vector<4x256xf32>
    %193 = tpu.matmul %192, %190, %cst_120 {dimension_numbers = #tpu.dot_dimension_numbers<[1], [0], [0], [1], [0, 0, 1, 1], [], []>} : vector<4x4xf32>, vector<4x256xf32>, vector<4x256xf32> -> vector<4x256xf32>
    %194 = arith.addf %189, %193 : vector<4x256xf32>
    %195 = vector.extract_strided_slice %173 {offsets = [0, 1024], sizes = [4, 256], strides = [1, 1]} : vector<4x2304xf32> to vector<4x256xf32>
    %c4_121 = arith.constant 4 : index
    %c0_122 = arith.constant 0 : index
    %c0_123 = arith.constant 0 : index
    %196 = vector.load %arg9[%c4_121, %c0_122, %c0_123] : memref<9x4x4xf32, #tpu.memory_space<vmem>>, vector<1x4x4xf32>
    %197 = vector.shape_cast %196 : vector<1x4x4xf32> to vector<4x4xf32>
    %cst_124 = arith.constant dense<0.000000e+00> : vector<4x256xf32>
    %198 = tpu.matmul %197, %195, %cst_124 {dimension_numbers = #tpu.dot_dimension_numbers<[1], [0], [0], [1], [0, 0, 1, 1], [], []>} : vector<4x4xf32>, vector<4x256xf32>, vector<4x256xf32> -> vector<4x256xf32>
    %199 = arith.addf %194, %198 : vector<4x256xf32>
    %200 = vector.extract_strided_slice %173 {offsets = [0, 1280], sizes = [4, 256], strides = [1, 1]} : vector<4x2304xf32> to vector<4x256xf32>
    %c5_125 = arith.constant 5 : index
    %c0_126 = arith.constant 0 : index
    %c0_127 = arith.constant 0 : index
    %201 = vector.load %arg9[%c5_125, %c0_126, %c0_127] : memref<9x4x4xf32, #tpu.memory_space<vmem>>, vector<1x4x4xf32>
    %202 = vector.shape_cast %201 : vector<1x4x4xf32> to vector<4x4xf32>
    %cst_128 = arith.constant dense<0.000000e+00> : vector<4x256xf32>
    %203 = tpu.matmul %202, %200, %cst_128 {dimension_numbers = #tpu.dot_dimension_numbers<[1], [0], [0], [1], [0, 0, 1, 1], [], []>} : vector<4x4xf32>, vector<4x256xf32>, vector<4x256xf32> -> vector<4x256xf32>
    %204 = arith.addf %199, %203 : vector<4x256xf32>
    %205 = vector.extract_strided_slice %173 {offsets = [0, 1536], sizes = [4, 256], strides = [1, 1]} : vector<4x2304xf32> to vector<4x256xf32>
    %c6_129 = arith.constant 6 : index
    %c0_130 = arith.constant 0 : index
    %c0_131 = arith.constant 0 : index
    %206 = vector.load %arg9[%c6_129, %c0_130, %c0_131] : memref<9x4x4xf32, #tpu.memory_space<vmem>>, vector<1x4x4xf32>
    %207 = vector.shape_cast %206 : vector<1x4x4xf32> to vector<4x4xf32>
    %cst_132 = arith.constant dense<0.000000e+00> : vector<4x256xf32>
    %208 = tpu.matmul %207, %205, %cst_132 {dimension_numbers = #tpu.dot_dimension_numbers<[1], [0], [0], [1], [0, 0, 1, 1], [], []>} : vector<4x4xf32>, vector<4x256xf32>, vector<4x256xf32> -> vector<4x256xf32>
    %209 = arith.addf %204, %208 : vector<4x256xf32>
    %210 = vector.extract_strided_slice %173 {offsets = [0, 1792], sizes = [4, 256], strides = [1, 1]} : vector<4x2304xf32> to vector<4x256xf32>
    %c7_133 = arith.constant 7 : index
    %c0_134 = arith.constant 0 : index
    %c0_135 = arith.constant 0 : index
    %211 = vector.load %arg9[%c7_133, %c0_134, %c0_135] : memref<9x4x4xf32, #tpu.memory_space<vmem>>, vector<1x4x4xf32>
    %212 = vector.shape_cast %211 : vector<1x4x4xf32> to vector<4x4xf32>
    %cst_136 = arith.constant dense<0.000000e+00> : vector<4x256xf32>
    %213 = tpu.matmul %212, %210, %cst_136 {dimension_numbers = #tpu.dot_dimension_numbers<[1], [0], [0], [1], [0, 0, 1, 1], [], []>} : vector<4x4xf32>, vector<4x256xf32>, vector<4x256xf32> -> vector<4x256xf32>
    %214 = arith.addf %209, %213 : vector<4x256xf32>
    %215 = vector.extract_strided_slice %173 {offsets = [0, 2048], sizes = [4, 256], strides = [1, 1]} : vector<4x2304xf32> to vector<4x256xf32>
    %c8_137 = arith.constant 8 : index
    %c0_138 = arith.constant 0 : index
    %c0_139 = arith.constant 0 : index
    %216 = vector.load %arg9[%c8_137, %c0_138, %c0_139] : memref<9x4x4xf32, #tpu.memory_space<vmem>>, vector<1x4x4xf32>
    %217 = vector.shape_cast %216 : vector<1x4x4xf32> to vector<4x4xf32>
    %cst_140 = arith.constant dense<0.000000e+00> : vector<4x256xf32>
    %218 = tpu.matmul %217, %215, %cst_140 {dimension_numbers = #tpu.dot_dimension_numbers<[1], [0], [0], [1], [0, 0, 1, 1], [], []>} : vector<4x4xf32>, vector<4x256xf32>, vector<4x256xf32> -> vector<4x256xf32>
    %219 = arith.addf %214, %218 : vector<4x256xf32>
    %c0_141 = arith.constant 0 : index
    %c0_142 = arith.constant 0 : index
    %220 = vector.load %arg10[%c0_141, %c0_142] : memref<4x1xf32, #tpu.memory_space<vmem>>, vector<4x1xf32>
    %221 = vector.broadcast %220 : vector<4x1xf32> to vector<4x256xf32>
    %222 = arith.addf %219, %221 : vector<4x256xf32>
    %c0_143 = arith.constant 0 : index
    %c0_144 = arith.constant 0 : index
    %c0_145 = arith.constant 0 : index
    %223 = vector.load %arg11[%c0_143, %c0_144, %c0_145] : memref<1x4x256xf32, #tpu.memory_space<vmem>>, vector<1x4x256xf32>
    %224 = vector.shape_cast %223 : vector<1x4x256xf32> to vector<4x256xf32>
    %225 = vector.shape_cast %222 : vector<4x256xf32> to vector<1x4x256xf32>
    tpu.vector_store %arg11[%c0_143, %c0_144, %c0_145], %225 {strides = array<i32>} : memref<1x4x256xf32, #tpu.memory_space<vmem>>, vector<1x4x256xf32>,
    %c0_146 = arith.constant 0 : index
    %c0_147 = arith.constant 0 : index
    %c0_148 = arith.constant 0 : index
    %226 = vector.load %arg12[%c0_146, %c0_147, %c0_148] : memref<1x4x256xf32, #tpu.memory_space<vmem>>, vector<1x4x256xf32>
    %227 = vector.shape_cast %226 : vector<1x4x256xf32> to vector<4x256xf32>
    %228 = vector.shape_cast %120 : vector<4x256xf32> to vector<1x4x256xf32>
    tpu.vector_store %arg12[%c0_146, %c0_147, %c0_148], %228 {strides = array<i32>} : memref<1x4x256xf32, #tpu.memory_space<vmem>>, vector<1x4x256xf32>,
    %c0_149 = arith.constant 0 : index
    %c0_150 = arith.constant 0 : index
    %c0_151 = arith.constant 0 : index
    %229 = vector.load %arg13[%c0_149, %c0_150, %c0_151] : memref<1x8x256xf32, #tpu.memory_space<vmem>>, vector<1x8x256xf32>
    %230 = vector.shape_cast %229 : vector<1x8x256xf32> to vector<8x256xf32>
    %231 = vector.shape_cast %52 : vector<8x256xf32> to vector<1x8x256xf32>
    tpu.vector_store %arg13[%c0_149, %c0_150, %c0_151], %231 {strides = array<i32>} : memref<1x8x256xf32, #tpu.memory_space<vmem>>, vector<1x8x256xf32>,
    %c0_152 = arith.constant 0 : index
    %c0_153 = arith.constant 0 : index
    %c0_154 = arith.constant 0 : index
    %232 = vector.load %arg14[%c0_152, %c0_153, %c0_154] : memref<1x8x256xf32, #tpu.memory_space<vmem>>, vector<1x8x256xf32>
    %233 = vector.shape_cast %232 : vector<1x8x256xf32> to vector<8x256xf32>
    %234 = vector.shape_cast %105 : vector<8x256xf32> to vector<1x8x256xf32>
    tpu.vector_store %arg14[%c0_152, %c0_153, %c0_154], %234 {strides = array<i32>} : memref<1x8x256xf32, #tpu.memory_space<vmem>>, vector<1x8x256xf32>,
    %c0_155 = arith.constant 0 : index
    %c0_156 = arith.constant 0 : index
    %c0_157 = arith.constant 0 : index
    %235 = vector.load %arg15[%c0_155, %c0_156, %c0_157] : memref<1x4x256xf32, #tpu.memory_space<vmem>>, vector<1x4x256xf32>
    %236 = vector.shape_cast %235 : vector<1x4x256xf32> to vector<4x256xf32>
    %237 = vector.shape_cast %171 : vector<4x256xf32> to vector<1x4x256xf32>
    tpu.vector_store %arg15[%c0_155, %c0_156, %c0_157], %237 {strides = array<i32>} : memref<1x4x256xf32, #tpu.memory_space<vmem>>, vector<1x4x256xf32>,
    %cst_158 = arith.constant dense<0.000000e+00> : vector<256xf32>
    %238 = vector.multi_reduction <add>, %157, %cst_158 [0] : vector<4x256xf32> to vector<256xf32>
    %239 = vector.shape_cast %238 : vector<256xf32> to vector<1x256xf32>
    %c0_159 = arith.constant 0 : index
    %c0_160 = arith.constant 0 : index
    %c0_161 = arith.constant 0 : index
    %240 = vector.load %arg16[%c0_159, %c0_160, %c0_161] : memref<1x1x256xf32, #tpu.memory_space<vmem>>, vector<1x1x256xf32>
    %241 = vector.shape_cast %240 : vector<1x1x256xf32> to vector<1x256xf32>
    %242 = vector.shape_cast %239 : vector<1x256xf32> to vector<1x1x256xf32>
    tpu.vector_store %arg16[%c0_159, %c0_160, %c0_161], %242 {strides = array<i32>} : memref<1x1x256xf32, #tpu.memory_space<vmem>>, vector<1x1x256xf32>,
    %243 = tpu.iota {dimensions = array<i32: 1>} : vector<1x128xi32>
    %c0_i32 = arith.constant 0 : i32
    %244 = vector.broadcast %c0_i32 : i32 to vector<1x128xi32>
    %245 = arith.cmpi eq, %243, %244 : vector<1x128xi32>
    %246 = vector.shape_cast %139 : vector<4x256xf32> to vector<1x4x256xf32>
    %cst_162 = arith.constant dense<0.000000e+00> : vector<1xf32>
    %247 = vector.multi_reduction <add>, %246, %cst_162 [1, 2] : vector<1x4x256xf32> to vector<1xf32>
    %248 = vector.shape_cast %247 : vector<1xf32> to vector<1x1x1xf32>
    %249 = vector.extract %248[0, 0, 0] : f32 from vector<1x1x1xf32>
    %cst_163 = arith.constant 0.000000e+00 : f32
    %250 = vector.broadcast %249 : f32 to vector<1x128xf32>
    %251 = vector.broadcast %cst_163 : f32 to vector<1x128xf32>
    %252 = arith.select %245, %250, %251 : vector<1x128xi1>, vector<1x128xf32>
    %c1_i32 = arith.constant 1 : i32
    %253 = vector.broadcast %c1_i32 : i32 to vector<1x128xi32>
    %254 = arith.cmpi eq, %243, %253 : vector<1x128xi32>
    %255 = vector.shape_cast %146 : vector<4x256xf32> to vector<1x4x256xf32>
    %cst_164 = arith.constant dense<0.000000e+00> : vector<1xf32>
    %256 = vector.multi_reduction <add>, %255, %cst_164 [1, 2] : vector<1x4x256xf32> to vector<1xf32>
    %257 = vector.shape_cast %256 : vector<1xf32> to vector<1x1x1xf32>
    %258 = vector.extract %257[0, 0, 0] : f32 from vector<1x1x1xf32>
    %cst_165 = arith.constant 0.000000e+00 : f32
    %259 = vector.broadcast %258 : f32 to vector<1x128xf32>
    %260 = vector.broadcast %cst_165 : f32 to vector<1x128xf32>
    %261 = arith.select %254, %259, %260 : vector<1x128xi1>, vector<1x128xf32>
    %262 = arith.addf %252, %261 : vector<1x128xf32>
    %c2_i32 = arith.constant 2 : i32
    %263 = vector.broadcast %c2_i32 : i32 to vector<1x128xi32>
    %264 = arith.cmpi eq, %243, %263 : vector<1x128xi32>
    %265 = vector.shape_cast %171 : vector<4x256xf32> to vector<1x4x256xf32>
    %cst_166 = arith.constant dense<0.000000e+00> : vector<1xf32>
    %266 = vector.multi_reduction <add>, %265, %cst_166 [1, 2] : vector<1x4x256xf32> to vector<1xf32>
    %267 = vector.shape_cast %266 : vector<1xf32> to vector<1x1x1xf32>
    %268 = vector.extract %267[0, 0, 0] : f32 from vector<1x1x1xf32>
    %cst_167 = arith.constant 0.000000e+00 : f32
    %269 = vector.broadcast %268 : f32 to vector<1x128xf32>
    %270 = vector.broadcast %cst_167 : f32 to vector<1x128xf32>
    %271 = arith.select %264, %269, %270 : vector<1x128xi1>, vector<1x128xf32>
    %272 = arith.addf %262, %271 : vector<1x128xf32>
    %c0_168 = arith.constant 0 : index
    %c0_169 = arith.constant 0 : index
    %c0_170 = arith.constant 0 : index
    %273 = vector.load %arg17[%c0_168, %c0_169, %c0_170] : memref<1x1x128xf32, #tpu.memory_space<vmem>>, vector<1x1x128xf32>
    %274 = vector.shape_cast %273 : vector<1x1x128xf32> to vector<1x128xf32>
    %275 = vector.shape_cast %272 : vector<1x128xf32> to vector<1x1x128xf32>
    tpu.vector_store %arg17[%c0_168, %c0_169, %c0_170], %275 {strides = array<i32>} : memref<1x1x128xf32, #tpu.memory_space<vmem>>, vector<1x1x128xf32>,
    return
  }
  func.func @transform_0(%arg0: i32) -> (i32, i32, i32) {
    %c0_i32 = arith.constant 0 : i32
    %c0_i32_0 = arith.constant 0 : i32
    %c0_i32_1 = arith.constant 0 : i32
    return %arg0, %c0_i32, %c0_i32_0 : i32, i32, i32
  }
  func.func @transform_1(%arg0: i32) -> (i32, i32, i32) {
    %c0_i32 = arith.constant 0 : i32
    %c0_i32_0 = arith.constant 0 : i32
    %c0_i32_1 = arith.constant 0 : i32
    return %arg0, %c0_i32, %c0_i32_0 : i32, i32, i32
  }
  func.func @transform_2(%arg0: i32) -> (i32, i32, i32) {
    %c0_i32 = arith.constant 0 : i32
    %c0_i32_0 = arith.constant 0 : i32
    %c0_i32_1 = arith.constant 0 : i32
    return %arg0, %c0_i32, %c0_i32_0 : i32, i32, i32
  }
  func.func @transform_3(%arg0: i32) -> (i32, i32) {
    %c0_i32 = arith.constant 0 : i32
    %c0_i32_0 = arith.constant 0 : i32
    %c0_i32_1 = arith.constant 0 : i32
    return %c0_i32, %c0_i32_0 : i32, i32
  }
  func.func @transform_4(%arg0: i32) -> (i32, i32, i32) {
    %c0_i32 = arith.constant 0 : i32
    %c0_i32_0 = arith.constant 0 : i32
    %c0_i32_1 = arith.constant 0 : i32
    %c0_i32_2 = arith.constant 0 : i32
    return %c0_i32, %c0_i32_0, %c0_i32_1 : i32, i32, i32
  }
  func.func @transform_5(%arg0: i32) -> (i32, i32) {
    %c0_i32 = arith.constant 0 : i32
    %c0_i32_0 = arith.constant 0 : i32
    %c0_i32_1 = arith.constant 0 : i32
    return %c0_i32, %c0_i32_0 : i32, i32
  }
  func.func @transform_6(%arg0: i32) -> (i32, i32, i32) {
    %c0_i32 = arith.constant 0 : i32
    %c0_i32_0 = arith.constant 0 : i32
    %c0_i32_1 = arith.constant 0 : i32
    %c0_i32_2 = arith.constant 0 : i32
    return %c0_i32, %c0_i32_0, %c0_i32_1 : i32, i32, i32
  }
  func.func @transform_7(%arg0: i32) -> (i32, i32) {
    %c0_i32 = arith.constant 0 : i32
    %c0_i32_0 = arith.constant 0 : i32
    %c0_i32_1 = arith.constant 0 : i32
    return %c0_i32, %c0_i32_0 : i32, i32
  }
  func.func @transform_8(%arg0: i32) -> (i32, i32, i32) {
    %c0_i32 = arith.constant 0 : i32
    %c0_i32_0 = arith.constant 0 : i32
    %c0_i32_1 = arith.constant 0 : i32
    %c0_i32_2 = arith.constant 0 : i32
    return %c0_i32, %c0_i32_0, %c0_i32_1 : i32, i32, i32
  }
  func.func @transform_9(%arg0: i32) -> (i32, i32) {
    %c0_i32 = arith.constant 0 : i32
    %c0_i32_0 = arith.constant 0 : i32
    %c0_i32_1 = arith.constant 0 : i32
    return %c0_i32, %c0_i32_0 : i32, i32
  }
  func.func @transform_10(%arg0: i32) -> (i32, i32, i32) {
    %c0_i32 = arith.constant 0 : i32
    %c0_i32_0 = arith.constant 0 : i32
    %c0_i32_1 = arith.constant 0 : i32
    return %arg0, %c0_i32, %c0_i32_0 : i32, i32, i32
  }
  func.func @transform_11(%arg0: i32) -> (i32, i32, i32) {
    %c0_i32 = arith.constant 0 : i32
    %c0_i32_0 = arith.constant 0 : i32
    %c0_i32_1 = arith.constant 0 : i32
    return %arg0, %c0_i32, %c0_i32_0 : i32, i32, i32
  }
  func.func @transform_12(%arg0: i32) -> (i32, i32, i32) {
    %c0_i32 = arith.constant 0 : i32
    %c0_i32_0 = arith.constant 0 : i32
    %c0_i32_1 = arith.constant 0 : i32
    return %arg0, %c0_i32, %c0_i32_0 : i32, i32, i32
  }
  func.func @transform_13(%arg0: i32) -> (i32, i32, i32) {
    %c0_i32 = arith.constant 0 : i32
    %c0_i32_0 = arith.constant 0 : i32
    %c0_i32_1 = arith.constant 0 : i32
    return %arg0, %c0_i32, %c0_i32_0 : i32, i32, i32
  }
  func.func @transform_14(%arg0: i32) -> (i32, i32, i32) {
    %c0_i32 = arith.constant 0 : i32
    %c0_i32_0 = arith.constant 0 : i32
    %c0_i32_1 = arith.constant 0 : i32
    return %arg0, %c0_i32, %c0_i32_0 : i32, i32, i32
  }
  func.func @transform_15(%arg0: i32) -> (i32, i32, i32) {
    %c0_i32 = arith.constant 0 : i32
    %c0_i32_0 = arith.constant 0 : i32
    %c0_i32_1 = arith.constant 0 : i32
    return %arg0, %c0_i32, %c0_i32_0 : i32, i32, i32
  }
  func.func @transform_16(%arg0: i32) -> (i32, i32, i32) {
    %c0_i32 = arith.constant 0 : i32
    %c0_i32_0 = arith.constant 0 : i32
    %c0_i32_1 = arith.constant 0 : i32
    return %arg0, %c0_i32, %c0_i32_0 : i32, i32, i32
  }
}

</mosaic_0001>

<llo_original>
// kernel: normal_stochastic_block_2d.1
$region0: #{normal_stochastic_block_2d.1}
  #allocation0 [shape = 'u32[]', space=smem, size = 0x4, offset = 0x4, fixed_abs, tag = 'smem constant byte address 0x4 - core index']
  #allocation1 [shape = 'u32[144,128]{1,0:T(1,128)}', space=vmem, size = 0x12000, scoped, tag = 'internal scratch']
  %s0 = inlined_call_operand.vmem [shape: f32[2,4,256], index: 0, kind: input, shape index: {}]
  %s1 = inlined_call_operand.vmem [shape: f32[2,4,256], index: 1, kind: input, shape index: {}]
  %s2 = inlined_call_operand.vmem [shape: f32[2,4,256], index: 2, kind: input, shape index: {}]
  %s3 = inlined_call_operand.hbm [shape: f32[256,2304], index: 3, kind: input, shape index: {}]
  %s4 = inlined_call_operand.hbm [shape: f32[9,8,4], index: 4, kind: input, shape index: {}]
  %s5 = inlined_call_operand.hbm [shape: f32[8,1], index: 5, kind: input, shape index: {}]
  %s6 = inlined_call_operand.hbm [shape: f32[9,8,4], index: 6, kind: input, shape index: {}]
  %s7 = inlined_call_operand.hbm [shape: f32[8,1], index: 7, kind: input, shape index: {}]
  %s8 = inlined_call_operand.hbm [shape: f32[9,4,4], index: 8, kind: input, shape index: {}]
  %s9 = inlined_call_operand.hbm [shape: f32[4,1], index: 9, kind: input, shape index: {}]
  %s10 = inlined_call_operand.vmem [shape: f32[2,4,256], index: 10, kind: output, shape index: {0}]
  %s11 = inlined_call_operand.vmem [shape: f32[2,4,256], index: 11, kind: output, shape index: {1}]
  %s12 = inlined_call_operand.vmem [shape: f32[2,8,256], index: 12, kind: output, shape index: {2}]
  %s13 = inlined_call_operand.vmem [shape: f32[2,8,256], index: 13, kind: output, shape index: {3}]
  %s14 = inlined_call_operand.vmem [shape: f32[2,4,256], index: 14, kind: output, shape index: {4}]
  %s15 = inlined_call_operand.vmem [shape: f32[2,1,256], index: 15, kind: output, shape index: {5}]
  %s16 = inlined_call_operand.vmem [shape: f32[2,1,128], index: 16, kind: output, shape index: {6}]
  %17 = xla_tuple %s10, %s11, %s12, %s13, %s14, %s15, %s16
  %s18 = sld [smem:[#allocation0]]
  $region149: #{normal_stochastic_block_2d.1} parent=0
    _
  %s20 = ssub.s32 1, %s18
  %s21 = scalar_select 0, %s20, %s18
  $region1: #{normal_stochastic_block_2d.1} parent=0
    #allocation2 [shape = 'u8[2359296]{0}', space=vmem, size = 0x240000, scoped, tag = 'input window, operand 3, single buffered']
    #allocation3 [shape = 's32[2]{0}', space=sflag, size = 0x8, scoped, tag = 'scoped memory for normal_stochastic_block_2d.1']
    #allocation4 [shape = 'u8[36864]{0}', space=vmem, size = 0x9000, scoped, tag = 'input window, operand 4, single buffered']
    #allocation5 [shape = 's32[1]{0}', space=sflag, size = 0x4, scoped, tag = 'scoped memory for normal_stochastic_block_2d.1']
    #allocation6 [shape = 'u8[4096]{0}', space=vmem, size = 0x1000, scoped, tag = 'input window, operand 5, single buffered']
    #allocation7 [shape = 'u8[36864]{0}', space=vmem, size = 0x9000, scoped, tag = 'input window, operand 6, single buffered']
    #allocation8 [shape = 's32[1]{0}', space=sflag, size = 0x4, scoped, tag = 'scoped memory for normal_stochastic_block_2d.1']
    #allocation9 [shape = 'u8[4096]{0}', space=vmem, size = 0x1000, scoped, tag = 'input window, operand 7, single buffered']
    #allocation10 [shape = 'u8[18432]{0}', space=vmem, size = 0x4800, scoped, tag = 'input window, operand 8, single buffered']
    #allocation11 [shape = 's32[1]{0}', space=sflag, size = 0x4, scoped, tag = 'scoped memory for normal_stochastic_block_2d.1']
    #allocation12 [shape = 'u8[2048]{0}', space=vmem, size = 0x800, scoped, tag = 'input window, operand 9, single buffered']
    %22 = vsyncpa [#allocation3], 0
    %23 = vsyncpa [#allocation5], 0
    %24 = vsyncpa [#allocation8], 0
    %25 = vsyncpa [#allocation11], 0
    loop: start=0, step=1, limit=4
    $region2: #{normal_stochastic_block_2d.1} parent=1 // loop_pre_header
      _
    $region3: #{normal_stochastic_block_2d.1} parent=1 // loop_header
      %s27 = sphi 0, %s31
      %p28 = scmp.ge.s32.totalorder %s27, 4
      %s37 = sphi 0, %s39
      %s40 = sphi 0, %s37
      %s41 = sphi 0, %s40
      %s57 = sphi 0, %s41
      %s63 = sphi 0, %s65
      %s66 = sphi 0, %s63
      %s67 = sphi 0, %s66
      %s83 = sphi 0, %s67
      %s89 = sphi 0, %s91
      %s92 = sphi 0, %s89
      %s93 = sphi 0, %s92
      %s109 = sphi 0, %s93
      %s113 = sphi 0, %s113
      %s115 = sphi 0, %s113
      %s116 = sphi 0, %s115
      %s130 = sphi 0, %s116
      %s134 = sphi 0, %s134
      %s136 = sphi 0, %s134
      %s137 = sphi 0, %s136
      %s151 = sphi 0, %s137
      %s155 = sphi 0, %s155
      %s157 = sphi 0, %s155
      %s158 = sphi 0, %s157
      %s172 = sphi 0, %s158
      %s176 = sphi 0, %s176
      %s178 = sphi 0, %s176
      %s179 = sphi 0, %s178
      %s193 = sphi 0, %s179
      %s197 = sphi 0, %s197
      %s199 = sphi 0, %s197
      %s200 = sphi 0, %s199
      %s214 = sphi 0, %s200
      %s218 = sphi 0, %s218
      %s220 = sphi 0, %s218
      %s221 = sphi 0, %s220
      %s235 = sphi 0, %s221
      %s239 = sphi 0, %s239
      %s241 = sphi 0, %s239
      %s242 = sphi 0, %s241
      %s256 = sphi 0, %s242
      %s262 = sphi 0, %s264
      %s265 = sphi 0, %s262
      %s266 = sphi 0, %s265
      %s282 = sphi 0, %s266
      %s288 = sphi 0, %s290
      %s291 = sphi 0, %s288
      %s292 = sphi 0, %s291
      %s308 = sphi 0, %s292
      %s314 = sphi 0, %s316
      %s317 = sphi 0, %s314
      %s318 = sphi 0, %s317
      %s334 = sphi 0, %s318
      %s340 = sphi 0, %s342
      %s343 = sphi 0, %s340
      %s344 = sphi 0, %s343
      %s360 = sphi 0, %s344
      %s366 = sphi 0, %s368
      %s369 = sphi 0, %s366
      %s370 = sphi 0, %s369
      %s386 = sphi 0, %s370
      %s392 = sphi 0, %s394
      %s395 = sphi 0, %s392
      %s396 = sphi 0, %s395
      %s412 = sphi 0, %s396
      %s418 = sphi 0, %s420
      %s421 = sphi 0, %s418
      %s422 = sphi 0, %s421
      %s438 = sphi 0, %s422
    $region4: #{normal_stochastic_block_2d.1} parent=1 // loop_header_branch
      %30 = sbr.rel (%p28) target = $region8
    $region5: #{normal_stochastic_block_2d.1} parent=1 // loop_body
      %s32 = ssub.s32 %s27, 1
      %s33 = ssub.s32 %s27, 2
      %s34 = sadd.s32 %s27, 1
      %s35 = ssub.s32 %s27, %s34
      %p36 = scmp.eq.s32.totalorder %s35, 0
      %s38 = sadd.s32 %s37, 1
      %s39 = scalar_select %p36, %s37, %s38
      %p42 = pneg %p36
      %p43 = scmp.eq.s32.totalorder %s27, 1
      %p44 = por %p42, %p43
      %p45 = scmp.ne.s32.totalorder %s37, %s40
      %p46 = scmp.eq.s32.totalorder %s27, 0
      %p47 = por %p45, %p46
      %p48 = scmp.ne.s32.totalorder %s37, %s40
      %p49 = scmp.eq.s32.totalorder %s32, 1
      %p50 = por %p48, %p49
      %p51 = scmp.ne.s32.totalorder %s40, %s41
      %p52 = scmp.eq.s32.totalorder %s32, 0
      %p53 = por %p51, %p52
      %p54 = scmp.ne.s32.totalorder %s40, %s41
      %p55 = scmp.eq.s32.totalorder %s33, 1
      %p56 = por %p54, %p55
      %p58 = scmp.ne.s32.totalorder %s41, %s57
      %p59 = scmp.eq.s32.totalorder %s33, 0
      %p60 = por %p58, %p59
      %s61 = ssub.s32 %s27, %s34
      %p62 = scmp.eq.s32.totalorder %s61, 0
      %s64 = sadd.s32 %s63, 1
      %s65 = scalar_select %p62, %s63, %s64
      %p68 = pneg %p62
      %p69 = scmp.eq.s32.totalorder %s27, 1
      %p70 = por %p68, %p69
      %p71 = scmp.ne.s32.totalorder %s63, %s66
      %p72 = scmp.eq.s32.totalorder %s27, 0
      %p73 = por %p71, %p72
      %p74 = scmp.ne.s32.totalorder %s63, %s66
      %p75 = scmp.eq.s32.totalorder %s32, 1
      %p76 = por %p74, %p75
      %p77 = scmp.ne.s32.totalorder %s66, %s67
      %p78 = scmp.eq.s32.totalorder %s32, 0
      %p79 = por %p77, %p78
      %p80 = scmp.ne.s32.totalorder %s66, %s67
      %p81 = scmp.eq.s32.totalorder %s33, 1
      %p82 = por %p80, %p81
      %p84 = scmp.ne.s32.totalorder %s67, %s83
      %p85 = scmp.eq.s32.totalorder %s33, 0
      %p86 = por %p84, %p85
      %s87 = ssub.s32 %s27, %s34
      %p88 = scmp.eq.s32.totalorder %s87, 0
      %s90 = sadd.s32 %s89, 1
      %s91 = scalar_select %p88, %s89, %s90
      %p94 = pneg %p88
      %p95 = scmp.eq.s32.totalorder %s27, 1
      %p96 = por %p94, %p95
      %p97 = scmp.ne.s32.totalorder %s89, %s92
      %p98 = scmp.eq.s32.totalorder %s27, 0
      %p99 = por %p97, %p98
      %p100 = scmp.ne.s32.totalorder %s89, %s92
      %p101 = scmp.eq.s32.totalorder %s32, 1
      %p102 = por %p100, %p101
      %p103 = scmp.ne.s32.totalorder %s92, %s93
      %p104 = scmp.eq.s32.totalorder %s32, 0
      %p105 = por %p103, %p104
      %p106 = scmp.ne.s32.totalorder %s92, %s93
      %p107 = scmp.eq.s32.totalorder %s33, 1
      %p108 = por %p106, %p107
      %p110 = scmp.ne.s32.totalorder %s93, %s109
      %p111 = scmp.eq.s32.totalorder %s33, 0
      %p112 = por %p110, %p111
      %s114 = sadd.s32 %s113, 1
      %p117 = scmp.eq.s32.totalorder %s27, 1
      %p118 = scmp.ne.s32.totalorder %s113, %s115
      %p119 = scmp.eq.s32.totalorder %s27, 0
      %p120 = por %p118, %p119
      %p121 = scmp.ne.s32.totalorder %s113, %s115
      %p122 = scmp.eq.s32.totalorder %s32, 1
      %p123 = por %p121, %p122
      %p124 = scmp.ne.s32.totalorder %s115, %s116
      %p125 = scmp.eq.s32.totalorder %s32, 0
      %p126 = por %p124, %p125
      %p127 = scmp.ne.s32.totalorder %s115, %s116
      %p128 = scmp.eq.s32.totalorder %s33, 1
      %p129 = por %p127, %p128
      %p131 = scmp.ne.s32.totalorder %s116, %s130
      %p132 = scmp.eq.s32.totalorder %s33, 0
      %p133 = por %p131, %p132
      %s135 = sadd.s32 %s134, 1
      %p138 = scmp.eq.s32.totalorder %s27, 1
      %p139 = scmp.ne.s32.totalorder %s134, %s136
      %p140 = scmp.eq.s32.totalorder %s27, 0
      %p141 = por %p139, %p140
      %p142 = scmp.ne.s32.totalorder %s134, %s136
      %p143 = scmp.eq.s32.totalorder %s32, 1
      %p144 = por %p142, %p143
      %p145 = scmp.ne.s32.totalorder %s136, %s137
      %p146 = scmp.eq.s32.totalorder %s32, 0
      %p147 = por %p145, %p146
      %p148 = scmp.ne.s32.totalorder %s136, %s137
      %p149 = scmp.eq.s32.totalorder %s33, 1
      %p150 = por %p148, %p149
      %p152 = scmp.ne.s32.totalorder %s137, %s151
      %p153 = scmp.eq.s32.totalorder %s33, 0
      %p154 = por %p152, %p153
      %s156 = sadd.s32 %s155, 1
      %p159 = scmp.eq.s32.totalorder %s27, 1
      %p160 = scmp.ne.s32.totalorder %s155, %s157
      %p161 = scmp.eq.s32.totalorder %s27, 0
      %p162 = por %p160, %p161
      %p163 = scmp.ne.s32.totalorder %s155, %s157
      %p164 = scmp.eq.s32.totalorder %s32, 1
      %p165 = por %p163, %p164
      %p166 = scmp.ne.s32.totalorder %s157, %s158
      %p167 = scmp.eq.s32.totalorder %s32, 0
      %p168 = por %p166, %p167
      %p169 = scmp.ne.s32.totalorder %s157, %s158
      %p170 = scmp.eq.s32.totalorder %s33, 1
      %p171 = por %p169, %p170
      %p173 = scmp.ne.s32.totalorder %s158, %s172
      %p174 = scmp.eq.s32.totalorder %s33, 0
      %p175 = por %p173, %p174
      %s177 = sadd.s32 %s176, 1
      %p180 = scmp.eq.s32.totalorder %s27, 1
      %p181 = scmp.ne.s32.totalorder %s176, %s178
      %p182 = scmp.eq.s32.totalorder %s27, 0
      %p183 = por %p181, %p182
      %p184 = scmp.ne.s32.totalorder %s176, %s178
      %p185 = scmp.eq.s32.totalorder %s32, 1
      %p186 = por %p184, %p185
      %p187 = scmp.ne.s32.totalorder %s178, %s179
      %p188 = scmp.eq.s32.totalorder %s32, 0
      %p189 = por %p187, %p188
      %p190 = scmp.ne.s32.totalorder %s178, %s179
      %p191 = scmp.eq.s32.totalorder %s33, 1
      %p192 = por %p190, %p191
      %p194 = scmp.ne.s32.totalorder %s179, %s193
      %p195 = scmp.eq.s32.totalorder %s33, 0
      %p196 = por %p194, %p195
      %s198 = sadd.s32 %s197, 1
      %p201 = scmp.eq.s32.totalorder %s27, 1
      %p202 = scmp.ne.s32.totalorder %s197, %s199
      %p203 = scmp.eq.s32.totalorder %s27, 0
      %p204 = por %p202, %p203
      %p205 = scmp.ne.s32.totalorder %s197, %s199
      %p206 = scmp.eq.s32.totalorder %s32, 1
      %p207 = por %p205, %p206
      %p208 = scmp.ne.s32.totalorder %s199, %s200
      %p209 = scmp.eq.s32.totalorder %s32, 0
      %p210 = por %p208, %p209
      %p211 = scmp.ne.s32.totalorder %s199, %s200
      %p212 = scmp.eq.s32.totalorder %s33, 1
      %p213 = por %p211, %p212
      %p215 = scmp.ne.s32.totalorder %s200, %s214
      %p216 = scmp.eq.s32.totalorder %s33, 0
      %p217 = por %p215, %p216
      %s219 = sadd.s32 %s218, 1
      %p222 = scmp.eq.s32.totalorder %s27, 1
      %p223 = scmp.ne.s32.totalorder %s218, %s220
      %p224 = scmp.eq.s32.totalorder %s27, 0
      %p225 = por %p223, %p224
      %p226 = scmp.ne.s32.totalorder %s218, %s220
      %p227 = scmp.eq.s32.totalorder %s32, 1
      %p228 = por %p226, %p227
      %p229 = scmp.ne.s32.totalorder %s220, %s221
      %p230 = scmp.eq.s32.totalorder %s32, 0
      %p231 = por %p229, %p230
      %p232 = scmp.ne.s32.totalorder %s220, %s221
      %p233 = scmp.eq.s32.totalorder %s33, 1
      %p234 = por %p232, %p233
      %p236 = scmp.ne.s32.totalorder %s221, %s235
      %p237 = scmp.eq.s32.totalorder %s33, 0
      %p238 = por %p236, %p237
      %s240 = sadd.s32 %s239, 1
      %p243 = scmp.eq.s32.totalorder %s27, 1
      %p244 = scmp.ne.s32.totalorder %s239, %s241
      %p245 = scmp.eq.s32.totalorder %s27, 0
      %p246 = por %p244, %p245
      %p247 = scmp.ne.s32.totalorder %s239, %s241
      %p248 = scmp.eq.s32.totalorder %s32, 1
      %p249 = por %p247, %p248
      %p250 = scmp.ne.s32.totalorder %s241, %s242
      %p251 = scmp.eq.s32.totalorder %s32, 0
      %p252 = por %p250, %p251
      %p253 = scmp.ne.s32.totalorder %s241, %s242
      %p254 = scmp.eq.s32.totalorder %s33, 1
      %p255 = por %p253, %p254
      %p257 = scmp.ne.s32.totalorder %s242, %s256
      %p258 = scmp.eq.s32.totalorder %s33, 0
      %p259 = por %p257, %p258
      %s260 = ssub.s32 %s27, %s34
      %p261 = scmp.eq.s32.totalorder %s260, 0
      %s263 = sadd.s32 %s262, 1
      %s264 = scalar_select %p261, %s262, %s263
      %p267 = pneg %p261
      %p268 = scmp.eq.s32.totalorder %s27, 1
      %p269 = por %p267, %p268
      %p270 = scmp.ne.s32.totalorder %s262, %s265
      %p271 = scmp.eq.s32.totalorder %s27, 0
      %p272 = por %p270, %p271
      %p273 = scmp.ne.s32.totalorder %s262, %s265
      %p274 = scmp.eq.s32.totalorder %s32, 1
      %p275 = por %p273, %p274
      %p276 = scmp.ne.s32.totalorder %s265, %s266
      %p277 = scmp.eq.s32.totalorder %s32, 0
      %p278 = por %p276, %p277
      %p279 = scmp.ne.s32.totalorder %s265, %s266
      %p280 = scmp.eq.s32.totalorder %s33, 1
      %p281 = por %p279, %p280
      %p283 = scmp.ne.s32.totalorder %s266, %s282
      %p284 = scmp.eq.s32.totalorder %s33, 0
      %p285 = por %p283, %p284
      %s286 = ssub.s32 %s27, %s34
      %p287 = scmp.eq.s32.totalorder %s286, 0
      %s289 = sadd.s32 %s288, 1
      %s290 = scalar_select %p287, %s288, %s289
      %p293 = pneg %p287
      %p294 = scmp.eq.s32.totalorder %s27, 1
      %p295 = por %p293, %p294
      %p296 = scmp.ne.s32.totalorder %s288, %s291
      %p297 = scmp.eq.s32.totalorder %s27, 0
      %p298 = por %p296, %p297
      %p299 = scmp.ne.s32.totalorder %s288, %s291
      %p300 = scmp.eq.s32.totalorder %s32, 1
      %p301 = por %p299, %p300
      %p302 = scmp.ne.s32.totalorder %s291, %s292
      %p303 = scmp.eq.s32.totalorder %s32, 0
      %p304 = por %p302, %p303
      %p305 = scmp.ne.s32.totalorder %s291, %s292
      %p306 = scmp.eq.s32.totalorder %s33, 1
      %p307 = por %p305, %p306
      %p309 = scmp.ne.s32.totalorder %s292, %s308
      %p310 = scmp.eq.s32.totalorder %s33, 0
      %p311 = por %p309, %p310
      %s312 = ssub.s32 %s27, %s34
      %p313 = scmp.eq.s32.totalorder %s312, 0
      %s315 = sadd.s32 %s314, 1
      %s316 = scalar_select %p313, %s314, %s315
      %p319 = pneg %p313
      %p320 = scmp.eq.s32.totalorder %s27, 1
      %p321 = por %p319, %p320
      %p322 = scmp.ne.s32.totalorder %s314, %s317
      %p323 = scmp.eq.s32.totalorder %s27, 0
      %p324 = por %p322, %p323
      %p325 = scmp.ne.s32.totalorder %s314, %s317
      %p326 = scmp.eq.s32.totalorder %s32, 1
      %p327 = por %p325, %p326
      %p328 = scmp.ne.s32.totalorder %s317, %s318
      %p329 = scmp.eq.s32.totalorder %s32, 0
      %p330 = por %p328, %p329
      %p331 = scmp.ne.s32.totalorder %s317, %s318
      %p332 = scmp.eq.s32.totalorder %s33, 1
      %p333 = por %p331, %p332
      %p335 = scmp.ne.s32.totalorder %s318, %s334
      %p336 = scmp.eq.s32.totalorder %s33, 0
      %p337 = por %p335, %p336
      %s338 = ssub.s32 %s27, %s34
      %p339 = scmp.eq.s32.totalorder %s338, 0
      %s341 = sadd.s32 %s340, 1
      %s342 = scalar_select %p339, %s340, %s341
      %p345 = pneg %p339
      %p346 = scmp.eq.s32.totalorder %s27, 1
      %p347 = por %p345, %p346
      %p348 = scmp.ne.s32.totalorder %s340, %s343
      %p349 = scmp.eq.s32.totalorder %s27, 0
      %p350 = por %p348, %p349
      %p351 = scmp.ne.s32.totalorder %s340, %s343
      %p352 = scmp.eq.s32.totalorder %s32, 1
      %p353 = por %p351, %p352
      %p354 = scmp.ne.s32.totalorder %s343, %s344
      %p355 = scmp.eq.s32.totalorder %s32, 0
      %p356 = por %p354, %p355
      %p357 = scmp.ne.s32.totalorder %s343, %s344
      %p358 = scmp.eq.s32.totalorder %s33, 1
      %p359 = por %p357, %p358
      %p361 = scmp.ne.s32.totalorder %s344, %s360
      %p362 = scmp.eq.s32.totalorder %s33, 0
      %p363 = por %p361, %p362
      %s364 = ssub.s32 %s27, %s34
      %p365 = scmp.eq.s32.totalorder %s364, 0
      %s367 = sadd.s32 %s366, 1
      %s368 = scalar_select %p365, %s366, %s367
      %p371 = pneg %p365
      %p372 = scmp.eq.s32.totalorder %s27, 1
      %p373 = por %p371, %p372
      %p374 = scmp.ne.s32.totalorder %s366, %s369
      %p375 = scmp.eq.s32.totalorder %s27, 0
      %p376 = por %p374, %p375
      %p377 = scmp.ne.s32.totalorder %s366, %s369
      %p378 = scmp.eq.s32.totalorder %s32, 1
      %p379 = por %p377, %p378
      %p380 = scmp.ne.s32.totalorder %s369, %s370
      %p381 = scmp.eq.s32.totalorder %s32, 0
      %p382 = por %p380, %p381
      %p383 = scmp.ne.s32.totalorder %s369, %s370
      %p384 = scmp.eq.s32.totalorder %s33, 1
      %p385 = por %p383, %p384
      %p387 = scmp.ne.s32.totalorder %s370, %s386
      %p388 = scmp.eq.s32.totalorder %s33, 0
      %p389 = por %p387, %p388
      %s390 = ssub.s32 %s27, %s34
      %p391 = scmp.eq.s32.totalorder %s390, 0
      %s393 = sadd.s32 %s392, 1
      %s394 = scalar_select %p391, %s392, %s393
      %p397 = pneg %p391
      %p398 = scmp.eq.s32.totalorder %s27, 1
      %p399 = por %p397, %p398
      %p400 = scmp.ne.s32.totalorder %s392, %s395
      %p401 = scmp.eq.s32.totalorder %s27, 0
      %p402 = por %p400, %p401
      %p403 = scmp.ne.s32.totalorder %s392, %s395
      %p404 = scmp.eq.s32.totalorder %s32, 1
      %p405 = por %p403, %p404
      %p406 = scmp.ne.s32.totalorder %s395, %s396
      %p407 = scmp.eq.s32.totalorder %s32, 0
      %p408 = por %p406, %p407
      %p409 = scmp.ne.s32.totalorder %s395, %s396
      %p410 = scmp.eq.s32.totalorder %s33, 1
      %p411 = por %p409, %p410
      %p413 = scmp.ne.s32.totalorder %s396, %s412
      %p414 = scmp.eq.s32.totalorder %s33, 0
      %p415 = por %p413, %p414
      %s416 = ssub.s32 %s27, %s34
      %p417 = scmp.eq.s32.totalorder %s416, 0
      %s419 = sadd.s32 %s418, 1
      %s420 = scalar_select %p417, %s418, %s419
      %p423 = pneg %p417
      %p424 = scmp.eq.s32.totalorder %s27, 1
      %p425 = por %p423, %p424
      %p426 = scmp.ne.s32.totalorder %s418, %s421
      %p427 = scmp.eq.s32.totalorder %s27, 0
      %p428 = por %p426, %p427
      %p429 = scmp.ne.s32.totalorder %s418, %s421
      %p430 = scmp.eq.s32.totalorder %s32, 1
      %p431 = por %p429, %p430
      %p432 = scmp.ne.s32.totalorder %s421, %s422
      %p433 = scmp.eq.s32.totalorder %s32, 0
      %p434 = por %p432, %p433
      %p435 = scmp.ne.s32.totalorder %s421, %s422
      %p436 = scmp.eq.s32.totalorder %s33, 1
      %p437 = por %p435, %p436
      %p439 = scmp.ne.s32.totalorder %s422, %s438
      %p440 = scmp.eq.s32.totalorder %s33, 0
      %p441 = por %p439, %p440
      %p442 = scmp.le.s32.totalorder 1, %s27
      %p443 = scmp.lt.s32.totalorder %s27, 3
      %p444 = pnand %p442, %p443
      %p445 = pneg %p444
      // Predicated region
      $region9: #{normal_stochastic_block_2d.1} parent=5 // pred_check
        _
      $region10: #{normal_stochastic_block_2d.1} parent=5 // pred_check_branch
        %447 = sbr.rel (%p444) target = $region12
      $region11: #{normal_stochastic_block_2d.1} parent=5 // pred_region
        %s448 = ssub.s32 %s27, 1
        // Predicated region
        $region13: #{normal_stochastic_block_2d.1} parent=11 // pred_check
          %p449 = pneg %p126
        $region14: #{normal_stochastic_block_2d.1} parent=11 // pred_check_branch
          %451 = sbr.rel (%p449) target = $region16
        $region15: #{normal_stochastic_block_2d.1} parent=11 // pred_region
          %s453 = ssub.s32 73728, 73728
          %454 = vsyncadd [#allocation3], %s453
          %s455 = sshll.u32 [#allocation2], 4
          %s456 = int_to_ptr.vmem [resolvable:$true] %s455
          %461 = dma.hbm_to_vmem [thread:$0]  %s3, 73728, %s456, [#allocation3], 2304, 2304, 144
        $region16: #{normal_stochastic_block_2d.1} parent=11 // pred_fallthru
          _
        // Predicated region
        $region17: #{normal_stochastic_block_2d.1} parent=11 // pred_check
          %p462 = pneg %p147
        $region18: #{normal_stochastic_block_2d.1} parent=11 // pred_check_branch
          %464 = sbr.rel (%p462) target = $region20
        $region19: #{normal_stochastic_block_2d.1} parent=11 // pred_region
          %s466 = ssub.s32 1152, 1152
          %467 = vsyncadd [#allocation5], %s466
          %s468 = sshll.u32 [#allocation4], 4
          %s469 = int_to_ptr.vmem [resolvable:$true] %s468
          %474 = dma.hbm_to_vmem [thread:$0]  %s4, 1152, %s469, [#allocation5], 128, 128, 8
        $region20: #{normal_stochastic_block_2d.1} parent=11 // pred_fallthru
          _
        // Predicated region
        $region21: #{normal_stochastic_block_2d.1} parent=11 // pred_check
          %p475 = pneg %p168
        $region22: #{normal_stochastic_block_2d.1} parent=11 // pred_check_branch
          %477 = sbr.rel (%p475) target = $region24
        $region23: #{normal_stochastic_block_2d.1} parent=11 // pred_region
          %s479 = ssub.s32 128, 128
          %480 = vsyncadd [#allocation5], %s479
          %s482 = sshll.u32 [#allocation6], 4
          %s483 = int_to_ptr.vmem [resolvable:$true] %s482
          %485 = dma.hbm_to_vmem [thread:$0]  %s5, 128, %s483, [#allocation5]
        $region24: #{normal_stochastic_block_2d.1} parent=11 // pred_fallthru
          _
        // Predicated region
        $region25: #{normal_stochastic_block_2d.1} parent=11 // pred_check
          %p486 = pneg %p189
        $region26: #{normal_stochastic_block_2d.1} parent=11 // pred_check_branch
          %488 = sbr.rel (%p486) target = $region28
        $region27: #{normal_stochastic_block_2d.1} parent=11 // pred_region
          %s490 = ssub.s32 1152, 1152
          %491 = vsyncadd [#allocation8], %s490
          %s492 = sshll.u32 [#allocation7], 4
          %s493 = int_to_ptr.vmem [resolvable:$true] %s492
          %498 = dma.hbm_to_vmem [thread:$0]  %s6, 1152, %s493, [#allocation8], 128, 128, 8
        $region28: #{normal_stochastic_block_2d.1} parent=11 // pred_fallthru
          _
        // Predicated region
        $region29: #{normal_stochastic_block_2d.1} parent=11 // pred_check
          %p499 = pneg %p210
        $region30: #{normal_stochastic_block_2d.1} parent=11 // pred_check_branch
          %501 = sbr.rel (%p499) target = $region32
        $region31: #{normal_stochastic_block_2d.1} parent=11 // pred_region
          %s503 = ssub.s32 128, 128
          %504 = vsyncadd [#allocation8], %s503
          %s506 = sshll.u32 [#allocation9], 4
          %s507 = int_to_ptr.vmem [resolvable:$true] %s506
          %509 = dma.hbm_to_vmem [thread:$0]  %s7, 128, %s507, [#allocation8]
        $region32: #{normal_stochastic_block_2d.1} parent=11 // pred_fallthru
          _
        // Predicated region
        $region33: #{normal_stochastic_block_2d.1} parent=11 // pred_check
          %p510 = pneg %p231
        $region34: #{normal_stochastic_block_2d.1} parent=11 // pred_check_branch
          %512 = sbr.rel (%p510) target = $region36
        $region35: #{normal_stochastic_block_2d.1} parent=11 // pred_region
          %s514 = ssub.s32 576, 576
          %515 = vsyncadd [#allocation11], %s514
          %s516 = sshll.u32 [#allocation10], 4
          %s517 = int_to_ptr.vmem [resolvable:$true] %s516
          %522 = dma.hbm_to_vmem [thread:$0]  %s8, 576, %s517, [#allocation11], 64, 64, 4
        $region36: #{normal_stochastic_block_2d.1} parent=11 // pred_fallthru
          _
        // Predicated region
        $region37: #{normal_stochastic_block_2d.1} parent=11 // pred_check
          %p523 = pneg %p252
        $region38: #{normal_stochastic_block_2d.1} parent=11 // pred_check_branch
          %525 = sbr.rel (%p523) target = $region40
        $region39: #{normal_stochastic_block_2d.1} parent=11 // pred_region
          %s527 = ssub.s32 64, 64
          %528 = vsyncadd [#allocation11], %s527
          %s530 = sshll.u32 [#allocation12], 4
          %s531 = int_to_ptr.vmem [resolvable:$true] %s530
          %533 = dma.hbm_to_vmem [thread:$0]  %s9, 64, %s531, [#allocation11]
        $region40: #{normal_stochastic_block_2d.1} parent=11 // pred_fallthru
          _
      $region12: #{normal_stochastic_block_2d.1} parent=5 // pred_fallthru
        _
      %p534 = scmp.lt.s32.totalorder %s27, 2
      // Predicated region
      $region41: #{normal_stochastic_block_2d.1} parent=5 // pred_check
        %p535 = pneg %p534
      $region42: #{normal_stochastic_block_2d.1} parent=5 // pred_check_branch
        %537 = sbr.rel (%p535) target = $region44
      $region43: #{normal_stochastic_block_2d.1} parent=5 // pred_region
        // Predicated region
        $region45: #{normal_stochastic_block_2d.1} parent=43 // pred_check
          %p538 = pneg %p47
        $region46: #{normal_stochastic_block_2d.1} parent=43 // pred_check_branch
          %540 = sbr.rel (%p538) target = $region48
        $region47: #{normal_stochastic_block_2d.1} parent=43 // pred_region
          %p541 = scmp.lt.s32.totalorder %s27, 1
          %s542 = scalar_select %p541, %s27, 1
          %s543 = smul.addr %s542, 2
          %s544 = smul.addr %s543, 4
          %s545 = scalar_lea.vmem %s0, %s544
        $region48: #{normal_stochastic_block_2d.1} parent=43 // pred_fallthru
          _
        // Predicated region
        $region49: #{normal_stochastic_block_2d.1} parent=43 // pred_check
          %p546 = pneg %p73
        $region50: #{normal_stochastic_block_2d.1} parent=43 // pred_check_branch
          %548 = sbr.rel (%p546) target = $region52
        $region51: #{normal_stochastic_block_2d.1} parent=43 // pred_region
          %p549 = scmp.lt.s32.totalorder %s27, 1
          %s550 = scalar_select %p549, %s27, 1
          %s551 = smul.addr %s550, 2
          %s552 = smul.addr %s551, 4
          %s553 = scalar_lea.vmem %s1, %s552
        $region52: #{normal_stochastic_block_2d.1} parent=43 // pred_fallthru
          _
        // Predicated region
        $region53: #{normal_stochastic_block_2d.1} parent=43 // pred_check
          %p554 = pneg %p99
        $region54: #{normal_stochastic_block_2d.1} parent=43 // pred_check_branch
          %556 = sbr.rel (%p554) target = $region56
        $region55: #{normal_stochastic_block_2d.1} parent=43 // pred_region
          %p557 = scmp.lt.s32.totalorder %s27, 1
          %s558 = scalar_select %p557, %s27, 1
          %s559 = smul.addr %s558, 2
          %s560 = smul.addr %s559, 4
          %s561 = scalar_lea.vmem %s2, %s560
        $region56: #{normal_stochastic_block_2d.1} parent=43 // pred_fallthru
          _
      $region44: #{normal_stochastic_block_2d.1} parent=5 // pred_fallthru
        _
      %p562 = scmp.le.s32.totalorder 1, %s27
      %p563 = scmp.lt.s32.totalorder %s27, 3
      %p564 = pnand %p562, %p563
      %p565 = pneg %p564
      // Predicated region
      $region57: #{normal_stochastic_block_2d.1} parent=5 // pred_check
        _
      $region58: #{normal_stochastic_block_2d.1} parent=5 // pred_check_branch
        %567 = sbr.rel (%p564) target = $region60
      $region59: #{normal_stochastic_block_2d.1} parent=5 // pred_region
        %s568 = ssub.s32 %s27, 1
        // Predicated region
        $region61: #{normal_stochastic_block_2d.1} parent=59 // pred_check
          %p569 = pneg %p126
        $region62: #{normal_stochastic_block_2d.1} parent=59 // pred_check_branch
          %571 = sbr.rel (%p569) target = $region64
        $region63: #{normal_stochastic_block_2d.1} parent=59 // pred_region
          %572 = dma.done [#allocation3], 73728
        $region64: #{normal_stochastic_block_2d.1} parent=59 // pred_fallthru
          _
        // Predicated region
        $region65: #{normal_stochastic_block_2d.1} parent=59 // pred_check
          %p573 = pneg %p147
        $region66: #{normal_stochastic_block_2d.1} parent=59 // pred_check_branch
          %575 = sbr.rel (%p573) target = $region68
        $region67: #{normal_stochastic_block_2d.1} parent=59 // pred_region
          %576 = dma.done [#allocation5], 1152
        $region68: #{normal_stochastic_block_2d.1} parent=59 // pred_fallthru
          _
        // Predicated region
        $region69: #{normal_stochastic_block_2d.1} parent=59 // pred_check
          %p577 = pneg %p168
        $region70: #{normal_stochastic_block_2d.1} parent=59 // pred_check_branch
          %579 = sbr.rel (%p577) target = $region72
        $region71: #{normal_stochastic_block_2d.1} parent=59 // pred_region
          %580 = dma.done [#allocation5], 128
        $region72: #{normal_stochastic_block_2d.1} parent=59 // pred_fallthru
          _
        // Predicated region
        $region73: #{normal_stochastic_block_2d.1} parent=59 // pred_check
          %p581 = pneg %p189
        $region74: #{normal_stochastic_block_2d.1} parent=59 // pred_check_branch
          %583 = sbr.rel (%p581) target = $region76
        $region75: #{normal_stochastic_block_2d.1} parent=59 // pred_region
          %584 = dma.done [#allocation8], 1152
        $region76: #{normal_stochastic_block_2d.1} parent=59 // pred_fallthru
          _
        // Predicated region
        $region77: #{normal_stochastic_block_2d.1} parent=59 // pred_check
          %p585 = pneg %p210
        $region78: #{normal_stochastic_block_2d.1} parent=59 // pred_check_branch
          %587 = sbr.rel (%p585) target = $region80
        $region79: #{normal_stochastic_block_2d.1} parent=59 // pred_region
          %588 = dma.done [#allocation8], 128
        $region80: #{normal_stochastic_block_2d.1} parent=59 // pred_fallthru
          _
        // Predicated region
        $region81: #{normal_stochastic_block_2d.1} parent=59 // pred_check
          %p589 = pneg %p231
        $region82: #{normal_stochastic_block_2d.1} parent=59 // pred_check_branch
          %591 = sbr.rel (%p589) target = $region84
        $region83: #{normal_stochastic_block_2d.1} parent=59 // pred_region
          %592 = dma.done [#allocation11], 576
        $region84: #{normal_stochastic_block_2d.1} parent=59 // pred_fallthru
          _
        // Predicated region
        $region85: #{normal_stochastic_block_2d.1} parent=59 // pred_check
          %p593 = pneg %p252
        $region86: #{normal_stochastic_block_2d.1} parent=59 // pred_check_branch
          %595 = sbr.rel (%p593) target = $region88
        $region87: #{normal_stochastic_block_2d.1} parent=59 // pred_region
          %596 = dma.done [#allocation11], 64
        $region88: #{normal_stochastic_block_2d.1} parent=59 // pred_fallthru
          _
        %p597 = scmp.lt.s32.totalorder %s32, 1
        %s598 = scalar_select %p597, %s32, 1
        %s599 = smul.addr %s598, 2
        %s600 = smul.addr %s599, 4
        %s601 = scalar_lea.vmem %s0, %s600
        %p602 = pneg %p53
        %p603 = pneg %p50
        %p604 = scmp.lt.s32.totalorder %s32, 1
        %s605 = scalar_select %p604, %s32, 1
        %s606 = smul.addr %s605, 2
        %s607 = smul.addr %s606, 4
        %s608 = scalar_lea.vmem %s1, %s607
        %p609 = pneg %p79
        %p610 = pneg %p76
        %p611 = scmp.lt.s32.totalorder %s32, 1
        %s612 = scalar_select %p611, %s32, 1
        %s613 = smul.addr %s612, 2
        %s614 = smul.addr %s613, 4
        %s615 = scalar_lea.vmem %s2, %s614
        %p616 = pneg %p105
        %p617 = pneg %p102
        %p618 = pneg %p126
        %p619 = pneg %p123
        %p620 = pneg %p147
        %p621 = pneg %p144
        %p622 = pneg %p168
        %p623 = pneg %p165
        %p624 = pneg %p189
        %p625 = pneg %p186
        %p626 = pneg %p210
        %p627 = pneg %p207
        %p628 = pneg %p231
        %p629 = pneg %p228
        %p630 = pneg %p252
        %p631 = pneg %p249
        %p632 = pneg %p278
        %p633 = pneg %p275
        %p634 = scmp.lt.s32.totalorder %s32, 1
        %s635 = scalar_select %p634, %s32, 1
        %s636 = smul.addr %s635, 2
        %s637 = smul.addr %s636, 4
        %s638 = scalar_lea.vmem %s10, %s637
        %p639 = pneg %p304
        %p640 = pneg %p301
        %p641 = scmp.lt.s32.totalorder %s32, 1
        %s642 = scalar_select %p641, %s32, 1
        %s643 = smul.addr %s642, 2
        %s644 = smul.addr %s643, 4
        %s645 = scalar_lea.vmem %s11, %s644
        %p646 = pneg %p330
        %p647 = pneg %p327
        %p648 = scmp.lt.s32.totalorder %s32, 1
        %s649 = scalar_select %p648, %s32, 1
        %s650 = smul.addr %s649, 2
        %s651 = smul.addr %s650, 8
        %s652 = scalar_lea.vmem %s12, %s651
        %p653 = pneg %p356
        %p654 = pneg %p353
        %p655 = scmp.lt.s32.totalorder %s32, 1
        %s656 = scalar_select %p655, %s32, 1
        %s657 = smul.addr %s656, 2
        %s658 = smul.addr %s657, 8
        %s659 = scalar_lea.vmem %s13, %s658
        %p660 = pneg %p382
        %p661 = pneg %p379
        %p662 = scmp.lt.s32.totalorder %s32, 1
        %s663 = scalar_select %p662, %s32, 1
        %s664 = smul.addr %s663, 2
        %s665 = smul.addr %s664, 4
        %s666 = scalar_lea.vmem %s14, %s665
        %p667 = pneg %p408
        %p668 = pneg %p405
        %p669 = scmp.lt.s32.totalorder %s32, 1
        %s670 = scalar_select %p669, %s32, 1
        %s671 = smul.addr %s670, 2
        %s672 = scalar_lea.vmem %s15, %s671
        %p673 = pneg %p434
        %p674 = pneg %p431
        %p675 = scmp.lt.s32.totalorder %s32, 1
        %s676 = scalar_select %p675, %s32, 1
        %s677 = scalar_lea.vmem %s16, %s676
        %p678 = scmp.lt.s32.totalorder %s32, 1
        %s679 = scalar_select %p678, %s32, 1
        %s680 = smul.addr %s679, 2
        %s681 = smul.addr %s680, 4
        %s682 = scalar_lea.vmem %s0, %s681
        %p683 = scmp.lt.s32.totalorder %s32, 1
        %s684 = scalar_select %p683, %s32, 1
        %s685 = smul.addr %s684, 2
        %s686 = smul.addr %s685, 4
        %s687 = scalar_lea.vmem %s1, %s686
        %p688 = scmp.lt.s32.totalorder %s32, 1
        %s689 = scalar_select %p688, %s32, 1
        %s690 = smul.addr %s689, 2
        %s691 = smul.addr %s690, 4
        %s692 = scalar_lea.vmem %s2, %s691
        %p693 = scmp.lt.s32.totalorder %s32, 1
        %s694 = scalar_select %p693, %s32, 1
        %s695 = smul.addr %s694, 2
        %s696 = smul.addr %s695, 4
        %s697 = scalar_lea.vmem %s10, %s696
        %p698 = scmp.lt.s32.totalorder %s32, 1
        %s699 = scalar_select %p698, %s32, 1
        %s700 = smul.addr %s699, 2
        %s701 = smul.addr %s700, 4
        %s702 = scalar_lea.vmem %s11, %s701
        %p703 = scmp.lt.s32.totalorder %s32, 1
        %s704 = scalar_select %p703, %s32, 1
        %s705 = smul.addr %s704, 2
        %s706 = smul.addr %s705, 8
        %s707 = scalar_lea.vmem %s12, %s706
        %p708 = scmp.lt.s32.totalorder %s32, 1
        %s709 = scalar_select %p708, %s32, 1
        %s710 = smul.addr %s709, 2
        %s711 = smul.addr %s710, 8
        %s712 = scalar_lea.vmem %s13, %s711
        %p713 = scmp.lt.s32.totalorder %s32, 1
        %s714 = scalar_select %p713, %s32, 1
        %s715 = smul.addr %s714, 2
        %s716 = smul.addr %s715, 4
        %s717 = scalar_lea.vmem %s14, %s716
        %p718 = scmp.lt.s32.totalorder %s32, 1
        %s719 = scalar_select %p718, %s32, 1
        %s720 = smul.addr %s719, 2
        %s721 = scalar_lea.vmem %s15, %s720
        %p722 = scmp.lt.s32.totalorder %s32, 1
        %s723 = scalar_select %p722, %s32, 1
        %s724 = scalar_lea.vmem %s16, %s723
        %v725 = vld [vmem:[%s682] sm:$0xff]
        %v726 = vld [vmem:[#allocation2] sm:$0xff]
        %v727 = vld [vmem:[#allocation2 + $0x8] sm:$0xff]
        %v728 = vld [vmem:[#allocation2 + $0x10] sm:$0xff]
        %v729 = vld [vmem:[#allocation2 + $0x18] sm:$0xff]
        %v730 = vld [vmem:[#allocation2 + $0x20] sm:$0xff]
        %v731 = vld [vmem:[#allocation2 + $0x28] sm:$0xff]
        %v732 = vld [vmem:[#allocation2 + $0x30] sm:$0xff]
        %v733 = vld [vmem:[#allocation2 + $0x38] sm:$0xff]
        %v734 = vld [vmem:[#allocation2 + $0x40] sm:$0xff]
        %v735 = vld [vmem:[#allocation2 + $0x48] sm:$0xff]
        %v736 = vld [vmem:[#allocation2 + $0x50] sm:$0xff]
        %v737 = vld [vmem:[#allocation2 + $0x58] sm:$0xff]
        %v738 = vld [vmem:[#allocation2 + $0x60] sm:$0xff]
        %v739 = vld [vmem:[#allocation2 + $0x68] sm:$0xff]
        %v740 = vld [vmem:[#allocation2 + $0x70] sm:$0xff]
        %v741 = vld [vmem:[#allocation2 + $0x78] sm:$0xff]
        %v742 = vld [vmem:[#allocation2 + $0x80] sm:$0xff]
        %v743 = vld [vmem:[#allocation2 + $0x88] sm:$0xff]
        %v744 = vld [vmem:[#allocation2 + $0x90] sm:$0xff]
        %v745 = vld [vmem:[#allocation2 + $0x98] sm:$0xff]
        %v746 = vld [vmem:[#allocation2 + $0xa0] sm:$0xff]
        %v747 = vld [vmem:[#allocation2 + $0xa8] sm:$0xff]
        %v748 = vld [vmem:[#allocation2 + $0xb0] sm:$0xff]
        %v749 = vld [vmem:[#allocation2 + $0xb8] sm:$0xff]
        %v750 = vld [vmem:[#allocation2 + $0xc0] sm:$0xff]
        %v751 = vld [vmem:[#allocation2 + $0xc8] sm:$0xff]
        %v752 = vld [vmem:[#allocation2 + $0xd0] sm:$0xff]
        %v753 = vld [vmem:[#allocation2 + $0xd8] sm:$0xff]
        %v754 = vld [vmem:[#allocation2 + $0xe0] sm:$0xff]
        %v755 = vld [vmem:[#allocation2 + $0xe8] sm:$0xff]
        %v756 = vld [vmem:[#allocation2 + $0xf0] sm:$0xff]
        %v757 = vld [vmem:[#allocation2 + $0xf8] sm:$0xff]
        %v758 = vld [vmem:[#allocation2 + $0x100] sm:$0xff]
        %v759 = vld [vmem:[#allocation2 + $0x108] sm:$0xff]
        %v760 = vld [vmem:[#allocation2 + $0x110] sm:$0xff]
        %v761 = vld [vmem:[#allocation2 + $0x118] sm:$0xff]
        %v762 = vld [vmem:[#allocation2 + $0x120] sm:$0xff]
        %v763 = vld [vmem:[#allocation2 + $0x128] sm:$0xff]
        %v764 = vld [vmem:[#allocation2 + $0x130] sm:$0xff]
        %v765 = vld [vmem:[#allocation2 + $0x138] sm:$0xff]
        %v766 = vld [vmem:[#allocation2 + $0x140] sm:$0xff]
        %v767 = vld [vmem:[#allocation2 + $0x148] sm:$0xff]
        %v768 = vld [vmem:[#allocation2 + $0x150] sm:$0xff]
        %v769 = vld [vmem:[#allocation2 + $0x158] sm:$0xff]
        %v770 = vld [vmem:[#allocation2 + $0x160] sm:$0xff]
        %v771 = vld [vmem:[#allocation2 + $0x168] sm:$0xff]
        %v772 = vld [vmem:[#allocation2 + $0x170] sm:$0xff]
        %v773 = vld [vmem:[#allocation2 + $0x178] sm:$0xff]
        %v774 = vld [vmem:[#allocation2 + $0x180] sm:$0xff]
        %v775 = vld [vmem:[#allocation2 + $0x188] sm:$0xff]
        %v776 = vld [vmem:[#allocation2 + $0x190] sm:$0xff]
        %v777 = vld [vmem:[#allocation2 + $0x198] sm:$0xff]
        %v778 = vld [vmem:[#allocation2 + $0x1a0] sm:$0xff]
        %v779 = vld [vmem:[#allocation2 + $0x1a8] sm:$0xff]
        %v780 = vld [vmem:[#allocation2 + $0x1b0] sm:$0xff]
        %v781 = vld [vmem:[#allocation2 + $0x1b8] sm:$0xff]
        %v782 = vld [vmem:[#allocation2 + $0x1c0] sm:$0xff]
        %v783 = vld [vmem:[#allocation2 + $0x1c8] sm:$0xff]
        %v784 = vld [vmem:[#allocation2 + $0x1d0] sm:$0xff]
        %v785 = vld [vmem:[#allocation2 + $0x1d8] sm:$0xff]
        %v786 = vld [vmem:[#allocation2 + $0x1e0] sm:$0xff]
        %v787 = vld [vmem:[#allocation2 + $0x1e8] sm:$0xff]
        %v788 = vld [vmem:[#allocation2 + $0x1f0] sm:$0xff]
        %v789 = vld [vmem:[#allocation2 + $0x1f8] sm:$0xff]
        %v790 = vld [vmem:[#allocation2 + $0x200] sm:$0xff]
        %v791 = vld [vmem:[#allocation2 + $0x208] sm:$0xff]
        %v792 = vld [vmem:[#allocation2 + $0x210] sm:$0xff]
        %v793 = vld [vmem:[#allocation2 + $0x218] sm:$0xff]
        %v794 = vld [vmem:[#allocation2 + $0x220] sm:$0xff]
        %v795 = vld [vmem:[#allocation2 + $0x228] sm:$0xff]
        %v796 = vld [vmem:[#allocation2 + $0x230] sm:$0xff]
        %v797 = vld [vmem:[#allocation2 + $0x238] sm:$0xff]
        %v798 = vld [vmem:[#allocation2 + $0x240] sm:$0xff]
        %v799 = vld [vmem:[#allocation2 + $0x248] sm:$0xff]
        %v800 = vld [vmem:[#allocation2 + $0x250] sm:$0xff]
        %v801 = vld [vmem:[#allocation2 + $0x258] sm:$0xff]
        %v802 = vld [vmem:[#allocation2 + $0x260] sm:$0xff]
        %v803 = vld [vmem:[#allocation2 + $0x268] sm:$0xff]
        %v804 = vld [vmem:[#allocation2 + $0x270] sm:$0xff]
        %v805 = vld [vmem:[#allocation2 + $0x278] sm:$0xff]
        %v806 = vld [vmem:[#allocation2 + $0x280] sm:$0xff]
        %v807 = vld [vmem:[#allocation2 + $0x288] sm:$0xff]
        %v808 = vld [vmem:[#allocation2 + $0x290] sm:$0xff]
        %v809 = vld [vmem:[#allocation2 + $0x298] sm:$0xff]
        %v810 = vld [vmem:[#allocation2 + $0x2a0] sm:$0xff]
        %v811 = vld [vmem:[#allocation2 + $0x2a8] sm:$0xff]
        %v812 = vld [vmem:[#allocation2 + $0x2b0] sm:$0xff]
        %v813 = vld [vmem:[#allocation2 + $0x2b8] sm:$0xff]
        %v814 = vld [vmem:[#allocation2 + $0x2c0] sm:$0xff]
        %v815 = vld [vmem:[#allocation2 + $0x2c8] sm:$0xff]
        %v816 = vld [vmem:[#allocation2 + $0x2d0] sm:$0xff]
        %v817 = vld [vmem:[#allocation2 + $0x2d8] sm:$0xff]
        %v818 = vld [vmem:[#allocation2 + $0x2e0] sm:$0xff]
        %v819 = vld [vmem:[#allocation2 + $0x2e8] sm:$0xff]
        %v820 = vld [vmem:[#allocation2 + $0x2f0] sm:$0xff]
        %v821 = vld [vmem:[#allocation2 + $0x2f8] sm:$0xff]
        %v822 = vld [vmem:[#allocation2 + $0x300] sm:$0xff]
        %v823 = vld [vmem:[#allocation2 + $0x308] sm:$0xff]
        %v824 = vld [vmem:[#allocation2 + $0x310] sm:$0xff]
        %v825 = vld [vmem:[#allocation2 + $0x318] sm:$0xff]
        %v826 = vld [vmem:[#allocation2 + $0x320] sm:$0xff]
        %v827 = vld [vmem:[#allocation2 + $0x328] sm:$0xff]
        %v828 = vld [vmem:[#allocation2 + $0x330] sm:$0xff]
        %v829 = vld [vmem:[#allocation2 + $0x338] sm:$0xff]
        %v830 = vld [vmem:[#allocation2 + $0x340] sm:$0xff]
        %v831 = vld [vmem:[#allocation2 + $0x348] sm:$0xff]
        %v832 = vld [vmem:[#allocation2 + $0x350] sm:$0xff]
        %v833 = vld [vmem:[#allocation2 + $0x358] sm:$0xff]
        %v834 = vld [vmem:[#allocation2 + $0x360] sm:$0xff]
        %v835 = vld [vmem:[#allocation2 + $0x368] sm:$0xff]
        %v836 = vld [vmem:[#allocation2 + $0x370] sm:$0xff]
        %v837 = vld [vmem:[#allocation2 + $0x378] sm:$0xff]
        %v838 = vld [vmem:[#allocation2 + $0x380] sm:$0xff]
        %v839 = vld [vmem:[#allocation2 + $0x388] sm:$0xff]
        %v840 = vld [vmem:[#allocation2 + $0x390] sm:$0xff]
        %v841 = vld [vmem:[#allocation2 + $0x398] sm:$0xff]
        %v842 = vld [vmem:[#allocation2 + $0x3a0] sm:$0xff]
        %v843 = vld [vmem:[#allocation2 + $0x3a8] sm:$0xff]
        %v844 = vld [vmem:[#allocation2 + $0x3b0] sm:$0xff]
        %v845 = vld [vmem:[#allocation2 + $0x3b8] sm:$0xff]
        %v846 = vld [vmem:[#allocation2 + $0x3c0] sm:$0xff]
        %v847 = vld [vmem:[#allocation2 + $0x3c8] sm:$0xff]
        %v848 = vld [vmem:[#allocation2 + $0x3d0] sm:$0xff]
        %v849 = vld [vmem:[#allocation2 + $0x3d8] sm:$0xff]
        %v850 = vld [vmem:[#allocation2 + $0x3e0] sm:$0xff]
        %v851 = vld [vmem:[#allocation2 + $0x3e8] sm:$0xff]
        %v852 = vld [vmem:[#allocation2 + $0x3f0] sm:$0xff]
        %v853 = vld [vmem:[#allocation2 + $0x3f8] sm:$0xff]
        %v854 = vld [vmem:[#allocation2 + $0x400] sm:$0xff]
        %v855 = vld [vmem:[#allocation2 + $0x408] sm:$0xff]
        %v856 = vld [vmem:[#allocation2 + $0x410] sm:$0xff]
        %v857 = vld [vmem:[#allocation2 + $0x418] sm:$0xff]
        %v858 = vld [vmem:[#allocation2 + $0x420] sm:$0xff]
        %v859 = vld [vmem:[#allocation2 + $0x428] sm:$0xff]
        %v860 = vld [vmem:[#allocation2 + $0x430] sm:$0xff]
        %v861 = vld [vmem:[#allocation2 + $0x438] sm:$0xff]
        %v862 = vld [vmem:[#allocation2 + $0x440] sm:$0xff]
        %v863 = vld [vmem:[#allocation2 + $0x448] sm:$0xff]
        %v864 = vld [vmem:[#allocation2 + $0x450] sm:$0xff]
        %v865 = vld [vmem:[#allocation2 + $0x458] sm:$0xff]
        %v866 = vld [vmem:[#allocation2 + $0x460] sm:$0xff]
        %v867 = vld [vmem:[#allocation2 + $0x468] sm:$0xff]
        %v868 = vld [vmem:[#allocation2 + $0x470] sm:$0xff]
        %v869 = vld [vmem:[#allocation2 + $0x478] sm:$0xff]
        %v870 = vld [vmem:[#allocation2 + $0x480] sm:$0xff]
        %v871 = vld [vmem:[#allocation2 + $0x488] sm:$0xff]
        %v872 = vld [vmem:[#allocation2 + $0x490] sm:$0xff]
        %v873 = vld [vmem:[#allocation2 + $0x498] sm:$0xff]
        %v874 = vld [vmem:[#allocation2 + $0x4a0] sm:$0xff]
        %v875 = vld [vmem:[#allocation2 + $0x4a8] sm:$0xff]
        %v876 = vld [vmem:[#allocation2 + $0x4b0] sm:$0xff]
        %v877 = vld [vmem:[#allocation2 + $0x4b8] sm:$0xff]
        %v878 = vld [vmem:[#allocation2 + $0x4c0] sm:$0xff]
        %v879 = vld [vmem:[#allocation2 + $0x4c8] sm:$0xff]
        %v880 = vld [vmem:[#allocation2 + $0x4d0] sm:$0xff]
        %v881 = vld [vmem:[#allocation2 + $0x4d8] sm:$0xff]
        %v882 = vld [vmem:[#allocation2 + $0x4e0] sm:$0xff]
        %v883 = vld [vmem:[#allocation2 + $0x4e8] sm:$0xff]
        %v884 = vld [vmem:[#allocation2 + $0x4f0] sm:$0xff]
        %v885 = vld [vmem:[#allocation2 + $0x4f8] sm:$0xff]
        %v886 = vld [vmem:[#allocation2 + $0x500] sm:$0xff]
        %v887 = vld [vmem:[#allocation2 + $0x508] sm:$0xff]
        %v888 = vld [vmem:[#allocation2 + $0x510] sm:$0xff]
        %v889 = vld [vmem:[#allocation2 + $0x518] sm:$0xff]
        %v890 = vld [vmem:[#allocation2 + $0x520] sm:$0xff]
        %v891 = vld [vmem:[#allocation2 + $0x528] sm:$0xff]
        %v892 = vld [vmem:[#allocation2 + $0x530] sm:$0xff]
        %v893 = vld [vmem:[#allocation2 + $0x538] sm:$0xff]
        %v894 = vld [vmem:[#allocation2 + $0x540] sm:$0xff]
        %v895 = vld [vmem:[#allocation2 + $0x548] sm:$0xff]
        %v896 = vld [vmem:[#allocation2 + $0x550] sm:$0xff]
        %v897 = vld [vmem:[#allocation2 + $0x558] sm:$0xff]
        %v898 = vld [vmem:[#allocation2 + $0x560] sm:$0xff]
        %v899 = vld [vmem:[#allocation2 + $0x568] sm:$0xff]
        %v900 = vld [vmem:[#allocation2 + $0x570] sm:$0xff]
        %v901 = vld [vmem:[#allocation2 + $0x578] sm:$0xff]
        %v902 = vld [vmem:[#allocation2 + $0x580] sm:$0xff]
        %v903 = vld [vmem:[#allocation2 + $0x588] sm:$0xff]
        %v904 = vld [vmem:[#allocation2 + $0x590] sm:$0xff]
        %v905 = vld [vmem:[#allocation2 + $0x598] sm:$0xff]
        %v906 = vld [vmem:[#allocation2 + $0x5a0] sm:$0xff]
        %v907 = vld [vmem:[#allocation2 + $0x5a8] sm:$0xff]
        %v908 = vld [vmem:[#allocation2 + $0x5b0] sm:$0xff]
        %v909 = vld [vmem:[#allocation2 + $0x5b8] sm:$0xff]
        %v910 = vld [vmem:[#allocation2 + $0x5c0] sm:$0xff]
        %v911 = vld [vmem:[#allocation2 + $0x5c8] sm:$0xff]
        %v912 = vld [vmem:[#allocation2 + $0x5d0] sm:$0xff]
        %v913 = vld [vmem:[#allocation2 + $0x5d8] sm:$0xff]
        %v914 = vld [vmem:[#allocation2 + $0x5e0] sm:$0xff]
        %v915 = vld [vmem:[#allocation2 + $0x5e8] sm:$0xff]
        %v916 = vld [vmem:[#allocation2 + $0x5f0] sm:$0xff]
        %v917 = vld [vmem:[#allocation2 + $0x5f8] sm:$0xff]
        %v918 = vld [vmem:[#allocation2 + $0x600] sm:$0xff]
        %v919 = vld [vmem:[#allocation2 + $0x608] sm:$0xff]
        %v920 = vld [vmem:[#allocation2 + $0x610] sm:$0xff]
        %v921 = vld [vmem:[#allocation2 + $0x618] sm:$0xff]
        %v922 = vld [vmem:[#allocation2 + $0x620] sm:$0xff]
        %v923 = vld [vmem:[#allocation2 + $0x628] sm:$0xff]
        %v924 = vld [vmem:[#allocation2 + $0x630] sm:$0xff]
        %v925 = vld [vmem:[#allocation2 + $0x638] sm:$0xff]
        %v926 = vld [vmem:[#allocation2 + $0x640] sm:$0xff]
        %v927 = vld [vmem:[#allocation2 + $0x648] sm:$0xff]
        %v928 = vld [vmem:[#allocation2 + $0x650] sm:$0xff]
        %v929 = vld [vmem:[#allocation2 + $0x658] sm:$0xff]
        %v930 = vld [vmem:[#allocation2 + $0x660] sm:$0xff]
        %v931 = vld [vmem:[#allocation2 + $0x668] sm:$0xff]
        %v932 = vld [vmem:[#allocation2 + $0x670] sm:$0xff]
        %v933 = vld [vmem:[#allocation2 + $0x678] sm:$0xff]
        %v934 = vld [vmem:[#allocation2 + $0x680] sm:$0xff]
        %v935 = vld [vmem:[#allocation2 + $0x688] sm:$0xff]
        %v936 = vld [vmem:[#allocation2 + $0x690] sm:$0xff]
        %v937 = vld [vmem:[#allocation2 + $0x698] sm:$0xff]
        %v938 = vld [vmem:[#allocation2 + $0x6a0] sm:$0xff]
        %v939 = vld [vmem:[#allocation2 + $0x6a8] sm:$0xff]
        %v940 = vld [vmem:[#allocation2 + $0x6b0] sm:$0xff]
        %v941 = vld [vmem:[#allocation2 + $0x6b8] sm:$0xff]
        %v942 = vld [vmem:[#allocation2 + $0x6c0] sm:$0xff]
        %v943 = vld [vmem:[#allocation2 + $0x6c8] sm:$0xff]
        %v944 = vld [vmem:[#allocation2 + $0x6d0] sm:$0xff]
        %v945 = vld [vmem:[#allocation2 + $0x6d8] sm:$0xff]
        %v946 = vld [vmem:[#allocation2 + $0x6e0] sm:$0xff]
        %v947 = vld [vmem:[#allocation2 + $0x6e8] sm:$0xff]
        %v948 = vld [vmem:[#allocation2 + $0x6f0] sm:$0xff]
        %v949 = vld [vmem:[#allocation2 + $0x6f8] sm:$0xff]
        %v950 = vld [vmem:[#allocation2 + $0x700] sm:$0xff]
        %v951 = vld [vmem:[#allocation2 + $0x708] sm:$0xff]
        %v952 = vld [vmem:[#allocation2 + $0x710] sm:$0xff]
        %v953 = vld [vmem:[#allocation2 + $0x718] sm:$0xff]
        %v954 = vld [vmem:[#allocation2 + $0x720] sm:$0xff]
        %v955 = vld [vmem:[#allocation2 + $0x728] sm:$0xff]
        %v956 = vld [vmem:[#allocation2 + $0x730] sm:$0xff]
        %v957 = vld [vmem:[#allocation2 + $0x738] sm:$0xff]
        %v958 = vld [vmem:[#allocation2 + $0x740] sm:$0xff]
        %v959 = vld [vmem:[#allocation2 + $0x748] sm:$0xff]
        %v960 = vld [vmem:[#allocation2 + $0x750] sm:$0xff]
        %v961 = vld [vmem:[#allocation2 + $0x758] sm:$0xff]
        %v962 = vld [vmem:[#allocation2 + $0x760] sm:$0xff]
        %v963 = vld [vmem:[#allocation2 + $0x768] sm:$0xff]
        %v964 = vld [vmem:[#allocation2 + $0x770] sm:$0xff]
        %v965 = vld [vmem:[#allocation2 + $0x778] sm:$0xff]
        %v966 = vld [vmem:[#allocation2 + $0x780] sm:$0xff]
        %v967 = vld [vmem:[#allocation2 + $0x788] sm:$0xff]
        %v968 = vld [vmem:[#allocation2 + $0x790] sm:$0xff]
        %v969 = vld [vmem:[#allocation2 + $0x798] sm:$0xff]
        %v970 = vld [vmem:[#allocation2 + $0x7a0] sm:$0xff]
        %v971 = vld [vmem:[#allocation2 + $0x7a8] sm:$0xff]
        %v972 = vld [vmem:[#allocation2 + $0x7b0] sm:$0xff]
        %v973 = vld [vmem:[#allocation2 + $0x7b8] sm:$0xff]
        %v974 = vld [vmem:[#allocation2 + $0x7c0] sm:$0xff]
        %v975 = vld [vmem:[#allocation2 + $0x7c8] sm:$0xff]
        %v976 = vld [vmem:[#allocation2 + $0x7d0] sm:$0xff]
        %v977 = vld [vmem:[#allocation2 + $0x7d8] sm:$0xff]
        %v978 = vld [vmem:[#allocation2 + $0x7e0] sm:$0xff]
        %v979 = vld [vmem:[#allocation2 + $0x7e8] sm:$0xff]
        %v980 = vld [vmem:[#allocation2 + $0x7f0] sm:$0xff]
        %v981 = vld [vmem:[#allocation2 + $0x7f8] sm:$0xff]
        %v982 = vld [vmem:[#allocation2 + $0x800] sm:$0xff]
        %v983 = vld [vmem:[#allocation2 + $0x808] sm:$0xff]
        %v984 = vld [vmem:[#allocation2 + $0x810] sm:$0xff]
        %v985 = vld [vmem:[#allocation2 + $0x818] sm:$0xff]
        %v986 = vld [vmem:[#allocation2 + $0x820] sm:$0xff]
        %v987 = vld [vmem:[#allocation2 + $0x828] sm:$0xff]
        %v988 = vld [vmem:[#allocation2 + $0x830] sm:$0xff]
        %v989 = vld [vmem:[#allocation2 + $0x838] sm:$0xff]
        %v990 = vld [vmem:[#allocation2 + $0x840] sm:$0xff]
        %v991 = vld [vmem:[#allocation2 + $0x848] sm:$0xff]
        %v992 = vld [vmem:[#allocation2 + $0x850] sm:$0xff]
        %v993 = vld [vmem:[#allocation2 + $0x858] sm:$0xff]
        %v994 = vld [vmem:[#allocation2 + $0x860] sm:$0xff]
        %v995 = vld [vmem:[#allocation2 + $0x868] sm:$0xff]
        %v996 = vld [vmem:[#allocation2 + $0x870] sm:$0xff]
        %v997 = vld [vmem:[#allocation2 + $0x878] sm:$0xff]
        %v998 = vld [vmem:[#allocation2 + $0x880] sm:$0xff]
        %v999 = vld [vmem:[#allocation2 + $0x888] sm:$0xff]
        %v1000 = vld [vmem:[#allocation2 + $0x890] sm:$0xff]
        %v1001 = vld [vmem:[#allocation2 + $0x898] sm:$0xff]
        %v1002 = vld [vmem:[#allocation2 + $0x8a0] sm:$0xff]
        %v1003 = vld [vmem:[#allocation2 + $0x8a8] sm:$0xff]
        %v1004 = vld [vmem:[#allocation2 + $0x8b0] sm:$0xff]
        %v1005 = vld [vmem:[#allocation2 + $0x8b8] sm:$0xff]
        %v1006 = vld [vmem:[#allocation2 + $0x8c0] sm:$0xff]
        %v1007 = vld [vmem:[#allocation2 + $0x8c8] sm:$0xff]
        %v1008 = vld [vmem:[#allocation2 + $0x8d0] sm:$0xff]
        %v1009 = vld [vmem:[#allocation2 + $0x8d8] sm:$0xff]
        %v1010 = vld [vmem:[#allocation2 + $0x8e0] sm:$0xff]
        %v1011 = vld [vmem:[#allocation2 + $0x8e8] sm:$0xff]
        %v1012 = vld [vmem:[#allocation2 + $0x8f0] sm:$0xff]
        %v1013 = vld [vmem:[#allocation2 + $0x8f8] sm:$0xff]
        %v1014 = vld [vmem:[#allocation2 + $0x900] sm:$0xff]
        %v1015 = vld [vmem:[#allocation2 + $0x908] sm:$0xff]
        %v1016 = vld [vmem:[#allocation2 + $0x910] sm:$0xff]
        %v1017 = vld [vmem:[#allocation2 + $0x918] sm:$0xff]
        %v1018 = vld [vmem:[#allocation2 + $0x920] sm:$0xff]
        %v1019 = vld [vmem:[#allocation2 + $0x928] sm:$0xff]
        %v1020 = vld [vmem:[#allocation2 + $0x930] sm:$0xff]
        %v1021 = vld [vmem:[#allocation2 + $0x938] sm:$0xff]
        %v1022 = vld [vmem:[#allocation2 + $0x940] sm:$0xff]
        %v1023 = vld [vmem:[#allocation2 + $0x948] sm:$0xff]
        %v1024 = vld [vmem:[#allocation2 + $0x950] sm:$0xff]
        %v1025 = vld [vmem:[#allocation2 + $0x958] sm:$0xff]
        %v1026 = vld [vmem:[#allocation2 + $0x960] sm:$0xff]
        %v1027 = vld [vmem:[#allocation2 + $0x968] sm:$0xff]
        %v1028 = vld [vmem:[#allocation2 + $0x970] sm:$0xff]
        %v1029 = vld [vmem:[#allocation2 + $0x978] sm:$0xff]
        %v1030 = vld [vmem:[#allocation2 + $0x980] sm:$0xff]
        %v1031 = vld [vmem:[#allocation2 + $0x988] sm:$0xff]
        %v1032 = vld [vmem:[#allocation2 + $0x990] sm:$0xff]
        %v1033 = vld [vmem:[#allocation2 + $0x998] sm:$0xff]
        %v1034 = vld [vmem:[#allocation2 + $0x9a0] sm:$0xff]
        %v1035 = vld [vmem:[#allocation2 + $0x9a8] sm:$0xff]
        %v1036 = vld [vmem:[#allocation2 + $0x9b0] sm:$0xff]
        %v1037 = vld [vmem:[#allocation2 + $0x9b8] sm:$0xff]
        %v1038 = vld [vmem:[#allocation2 + $0x9c0] sm:$0xff]
        %v1039 = vld [vmem:[#allocation2 + $0x9c8] sm:$0xff]
        %v1040 = vld [vmem:[#allocation2 + $0x9d0] sm:$0xff]
        %v1041 = vld [vmem:[#allocation2 + $0x9d8] sm:$0xff]
        %v1042 = vld [vmem:[#allocation2 + $0x9e0] sm:$0xff]
        %v1043 = vld [vmem:[#allocation2 + $0x9e8] sm:$0xff]
        %v1044 = vld [vmem:[#allocation2 + $0x9f0] sm:$0xff]
        %v1045 = vld [vmem:[#allocation2 + $0x9f8] sm:$0xff]
        %v1046 = vld [vmem:[#allocation2 + $0xa00] sm:$0xff]
        %v1047 = vld [vmem:[#allocation2 + $0xa08] sm:$0xff]
        %v1048 = vld [vmem:[#allocation2 + $0xa10] sm:$0xff]
        %v1049 = vld [vmem:[#allocation2 + $0xa18] sm:$0xff]
        %v1050 = vld [vmem:[#allocation2 + $0xa20] sm:$0xff]
        %v1051 = vld [vmem:[#allocation2 + $0xa28] sm:$0xff]
        %v1052 = vld [vmem:[#allocation2 + $0xa30] sm:$0xff]
        %v1053 = vld [vmem:[#allocation2 + $0xa38] sm:$0xff]
        %v1054 = vld [vmem:[#allocation2 + $0xa40] sm:$0xff]
        %v1055 = vld [vmem:[#allocation2 + $0xa48] sm:$0xff]
        %v1056 = vld [vmem:[#allocation2 + $0xa50] sm:$0xff]
        %v1057 = vld [vmem:[#allocation2 + $0xa58] sm:$0xff]
        %v1058 = vld [vmem:[#allocation2 + $0xa60] sm:$0xff]
        %v1059 = vld [vmem:[#allocation2 + $0xa68] sm:$0xff]
        %v1060 = vld [vmem:[#allocation2 + $0xa70] sm:$0xff]
        %v1061 = vld [vmem:[#allocation2 + $0xa78] sm:$0xff]
        %v1062 = vld [vmem:[#allocation2 + $0xa80] sm:$0xff]
        %v1063 = vld [vmem:[#allocation2 + $0xa88] sm:$0xff]
        %v1064 = vld [vmem:[#allocation2 + $0xa90] sm:$0xff]
        %v1065 = vld [vmem:[#allocation2 + $0xa98] sm:$0xff]
        %v1066 = vld [vmem:[#allocation2 + $0xaa0] sm:$0xff]
        %v1067 = vld [vmem:[#allocation2 + $0xaa8] sm:$0xff]
        %v1068 = vld [vmem:[#allocation2 + $0xab0] sm:$0xff]
        %v1069 = vld [vmem:[#allocation2 + $0xab8] sm:$0xff]
        %v1070 = vld [vmem:[#allocation2 + $0xac0] sm:$0xff]
        %v1071 = vld [vmem:[#allocation2 + $0xac8] sm:$0xff]
        %v1072 = vld [vmem:[#allocation2 + $0xad0] sm:$0xff]
        %v1073 = vld [vmem:[#allocation2 + $0xad8] sm:$0xff]
        %v1074 = vld [vmem:[#allocation2 + $0xae0] sm:$0xff]
        %v1075 = vld [vmem:[#allocation2 + $0xae8] sm:$0xff]
        %v1076 = vld [vmem:[#allocation2 + $0xaf0] sm:$0xff]
        %v1077 = vld [vmem:[#allocation2 + $0xaf8] sm:$0xff]
        %v1078 = vld [vmem:[#allocation2 + $0xb00] sm:$0xff]
        %v1079 = vld [vmem:[#allocation2 + $0xb08] sm:$0xff]
        %v1080 = vld [vmem:[#allocation2 + $0xb10] sm:$0xff]
        %v1081 = vld [vmem:[#allocation2 + $0xb18] sm:$0xff]
        %v1082 = vld [vmem:[#allocation2 + $0xb20] sm:$0xff]
        %v1083 = vld [vmem:[#allocation2 + $0xb28] sm:$0xff]
        %v1084 = vld [vmem:[#allocation2 + $0xb30] sm:$0xff]
        %v1085 = vld [vmem:[#allocation2 + $0xb38] sm:$0xff]
        %v1086 = vld [vmem:[#allocation2 + $0xb40] sm:$0xff]
        %v1087 = vld [vmem:[#allocation2 + $0xb48] sm:$0xff]
        %v1088 = vld [vmem:[#allocation2 + $0xb50] sm:$0xff]
        %v1089 = vld [vmem:[#allocation2 + $0xb58] sm:$0xff]
        %v1090 = vld [vmem:[#allocation2 + $0xb60] sm:$0xff]
        %v1091 = vld [vmem:[#allocation2 + $0xb68] sm:$0xff]
        %v1092 = vld [vmem:[#allocation2 + $0xb70] sm:$0xff]
        %v1093 = vld [vmem:[#allocation2 + $0xb78] sm:$0xff]
        %v1094 = vld [vmem:[#allocation2 + $0xb80] sm:$0xff]
        %v1095 = vld [vmem:[#allocation2 + $0xb88] sm:$0xff]
        %v1096 = vld [vmem:[#allocation2 + $0xb90] sm:$0xff]
        %v1097 = vld [vmem:[#allocation2 + $0xb98] sm:$0xff]
        %v1098 = vld [vmem:[#allocation2 + $0xba0] sm:$0xff]
        %v1099 = vld [vmem:[#allocation2 + $0xba8] sm:$0xff]
        %v1100 = vld [vmem:[#allocation2 + $0xbb0] sm:$0xff]
        %v1101 = vld [vmem:[#allocation2 + $0xbb8] sm:$0xff]
        %v1102 = vld [vmem:[#allocation2 + $0xbc0] sm:$0xff]
        %v1103 = vld [vmem:[#allocation2 + $0xbc8] sm:$0xff]
        %v1104 = vld [vmem:[#allocation2 + $0xbd0] sm:$0xff]
        %v1105 = vld [vmem:[#allocation2 + $0xbd8] sm:$0xff]
        %v1106 = vld [vmem:[#allocation2 + $0xbe0] sm:$0xff]
        %v1107 = vld [vmem:[#allocation2 + $0xbe8] sm:$0xff]
        %v1108 = vld [vmem:[#allocation2 + $0xbf0] sm:$0xff]
        %v1109 = vld [vmem:[#allocation2 + $0xbf8] sm:$0xff]
        %v1110 = vld [vmem:[#allocation2 + $0xc00] sm:$0xff]
        %v1111 = vld [vmem:[#allocation2 + $0xc08] sm:$0xff]
        %v1112 = vld [vmem:[#allocation2 + $0xc10] sm:$0xff]
        %v1113 = vld [vmem:[#allocation2 + $0xc18] sm:$0xff]
        %v1114 = vld [vmem:[#allocation2 + $0xc20] sm:$0xff]
        %v1115 = vld [vmem:[#allocation2 + $0xc28] sm:$0xff]
        %v1116 = vld [vmem:[#allocation2 + $0xc30] sm:$0xff]
        %v1117 = vld [vmem:[#allocation2 + $0xc38] sm:$0xff]
        %v1118 = vld [vmem:[#allocation2 + $0xc40] sm:$0xff]
        %v1119 = vld [vmem:[#allocation2 + $0xc48] sm:$0xff]
        %v1120 = vld [vmem:[#allocation2 + $0xc50] sm:$0xff]
        %v1121 = vld [vmem:[#allocation2 + $0xc58] sm:$0xff]
        %v1122 = vld [vmem:[#allocation2 + $0xc60] sm:$0xff]
        %v1123 = vld [vmem:[#allocation2 + $0xc68] sm:$0xff]
        %v1124 = vld [vmem:[#allocation2 + $0xc70] sm:$0xff]
        %v1125 = vld [vmem:[#allocation2 + $0xc78] sm:$0xff]
        %v1126 = vld [vmem:[#allocation2 + $0xc80] sm:$0xff]
        %v1127 = vld [vmem:[#allocation2 + $0xc88] sm:$0xff]
        %v1128 = vld [vmem:[#allocation2 + $0xc90] sm:$0xff]
        %v1129 = vld [vmem:[#allocation2 + $0xc98] sm:$0xff]
        %v1130 = vld [vmem:[#allocation2 + $0xca0] sm:$0xff]
        %v1131 = vld [vmem:[#allocation2 + $0xca8] sm:$0xff]
        %v1132 = vld [vmem:[#allocation2 + $0xcb0] sm:$0xff]
        %v1133 = vld [vmem:[#allocation2 + $0xcb8] sm:$0xff]
        %v1134 = vld [vmem:[#allocation2 + $0xcc0] sm:$0xff]
        %v1135 = vld [vmem:[#allocation2 + $0xcc8] sm:$0xff]
        %v1136 = vld [vmem:[#allocation2 + $0xcd0] sm:$0xff]
        %v1137 = vld [vmem:[#allocation2 + $0xcd8] sm:$0xff]
        %v1138 = vld [vmem:[#allocation2 + $0xce0] sm:$0xff]
        %v1139 = vld [vmem:[#allocation2 + $0xce8] sm:$0xff]
        %v1140 = vld [vmem:[#allocation2 + $0xcf0] sm:$0xff]
        %v1141 = vld [vmem:[#allocation2 + $0xcf8] sm:$0xff]
        %v1142 = vld [vmem:[#allocation2 + $0xd00] sm:$0xff]
        %v1143 = vld [vmem:[#allocation2 + $0xd08] sm:$0xff]
        %v1144 = vld [vmem:[#allocation2 + $0xd10] sm:$0xff]
        %v1145 = vld [vmem:[#allocation2 + $0xd18] sm:$0xff]
        %v1146 = vld [vmem:[#allocation2 + $0xd20] sm:$0xff]
        %v1147 = vld [vmem:[#allocation2 + $0xd28] sm:$0xff]
        %v1148 = vld [vmem:[#allocation2 + $0xd30] sm:$0xff]
        %v1149 = vld [vmem:[#allocation2 + $0xd38] sm:$0xff]
        %v1150 = vld [vmem:[#allocation2 + $0xd40] sm:$0xff]
        %v1151 = vld [vmem:[#allocation2 + $0xd48] sm:$0xff]
        %v1152 = vld [vmem:[#allocation2 + $0xd50] sm:$0xff]
        %v1153 = vld [vmem:[#allocation2 + $0xd58] sm:$0xff]
        %v1154 = vld [vmem:[#allocation2 + $0xd60] sm:$0xff]
        %v1155 = vld [vmem:[#allocation2 + $0xd68] sm:$0xff]
        %v1156 = vld [vmem:[#allocation2 + $0xd70] sm:$0xff]
        %v1157 = vld [vmem:[#allocation2 + $0xd78] sm:$0xff]
        %v1158 = vld [vmem:[#allocation2 + $0xd80] sm:$0xff]
        %v1159 = vld [vmem:[#allocation2 + $0xd88] sm:$0xff]
        %v1160 = vld [vmem:[#allocation2 + $0xd90] sm:$0xff]
        %v1161 = vld [vmem:[#allocation2 + $0xd98] sm:$0xff]
        %v1162 = vld [vmem:[#allocation2 + $0xda0] sm:$0xff]
        %v1163 = vld [vmem:[#allocation2 + $0xda8] sm:$0xff]
        %v1164 = vld [vmem:[#allocation2 + $0xdb0] sm:$0xff]
        %v1165 = vld [vmem:[#allocation2 + $0xdb8] sm:$0xff]
        %v1166 = vld [vmem:[#allocation2 + $0xdc0] sm:$0xff]
        %v1167 = vld [vmem:[#allocation2 + $0xdc8] sm:$0xff]
        %v1168 = vld [vmem:[#allocation2 + $0xdd0] sm:$0xff]
        %v1169 = vld [vmem:[#allocation2 + $0xdd8] sm:$0xff]
        %v1170 = vld [vmem:[#allocation2 + $0xde0] sm:$0xff]
        %v1171 = vld [vmem:[#allocation2 + $0xde8] sm:$0xff]
        %v1172 = vld [vmem:[#allocation2 + $0xdf0] sm:$0xff]
        %v1173 = vld [vmem:[#allocation2 + $0xdf8] sm:$0xff]
        %v1174 = vld [vmem:[#allocation2 + $0xe00] sm:$0xff]
        %v1175 = vld [vmem:[#allocation2 + $0xe08] sm:$0xff]
        %v1176 = vld [vmem:[#allocation2 + $0xe10] sm:$0xff]
        %v1177 = vld [vmem:[#allocation2 + $0xe18] sm:$0xff]
        %v1178 = vld [vmem:[#allocation2 + $0xe20] sm:$0xff]
        %v1179 = vld [vmem:[#allocation2 + $0xe28] sm:$0xff]
        %v1180 = vld [vmem:[#allocation2 + $0xe30] sm:$0xff]
        %v1181 = vld [vmem:[#allocation2 + $0xe38] sm:$0xff]
        %v1182 = vld [vmem:[#allocation2 + $0xe40] sm:$0xff]
        %v1183 = vld [vmem:[#allocation2 + $0xe48] sm:$0xff]
        %v1184 = vld [vmem:[#allocation2 + $0xe50] sm:$0xff]
        %v1185 = vld [vmem:[#allocation2 + $0xe58] sm:$0xff]
        %v1186 = vld [vmem:[#allocation2 + $0xe60] sm:$0xff]
        %v1187 = vld [vmem:[#allocation2 + $0xe68] sm:$0xff]
        %v1188 = vld [vmem:[#allocation2 + $0xe70] sm:$0xff]
        %v1189 = vld [vmem:[#allocation2 + $0xe78] sm:$0xff]
        %v1190 = vld [vmem:[#allocation2 + $0xe80] sm:$0xff]
        %v1191 = vld [vmem:[#allocation2 + $0xe88] sm:$0xff]
        %v1192 = vld [vmem:[#allocation2 + $0xe90] sm:$0xff]
        %v1193 = vld [vmem:[#allocation2 + $0xe98] sm:$0xff]
        %v1194 = vld [vmem:[#allocation2 + $0xea0] sm:$0xff]
        %v1195 = vld [vmem:[#allocation2 + $0xea8] sm:$0xff]
        %v1196 = vld [vmem:[#allocation2 + $0xeb0] sm:$0xff]
        %v1197 = vld [vmem:[#allocation2 + $0xeb8] sm:$0xff]
        %v1198 = vld [vmem:[#allocation2 + $0xec0] sm:$0xff]
        %v1199 = vld [vmem:[#allocation2 + $0xec8] sm:$0xff]
        %v1200 = vld [vmem:[#allocation2 + $0xed0] sm:$0xff]
        %v1201 = vld [vmem:[#allocation2 + $0xed8] sm:$0xff]
        %v1202 = vld [vmem:[#allocation2 + $0xee0] sm:$0xff]
        %v1203 = vld [vmem:[#allocation2 + $0xee8] sm:$0xff]
        %v1204 = vld [vmem:[#allocation2 + $0xef0] sm:$0xff]
        %v1205 = vld [vmem:[#allocation2 + $0xef8] sm:$0xff]
        %v1206 = vld [vmem:[#allocation2 + $0xf00] sm:$0xff]
        %v1207 = vld [vmem:[#allocation2 + $0xf08] sm:$0xff]
        %v1208 = vld [vmem:[#allocation2 + $0xf10] sm:$0xff]
        %v1209 = vld [vmem:[#allocation2 + $0xf18] sm:$0xff]
        %v1210 = vld [vmem:[#allocation2 + $0xf20] sm:$0xff]
        %v1211 = vld [vmem:[#allocation2 + $0xf28] sm:$0xff]
        %v1212 = vld [vmem:[#allocation2 + $0xf30] sm:$0xff]
        %v1213 = vld [vmem:[#allocation2 + $0xf38] sm:$0xff]
        %v1214 = vld [vmem:[#allocation2 + $0xf40] sm:$0xff]
        %v1215 = vld [vmem:[#allocation2 + $0xf48] sm:$0xff]
        %v1216 = vld [vmem:[#allocation2 + $0xf50] sm:$0xff]
        %v1217 = vld [vmem:[#allocation2 + $0xf58] sm:$0xff]
        %v1218 = vld [vmem:[#allocation2 + $0xf60] sm:$0xff]
        %v1219 = vld [vmem:[#allocation2 + $0xf68] sm:$0xff]
        %v1220 = vld [vmem:[#allocation2 + $0xf70] sm:$0xff]
        %v1221 = vld [vmem:[#allocation2 + $0xf78] sm:$0xff]
        %v1222 = vld [vmem:[#allocation2 + $0xf80] sm:$0xff]
        %v1223 = vld [vmem:[#allocation2 + $0xf88] sm:$0xff]
        %v1224 = vld [vmem:[#allocation2 + $0xf90] sm:$0xff]
        %v1225 = vld [vmem:[#allocation2 + $0xf98] sm:$0xff]
        %v1226 = vld [vmem:[#allocation2 + $0xfa0] sm:$0xff]
        %v1227 = vld [vmem:[#allocation2 + $0xfa8] sm:$0xff]
        %v1228 = vld [vmem:[#allocation2 + $0xfb0] sm:$0xff]
        %v1229 = vld [vmem:[#allocation2 + $0xfb8] sm:$0xff]
        %v1230 = vld [vmem:[#allocation2 + $0xfc0] sm:$0xff]
        %v1231 = vld [vmem:[#allocation2 + $0xfc8] sm:$0xff]
        %v1232 = vld [vmem:[#allocation2 + $0xfd0] sm:$0xff]
        %v1233 = vld [vmem:[#allocation2 + $0xfd8] sm:$0xff]
        %v1234 = vld [vmem:[#allocation2 + $0xfe0] sm:$0xff]
        %v1235 = vld [vmem:[#allocation2 + $0xfe8] sm:$0xff]
        %v1236 = vld [vmem:[#allocation2 + $0xff0] sm:$0xff]
        %v1237 = vld [vmem:[#allocation2 + $0xff8] sm:$0xff]
        %v1238 = vld [vmem:[#allocation2 + $0x1000] sm:$0xff]
        %v1239 = vld [vmem:[#allocation2 + $0x1008] sm:$0xff]
        %v1240 = vld [vmem:[#allocation2 + $0x1010] sm:$0xff]
        %v1241 = vld [vmem:[#allocation2 + $0x1018] sm:$0xff]
        %v1242 = vld [vmem:[#allocation2 + $0x1020] sm:$0xff]
        %v1243 = vld [vmem:[#allocation2 + $0x1028] sm:$0xff]
        %v1244 = vld [vmem:[#allocation2 + $0x1030] sm:$0xff]
        %v1245 = vld [vmem:[#allocation2 + $0x1038] sm:$0xff]
        %v1246 = vld [vmem:[#allocation2 + $0x1040] sm:$0xff]
        %v1247 = vld [vmem:[#allocation2 + $0x1048] sm:$0xff]
        %v1248 = vld [vmem:[#allocation2 + $0x1050] sm:$0xff]
        %v1249 = vld [vmem:[#allocation2 + $0x1058] sm:$0xff]
        %v1250 = vld [vmem:[#allocation2 + $0x1060] sm:$0xff]
        %v1251 = vld [vmem:[#allocation2 + $0x1068] sm:$0xff]
        %v1252 = vld [vmem:[#allocation2 + $0x1070] sm:$0xff]
        %v1253 = vld [vmem:[#allocation2 + $0x1078] sm:$0xff]
        %v1254 = vld [vmem:[#allocation2 + $0x1080] sm:$0xff]
        %v1255 = vld [vmem:[#allocation2 + $0x1088] sm:$0xff]
        %v1256 = vld [vmem:[#allocation2 + $0x1090] sm:$0xff]
        %v1257 = vld [vmem:[#allocation2 + $0x1098] sm:$0xff]
        %v1258 = vld [vmem:[#allocation2 + $0x10a0] sm:$0xff]
        %v1259 = vld [vmem:[#allocation2 + $0x10a8] sm:$0xff]
        %v1260 = vld [vmem:[#allocation2 + $0x10b0] sm:$0xff]
        %v1261 = vld [vmem:[#allocation2 + $0x10b8] sm:$0xff]
        %v1262 = vld [vmem:[#allocation2 + $0x10c0] sm:$0xff]
        %v1263 = vld [vmem:[#allocation2 + $0x10c8] sm:$0xff]
        %v1264 = vld [vmem:[#allocation2 + $0x10d0] sm:$0xff]
        %v1265 = vld [vmem:[#allocation2 + $0x10d8] sm:$0xff]
        %v1266 = vld [vmem:[#allocation2 + $0x10e0] sm:$0xff]
        %v1267 = vld [vmem:[#allocation2 + $0x10e8] sm:$0xff]
        %v1268 = vld [vmem:[#allocation2 + $0x10f0] sm:$0xff]
        %v1269 = vld [vmem:[#allocation2 + $0x10f8] sm:$0xff]
        %v1270 = vld [vmem:[#allocation2 + $0x1100] sm:$0xff]
        %v1271 = vld [vmem:[#allocation2 + $0x1108] sm:$0xff]
        %v1272 = vld [vmem:[#allocation2 + $0x1110] sm:$0xff]
        %v1273 = vld [vmem:[#allocation2 + $0x1118] sm:$0xff]
        %v1274 = vld [vmem:[#allocation2 + $0x1120] sm:$0xff]
        %v1275 = vld [vmem:[#allocation2 + $0x1128] sm:$0xff]
        %v1276 = vld [vmem:[#allocation2 + $0x1130] sm:$0xff]
        %v1277 = vld [vmem:[#allocation2 + $0x1138] sm:$0xff]
        %v1278 = vld [vmem:[#allocation2 + $0x1140] sm:$0xff]
        %v1279 = vld [vmem:[#allocation2 + $0x1148] sm:$0xff]
        %v1280 = vld [vmem:[#allocation2 + $0x1150] sm:$0xff]
        %v1281 = vld [vmem:[#allocation2 + $0x1158] sm:$0xff]
        %v1282 = vld [vmem:[#allocation2 + $0x1160] sm:$0xff]
        %v1283 = vld [vmem:[#allocation2 + $0x1168] sm:$0xff]
        %v1284 = vld [vmem:[#allocation2 + $0x1170] sm:$0xff]
        %v1285 = vld [vmem:[#allocation2 + $0x1178] sm:$0xff]
        %v1286 = vld [vmem:[#allocation2 + $0x1180] sm:$0xff]
        %v1287 = vld [vmem:[#allocation2 + $0x1188] sm:$0xff]
        %v1288 = vld [vmem:[#allocation2 + $0x1190] sm:$0xff]
        %v1289 = vld [vmem:[#allocation2 + $0x1198] sm:$0xff]
        %v1290 = vld [vmem:[#allocation2 + $0x11a0] sm:$0xff]
        %v1291 = vld [vmem:[#allocation2 + $0x11a8] sm:$0xff]
        %v1292 = vld [vmem:[#allocation2 + $0x11b0] sm:$0xff]
        %v1293 = vld [vmem:[#allocation2 + $0x11b8] sm:$0xff]
        %v1294 = vld [vmem:[#allocation2 + $0x11c0] sm:$0xff]
        %v1295 = vld [vmem:[#allocation2 + $0x11c8] sm:$0xff]
        %v1296 = vld [vmem:[#allocation2 + $0x11d0] sm:$0xff]
        %v1297 = vld [vmem:[#allocation2 + $0x11d8] sm:$0xff]
        %v1298 = vld [vmem:[#allocation2 + $0x11e0] sm:$0xff]
        %v1299 = vld [vmem:[#allocation2 + $0x11e8] sm:$0xff]
        %v1300 = vld [vmem:[#allocation2 + $0x11f0] sm:$0xff]
        %v1301 = vld [vmem:[#allocation2 + $0x11f8] sm:$0xff]
        %v1303 = vcombine.high %v725, %v725
        %1305 = vmatprep.subr.mxu0 %v727
        %1306 = vmatpush1.msra.mxu0 %v726
        %1307 = vmatprep.subr.mxu0 %v745
        %1308 = vmatpush1.msra.mxu0 %v744
        %1309 = vmatprep.subr.mxu0 %v763
        %1310 = vmatpush1.msra.mxu0 %v762
        %1311 = vmatprep.subr.mxu0 %v781
        %1312 = vmatpush1.msra.mxu0 %v780
        %1313 = vmatprep.subr.mxu0 %v799
        %1314 = vmatpush1.msra.mxu0 %v798
        %1315 = vmatprep.subr.mxu0 %v817
        %1316 = vmatpush1.msra.mxu0 %v816
        %1317 = vmatprep.subr.mxu0 %v835
        %1318 = vmatpush1.msra.mxu0 %v834
        %1319 = vmatprep.subr.mxu0 %v853
        %1320 = vmatpush1.msra.mxu0 %v852
        %1321 = vmatprep.subr.mxu0 %v871
        %1322 = vmatpush1.msra.mxu0 %v870
        %1323 = vmatprep.subr.mxu0 %v889
        %1324 = vmatpush1.msra.mxu0 %v888
        %1325 = vmatprep.subr.mxu0 %v907
        %1326 = vmatpush1.msra.mxu0 %v906
        %1327 = vmatprep.subr.mxu0 %v925
        %1328 = vmatpush1.msra.mxu0 %v924
        %1329 = vmatprep.subr.mxu0 %v943
        %1330 = vmatpush1.msra.mxu0 %v942
        %1331 = vmatprep.subr.mxu0 %v961
        %1332 = vmatpush1.msra.mxu0 %v960
        %1333 = vmatprep.subr.mxu0 %v979
        %1334 = vmatpush1.msra.mxu0 %v978
        %1335 = vmatprep.subr.mxu0 %v997
        %1336 = vmatpush1.msra.mxu0 %v996
        %1337 = vmatprep.subr.mxu0 %v1015
        %1338 = vmatpush1.msra.mxu0 %v1014
        %1339 = vmatprep.subr.mxu0 %v1033
        %1340 = vmatpush1.msra.mxu0 %v1032
        %1341 = vmatprep.subr.mxu0 %v1051
        %1342 = vmatpush1.msra.mxu0 %v1050
        %1343 = vmatprep.subr.mxu0 %v1069
        %1344 = vmatpush1.msra.mxu0 %v1068
        %1345 = vmatprep.subr.mxu0 %v1087
        %1346 = vmatpush1.msra.mxu0 %v1086
        %1347 = vmatprep.subr.mxu0 %v1105
        %1348 = vmatpush1.msra.mxu0 %v1104
        %1349 = vmatprep.subr.mxu0 %v1123
        %1350 = vmatpush1.msra.mxu0 %v1122
        %1351 = vmatprep.subr.mxu0 %v1141
        %1352 = vmatpush1.msra.mxu0 %v1140
        %1353 = vmatprep.subr.mxu0 %v1159
        %1354 = vmatpush1.msra.mxu0 %v1158
        %1355 = vmatprep.subr.mxu0 %v1177
        %1356 = vmatpush1.msra.mxu0 %v1176
        %1357 = vmatprep.subr.mxu0 %v1195
        %1358 = vmatpush1.msra.mxu0 %v1194
        %1359 = vmatprep.subr.mxu0 %v1213
        %1360 = vmatpush1.msra.mxu0 %v1212
        %1361 = vmatprep.subr.mxu0 %v1231
        %1362 = vmatpush1.msra.mxu0 %v1230
        %1363 = vmatprep.subr.mxu0 %v1249
        %1364 = vmatpush1.msra.mxu0 %v1248
        %1365 = vmatprep.subr.mxu0 %v1267
        %1366 = vmatpush1.msra.mxu0 %v1266
        %1367 = vmatprep.subr.mxu0 %v1285
        %1368 = vmatpush1.msra.mxu0 %v1284
        %1369 = vmatprep.mubr.f32.mxu0 %v1303
        %1370 = vmatmul.mubr.f32.gmra.mrb[0].mxu0 %v725
        %v1371 = vpop.f32.mrb[0].mxu0
        %v1372 = vadd.f32 0.0, %v1371
        %v1373 = vpop.f32.mrb[0].mxu0
        %v1374 = vadd.f32 0.0, %v1373
        %1375 = vdwg.mxu0
        %1376 = vmatprep.subr.mxu0 %v729
        %1377 = vmatpush1.msra.mxu0 %v728
        %1378 = vmatprep.subr.mxu0 %v747
        %1379 = vmatpush1.msra.mxu0 %v746
        %1380 = vmatprep.subr.mxu0 %v765
        %1381 = vmatpush1.msra.mxu0 %v764
        %1382 = vmatprep.subr.mxu0 %v783
        %1383 = vmatpush1.msra.mxu0 %v782
        %1384 = vmatprep.subr.mxu0 %v801
        %1385 = vmatpush1.msra.mxu0 %v800
        %1386 = vmatprep.subr.mxu0 %v819
        %1387 = vmatpush1.msra.mxu0 %v818
        %1388 = vmatprep.subr.mxu0 %v837
        %1389 = vmatpush1.msra.mxu0 %v836
        %1390 = vmatprep.subr.mxu0 %v855
        %1391 = vmatpush1.msra.mxu0 %v854
        %1392 = vmatprep.subr.mxu0 %v873
        %1393 = vmatpush1.msra.mxu0 %v872
        %1394 = vmatprep.subr.mxu0 %v891
        %1395 = vmatpush1.msra.mxu0 %v890
        %1396 = vmatprep.subr.mxu0 %v909
        %1397 = vmatpush1.msra.mxu0 %v908
        %1398 = vmatprep.subr.mxu0 %v927
        %1399 = vmatpush1.msra.mxu0 %v926
        %1400 = vmatprep.subr.mxu0 %v945
        %1401 = vmatpush1.msra.mxu0 %v944
        %1402 = vmatprep.subr.mxu0 %v963
        %1403 = vmatpush1.msra.mxu0 %v962
        %1404 = vmatprep.subr.mxu0 %v981
        %1405 = vmatpush1.msra.mxu0 %v980
        %1406 = vmatprep.subr.mxu0 %v999
        %1407 = vmatpush1.msra.mxu0 %v998
        %1408 = vmatprep.subr.mxu0 %v1017
        %1409 = vmatpush1.msra.mxu0 %v1016
        %1410 = vmatprep.subr.mxu0 %v1035
        %1411 = vmatpush1.msra.mxu0 %v1034
        %1412 = vmatprep.subr.mxu0 %v1053
        %1413 = vmatpush1.msra.mxu0 %v1052
        %1414 = vmatprep.subr.mxu0 %v1071
        %1415 = vmatpush1.msra.mxu0 %v1070
        %1416 = vmatprep.subr.mxu0 %v1089
        %1417 = vmatpush1.msra.mxu0 %v1088
        %1418 = vmatprep.subr.mxu0 %v1107
        %1419 = vmatpush1.msra.mxu0 %v1106
        %1420 = vmatprep.subr.mxu0 %v1125
        %1421 = vmatpush1.msra.mxu0 %v1124
        %1422 = vmatprep.subr.mxu0 %v1143
        %1423 = vmatpush1.msra.mxu0 %v1142
        %1424 = vmatprep.subr.mxu0 %v1161
        %1425 = vmatpush1.msra.mxu0 %v1160
        %1426 = vmatprep.subr.mxu0 %v1179
        %1427 = vmatpush1.msra.mxu0 %v1178
        %1428 = vmatprep.subr.mxu0 %v1197
        %1429 = vmatpush1.msra.mxu0 %v1196
        %1430 = vmatprep.subr.mxu0 %v1215
        %1431 = vmatpush1.msra.mxu0 %v1214
        %1432 = vmatprep.subr.mxu0 %v1233
        %1433 = vmatpush1.msra.mxu0 %v1232
        %1434 = vmatprep.subr.mxu0 %v1251
        %1435 = vmatpush1.msra.mxu0 %v1250
        %1436 = vmatprep.subr.mxu0 %v1269
        %1437 = vmatpush1.msra.mxu0 %v1268
        %1438 = vmatprep.subr.mxu0 %v1287
        %1439 = vmatpush1.msra.mxu0 %v1286
        %1440 = vmatprep.mubr.f32.mxu0 %v1303
        %1441 = vmatmul.mubr.f32.gmra.mrb[0].mxu0 %v725
        %v1442 = vpop.f32.mrb[0].mxu0
        %v1443 = vadd.f32 0.0, %v1442
        %v1444 = vpop.f32.mrb[0].mxu0
        %v1445 = vadd.f32 0.0, %v1444
        %1446 = vdwg.mxu0
        %1447 = vmatprep.subr.mxu0 %v731
        %1448 = vmatpush1.msra.mxu0 %v730
        %1449 = vmatprep.subr.mxu0 %v749
        %1450 = vmatpush1.msra.mxu0 %v748
        %1451 = vmatprep.subr.mxu0 %v767
        %1452 = vmatpush1.msra.mxu0 %v766
        %1453 = vmatprep.subr.mxu0 %v785
        %1454 = vmatpush1.msra.mxu0 %v784
        %1455 = vmatprep.subr.mxu0 %v803
        %1456 = vmatpush1.msra.mxu0 %v802
        %1457 = vmatprep.subr.mxu0 %v821
        %1458 = vmatpush1.msra.mxu0 %v820
        %1459 = vmatprep.subr.mxu0 %v839
        %1460 = vmatpush1.msra.mxu0 %v838
        %1461 = vmatprep.subr.mxu0 %v857
        %1462 = vmatpush1.msra.mxu0 %v856
        %1463 = vmatprep.subr.mxu0 %v875
        %1464 = vmatpush1.msra.mxu0 %v874
        %1465 = vmatprep.subr.mxu0 %v893
        %1466 = vmatpush1.msra.mxu0 %v892
        %1467 = vmatprep.subr.mxu0 %v911
        %1468 = vmatpush1.msra.mxu0 %v910
        %1469 = vmatprep.subr.mxu0 %v929
        %1470 = vmatpush1.msra.mxu0 %v928
        %1471 = vmatprep.subr.mxu0 %v947
        %1472 = vmatpush1.msra.mxu0 %v946
        %1473 = vmatprep.subr.mxu0 %v965
        %1474 = vmatpush1.msra.mxu0 %v964
        %1475 = vmatprep.subr.mxu0 %v983
        %1476 = vmatpush1.msra.mxu0 %v982
        %1477 = vmatprep.subr.mxu0 %v1001
        %1478 = vmatpush1.msra.mxu0 %v1000
        %1479 = vmatprep.subr.mxu0 %v1019
        %1480 = vmatpush1.msra.mxu0 %v1018
        %1481 = vmatprep.subr.mxu0 %v1037
        %1482 = vmatpush1.msra.mxu0 %v1036
        %1483 = vmatprep.subr.mxu0 %v1055
        %1484 = vmatpush1.msra.mxu0 %v1054
        %1485 = vmatprep.subr.mxu0 %v1073
        %1486 = vmatpush1.msra.mxu0 %v1072
        %1487 = vmatprep.subr.mxu0 %v1091
        %1488 = vmatpush1.msra.mxu0 %v1090
        %1489 = vmatprep.subr.mxu0 %v1109
        %1490 = vmatpush1.msra.mxu0 %v1108
        %1491 = vmatprep.subr.mxu0 %v1127
        %1492 = vmatpush1.msra.mxu0 %v1126
        %1493 = vmatprep.subr.mxu0 %v1145
        %1494 = vmatpush1.msra.mxu0 %v1144
        %1495 = vmatprep.subr.mxu0 %v1163
        %1496 = vmatpush1.msra.mxu0 %v1162
        %1497 = vmatprep.subr.mxu0 %v1181
        %1498 = vmatpush1.msra.mxu0 %v1180
        %1499 = vmatprep.subr.mxu0 %v1199
        %1500 = vmatpush1.msra.mxu0 %v1198
        %1501 = vmatprep.subr.mxu0 %v1217
        %1502 = vmatpush1.msra.mxu0 %v1216
        %1503 = vmatprep.subr.mxu0 %v1235
        %1504 = vmatpush1.msra.mxu0 %v1234
        %1505 = vmatprep.subr.mxu0 %v1253
        %1506 = vmatpush1.msra.mxu0 %v1252
        %1507 = vmatprep.subr.mxu0 %v1271
        %1508 = vmatpush1.msra.mxu0 %v1270
        %1509 = vmatprep.subr.mxu0 %v1289
        %1510 = vmatpush1.msra.mxu0 %v1288
        %1511 = vmatprep.mubr.f32.mxu0 %v1303
        %1512 = vmatmul.mubr.f32.gmra.mrb[0].mxu0 %v725
        %v1513 = vpop.f32.mrb[0].mxu0
        %v1514 = vadd.f32 0.0, %v1513
        %v1515 = vpop.f32.mrb[0].mxu0
        %v1516 = vadd.f32 0.0, %v1515
        %1517 = vdwg.mxu0
        %1518 = vmatprep.subr.mxu0 %v733
        %1519 = vmatpush1.msra.mxu0 %v732
        %1520 = vmatprep.subr.mxu0 %v751
        %1521 = vmatpush1.msra.mxu0 %v750
        %1522 = vmatprep.subr.mxu0 %v769
        %1523 = vmatpush1.msra.mxu0 %v768
        %1524 = vmatprep.subr.mxu0 %v787
        %1525 = vmatpush1.msra.mxu0 %v786
        %1526 = vmatprep.subr.mxu0 %v805
        %1527 = vmatpush1.msra.mxu0 %v804
        %1528 = vmatprep.subr.mxu0 %v823
        %1529 = vmatpush1.msra.mxu0 %v822
        %1530 = vmatprep.subr.mxu0 %v841
        %1531 = vmatpush1.msra.mxu0 %v840
        %1532 = vmatprep.subr.mxu0 %v859
        %1533 = vmatpush1.msra.mxu0 %v858
        %1534 = vmatprep.subr.mxu0 %v877
        %1535 = vmatpush1.msra.mxu0 %v876
        %1536 = vmatprep.subr.mxu0 %v895
        %1537 = vmatpush1.msra.mxu0 %v894
        %1538 = vmatprep.subr.mxu0 %v913
        %1539 = vmatpush1.msra.mxu0 %v912
        %1540 = vmatprep.subr.mxu0 %v931
        %1541 = vmatpush1.msra.mxu0 %v930
        %1542 = vmatprep.subr.mxu0 %v949
        %1543 = vmatpush1.msra.mxu0 %v948
        %1544 = vmatprep.subr.mxu0 %v967
        %1545 = vmatpush1.msra.mxu0 %v966
        %1546 = vmatprep.subr.mxu0 %v985
        %1547 = vmatpush1.msra.mxu0 %v984
        %1548 = vmatprep.subr.mxu0 %v1003
        %1549 = vmatpush1.msra.mxu0 %v1002
        %1550 = vmatprep.subr.mxu0 %v1021
        %1551 = vmatpush1.msra.mxu0 %v1020
        %1552 = vmatprep.subr.mxu0 %v1039
        %1553 = vmatpush1.msra.mxu0 %v1038
        %1554 = vmatprep.subr.mxu0 %v1057
        %1555 = vmatpush1.msra.mxu0 %v1056
        %1556 = vmatprep.subr.mxu0 %v1075
        %1557 = vmatpush1.msra.mxu0 %v1074
        %1558 = vmatprep.subr.mxu0 %v1093
        %1559 = vmatpush1.msra.mxu0 %v1092
        %1560 = vmatprep.subr.mxu0 %v1111
        %1561 = vmatpush1.msra.mxu0 %v1110
        %1562 = vmatprep.subr.mxu0 %v1129
        %1563 = vmatpush1.msra.mxu0 %v1128
        %1564 = vmatprep.subr.mxu0 %v1147
        %1565 = vmatpush1.msra.mxu0 %v1146
        %1566 = vmatprep.subr.mxu0 %v1165
        %1567 = vmatpush1.msra.mxu0 %v1164
        %1568 = vmatprep.subr.mxu0 %v1183
        %1569 = vmatpush1.msra.mxu0 %v1182
        %1570 = vmatprep.subr.mxu0 %v1201
        %1571 = vmatpush1.msra.mxu0 %v1200
        %1572 = vmatprep.subr.mxu0 %v1219
        %1573 = vmatpush1.msra.mxu0 %v1218
        %1574 = vmatprep.subr.mxu0 %v1237
        %1575 = vmatpush1.msra.mxu0 %v1236
        %1576 = vmatprep.subr.mxu0 %v1255
        %1577 = vmatpush1.msra.mxu0 %v1254
        %1578 = vmatprep.subr.mxu0 %v1273
        %1579 = vmatpush1.msra.mxu0 %v1272
        %1580 = vmatprep.subr.mxu0 %v1291
        %1581 = vmatpush1.msra.mxu0 %v1290
        %1582 = vmatprep.mubr.f32.mxu0 %v1303
        %1583 = vmatmul.mubr.f32.gmra.mrb[0].mxu0 %v725
        %v1584 = vpop.f32.mrb[0].mxu0
        %v1585 = vadd.f32 0.0, %v1584
        %v1586 = vpop.f32.mrb[0].mxu0
        %v1587 = vadd.f32 0.0, %v1586
        %1588 = vdwg.mxu0
        %1589 = vmatprep.subr.mxu0 %v735
        %1590 = vmatpush1.msra.mxu0 %v734
        %1591 = vmatprep.subr.mxu0 %v753
        %1592 = vmatpush1.msra.mxu0 %v752
        %1593 = vmatprep.subr.mxu0 %v771
        %1594 = vmatpush1.msra.mxu0 %v770
        %1595 = vmatprep.subr.mxu0 %v789
        %1596 = vmatpush1.msra.mxu0 %v788
        %1597 = vmatprep.subr.mxu0 %v807
        %1598 = vmatpush1.msra.mxu0 %v806
        %1599 = vmatprep.subr.mxu0 %v825
        %1600 = vmatpush1.msra.mxu0 %v824
        %1601 = vmatprep.subr.mxu0 %v843
        %1602 = vmatpush1.msra.mxu0 %v842
        %1603 = vmatprep.subr.mxu0 %v861
        %1604 = vmatpush1.msra.mxu0 %v860
        %1605 = vmatprep.subr.mxu0 %v879
        %1606 = vmatpush1.msra.mxu0 %v878
        %1607 = vmatprep.subr.mxu0 %v897
        %1608 = vmatpush1.msra.mxu0 %v896
        %1609 = vmatprep.subr.mxu0 %v915
        %1610 = vmatpush1.msra.mxu0 %v914
        %1611 = vmatprep.subr.mxu0 %v933
        %1612 = vmatpush1.msra.mxu0 %v932
        %1613 = vmatprep.subr.mxu0 %v951
        %1614 = vmatpush1.msra.mxu0 %v950
        %1615 = vmatprep.subr.mxu0 %v969
        %1616 = vmatpush1.msra.mxu0 %v968
        %1617 = vmatprep.subr.mxu0 %v987
        %1618 = vmatpush1.msra.mxu0 %v986
        %1619 = vmatprep.subr.mxu0 %v1005
        %1620 = vmatpush1.msra.mxu0 %v1004
        %1621 = vmatprep.subr.mxu0 %v1023
        %1622 = vmatpush1.msra.mxu0 %v1022
        %1623 = vmatprep.subr.mxu0 %v1041
        %1624 = vmatpush1.msra.mxu0 %v1040
        %1625 = vmatprep.subr.mxu0 %v1059
        %1626 = vmatpush1.msra.mxu0 %v1058
        %1627 = vmatprep.subr.mxu0 %v1077
        %1628 = vmatpush1.msra.mxu0 %v1076
        %1629 = vmatprep.subr.mxu0 %v1095
        %1630 = vmatpush1.msra.mxu0 %v1094
        %1631 = vmatprep.subr.mxu0 %v1113
        %1632 = vmatpush1.msra.mxu0 %v1112
        %1633 = vmatprep.subr.mxu0 %v1131
        %1634 = vmatpush1.msra.mxu0 %v1130
        %1635 = vmatprep.subr.mxu0 %v1149
        %1636 = vmatpush1.msra.mxu0 %v1148
        %1637 = vmatprep.subr.mxu0 %v1167
        %1638 = vmatpush1.msra.mxu0 %v1166
        %1639 = vmatprep.subr.mxu0 %v1185
        %1640 = vmatpush1.msra.mxu0 %v1184
        %1641 = vmatprep.subr.mxu0 %v1203
        %1642 = vmatpush1.msra.mxu0 %v1202
        %1643 = vmatprep.subr.mxu0 %v1221
        %1644 = vmatpush1.msra.mxu0 %v1220
        %1645 = vmatprep.subr.mxu0 %v1239
        %1646 = vmatpush1.msra.mxu0 %v1238
        %1647 = vmatprep.subr.mxu0 %v1257
        %1648 = vmatpush1.msra.mxu0 %v1256
        %1649 = vmatprep.subr.mxu0 %v1275
        %1650 = vmatpush1.msra.mxu0 %v1274
        %1651 = vmatprep.subr.mxu0 %v1293
        %1652 = vmatpush1.msra.mxu0 %v1292
        %1653 = vmatprep.mubr.f32.mxu0 %v1303
        %1654 = vmatmul.mubr.f32.gmra.mrb[0].mxu0 %v725
        %v1655 = vpop.f32.mrb[0].mxu0
        %v1656 = vadd.f32 0.0, %v1655
        %v1657 = vpop.f32.mrb[0].mxu0
        %v1658 = vadd.f32 0.0, %v1657
        %1659 = vdwg.mxu0
        %1660 = vmatprep.subr.mxu0 %v737
        %1661 = vmatpush1.msra.mxu0 %v736
        %1662 = vmatprep.subr.mxu0 %v755
        %1663 = vmatpush1.msra.mxu0 %v754
        %1664 = vmatprep.subr.mxu0 %v773
        %1665 = vmatpush1.msra.mxu0 %v772
        %1666 = vmatprep.subr.mxu0 %v791
        %1667 = vmatpush1.msra.mxu0 %v790
        %1668 = vmatprep.subr.mxu0 %v809
        %1669 = vmatpush1.msra.mxu0 %v808
        %1670 = vmatprep.subr.mxu0 %v827
        %1671 = vmatpush1.msra.mxu0 %v826
        %1672 = vmatprep.subr.mxu0 %v845
        %1673 = vmatpush1.msra.mxu0 %v844
        %1674 = vmatprep.subr.mxu0 %v863
        %1675 = vmatpush1.msra.mxu0 %v862
        %1676 = vmatprep.subr.mxu0 %v881
        %1677 = vmatpush1.msra.mxu0 %v880
        %1678 = vmatprep.subr.mxu0 %v899
        %1679 = vmatpush1.msra.mxu0 %v898
        %1680 = vmatprep.subr.mxu0 %v917
        %1681 = vmatpush1.msra.mxu0 %v916
        %1682 = vmatprep.subr.mxu0 %v935
        %1683 = vmatpush1.msra.mxu0 %v934
        %1684 = vmatprep.subr.mxu0 %v953
        %1685 = vmatpush1.msra.mxu0 %v952
        %1686 = vmatprep.subr.mxu0 %v971
        %1687 = vmatpush1.msra.mxu0 %v970
        %1688 = vmatprep.subr.mxu0 %v989
        %1689 = vmatpush1.msra.mxu0 %v988
        %1690 = vmatprep.subr.mxu0 %v1007
        %1691 = vmatpush1.msra.mxu0 %v1006
        %1692 = vmatprep.subr.mxu0 %v1025
        %1693 = vmatpush1.msra.mxu0 %v1024
        %1694 = vmatprep.subr.mxu0 %v1043
        %1695 = vmatpush1.msra.mxu0 %v1042
        %1696 = vmatprep.subr.mxu0 %v1061
        %1697 = vmatpush1.msra.mxu0 %v1060
        %1698 = vmatprep.subr.mxu0 %v1079
        %1699 = vmatpush1.msra.mxu0 %v1078
        %1700 = vmatprep.subr.mxu0 %v1097
        %1701 = vmatpush1.msra.mxu0 %v1096
        %1702 = vmatprep.subr.mxu0 %v1115
        %1703 = vmatpush1.msra.mxu0 %v1114
        %1704 = vmatprep.subr.mxu0 %v1133
        %1705 = vmatpush1.msra.mxu0 %v1132
        %1706 = vmatprep.subr.mxu0 %v1151
        %1707 = vmatpush1.msra.mxu0 %v1150
        %1708 = vmatprep.subr.mxu0 %v1169
        %1709 = vmatpush1.msra.mxu0 %v1168
        %1710 = vmatprep.subr.mxu0 %v1187
        %1711 = vmatpush1.msra.mxu0 %v1186
        %1712 = vmatprep.subr.mxu0 %v1205
        %1713 = vmatpush1.msra.mxu0 %v1204
        %1714 = vmatprep.subr.mxu0 %v1223
        %1715 = vmatpush1.msra.mxu0 %v1222
        %1716 = vmatprep.subr.mxu0 %v1241
        %1717 = vmatpush1.msra.mxu0 %v1240
        %1718 = vmatprep.subr.mxu0 %v1259
        %1719 = vmatpush1.msra.mxu0 %v1258
        %1720 = vmatprep.subr.mxu0 %v1277
        %1721 = vmatpush1.msra.mxu0 %v1276
        %1722 = vmatprep.subr.mxu0 %v1295
        %1723 = vmatpush1.msra.mxu0 %v1294
        %1724 = vmatprep.mubr.f32.mxu0 %v1303
        %1725 = vmatmul.mubr.f32.gmra.mrb[0].mxu0 %v725
        %v1726 = vpop.f32.mrb[0].mxu0
        %v1727 = vadd.f32 0.0, %v1726
        %v1728 = vpop.f32.mrb[0].mxu0
        %v1729 = vadd.f32 0.0, %v1728
        %1730 = vdwg.mxu0
        %1731 = vmatprep.subr.mxu0 %v739
        %1732 = vmatpush1.msra.mxu0 %v738
        %1733 = vmatprep.subr.mxu0 %v757
        %1734 = vmatpush1.msra.mxu0 %v756
        %1735 = vmatprep.subr.mxu0 %v775
        %1736 = vmatpush1.msra.mxu0 %v774
        %1737 = vmatprep.subr.mxu0 %v793
        %1738 = vmatpush1.msra.mxu0 %v792
        %1739 = vmatprep.subr.mxu0 %v811
        %1740 = vmatpush1.msra.mxu0 %v810
        %1741 = vmatprep.subr.mxu0 %v829
        %1742 = vmatpush1.msra.mxu0 %v828
        %1743 = vmatprep.subr.mxu0 %v847
        %1744 = vmatpush1.msra.mxu0 %v846
        %1745 = vmatprep.subr.mxu0 %v865
        %1746 = vmatpush1.msra.mxu0 %v864
        %1747 = vmatprep.subr.mxu0 %v883
        %1748 = vmatpush1.msra.mxu0 %v882
        %1749 = vmatprep.subr.mxu0 %v901
        %1750 = vmatpush1.msra.mxu0 %v900
        %1751 = vmatprep.subr.mxu0 %v919
        %1752 = vmatpush1.msra.mxu0 %v918
        %1753 = vmatprep.subr.mxu0 %v937
        %1754 = vmatpush1.msra.mxu0 %v936
        %1755 = vmatprep.subr.mxu0 %v955
        %1756 = vmatpush1.msra.mxu0 %v954
        %1757 = vmatprep.subr.mxu0 %v973
        %1758 = vmatpush1.msra.mxu0 %v972
        %1759 = vmatprep.subr.mxu0 %v991
        %1760 = vmatpush1.msra.mxu0 %v990
        %1761 = vmatprep.subr.mxu0 %v1009
        %1762 = vmatpush1.msra.mxu0 %v1008
        %1763 = vmatprep.subr.mxu0 %v1027
        %1764 = vmatpush1.msra.mxu0 %v1026
        %1765 = vmatprep.subr.mxu0 %v1045
        %1766 = vmatpush1.msra.mxu0 %v1044
        %1767 = vmatprep.subr.mxu0 %v1063
        %1768 = vmatpush1.msra.mxu0 %v1062
        %1769 = vmatprep.subr.mxu0 %v1081
        %1770 = vmatpush1.msra.mxu0 %v1080
        %1771 = vmatprep.subr.mxu0 %v1099
        %1772 = vmatpush1.msra.mxu0 %v1098
        %1773 = vmatprep.subr.mxu0 %v1117
        %1774 = vmatpush1.msra.mxu0 %v1116
        %1775 = vmatprep.subr.mxu0 %v1135
        %1776 = vmatpush1.msra.mxu0 %v1134
        %1777 = vmatprep.subr.mxu0 %v1153
        %1778 = vmatpush1.msra.mxu0 %v1152
        %1779 = vmatprep.subr.mxu0 %v1171
        %1780 = vmatpush1.msra.mxu0 %v1170
        %1781 = vmatprep.subr.mxu0 %v1189
        %1782 = vmatpush1.msra.mxu0 %v1188
        %1783 = vmatprep.subr.mxu0 %v1207
        %1784 = vmatpush1.msra.mxu0 %v1206
        %1785 = vmatprep.subr.mxu0 %v1225
        %1786 = vmatpush1.msra.mxu0 %v1224
        %1787 = vmatprep.subr.mxu0 %v1243
        %1788 = vmatpush1.msra.mxu0 %v1242
        %1789 = vmatprep.subr.mxu0 %v1261
        %1790 = vmatpush1.msra.mxu0 %v1260
        %1791 = vmatprep.subr.mxu0 %v1279
        %1792 = vmatpush1.msra.mxu0 %v1278
        %1793 = vmatprep.subr.mxu0 %v1297
        %1794 = vmatpush1.msra.mxu0 %v1296
        %1795 = vmatprep.mubr.f32.mxu0 %v1303
        %1796 = vmatmul.mubr.f32.gmra.mrb[0].mxu0 %v725
        %v1797 = vpop.f32.mrb[0].mxu0
        %v1798 = vadd.f32 0.0, %v1797
        %v1799 = vpop.f32.mrb[0].mxu0
        %v1800 = vadd.f32 0.0, %v1799
        %1801 = vdwg.mxu0
        %1802 = vmatprep.subr.mxu0 %v741
        %1803 = vmatpush1.msra.mxu0 %v740
        %1804 = vmatprep.subr.mxu0 %v759
        %1805 = vmatpush1.msra.mxu0 %v758
        %1806 = vmatprep.subr.mxu0 %v777
        %1807 = vmatpush1.msra.mxu0 %v776
        %1808 = vmatprep.subr.mxu0 %v795
        %1809 = vmatpush1.msra.mxu0 %v794
        %1810 = vmatprep.subr.mxu0 %v813
        %1811 = vmatpush1.msra.mxu0 %v812
        %1812 = vmatprep.subr.mxu0 %v831
        %1813 = vmatpush1.msra.mxu0 %v830
        %1814 = vmatprep.subr.mxu0 %v849
        %1815 = vmatpush1.msra.mxu0 %v848
        %1816 = vmatprep.subr.mxu0 %v867
        %1817 = vmatpush1.msra.mxu0 %v866
        %1818 = vmatprep.subr.mxu0 %v885
        %1819 = vmatpush1.msra.mxu0 %v884
        %1820 = vmatprep.subr.mxu0 %v903
        %1821 = vmatpush1.msra.mxu0 %v902
        %1822 = vmatprep.subr.mxu0 %v921
        %1823 = vmatpush1.msra.mxu0 %v920
        %1824 = vmatprep.subr.mxu0 %v939
        %1825 = vmatpush1.msra.mxu0 %v938
        %1826 = vmatprep.subr.mxu0 %v957
        %1827 = vmatpush1.msra.mxu0 %v956
        %1828 = vmatprep.subr.mxu0 %v975
        %1829 = vmatpush1.msra.mxu0 %v974
        %1830 = vmatprep.subr.mxu0 %v993
        %1831 = vmatpush1.msra.mxu0 %v992
        %1832 = vmatprep.subr.mxu0 %v1011
        %1833 = vmatpush1.msra.mxu0 %v1010
        %1834 = vmatprep.subr.mxu0 %v1029
        %1835 = vmatpush1.msra.mxu0 %v1028
        %1836 = vmatprep.subr.mxu0 %v1047
        %1837 = vmatpush1.msra.mxu0 %v1046
        %1838 = vmatprep.subr.mxu0 %v1065
        %1839 = vmatpush1.msra.mxu0 %v1064
        %1840 = vmatprep.subr.mxu0 %v1083
        %1841 = vmatpush1.msra.mxu0 %v1082
        %1842 = vmatprep.subr.mxu0 %v1101
        %1843 = vmatpush1.msra.mxu0 %v1100
        %1844 = vmatprep.subr.mxu0 %v1119
        %1845 = vmatpush1.msra.mxu0 %v1118
        %1846 = vmatprep.subr.mxu0 %v1137
        %1847 = vmatpush1.msra.mxu0 %v1136
        %1848 = vmatprep.subr.mxu0 %v1155
        %1849 = vmatpush1.msra.mxu0 %v1154
        %1850 = vmatprep.subr.mxu0 %v1173
        %1851 = vmatpush1.msra.mxu0 %v1172
        %1852 = vmatprep.subr.mxu0 %v1191
        %1853 = vmatpush1.msra.mxu0 %v1190
        %1854 = vmatprep.subr.mxu0 %v1209
        %1855 = vmatpush1.msra.mxu0 %v1208
        %1856 = vmatprep.subr.mxu0 %v1227
        %1857 = vmatpush1.msra.mxu0 %v1226
        %1858 = vmatprep.subr.mxu0 %v1245
        %1859 = vmatpush1.msra.mxu0 %v1244
        %1860 = vmatprep.subr.mxu0 %v1263
        %1861 = vmatpush1.msra.mxu0 %v1262
        %1862 = vmatprep.subr.mxu0 %v1281
        %1863 = vmatpush1.msra.mxu0 %v1280
        %1864 = vmatprep.subr.mxu0 %v1299
        %1865 = vmatpush1.msra.mxu0 %v1298
        %1866 = vmatprep.mubr.f32.mxu0 %v1303
        %1867 = vmatmul.mubr.f32.gmra.mrb[0].mxu0 %v725
        %v1868 = vpop.f32.mrb[0].mxu0
        %v1869 = vadd.f32 0.0, %v1868
        %v1870 = vpop.f32.mrb[0].mxu0
        %v1871 = vadd.f32 0.0, %v1870
        %1872 = vdwg.mxu0
        %1873 = vmatprep.subr.mxu0 %v743
        %1874 = vmatpush1.msra.mxu0 %v742
        %1875 = vmatprep.subr.mxu0 %v761
        %1876 = vmatpush1.msra.mxu0 %v760
        %1877 = vmatprep.subr.mxu0 %v779
        %1878 = vmatpush1.msra.mxu0 %v778
        %1879 = vmatprep.subr.mxu0 %v797
        %1880 = vmatpush1.msra.mxu0 %v796
        %1881 = vmatprep.subr.mxu0 %v815
        %1882 = vmatpush1.msra.mxu0 %v814
        %1883 = vmatprep.subr.mxu0 %v833
        %1884 = vmatpush1.msra.mxu0 %v832
        %1885 = vmatprep.subr.mxu0 %v851
        %1886 = vmatpush1.msra.mxu0 %v850
        %1887 = vmatprep.subr.mxu0 %v869
        %1888 = vmatpush1.msra.mxu0 %v868
        %1889 = vmatprep.subr.mxu0 %v887
        %1890 = vmatpush1.msra.mxu0 %v886
        %1891 = vmatprep.subr.mxu0 %v905
        %1892 = vmatpush1.msra.mxu0 %v904
        %1893 = vmatprep.subr.mxu0 %v923
        %1894 = vmatpush1.msra.mxu0 %v922
        %1895 = vmatprep.subr.mxu0 %v941
        %1896 = vmatpush1.msra.mxu0 %v940
        %1897 = vmatprep.subr.mxu0 %v959
        %1898 = vmatpush1.msra.mxu0 %v958
        %1899 = vmatprep.subr.mxu0 %v977
        %1900 = vmatpush1.msra.mxu0 %v976
        %1901 = vmatprep.subr.mxu0 %v995
        %1902 = vmatpush1.msra.mxu0 %v994
        %1903 = vmatprep.subr.mxu0 %v1013
        %1904 = vmatpush1.msra.mxu0 %v1012
        %1905 = vmatprep.subr.mxu0 %v1031
        %1906 = vmatpush1.msra.mxu0 %v1030
        %1907 = vmatprep.subr.mxu0 %v1049
        %1908 = vmatpush1.msra.mxu0 %v1048
        %1909 = vmatprep.subr.mxu0 %v1067
        %1910 = vmatpush1.msra.mxu0 %v1066
        %1911 = vmatprep.subr.mxu0 %v1085
        %1912 = vmatpush1.msra.mxu0 %v1084
        %1913 = vmatprep.subr.mxu0 %v1103
        %1914 = vmatpush1.msra.mxu0 %v1102
        %1915 = vmatprep.subr.mxu0 %v1121
        %1916 = vmatpush1.msra.mxu0 %v1120
        %1917 = vmatprep.subr.mxu0 %v1139
        %1918 = vmatpush1.msra.mxu0 %v1138
        %1919 = vmatprep.subr.mxu0 %v1157
        %1920 = vmatpush1.msra.mxu0 %v1156
        %1921 = vmatprep.subr.mxu0 %v1175
        %1922 = vmatpush1.msra.mxu0 %v1174
        %1923 = vmatprep.subr.mxu0 %v1193
        %1924 = vmatpush1.msra.mxu0 %v1192
        %1925 = vmatprep.subr.mxu0 %v1211
        %1926 = vmatpush1.msra.mxu0 %v1210
        %1927 = vmatprep.subr.mxu0 %v1229
        %1928 = vmatpush1.msra.mxu0 %v1228
        %1929 = vmatprep.subr.mxu0 %v1247
        %1930 = vmatpush1.msra.mxu0 %v1246
        %1931 = vmatprep.subr.mxu0 %v1265
        %1932 = vmatpush1.msra.mxu0 %v1264
        %1933 = vmatprep.subr.mxu0 %v1283
        %1934 = vmatpush1.msra.mxu0 %v1282
        %1935 = vmatprep.subr.mxu0 %v1301
        %1936 = vmatpush1.msra.mxu0 %v1300
        %1937 = vmatprep.mubr.f32.mxu0 %v1303
        %1938 = vmatmul.mubr.f32.gmra.mrb[0].mxu0 %v725
        %v1939 = vpop.f32.mrb[0].mxu0
        %v1940 = vadd.f32 0.0, %v1939
        %v1941 = vpop.f32.mrb[0].mxu0
        %v1942 = vadd.f32 0.0, %v1941
        %1943 = vdwg.mxu0
        %v1944 = vld [vmem:[#allocation4] sm:$0xff]
        %s1945 = scalar_lea.vmem [#allocation4], 8
        %v1946 = vld [vmem:[%s1945] sm:$0xff]
        %vm1947 = vcmask 31744
        %v1949 = vsel %vm1947, %v1946, 0
        %vm1951 = vcmask 1043456
        %v1953 = vsel %vm1951, %v1443, 0
        %v1956 = vsel %vm1951, %v1445, 0
        %1958 = vmatprep.subr.mxu0 %v1956
        %1959 = vmatpush1.msra.mxu0 %v1953
        %1960 = vmatprep.subr.mxu0 0.0
        %1961 = vmatpush1.msra.mxu0 0.0
        %1962 = vmatprep.subr.mxu0 0.0
        %1963 = vmatpush1.msra.mxu0 0.0
        %1964 = vmatprep.subr.mxu0 0.0
        %1965 = vmatpush1.msra.mxu0 0.0
        %1966 = vmatprep.subr.mxu0 0.0
        %1967 = vmatpush1.msra.mxu0 0.0
        %1968 = vmatprep.subr.mxu0 0.0
        %1969 = vmatpush1.msra.mxu0 0.0
        %1970 = vmatprep.subr.mxu0 0.0
        %1971 = vmatpush1.msra.mxu0 0.0
        %1972 = vmatprep.subr.mxu0 0.0
        %1973 = vmatpush1.msra.mxu0 0.0
        %1974 = vmatprep.subr.mxu0 0.0
        %1975 = vmatpush1.msra.mxu0 0.0
        %1976 = vmatprep.subr.mxu0 0.0
        %1977 = vmatpush1.msra.mxu0 0.0
        %1978 = vmatprep.subr.mxu0 0.0
        %1979 = vmatpush1.msra.mxu0 0.0
        %1980 = vmatprep.subr.mxu0 0.0
        %1981 = vmatpush1.msra.mxu0 0.0
        %1982 = vmatprep.subr.mxu0 0.0
        %1983 = vmatpush1.msra.mxu0 0.0
        %1984 = vmatprep.subr.mxu0 0.0
        %1985 = vmatpush1.msra.mxu0 0.0
        %1986 = vmatprep.subr.mxu0 0.0
        %1987 = vmatpush1.msra.mxu0 0.0
        %1988 = vmatprep.subr.mxu0 0.0
        %1989 = vmatpush1.msra.mxu0 0.0
        %1990 = vmatprep.subr.mxu0 0.0
        %1991 = vmatpush1.msra.mxu0 0.0
        %1992 = vmatprep.subr.mxu0 0.0
        %1993 = vmatpush1.msra.mxu0 0.0
        %1994 = vmatprep.subr.mxu0 0.0
        %1995 = vmatpush1.msra.mxu0 0.0
        %1996 = vmatprep.subr.mxu0 0.0
        %1997 = vmatpush1.msra.mxu0 0.0
        %1998 = vmatprep.subr.mxu0 0.0
        %1999 = vmatpush1.msra.mxu0 0.0
        %2000 = vmatprep.subr.mxu0 0.0
        %2001 = vmatpush1.msra.mxu0 0.0
        %2002 = vmatprep.subr.mxu0 0.0
        %2003 = vmatpush1.msra.mxu0 0.0
        %2004 = vmatprep.subr.mxu0 0.0
        %2005 = vmatpush1.msra.mxu0 0.0
        %2006 = vmatprep.subr.mxu0 0.0
        %2007 = vmatpush1.msra.mxu0 0.0
        %2008 = vmatprep.subr.mxu0 0.0
        %2009 = vmatpush1.msra.mxu0 0.0
        %2010 = vmatprep.subr.mxu0 0.0
        %2011 = vmatpush1.msra.mxu0 0.0
        %2012 = vmatprep.subr.mxu0 0.0
        %2013 = vmatpush1.msra.mxu0 0.0
        %2014 = vmatprep.subr.mxu0 0.0
        %2015 = vmatpush1.msra.mxu0 0.0
        %2016 = vmatprep.subr.mxu0 0.0
        %2017 = vmatpush1.msra.mxu0 0.0
        %2018 = vmatprep.subr.mxu0 0.0
        %2019 = vmatpush1.msra.mxu0 0.0
        %2020 = vmatprep.subr.mxu0 0.0
        %2021 = vmatpush1.msra.mxu0 0.0
        %2022 = vmatprep.mubr.f32.mxu0 0.0
        %2023 = vmatmul.mubr.f32.gmra.mrb[0].mxu0 %v1949
        %v2024 = vpop.f32.mrb[0].mxu0
        %v2025 = vadd.f32 0.0, %v2024
        %v2026 = vpop.f32.mrb[0].mxu0
        %v2027 = vadd.f32 0.0, %v2026
        %2028 = vdwg.mxu0
        %v2030 = vsel %vm1947, %v1944, 0
        %v2033 = vsel %vm1951, %v1372, 0
        %v2036 = vsel %vm1951, %v1374, 0
        %2038 = vmatprep.subr.mxu0 %v2036
        %2039 = vmatpush1.msra.mxu0 %v2033
        %2040 = vmatprep.subr.mxu0 0.0
        %2041 = vmatpush1.msra.mxu0 0.0
        %2042 = vmatprep.subr.mxu0 0.0
        %2043 = vmatpush1.msra.mxu0 0.0
        %2044 = vmatprep.subr.mxu0 0.0
        %2045 = vmatpush1.msra.mxu0 0.0
        %2046 = vmatprep.subr.mxu0 0.0
        %2047 = vmatpush1.msra.mxu0 0.0
        %2048 = vmatprep.subr.mxu0 0.0
        %2049 = vmatpush1.msra.mxu0 0.0
        %2050 = vmatprep.subr.mxu0 0.0
        %2051 = vmatpush1.msra.mxu0 0.0
        %2052 = vmatprep.subr.mxu0 0.0
        %2053 = vmatpush1.msra.mxu0 0.0
        %2054 = vmatprep.subr.mxu0 0.0
        %2055 = vmatpush1.msra.mxu0 0.0
        %2056 = vmatprep.subr.mxu0 0.0
        %2057 = vmatpush1.msra.mxu0 0.0
        %2058 = vmatprep.subr.mxu0 0.0
        %2059 = vmatpush1.msra.mxu0 0.0
        %2060 = vmatprep.subr.mxu0 0.0
        %2061 = vmatpush1.msra.mxu0 0.0
        %2062 = vmatprep.subr.mxu0 0.0
        %2063 = vmatpush1.msra.mxu0 0.0
        %2064 = vmatprep.subr.mxu0 0.0
        %2065 = vmatpush1.msra.mxu0 0.0
        %2066 = vmatprep.subr.mxu0 0.0
        %2067 = vmatpush1.msra.mxu0 0.0
        %2068 = vmatprep.subr.mxu0 0.0
        %2069 = vmatpush1.msra.mxu0 0.0
        %2070 = vmatprep.subr.mxu0 0.0
        %2071 = vmatpush1.msra.mxu0 0.0
        %2072 = vmatprep.subr.mxu0 0.0
        %2073 = vmatpush1.msra.mxu0 0.0
        %2074 = vmatprep.subr.mxu0 0.0
        %2075 = vmatpush1.msra.mxu0 0.0
        %2076 = vmatprep.subr.mxu0 0.0
        %2077 = vmatpush1.msra.mxu0 0.0
        %2078 = vmatprep.subr.mxu0 0.0
        %2079 = vmatpush1.msra.mxu0 0.0
        %2080 = vmatprep.subr.mxu0 0.0
        %2081 = vmatpush1.msra.mxu0 0.0
        %2082 = vmatprep.subr.mxu0 0.0
        %2083 = vmatpush1.msra.mxu0 0.0
        %2084 = vmatprep.subr.mxu0 0.0
        %2085 = vmatpush1.msra.mxu0 0.0
        %2086 = vmatprep.subr.mxu0 0.0
        %2087 = vmatpush1.msra.mxu0 0.0
        %2088 = vmatprep.subr.mxu0 0.0
        %2089 = vmatpush1.msra.mxu0 0.0
        %2090 = vmatprep.subr.mxu0 0.0
        %2091 = vmatpush1.msra.mxu0 0.0
        %2092 = vmatprep.subr.mxu0 0.0
        %2093 = vmatpush1.msra.mxu0 0.0
        %2094 = vmatprep.subr.mxu0 0.0
        %2095 = vmatpush1.msra.mxu0 0.0
        %2096 = vmatprep.subr.mxu0 0.0
        %2097 = vmatpush1.msra.mxu0 0.0
        %2098 = vmatprep.subr.mxu0 0.0
        %2099 = vmatpush1.msra.mxu0 0.0
        %2100 = vmatprep.subr.mxu0 0.0
        %2101 = vmatpush1.msra.mxu0 0.0
        %2102 = vmatprep.mubr.f32.mxu0 0.0
        %2103 = vmatmul.mubr.f32.gmra.mrb[0].mxu0 %v2030
        %v2104 = vpop.f32.mrb[0].mxu0
        %v2105 = vadd.f32 %v2025, %v2104
        %v2106 = vpop.f32.mrb[0].mxu0
        %v2107 = vadd.f32 %v2027, %v2106
        %2108 = vdwg.mxu0
        %s2109 = scalar_lea.vmem [#allocation4], 16
        %v2110 = vld [vmem:[%s2109] sm:$0xff]
        %v2112 = vsel %vm1947, %v2110, 0
        %v2115 = vsel %vm1951, %v1514, 0
        %v2118 = vsel %vm1951, %v1516, 0
        %2120 = vmatprep.subr.mxu0 %v2118
        %2121 = vmatpush1.msra.mxu0 %v2115
        %2122 = vmatprep.subr.mxu0 0.0
        %2123 = vmatpush1.msra.mxu0 0.0
        %2124 = vmatprep.subr.mxu0 0.0
        %2125 = vmatpush1.msra.mxu0 0.0
        %2126 = vmatprep.subr.mxu0 0.0
        %2127 = vmatpush1.msra.mxu0 0.0
        %2128 = vmatprep.subr.mxu0 0.0
        %2129 = vmatpush1.msra.mxu0 0.0
        %2130 = vmatprep.subr.mxu0 0.0
        %2131 = vmatpush1.msra.mxu0 0.0
        %2132 = vmatprep.subr.mxu0 0.0
        %2133 = vmatpush1.msra.mxu0 0.0
        %2134 = vmatprep.subr.mxu0 0.0
        %2135 = vmatpush1.msra.mxu0 0.0
        %2136 = vmatprep.subr.mxu0 0.0
        %2137 = vmatpush1.msra.mxu0 0.0
        %2138 = vmatprep.subr.mxu0 0.0
        %2139 = vmatpush1.msra.mxu0 0.0
        %2140 = vmatprep.subr.mxu0 0.0
        %2141 = vmatpush1.msra.mxu0 0.0
        %2142 = vmatprep.subr.mxu0 0.0
        %2143 = vmatpush1.msra.mxu0 0.0
        %2144 = vmatprep.subr.mxu0 0.0
        %2145 = vmatpush1.msra.mxu0 0.0
        %2146 = vmatprep.subr.mxu0 0.0
        %2147 = vmatpush1.msra.mxu0 0.0
        %2148 = vmatprep.subr.mxu0 0.0
        %2149 = vmatpush1.msra.mxu0 0.0
        %2150 = vmatprep.subr.mxu0 0.0
        %2151 = vmatpush1.msra.mxu0 0.0
        %2152 = vmatprep.subr.mxu0 0.0
        %2153 = vmatpush1.msra.mxu0 0.0
        %2154 = vmatprep.subr.mxu0 0.0
        %2155 = vmatpush1.msra.mxu0 0.0
        %2156 = vmatprep.subr.mxu0 0.0
        %2157 = vmatpush1.msra.mxu0 0.0
        %2158 = vmatprep.subr.mxu0 0.0
        %2159 = vmatpush1.msra.mxu0 0.0
        %2160 = vmatprep.subr.mxu0 0.0
        %2161 = vmatpush1.msra.mxu0 0.0
        %2162 = vmatprep.subr.mxu0 0.0
        %2163 = vmatpush1.msra.mxu0 0.0
        %2164 = vmatprep.subr.mxu0 0.0
        %2165 = vmatpush1.msra.mxu0 0.0
        %2166 = vmatprep.subr.mxu0 0.0
        %2167 = vmatpush1.msra.mxu0 0.0
        %2168 = vmatprep.subr.mxu0 0.0
        %2169 = vmatpush1.msra.mxu0 0.0
        %2170 = vmatprep.subr.mxu0 0.0
        %2171 = vmatpush1.msra.mxu0 0.0
        %2172 = vmatprep.subr.mxu0 0.0
        %2173 = vmatpush1.msra.mxu0 0.0
        %2174 = vmatprep.subr.mxu0 0.0
        %2175 = vmatpush1.msra.mxu0 0.0
        %2176 = vmatprep.subr.mxu0 0.0
        %2177 = vmatpush1.msra.mxu0 0.0
        %2178 = vmatprep.subr.mxu0 0.0
        %2179 = vmatpush1.msra.mxu0 0.0
        %2180 = vmatprep.subr.mxu0 0.0
        %2181 = vmatpush1.msra.mxu0 0.0
        %2182 = vmatprep.subr.mxu0 0.0
        %2183 = vmatpush1.msra.mxu0 0.0
        %2184 = vmatprep.mubr.f32.mxu0 0.0
        %2185 = vmatmul.mubr.f32.gmra.mrb[0].mxu0 %v2112
        %v2186 = vpop.f32.mrb[0].mxu0
        %v2187 = vadd.f32 0.0, %v2186
        %v2188 = vpop.f32.mrb[0].mxu0
        %v2189 = vadd.f32 0.0, %v2188
        %2190 = vdwg.mxu0
        %v2191 = vadd.f32 %v2105, %v2187
        %v2192 = vadd.f32 %v2107, %v2189
        %s2193 = scalar_lea.vmem [#allocation4], 24
        %v2194 = vld [vmem:[%s2193] sm:$0xff]
        %v2196 = vsel %vm1947, %v2194, 0
        %v2199 = vsel %vm1951, %v1585, 0
        %v2202 = vsel %vm1951, %v1587, 0
        %2204 = vmatprep.subr.mxu0 %v2202
        %2205 = vmatpush1.msra.mxu0 %v2199
        %2206 = vmatprep.subr.mxu0 0.0
        %2207 = vmatpush1.msra.mxu0 0.0
        %2208 = vmatprep.subr.mxu0 0.0
        %2209 = vmatpush1.msra.mxu0 0.0
        %2210 = vmatprep.subr.mxu0 0.0
        %2211 = vmatpush1.msra.mxu0 0.0
        %2212 = vmatprep.subr.mxu0 0.0
        %2213 = vmatpush1.msra.mxu0 0.0
        %2214 = vmatprep.subr.mxu0 0.0
        %2215 = vmatpush1.msra.mxu0 0.0
        %2216 = vmatprep.subr.mxu0 0.0
        %2217 = vmatpush1.msra.mxu0 0.0
        %2218 = vmatprep.subr.mxu0 0.0
        %2219 = vmatpush1.msra.mxu0 0.0
        %2220 = vmatprep.subr.mxu0 0.0
        %2221 = vmatpush1.msra.mxu0 0.0
        %2222 = vmatprep.subr.mxu0 0.0
        %2223 = vmatpush1.msra.mxu0 0.0
        %2224 = vmatprep.subr.mxu0 0.0
        %2225 = vmatpush1.msra.mxu0 0.0
        %2226 = vmatprep.subr.mxu0 0.0
        %2227 = vmatpush1.msra.mxu0 0.0
        %2228 = vmatprep.subr.mxu0 0.0
        %2229 = vmatpush1.msra.mxu0 0.0
        %2230 = vmatprep.subr.mxu0 0.0
        %2231 = vmatpush1.msra.mxu0 0.0
        %2232 = vmatprep.subr.mxu0 0.0
        %2233 = vmatpush1.msra.mxu0 0.0
        %2234 = vmatprep.subr.mxu0 0.0
        %2235 = vmatpush1.msra.mxu0 0.0
        %2236 = vmatprep.subr.mxu0 0.0
        %2237 = vmatpush1.msra.mxu0 0.0
        %2238 = vmatprep.subr.mxu0 0.0
        %2239 = vmatpush1.msra.mxu0 0.0
        %2240 = vmatprep.subr.mxu0 0.0
        %2241 = vmatpush1.msra.mxu0 0.0
        %2242 = vmatprep.subr.mxu0 0.0
        %2243 = vmatpush1.msra.mxu0 0.0
        %2244 = vmatprep.subr.mxu0 0.0
        %2245 = vmatpush1.msra.mxu0 0.0
        %2246 = vmatprep.subr.mxu0 0.0
        %2247 = vmatpush1.msra.mxu0 0.0
        %2248 = vmatprep.subr.mxu0 0.0
        %2249 = vmatpush1.msra.mxu0 0.0
        %2250 = vmatprep.subr.mxu0 0.0
        %2251 = vmatpush1.msra.mxu0 0.0
        %2252 = vmatprep.subr.mxu0 0.0
        %2253 = vmatpush1.msra.mxu0 0.0
        %2254 = vmatprep.subr.mxu0 0.0
        %2255 = vmatpush1.msra.mxu0 0.0
        %2256 = vmatprep.subr.mxu0 0.0
        %2257 = vmatpush1.msra.mxu0 0.0
        %2258 = vmatprep.subr.mxu0 0.0
        %2259 = vmatpush1.msra.mxu0 0.0
        %2260 = vmatprep.subr.mxu0 0.0
        %2261 = vmatpush1.msra.mxu0 0.0
        %2262 = vmatprep.subr.mxu0 0.0
        %2263 = vmatpush1.msra.mxu0 0.0
        %2264 = vmatprep.subr.mxu0 0.0
        %2265 = vmatpush1.msra.mxu0 0.0
        %2266 = vmatprep.subr.mxu0 0.0
        %2267 = vmatpush1.msra.mxu0 0.0
        %2268 = vmatprep.mubr.f32.mxu0 0.0
        %2269 = vmatmul.mubr.f32.gmra.mrb[0].mxu0 %v2196
        %v2270 = vpop.f32.mrb[0].mxu0
        %v2271 = vadd.f32 0.0, %v2270
        %v2272 = vpop.f32.mrb[0].mxu0
        %v2273 = vadd.f32 0.0, %v2272
        %2274 = vdwg.mxu0
        %v2275 = vadd.f32 %v2191, %v2271
        %v2276 = vadd.f32 %v2192, %v2273
        %s2277 = scalar_lea.vmem [#allocation4], 32
        %v2278 = vld [vmem:[%s2277] sm:$0xff]
        %v2280 = vsel %vm1947, %v2278, 0
        %v2283 = vsel %vm1951, %v1656, 0
        %v2286 = vsel %vm1951, %v1658, 0
        %2288 = vmatprep.subr.mxu0 %v2286
        %2289 = vmatpush1.msra.mxu0 %v2283
        %2290 = vmatprep.subr.mxu0 0.0
        %2291 = vmatpush1.msra.mxu0 0.0
        %2292 = vmatprep.subr.mxu0 0.0
        %2293 = vmatpush1.msra.mxu0 0.0
        %2294 = vmatprep.subr.mxu0 0.0
        %2295 = vmatpush1.msra.mxu0 0.0
        %2296 = vmatprep.subr.mxu0 0.0
        %2297 = vmatpush1.msra.mxu0 0.0
        %2298 = vmatprep.subr.mxu0 0.0
        %2299 = vmatpush1.msra.mxu0 0.0
        %2300 = vmatprep.subr.mxu0 0.0
        %2301 = vmatpush1.msra.mxu0 0.0
        %2302 = vmatprep.subr.mxu0 0.0
        %2303 = vmatpush1.msra.mxu0 0.0
        %2304 = vmatprep.subr.mxu0 0.0
        %2305 = vmatpush1.msra.mxu0 0.0
        %2306 = vmatprep.subr.mxu0 0.0
        %2307 = vmatpush1.msra.mxu0 0.0
        %2308 = vmatprep.subr.mxu0 0.0
        %2309 = vmatpush1.msra.mxu0 0.0
        %2310 = vmatprep.subr.mxu0 0.0
        %2311 = vmatpush1.msra.mxu0 0.0
        %2312 = vmatprep.subr.mxu0 0.0
        %2313 = vmatpush1.msra.mxu0 0.0
        %2314 = vmatprep.subr.mxu0 0.0
        %2315 = vmatpush1.msra.mxu0 0.0
        %2316 = vmatprep.subr.mxu0 0.0
        %2317 = vmatpush1.msra.mxu0 0.0
        %2318 = vmatprep.subr.mxu0 0.0
        %2319 = vmatpush1.msra.mxu0 0.0
        %2320 = vmatprep.subr.mxu0 0.0
        %2321 = vmatpush1.msra.mxu0 0.0
        %2322 = vmatprep.subr.mxu0 0.0
        %2323 = vmatpush1.msra.mxu0 0.0
        %2324 = vmatprep.subr.mxu0 0.0
        %2325 = vmatpush1.msra.mxu0 0.0
        %2326 = vmatprep.subr.mxu0 0.0
        %2327 = vmatpush1.msra.mxu0 0.0
        %2328 = vmatprep.subr.mxu0 0.0
        %2329 = vmatpush1.msra.mxu0 0.0
        %2330 = vmatprep.subr.mxu0 0.0
        %2331 = vmatpush1.msra.mxu0 0.0
        %2332 = vmatprep.subr.mxu0 0.0
        %2333 = vmatpush1.msra.mxu0 0.0
        %2334 = vmatprep.subr.mxu0 0.0
        %2335 = vmatpush1.msra.mxu0 0.0
        %2336 = vmatprep.subr.mxu0 0.0
        %2337 = vmatpush1.msra.mxu0 0.0
        %2338 = vmatprep.subr.mxu0 0.0
        %2339 = vmatpush1.msra.mxu0 0.0
        %2340 = vmatprep.subr.mxu0 0.0
        %2341 = vmatpush1.msra.mxu0 0.0
        %2342 = vmatprep.subr.mxu0 0.0
        %2343 = vmatpush1.msra.mxu0 0.0
        %2344 = vmatprep.subr.mxu0 0.0
        %2345 = vmatpush1.msra.mxu0 0.0
        %2346 = vmatprep.subr.mxu0 0.0
        %2347 = vmatpush1.msra.mxu0 0.0
        %2348 = vmatprep.subr.mxu0 0.0
        %2349 = vmatpush1.msra.mxu0 0.0
        %2350 = vmatprep.subr.mxu0 0.0
        %2351 = vmatpush1.msra.mxu0 0.0
        %2352 = vmatprep.mubr.f32.mxu0 0.0
        %2353 = vmatmul.mubr.f32.gmra.mrb[0].mxu0 %v2280
        %v2354 = vpop.f32.mrb[0].mxu0
        %v2355 = vadd.f32 0.0, %v2354
        %v2356 = vpop.f32.mrb[0].mxu0
        %v2357 = vadd.f32 0.0, %v2356
        %2358 = vdwg.mxu0
        %v2359 = vadd.f32 %v2275, %v2355
        %v2360 = vadd.f32 %v2276, %v2357
        %s2361 = scalar_lea.vmem [#allocation4], 40
        %v2362 = vld [vmem:[%s2361] sm:$0xff]
        %v2364 = vsel %vm1947, %v2362, 0
        %v2367 = vsel %vm1951, %v1727, 0
        %v2370 = vsel %vm1951, %v1729, 0
        %2372 = vmatprep.subr.mxu0 %v2370
        %2373 = vmatpush1.msra.mxu0 %v2367
        %2374 = vmatprep.subr.mxu0 0.0
        %2375 = vmatpush1.msra.mxu0 0.0
        %2376 = vmatprep.subr.mxu0 0.0
        %2377 = vmatpush1.msra.mxu0 0.0
        %2378 = vmatprep.subr.mxu0 0.0
        %2379 = vmatpush1.msra.mxu0 0.0
        %2380 = vmatprep.subr.mxu0 0.0
        %2381 = vmatpush1.msra.mxu0 0.0
        %2382 = vmatprep.subr.mxu0 0.0
        %2383 = vmatpush1.msra.mxu0 0.0
        %2384 = vmatprep.subr.mxu0 0.0
        %2385 = vmatpush1.msra.mxu0 0.0
        %2386 = vmatprep.subr.mxu0 0.0
        %2387 = vmatpush1.msra.mxu0 0.0
        %2388 = vmatprep.subr.mxu0 0.0
        %2389 = vmatpush1.msra.mxu0 0.0
        %2390 = vmatprep.subr.mxu0 0.0
        %2391 = vmatpush1.msra.mxu0 0.0
        %2392 = vmatprep.subr.mxu0 0.0
        %2393 = vmatpush1.msra.mxu0 0.0
        %2394 = vmatprep.subr.mxu0 0.0
        %2395 = vmatpush1.msra.mxu0 0.0
        %2396 = vmatprep.subr.mxu0 0.0
        %2397 = vmatpush1.msra.mxu0 0.0
        %2398 = vmatprep.subr.mxu0 0.0
        %2399 = vmatpush1.msra.mxu0 0.0
        %2400 = vmatprep.subr.mxu0 0.0
        %2401 = vmatpush1.msra.mxu0 0.0
        %2402 = vmatprep.subr.mxu0 0.0
        %2403 = vmatpush1.msra.mxu0 0.0
        %2404 = vmatprep.subr.mxu0 0.0
        %2405 = vmatpush1.msra.mxu0 0.0
        %2406 = vmatprep.subr.mxu0 0.0
        %2407 = vmatpush1.msra.mxu0 0.0
        %2408 = vmatprep.subr.mxu0 0.0
        %2409 = vmatpush1.msra.mxu0 0.0
        %2410 = vmatprep.subr.mxu0 0.0
        %2411 = vmatpush1.msra.mxu0 0.0
        %2412 = vmatprep.subr.mxu0 0.0
        %2413 = vmatpush1.msra.mxu0 0.0
        %2414 = vmatprep.subr.mxu0 0.0
        %2415 = vmatpush1.msra.mxu0 0.0
        %2416 = vmatprep.subr.mxu0 0.0
        %2417 = vmatpush1.msra.mxu0 0.0
        %2418 = vmatprep.subr.mxu0 0.0
        %2419 = vmatpush1.msra.mxu0 0.0
        %2420 = vmatprep.subr.mxu0 0.0
        %2421 = vmatpush1.msra.mxu0 0.0
        %2422 = vmatprep.subr.mxu0 0.0
        %2423 = vmatpush1.msra.mxu0 0.0
        %2424 = vmatprep.subr.mxu0 0.0
        %2425 = vmatpush1.msra.mxu0 0.0
        %2426 = vmatprep.subr.mxu0 0.0
        %2427 = vmatpush1.msra.mxu0 0.0
        %2428 = vmatprep.subr.mxu0 0.0
        %2429 = vmatpush1.msra.mxu0 0.0
        %2430 = vmatprep.subr.mxu0 0.0
        %2431 = vmatpush1.msra.mxu0 0.0
        %2432 = vmatprep.subr.mxu0 0.0
        %2433 = vmatpush1.msra.mxu0 0.0
        %2434 = vmatprep.subr.mxu0 0.0
        %2435 = vmatpush1.msra.mxu0 0.0
        %2436 = vmatprep.mubr.f32.mxu0 0.0
        %2437 = vmatmul.mubr.f32.gmra.mrb[0].mxu0 %v2364
        %v2438 = vpop.f32.mrb[0].mxu0
        %v2439 = vadd.f32 0.0, %v2438
        %v2440 = vpop.f32.mrb[0].mxu0
        %v2441 = vadd.f32 0.0, %v2440
        %2442 = vdwg.mxu0
        %v2443 = vadd.f32 %v2359, %v2439
        %v2444 = vadd.f32 %v2360, %v2441
        %s2445 = scalar_lea.vmem [#allocation4], 48
        %v2446 = vld [vmem:[%s2445] sm:$0xff]
        %v2448 = vsel %vm1947, %v2446, 0
        %v2451 = vsel %vm1951, %v1798, 0
        %v2454 = vsel %vm1951, %v1800, 0
        %2456 = vmatprep.subr.mxu0 %v2454
        %2457 = vmatpush1.msra.mxu0 %v2451
        %2458 = vmatprep.subr.mxu0 0.0
        %2459 = vmatpush1.msra.mxu0 0.0
        %2460 = vmatprep.subr.mxu0 0.0
        %2461 = vmatpush1.msra.mxu0 0.0
        %2462 = vmatprep.subr.mxu0 0.0
        %2463 = vmatpush1.msra.mxu0 0.0
        %2464 = vmatprep.subr.mxu0 0.0
        %2465 = vmatpush1.msra.mxu0 0.0
        %2466 = vmatprep.subr.mxu0 0.0
        %2467 = vmatpush1.msra.mxu0 0.0
        %2468 = vmatprep.subr.mxu0 0.0
        %2469 = vmatpush1.msra.mxu0 0.0
        %2470 = vmatprep.subr.mxu0 0.0
        %2471 = vmatpush1.msra.mxu0 0.0
        %2472 = vmatprep.subr.mxu0 0.0
        %2473 = vmatpush1.msra.mxu0 0.0
        %2474 = vmatprep.subr.mxu0 0.0
        %2475 = vmatpush1.msra.mxu0 0.0
        %2476 = vmatprep.subr.mxu0 0.0
        %2477 = vmatpush1.msra.mxu0 0.0
        %2478 = vmatprep.subr.mxu0 0.0
        %2479 = vmatpush1.msra.mxu0 0.0
        %2480 = vmatprep.subr.mxu0 0.0
        %2481 = vmatpush1.msra.mxu0 0.0
        %2482 = vmatprep.subr.mxu0 0.0
        %2483 = vmatpush1.msra.mxu0 0.0
        %2484 = vmatprep.subr.mxu0 0.0
        %2485 = vmatpush1.msra.mxu0 0.0
        %2486 = vmatprep.subr.mxu0 0.0
        %2487 = vmatpush1.msra.mxu0 0.0
        %2488 = vmatprep.subr.mxu0 0.0
        %2489 = vmatpush1.msra.mxu0 0.0
        %2490 = vmatprep.subr.mxu0 0.0
        %2491 = vmatpush1.msra.mxu0 0.0
        %2492 = vmatprep.subr.mxu0 0.0
        %2493 = vmatpush1.msra.mxu0 0.0
        %2494 = vmatprep.subr.mxu0 0.0
        %2495 = vmatpush1.msra.mxu0 0.0
        %2496 = vmatprep.subr.mxu0 0.0
        %2497 = vmatpush1.msra.mxu0 0.0
        %2498 = vmatprep.subr.mxu0 0.0
        %2499 = vmatpush1.msra.mxu0 0.0
        %2500 = vmatprep.subr.mxu0 0.0
        %2501 = vmatpush1.msra.mxu0 0.0
        %2502 = vmatprep.subr.mxu0 0.0
        %2503 = vmatpush1.msra.mxu0 0.0
        %2504 = vmatprep.subr.mxu0 0.0
        %2505 = vmatpush1.msra.mxu0 0.0
        %2506 = vmatprep.subr.mxu0 0.0
        %2507 = vmatpush1.msra.mxu0 0.0
        %2508 = vmatprep.subr.mxu0 0.0
        %2509 = vmatpush1.msra.mxu0 0.0
        %2510 = vmatprep.subr.mxu0 0.0
        %2511 = vmatpush1.msra.mxu0 0.0
        %2512 = vmatprep.subr.mxu0 0.0
        %2513 = vmatpush1.msra.mxu0 0.0
        %2514 = vmatprep.subr.mxu0 0.0
        %2515 = vmatpush1.msra.mxu0 0.0
        %2516 = vmatprep.subr.mxu0 0.0
        %2517 = vmatpush1.msra.mxu0 0.0
        %2518 = vmatprep.subr.mxu0 0.0
        %2519 = vmatpush1.msra.mxu0 0.0
        %2520 = vmatprep.mubr.f32.mxu0 0.0
        %2521 = vmatmul.mubr.f32.gmra.mrb[0].mxu0 %v2448
        %v2522 = vpop.f32.mrb[0].mxu0
        %v2523 = vadd.f32 0.0, %v2522
        %v2524 = vpop.f32.mrb[0].mxu0
        %v2525 = vadd.f32 0.0, %v2524
        %2526 = vdwg.mxu0
        %v2527 = vadd.f32 %v2443, %v2523
        %v2528 = vadd.f32 %v2444, %v2525
        %s2529 = scalar_lea.vmem [#allocation4], 56
        %v2530 = vld [vmem:[%s2529] sm:$0xff]
        %v2532 = vsel %vm1947, %v2530, 0
        %v2535 = vsel %vm1951, %v1869, 0
        %v2538 = vsel %vm1951, %v1871, 0
        %2540 = vmatprep.subr.mxu0 %v2538
        %2541 = vmatpush1.msra.mxu0 %v2535
        %2542 = vmatprep.subr.mxu0 0.0
        %2543 = vmatpush1.msra.mxu0 0.0
        %2544 = vmatprep.subr.mxu0 0.0
        %2545 = vmatpush1.msra.mxu0 0.0
        %2546 = vmatprep.subr.mxu0 0.0
        %2547 = vmatpush1.msra.mxu0 0.0
        %2548 = vmatprep.subr.mxu0 0.0
        %2549 = vmatpush1.msra.mxu0 0.0
        %2550 = vmatprep.subr.mxu0 0.0
        %2551 = vmatpush1.msra.mxu0 0.0
        %2552 = vmatprep.subr.mxu0 0.0
        %2553 = vmatpush1.msra.mxu0 0.0
        %2554 = vmatprep.subr.mxu0 0.0
        %2555 = vmatpush1.msra.mxu0 0.0
        %2556 = vmatprep.subr.mxu0 0.0
        %2557 = vmatpush1.msra.mxu0 0.0
        %2558 = vmatprep.subr.mxu0 0.0
        %2559 = vmatpush1.msra.mxu0 0.0
        %2560 = vmatprep.subr.mxu0 0.0
        %2561 = vmatpush1.msra.mxu0 0.0
        %2562 = vmatprep.subr.mxu0 0.0
        %2563 = vmatpush1.msra.mxu0 0.0
        %2564 = vmatprep.subr.mxu0 0.0
        %2565 = vmatpush1.msra.mxu0 0.0
        %2566 = vmatprep.subr.mxu0 0.0
        %2567 = vmatpush1.msra.mxu0 0.0
        %2568 = vmatprep.subr.mxu0 0.0
        %2569 = vmatpush1.msra.mxu0 0.0
        %2570 = vmatprep.subr.mxu0 0.0
        %2571 = vmatpush1.msra.mxu0 0.0
        %2572 = vmatprep.subr.mxu0 0.0
        %2573 = vmatpush1.msra.mxu0 0.0
        %2574 = vmatprep.subr.mxu0 0.0
        %2575 = vmatpush1.msra.mxu0 0.0
        %2576 = vmatprep.subr.mxu0 0.0
        %2577 = vmatpush1.msra.mxu0 0.0
        %2578 = vmatprep.subr.mxu0 0.0
        %2579 = vmatpush1.msra.mxu0 0.0
        %2580 = vmatprep.subr.mxu0 0.0
        %2581 = vmatpush1.msra.mxu0 0.0
        %2582 = vmatprep.subr.mxu0 0.0
        %2583 = vmatpush1.msra.mxu0 0.0
        %2584 = vmatprep.subr.mxu0 0.0
        %2585 = vmatpush1.msra.mxu0 0.0
        %2586 = vmatprep.subr.mxu0 0.0
        %2587 = vmatpush1.msra.mxu0 0.0
        %2588 = vmatprep.subr.mxu0 0.0
        %2589 = vmatpush1.msra.mxu0 0.0
        %2590 = vmatprep.subr.mxu0 0.0
        %2591 = vmatpush1.msra.mxu0 0.0
        %2592 = vmatprep.subr.mxu0 0.0
        %2593 = vmatpush1.msra.mxu0 0.0
        %2594 = vmatprep.subr.mxu0 0.0
        %2595 = vmatpush1.msra.mxu0 0.0
        %2596 = vmatprep.subr.mxu0 0.0
        %2597 = vmatpush1.msra.mxu0 0.0
        %2598 = vmatprep.subr.mxu0 0.0
        %2599 = vmatpush1.msra.mxu0 0.0
        %2600 = vmatprep.subr.mxu0 0.0
        %2601 = vmatpush1.msra.mxu0 0.0
        %2602 = vmatprep.subr.mxu0 0.0
        %2603 = vmatpush1.msra.mxu0 0.0
        %2604 = vmatprep.mubr.f32.mxu0 0.0
        %2605 = vmatmul.mubr.f32.gmra.mrb[0].mxu0 %v2532
        %v2606 = vpop.f32.mrb[0].mxu0
        %v2607 = vadd.f32 0.0, %v2606
        %v2608 = vpop.f32.mrb[0].mxu0
        %v2609 = vadd.f32 0.0, %v2608
        %2610 = vdwg.mxu0
        %v2611 = vadd.f32 %v2527, %v2607
        %v2612 = vadd.f32 %v2528, %v2609
        %s2613 = scalar_lea.vmem [#allocation4], 64
        %v2614 = vld [vmem:[%s2613] sm:$0xff]
        %v2616 = vsel %vm1947, %v2614, 0
        %v2619 = vsel %vm1951, %v1940, 0
        %v2622 = vsel %vm1951, %v1942, 0
        %2624 = vmatprep.subr.mxu0 %v2622
        %2625 = vmatpush1.msra.mxu0 %v2619
        %2626 = vmatprep.subr.mxu0 0.0
        %2627 = vmatpush1.msra.mxu0 0.0
        %2628 = vmatprep.subr.mxu0 0.0
        %2629 = vmatpush1.msra.mxu0 0.0
        %2630 = vmatprep.subr.mxu0 0.0
        %2631 = vmatpush1.msra.mxu0 0.0
        %2632 = vmatprep.subr.mxu0 0.0
        %2633 = vmatpush1.msra.mxu0 0.0
        %2634 = vmatprep.subr.mxu0 0.0
        %2635 = vmatpush1.msra.mxu0 0.0
        %2636 = vmatprep.subr.mxu0 0.0
        %2637 = vmatpush1.msra.mxu0 0.0
        %2638 = vmatprep.subr.mxu0 0.0
        %2639 = vmatpush1.msra.mxu0 0.0
        %2640 = vmatprep.subr.mxu0 0.0
        %2641 = vmatpush1.msra.mxu0 0.0
        %2642 = vmatprep.subr.mxu0 0.0
        %2643 = vmatpush1.msra.mxu0 0.0
        %2644 = vmatprep.subr.mxu0 0.0
        %2645 = vmatpush1.msra.mxu0 0.0
        %2646 = vmatprep.subr.mxu0 0.0
        %2647 = vmatpush1.msra.mxu0 0.0
        %2648 = vmatprep.subr.mxu0 0.0
        %2649 = vmatpush1.msra.mxu0 0.0
        %2650 = vmatprep.subr.mxu0 0.0
        %2651 = vmatpush1.msra.mxu0 0.0
        %2652 = vmatprep.subr.mxu0 0.0
        %2653 = vmatpush1.msra.mxu0 0.0
        %2654 = vmatprep.subr.mxu0 0.0
        %2655 = vmatpush1.msra.mxu0 0.0
        %2656 = vmatprep.subr.mxu0 0.0
        %2657 = vmatpush1.msra.mxu0 0.0
        %2658 = vmatprep.subr.mxu0 0.0
        %2659 = vmatpush1.msra.mxu0 0.0
        %2660 = vmatprep.subr.mxu0 0.0
        %2661 = vmatpush1.msra.mxu0 0.0
        %2662 = vmatprep.subr.mxu0 0.0
        %2663 = vmatpush1.msra.mxu0 0.0
        %2664 = vmatprep.subr.mxu0 0.0
        %2665 = vmatpush1.msra.mxu0 0.0
        %2666 = vmatprep.subr.mxu0 0.0
        %2667 = vmatpush1.msra.mxu0 0.0
        %2668 = vmatprep.subr.mxu0 0.0
        %2669 = vmatpush1.msra.mxu0 0.0
        %2670 = vmatprep.subr.mxu0 0.0
        %2671 = vmatpush1.msra.mxu0 0.0
        %2672 = vmatprep.subr.mxu0 0.0
        %2673 = vmatpush1.msra.mxu0 0.0
        %2674 = vmatprep.subr.mxu0 0.0
        %2675 = vmatpush1.msra.mxu0 0.0
        %2676 = vmatprep.subr.mxu0 0.0
        %2677 = vmatpush1.msra.mxu0 0.0
        %2678 = vmatprep.subr.mxu0 0.0
        %2679 = vmatpush1.msra.mxu0 0.0
        %2680 = vmatprep.subr.mxu0 0.0
        %2681 = vmatpush1.msra.mxu0 0.0
        %2682 = vmatprep.subr.mxu0 0.0
        %2683 = vmatpush1.msra.mxu0 0.0
        %2684 = vmatprep.subr.mxu0 0.0
        %2685 = vmatpush1.msra.mxu0 0.0
        %2686 = vmatprep.subr.mxu0 0.0
        %2687 = vmatpush1.msra.mxu0 0.0
        %2688 = vmatprep.mubr.f32.mxu0 0.0
        %2689 = vmatmul.mubr.f32.gmra.mrb[0].mxu0 %v2616
        %v2690 = vpop.f32.mrb[0].mxu0
        %v2691 = vadd.f32 0.0, %v2690
        %v2692 = vpop.f32.mrb[0].mxu0
        %v2693 = vadd.f32 0.0, %v2692
        %2694 = vdwg.mxu0
        %v2695 = vadd.f32 %v2611, %v2691
        %v2696 = vadd.f32 %v2612, %v2693
        %v2697 = vld [vmem:[#allocation6] sm:$0xff]
        %2699 = vset.pattern.permute.xlu0 0
        %2700 = vperm.xlu0 %2699, %v2697
        %v2701 = vpop.permute.xlu0 %2700
        %v2703 = vadd.f32 %v2695, %v2701
        %v2704 = vadd.f32 %v2696, %v2701
        %v2705 = vld [vmem:[%s687] sm:$0xff]
        %v2707 = vcombine.high %v2705, %v2705
        %2709 = vmatprep.subr.mxu0 %v727
        %2710 = vmatpush1.msra.mxu0 %v726
        %2711 = vmatprep.subr.mxu0 %v745
        %2712 = vmatpush1.msra.mxu0 %v744
        %2713 = vmatprep.subr.mxu0 %v763
        %2714 = vmatpush1.msra.mxu0 %v762
        %2715 = vmatprep.subr.mxu0 %v781
        %2716 = vmatpush1.msra.mxu0 %v780
        %2717 = vmatprep.subr.mxu0 %v799
        %2718 = vmatpush1.msra.mxu0 %v798
        %2719 = vmatprep.subr.mxu0 %v817
        %2720 = vmatpush1.msra.mxu0 %v816
        %2721 = vmatprep.subr.mxu0 %v835
        %2722 = vmatpush1.msra.mxu0 %v834
        %2723 = vmatprep.subr.mxu0 %v853
        %2724 = vmatpush1.msra.mxu0 %v852
        %2725 = vmatprep.subr.mxu0 %v871
        %2726 = vmatpush1.msra.mxu0 %v870
        %2727 = vmatprep.subr.mxu0 %v889
        %2728 = vmatpush1.msra.mxu0 %v888
        %2729 = vmatprep.subr.mxu0 %v907
        %2730 = vmatpush1.msra.mxu0 %v906
        %2731 = vmatprep.subr.mxu0 %v925
        %2732 = vmatpush1.msra.mxu0 %v924
        %2733 = vmatprep.subr.mxu0 %v943
        %2734 = vmatpush1.msra.mxu0 %v942
        %2735 = vmatprep.subr.mxu0 %v961
        %2736 = vmatpush1.msra.mxu0 %v960
        %2737 = vmatprep.subr.mxu0 %v979
        %2738 = vmatpush1.msra.mxu0 %v978
        %2739 = vmatprep.subr.mxu0 %v997
        %2740 = vmatpush1.msra.mxu0 %v996
        %2741 = vmatprep.subr.mxu0 %v1015
        %2742 = vmatpush1.msra.mxu0 %v1014
        %2743 = vmatprep.subr.mxu0 %v1033
        %2744 = vmatpush1.msra.mxu0 %v1032
        %2745 = vmatprep.subr.mxu0 %v1051
        %2746 = vmatpush1.msra.mxu0 %v1050
        %2747 = vmatprep.subr.mxu0 %v1069
        %2748 = vmatpush1.msra.mxu0 %v1068
        %2749 = vmatprep.subr.mxu0 %v1087
        %2750 = vmatpush1.msra.mxu0 %v1086
        %2751 = vmatprep.subr.mxu0 %v1105
        %2752 = vmatpush1.msra.mxu0 %v1104
        %2753 = vmatprep.subr.mxu0 %v1123
        %2754 = vmatpush1.msra.mxu0 %v1122
        %2755 = vmatprep.subr.mxu0 %v1141
        %2756 = vmatpush1.msra.mxu0 %v1140
        %2757 = vmatprep.subr.mxu0 %v1159
        %2758 = vmatpush1.msra.mxu0 %v1158
        %2759 = vmatprep.subr.mxu0 %v1177
        %2760 = vmatpush1.msra.mxu0 %v1176
        %2761 = vmatprep.subr.mxu0 %v1195
        %2762 = vmatpush1.msra.mxu0 %v1194
        %2763 = vmatprep.subr.mxu0 %v1213
        %2764 = vmatpush1.msra.mxu0 %v1212
        %2765 = vmatprep.subr.mxu0 %v1231
        %2766 = vmatpush1.msra.mxu0 %v1230
        %2767 = vmatprep.subr.mxu0 %v1249
        %2768 = vmatpush1.msra.mxu0 %v1248
        %2769 = vmatprep.subr.mxu0 %v1267
        %2770 = vmatpush1.msra.mxu0 %v1266
        %2771 = vmatprep.subr.mxu0 %v1285
        %2772 = vmatpush1.msra.mxu0 %v1284
        %2773 = vmatprep.mubr.f32.mxu0 %v2707
        %2774 = vmatmul.mubr.f32.gmra.mrb[0].mxu0 %v2705
        %v2775 = vpop.f32.mrb[0].mxu0
        %v2776 = vadd.f32 0.0, %v2775
        %v2777 = vpop.f32.mrb[0].mxu0
        %v2778 = vadd.f32 0.0, %v2777
        %2779 = vdwg.mxu0
        %2780 = vmatprep.subr.mxu0 %v729
        %2781 = vmatpush1.msra.mxu0 %v728
        %2782 = vmatprep.subr.mxu0 %v747
        %2783 = vmatpush1.msra.mxu0 %v746
        %2784 = vmatprep.subr.mxu0 %v765
        %2785 = vmatpush1.msra.mxu0 %v764
        %2786 = vmatprep.subr.mxu0 %v783
        %2787 = vmatpush1.msra.mxu0 %v782
        %2788 = vmatprep.subr.mxu0 %v801
        %2789 = vmatpush1.msra.mxu0 %v800
        %2790 = vmatprep.subr.mxu0 %v819
        %2791 = vmatpush1.msra.mxu0 %v818
        %2792 = vmatprep.subr.mxu0 %v837
        %2793 = vmatpush1.msra.mxu0 %v836
        %2794 = vmatprep.subr.mxu0 %v855
        %2795 = vmatpush1.msra.mxu0 %v854
        %2796 = vmatprep.subr.mxu0 %v873
        %2797 = vmatpush1.msra.mxu0 %v872
        %2798 = vmatprep.subr.mxu0 %v891
        %2799 = vmatpush1.msra.mxu0 %v890
        %2800 = vmatprep.subr.mxu0 %v909
        %2801 = vmatpush1.msra.mxu0 %v908
        %2802 = vmatprep.subr.mxu0 %v927
        %2803 = vmatpush1.msra.mxu0 %v926
        %2804 = vmatprep.subr.mxu0 %v945
        %2805 = vmatpush1.msra.mxu0 %v944
        %2806 = vmatprep.subr.mxu0 %v963
        %2807 = vmatpush1.msra.mxu0 %v962
        %2808 = vmatprep.subr.mxu0 %v981
        %2809 = vmatpush1.msra.mxu0 %v980
        %2810 = vmatprep.subr.mxu0 %v999
        %2811 = vmatpush1.msra.mxu0 %v998
        %2812 = vmatprep.subr.mxu0 %v1017
        %2813 = vmatpush1.msra.mxu0 %v1016
        %2814 = vmatprep.subr.mxu0 %v1035
        %2815 = vmatpush1.msra.mxu0 %v1034
        %2816 = vmatprep.subr.mxu0 %v1053
        %2817 = vmatpush1.msra.mxu0 %v1052
        %2818 = vmatprep.subr.mxu0 %v1071
        %2819 = vmatpush1.msra.mxu0 %v1070
        %2820 = vmatprep.subr.mxu0 %v1089
        %2821 = vmatpush1.msra.mxu0 %v1088
        %2822 = vmatprep.subr.mxu0 %v1107
        %2823 = vmatpush1.msra.mxu0 %v1106
        %2824 = vmatprep.subr.mxu0 %v1125
        %2825 = vmatpush1.msra.mxu0 %v1124
        %2826 = vmatprep.subr.mxu0 %v1143
        %2827 = vmatpush1.msra.mxu0 %v1142
        %2828 = vmatprep.subr.mxu0 %v1161
        %2829 = vmatpush1.msra.mxu0 %v1160
        %2830 = vmatprep.subr.mxu0 %v1179
        %2831 = vmatpush1.msra.mxu0 %v1178
        %2832 = vmatprep.subr.mxu0 %v1197
        %2833 = vmatpush1.msra.mxu0 %v1196
        %2834 = vmatprep.subr.mxu0 %v1215
        %2835 = vmatpush1.msra.mxu0 %v1214
        %2836 = vmatprep.subr.mxu0 %v1233
        %2837 = vmatpush1.msra.mxu0 %v1232
        %2838 = vmatprep.subr.mxu0 %v1251
        %2839 = vmatpush1.msra.mxu0 %v1250
        %2840 = vmatprep.subr.mxu0 %v1269
        %2841 = vmatpush1.msra.mxu0 %v1268
        %2842 = vmatprep.subr.mxu0 %v1287
        %2843 = vmatpush1.msra.mxu0 %v1286
        %2844 = vmatprep.mubr.f32.mxu0 %v2707
        %2845 = vmatmul.mubr.f32.gmra.mrb[0].mxu0 %v2705
        %v2846 = vpop.f32.mrb[0].mxu0
        %v2847 = vadd.f32 0.0, %v2846
        %v2848 = vpop.f32.mrb[0].mxu0
        %v2849 = vadd.f32 0.0, %v2848
        %2850 = vdwg.mxu0
        %2851 = vmatprep.subr.mxu0 %v731
        %2852 = vmatpush1.msra.mxu0 %v730
        %2853 = vmatprep.subr.mxu0 %v749
        %2854 = vmatpush1.msra.mxu0 %v748
        %2855 = vmatprep.subr.mxu0 %v767
        %2856 = vmatpush1.msra.mxu0 %v766
        %2857 = vmatprep.subr.mxu0 %v785
        %2858 = vmatpush1.msra.mxu0 %v784
        %2859 = vmatprep.subr.mxu0 %v803
        %2860 = vmatpush1.msra.mxu0 %v802
        %2861 = vmatprep.subr.mxu0 %v821
        %2862 = vmatpush1.msra.mxu0 %v820
        %2863 = vmatprep.subr.mxu0 %v839
        %2864 = vmatpush1.msra.mxu0 %v838
        %2865 = vmatprep.subr.mxu0 %v857
        %2866 = vmatpush1.msra.mxu0 %v856
        %2867 = vmatprep.subr.mxu0 %v875
        %2868 = vmatpush1.msra.mxu0 %v874
        %2869 = vmatprep.subr.mxu0 %v893
        %2870 = vmatpush1.msra.mxu0 %v892
        %2871 = vmatprep.subr.mxu0 %v911
        %2872 = vmatpush1.msra.mxu0 %v910
        %2873 = vmatprep.subr.mxu0 %v929
        %2874 = vmatpush1.msra.mxu0 %v928
        %2875 = vmatprep.subr.mxu0 %v947
        %2876 = vmatpush1.msra.mxu0 %v946
        %2877 = vmatprep.subr.mxu0 %v965
        %2878 = vmatpush1.msra.mxu0 %v964
        %2879 = vmatprep.subr.mxu0 %v983
        %2880 = vmatpush1.msra.mxu0 %v982
        %2881 = vmatprep.subr.mxu0 %v1001
        %2882 = vmatpush1.msra.mxu0 %v1000
        %2883 = vmatprep.subr.mxu0 %v1019
        %2884 = vmatpush1.msra.mxu0 %v1018
        %2885 = vmatprep.subr.mxu0 %v1037
        %2886 = vmatpush1.msra.mxu0 %v1036
        %2887 = vmatprep.subr.mxu0 %v1055
        %2888 = vmatpush1.msra.mxu0 %v1054
        %2889 = vmatprep.subr.mxu0 %v1073
        %2890 = vmatpush1.msra.mxu0 %v1072
        %2891 = vmatprep.subr.mxu0 %v1091
        %2892 = vmatpush1.msra.mxu0 %v1090
        %2893 = vmatprep.subr.mxu0 %v1109
        %2894 = vmatpush1.msra.mxu0 %v1108
        %2895 = vmatprep.subr.mxu0 %v1127
        %2896 = vmatpush1.msra.mxu0 %v1126
        %2897 = vmatprep.subr.mxu0 %v1145
        %2898 = vmatpush1.msra.mxu0 %v1144
        %2899 = vmatprep.subr.mxu0 %v1163
        %2900 = vmatpush1.msra.mxu0 %v1162
        %2901 = vmatprep.subr.mxu0 %v1181
        %2902 = vmatpush1.msra.mxu0 %v1180
        %2903 = vmatprep.subr.mxu0 %v1199
        %2904 = vmatpush1.msra.mxu0 %v1198
        %2905 = vmatprep.subr.mxu0 %v1217
        %2906 = vmatpush1.msra.mxu0 %v1216
        %2907 = vmatprep.subr.mxu0 %v1235
        %2908 = vmatpush1.msra.mxu0 %v1234
        %2909 = vmatprep.subr.mxu0 %v1253
        %2910 = vmatpush1.msra.mxu0 %v1252
        %2911 = vmatprep.subr.mxu0 %v1271
        %2912 = vmatpush1.msra.mxu0 %v1270
        %2913 = vmatprep.subr.mxu0 %v1289
        %2914 = vmatpush1.msra.mxu0 %v1288
        %2915 = vmatprep.mubr.f32.mxu0 %v2707
        %2916 = vmatmul.mubr.f32.gmra.mrb[0].mxu0 %v2705
        %v2917 = vpop.f32.mrb[0].mxu0
        %v2918 = vadd.f32 0.0, %v2917
        %v2919 = vpop.f32.mrb[0].mxu0
        %v2920 = vadd.f32 0.0, %v2919
        %2921 = vdwg.mxu0
        %2922 = vmatprep.subr.mxu0 %v733
        %2923 = vmatpush1.msra.mxu0 %v732
        %2924 = vmatprep.subr.mxu0 %v751
        %2925 = vmatpush1.msra.mxu0 %v750
        %2926 = vmatprep.subr.mxu0 %v769
        %2927 = vmatpush1.msra.mxu0 %v768
        %2928 = vmatprep.subr.mxu0 %v787
        %2929 = vmatpush1.msra.mxu0 %v786
        %2930 = vmatprep.subr.mxu0 %v805
        %2931 = vmatpush1.msra.mxu0 %v804
        %2932 = vmatprep.subr.mxu0 %v823
        %2933 = vmatpush1.msra.mxu0 %v822
        %2934 = vmatprep.subr.mxu0 %v841
        %2935 = vmatpush1.msra.mxu0 %v840
        %2936 = vmatprep.subr.mxu0 %v859
        %2937 = vmatpush1.msra.mxu0 %v858
        %2938 = vmatprep.subr.mxu0 %v877
        %2939 = vmatpush1.msra.mxu0 %v876
        %2940 = vmatprep.subr.mxu0 %v895
        %2941 = vmatpush1.msra.mxu0 %v894
        %2942 = vmatprep.subr.mxu0 %v913
        %2943 = vmatpush1.msra.mxu0 %v912
        %2944 = vmatprep.subr.mxu0 %v931
        %2945 = vmatpush1.msra.mxu0 %v930
        %2946 = vmatprep.subr.mxu0 %v949
        %2947 = vmatpush1.msra.mxu0 %v948
        %2948 = vmatprep.subr.mxu0 %v967
        %2949 = vmatpush1.msra.mxu0 %v966
        %2950 = vmatprep.subr.mxu0 %v985
        %2951 = vmatpush1.msra.mxu0 %v984
        %2952 = vmatprep.subr.mxu0 %v1003
        %2953 = vmatpush1.msra.mxu0 %v1002
        %2954 = vmatprep.subr.mxu0 %v1021
        %2955 = vmatpush1.msra.mxu0 %v1020
        %2956 = vmatprep.subr.mxu0 %v1039
        %2957 = vmatpush1.msra.mxu0 %v1038
        %2958 = vmatprep.subr.mxu0 %v1057
        %2959 = vmatpush1.msra.mxu0 %v1056
        %2960 = vmatprep.subr.mxu0 %v1075
        %2961 = vmatpush1.msra.mxu0 %v1074
        %2962 = vmatprep.subr.mxu0 %v1093
        %2963 = vmatpush1.msra.mxu0 %v1092
        %2964 = vmatprep.subr.mxu0 %v1111
        %2965 = vmatpush1.msra.mxu0 %v1110
        %2966 = vmatprep.subr.mxu0 %v1129
        %2967 = vmatpush1.msra.mxu0 %v1128
        %2968 = vmatprep.subr.mxu0 %v1147
        %2969 = vmatpush1.msra.mxu0 %v1146
        %2970 = vmatprep.subr.mxu0 %v1165
        %2971 = vmatpush1.msra.mxu0 %v1164
        %2972 = vmatprep.subr.mxu0 %v1183
        %2973 = vmatpush1.msra.mxu0 %v1182
        %2974 = vmatprep.subr.mxu0 %v1201
        %2975 = vmatpush1.msra.mxu0 %v1200
        %2976 = vmatprep.subr.mxu0 %v1219
        %2977 = vmatpush1.msra.mxu0 %v1218
        %2978 = vmatprep.subr.mxu0 %v1237
        %2979 = vmatpush1.msra.mxu0 %v1236
        %2980 = vmatprep.subr.mxu0 %v1255
        %2981 = vmatpush1.msra.mxu0 %v1254
        %2982 = vmatprep.subr.mxu0 %v1273
        %2983 = vmatpush1.msra.mxu0 %v1272
        %2984 = vmatprep.subr.mxu0 %v1291
        %2985 = vmatpush1.msra.mxu0 %v1290
        %2986 = vmatprep.mubr.f32.mxu0 %v2707
        %2987 = vmatmul.mubr.f32.gmra.mrb[0].mxu0 %v2705
        %v2988 = vpop.f32.mrb[0].mxu0
        %v2989 = vadd.f32 0.0, %v2988
        %v2990 = vpop.f32.mrb[0].mxu0
        %v2991 = vadd.f32 0.0, %v2990
        %2992 = vdwg.mxu0
        %2993 = vmatprep.subr.mxu0 %v735
        %2994 = vmatpush1.msra.mxu0 %v734
        %2995 = vmatprep.subr.mxu0 %v753
        %2996 = vmatpush1.msra.mxu0 %v752
        %2997 = vmatprep.subr.mxu0 %v771
        %2998 = vmatpush1.msra.mxu0 %v770
        %2999 = vmatprep.subr.mxu0 %v789
        %3000 = vmatpush1.msra.mxu0 %v788
        %3001 = vmatprep.subr.mxu0 %v807
        %3002 = vmatpush1.msra.mxu0 %v806
        %3003 = vmatprep.subr.mxu0 %v825
        %3004 = vmatpush1.msra.mxu0 %v824
        %3005 = vmatprep.subr.mxu0 %v843
        %3006 = vmatpush1.msra.mxu0 %v842
        %3007 = vmatprep.subr.mxu0 %v861
        %3008 = vmatpush1.msra.mxu0 %v860
        %3009 = vmatprep.subr.mxu0 %v879
        %3010 = vmatpush1.msra.mxu0 %v878
        %3011 = vmatprep.subr.mxu0 %v897
        %3012 = vmatpush1.msra.mxu0 %v896
        %3013 = vmatprep.subr.mxu0 %v915
        %3014 = vmatpush1.msra.mxu0 %v914
        %3015 = vmatprep.subr.mxu0 %v933
        %3016 = vmatpush1.msra.mxu0 %v932
        %3017 = vmatprep.subr.mxu0 %v951
        %3018 = vmatpush1.msra.mxu0 %v950
        %3019 = vmatprep.subr.mxu0 %v969
        %3020 = vmatpush1.msra.mxu0 %v968
        %3021 = vmatprep.subr.mxu0 %v987
        %3022 = vmatpush1.msra.mxu0 %v986
        %3023 = vmatprep.subr.mxu0 %v1005
        %3024 = vmatpush1.msra.mxu0 %v1004
        %3025 = vmatprep.subr.mxu0 %v1023
        %3026 = vmatpush1.msra.mxu0 %v1022
        %3027 = vmatprep.subr.mxu0 %v1041
        %3028 = vmatpush1.msra.mxu0 %v1040
        %3029 = vmatprep.subr.mxu0 %v1059
        %3030 = vmatpush1.msra.mxu0 %v1058
        %3031 = vmatprep.subr.mxu0 %v1077
        %3032 = vmatpush1.msra.mxu0 %v1076
        %3033 = vmatprep.subr.mxu0 %v1095
        %3034 = vmatpush1.msra.mxu0 %v1094
        %3035 = vmatprep.subr.mxu0 %v1113
        %3036 = vmatpush1.msra.mxu0 %v1112
        %3037 = vmatprep.subr.mxu0 %v1131
        %3038 = vmatpush1.msra.mxu0 %v1130
        %3039 = vmatprep.subr.mxu0 %v1149
        %3040 = vmatpush1.msra.mxu0 %v1148
        %3041 = vmatprep.subr.mxu0 %v1167
        %3042 = vmatpush1.msra.mxu0 %v1166
        %3043 = vmatprep.subr.mxu0 %v1185
        %3044 = vmatpush1.msra.mxu0 %v1184
        %3045 = vmatprep.subr.mxu0 %v1203
        %3046 = vmatpush1.msra.mxu0 %v1202
        %3047 = vmatprep.subr.mxu0 %v1221
        %3048 = vmatpush1.msra.mxu0 %v1220
        %3049 = vmatprep.subr.mxu0 %v1239
        %3050 = vmatpush1.msra.mxu0 %v1238
        %3051 = vmatprep.subr.mxu0 %v1257
        %3052 = vmatpush1.msra.mxu0 %v1256
        %3053 = vmatprep.subr.mxu0 %v1275
        %3054 = vmatpush1.msra.mxu0 %v1274
        %3055 = vmatprep.subr.mxu0 %v1293
        %3056 = vmatpush1.msra.mxu0 %v1292
        %3057 = vmatprep.mubr.f32.mxu0 %v2707
        %3058 = vmatmul.mubr.f32.gmra.mrb[0].mxu0 %v2705
        %v3059 = vpop.f32.mrb[0].mxu0
        %v3060 = vadd.f32 0.0, %v3059
        %v3061 = vpop.f32.mrb[0].mxu0
        %v3062 = vadd.f32 0.0, %v3061
        %3063 = vdwg.mxu0
        %3064 = vmatprep.subr.mxu0 %v737
        %3065 = vmatpush1.msra.mxu0 %v736
        %3066 = vmatprep.subr.mxu0 %v755
        %3067 = vmatpush1.msra.mxu0 %v754
        %3068 = vmatprep.subr.mxu0 %v773
        %3069 = vmatpush1.msra.mxu0 %v772
        %3070 = vmatprep.subr.mxu0 %v791
        %3071 = vmatpush1.msra.mxu0 %v790
        %3072 = vmatprep.subr.mxu0 %v809
        %3073 = vmatpush1.msra.mxu0 %v808
        %3074 = vmatprep.subr.mxu0 %v827
        %3075 = vmatpush1.msra.mxu0 %v826
        %3076 = vmatprep.subr.mxu0 %v845
        %3077 = vmatpush1.msra.mxu0 %v844
        %3078 = vmatprep.subr.mxu0 %v863
        %3079 = vmatpush1.msra.mxu0 %v862
        %3080 = vmatprep.subr.mxu0 %v881
        %3081 = vmatpush1.msra.mxu0 %v880
        %3082 = vmatprep.subr.mxu0 %v899
        %3083 = vmatpush1.msra.mxu0 %v898
        %3084 = vmatprep.subr.mxu0 %v917
        %3085 = vmatpush1.msra.mxu0 %v916
        %3086 = vmatprep.subr.mxu0 %v935
        %3087 = vmatpush1.msra.mxu0 %v934
        %3088 = vmatprep.subr.mxu0 %v953
        %3089 = vmatpush1.msra.mxu0 %v952
        %3090 = vmatprep.subr.mxu0 %v971
        %3091 = vmatpush1.msra.mxu0 %v970
        %3092 = vmatprep.subr.mxu0 %v989
        %3093 = vmatpush1.msra.mxu0 %v988
        %3094 = vmatprep.subr.mxu0 %v1007
        %3095 = vmatpush1.msra.mxu0 %v1006
        %3096 = vmatprep.subr.mxu0 %v1025
        %3097 = vmatpush1.msra.mxu0 %v1024
        %3098 = vmatprep.subr.mxu0 %v1043
        %3099 = vmatpush1.msra.mxu0 %v1042
        %3100 = vmatprep.subr.mxu0 %v1061
        %3101 = vmatpush1.msra.mxu0 %v1060
        %3102 = vmatprep.subr.mxu0 %v1079
        %3103 = vmatpush1.msra.mxu0 %v1078
        %3104 = vmatprep.subr.mxu0 %v1097
        %3105 = vmatpush1.msra.mxu0 %v1096
        %3106 = vmatprep.subr.mxu0 %v1115
        %3107 = vmatpush1.msra.mxu0 %v1114
        %3108 = vmatprep.subr.mxu0 %v1133
        %3109 = vmatpush1.msra.mxu0 %v1132
        %3110 = vmatprep.subr.mxu0 %v1151
        %3111 = vmatpush1.msra.mxu0 %v1150
        %3112 = vmatprep.subr.mxu0 %v1169
        %3113 = vmatpush1.msra.mxu0 %v1168
        %3114 = vmatprep.subr.mxu0 %v1187
        %3115 = vmatpush1.msra.mxu0 %v1186
        %3116 = vmatprep.subr.mxu0 %v1205
        %3117 = vmatpush1.msra.mxu0 %v1204
        %3118 = vmatprep.subr.mxu0 %v1223
        %3119 = vmatpush1.msra.mxu0 %v1222
        %3120 = vmatprep.subr.mxu0 %v1241
        %3121 = vmatpush1.msra.mxu0 %v1240
        %3122 = vmatprep.subr.mxu0 %v1259
        %3123 = vmatpush1.msra.mxu0 %v1258
        %3124 = vmatprep.subr.mxu0 %v1277
        %3125 = vmatpush1.msra.mxu0 %v1276
        %3126 = vmatprep.subr.mxu0 %v1295
        %3127 = vmatpush1.msra.mxu0 %v1294
        %3128 = vmatprep.mubr.f32.mxu0 %v2707
        %3129 = vmatmul.mubr.f32.gmra.mrb[0].mxu0 %v2705
        %v3130 = vpop.f32.mrb[0].mxu0
        %v3131 = vadd.f32 0.0, %v3130
        %v3132 = vpop.f32.mrb[0].mxu0
        %v3133 = vadd.f32 0.0, %v3132
        %3134 = vdwg.mxu0
        %3135 = vmatprep.subr.mxu0 %v739
        %3136 = vmatpush1.msra.mxu0 %v738
        %3137 = vmatprep.subr.mxu0 %v757
        %3138 = vmatpush1.msra.mxu0 %v756
        %3139 = vmatprep.subr.mxu0 %v775
        %3140 = vmatpush1.msra.mxu0 %v774
        %3141 = vmatprep.subr.mxu0 %v793
        %3142 = vmatpush1.msra.mxu0 %v792
        %3143 = vmatprep.subr.mxu0 %v811
        %3144 = vmatpush1.msra.mxu0 %v810
        %3145 = vmatprep.subr.mxu0 %v829
        %3146 = vmatpush1.msra.mxu0 %v828
        %3147 = vmatprep.subr.mxu0 %v847
        %3148 = vmatpush1.msra.mxu0 %v846
        %3149 = vmatprep.subr.mxu0 %v865
        %3150 = vmatpush1.msra.mxu0 %v864
        %3151 = vmatprep.subr.mxu0 %v883
        %3152 = vmatpush1.msra.mxu0 %v882
        %3153 = vmatprep.subr.mxu0 %v901
        %3154 = vmatpush1.msra.mxu0 %v900
        %3155 = vmatprep.subr.mxu0 %v919
        %3156 = vmatpush1.msra.mxu0 %v918
        %3157 = vmatprep.subr.mxu0 %v937
        %3158 = vmatpush1.msra.mxu0 %v936
        %3159 = vmatprep.subr.mxu0 %v955
        %3160 = vmatpush1.msra.mxu0 %v954
        %3161 = vmatprep.subr.mxu0 %v973
        %3162 = vmatpush1.msra.mxu0 %v972
        %3163 = vmatprep.subr.mxu0 %v991
        %3164 = vmatpush1.msra.mxu0 %v990
        %3165 = vmatprep.subr.mxu0 %v1009
        %3166 = vmatpush1.msra.mxu0 %v1008
        %3167 = vmatprep.subr.mxu0 %v1027
        %3168 = vmatpush1.msra.mxu0 %v1026
        %3169 = vmatprep.subr.mxu0 %v1045
        %3170 = vmatpush1.msra.mxu0 %v1044
        %3171 = vmatprep.subr.mxu0 %v1063
        %3172 = vmatpush1.msra.mxu0 %v1062
        %3173 = vmatprep.subr.mxu0 %v1081
        %3174 = vmatpush1.msra.mxu0 %v1080
        %3175 = vmatprep.subr.mxu0 %v1099
        %3176 = vmatpush1.msra.mxu0 %v1098
        %3177 = vmatprep.subr.mxu0 %v1117
        %3178 = vmatpush1.msra.mxu0 %v1116
        %3179 = vmatprep.subr.mxu0 %v1135
        %3180 = vmatpush1.msra.mxu0 %v1134
        %3181 = vmatprep.subr.mxu0 %v1153
        %3182 = vmatpush1.msra.mxu0 %v1152
        %3183 = vmatprep.subr.mxu0 %v1171
        %3184 = vmatpush1.msra.mxu0 %v1170
        %3185 = vmatprep.subr.mxu0 %v1189
        %3186 = vmatpush1.msra.mxu0 %v1188
        %3187 = vmatprep.subr.mxu0 %v1207
        %3188 = vmatpush1.msra.mxu0 %v1206
        %3189 = vmatprep.subr.mxu0 %v1225
        %3190 = vmatpush1.msra.mxu0 %v1224
        %3191 = vmatprep.subr.mxu0 %v1243
        %3192 = vmatpush1.msra.mxu0 %v1242
        %3193 = vmatprep.subr.mxu0 %v1261
        %3194 = vmatpush1.msra.mxu0 %v1260
        %3195 = vmatprep.subr.mxu0 %v1279
        %3196 = vmatpush1.msra.mxu0 %v1278
        %3197 = vmatprep.subr.mxu0 %v1297
        %3198 = vmatpush1.msra.mxu0 %v1296
        %3199 = vmatprep.mubr.f32.mxu0 %v2707
        %3200 = vmatmul.mubr.f32.gmra.mrb[0].mxu0 %v2705
        %v3201 = vpop.f32.mrb[0].mxu0
        %v3202 = vadd.f32 0.0, %v3201
        %v3203 = vpop.f32.mrb[0].mxu0
        %v3204 = vadd.f32 0.0, %v3203
        %3205 = vdwg.mxu0
        %3206 = vmatprep.subr.mxu0 %v741
        %3207 = vmatpush1.msra.mxu0 %v740
        %3208 = vmatprep.subr.mxu0 %v759
        %3209 = vmatpush1.msra.mxu0 %v758
        %3210 = vmatprep.subr.mxu0 %v777
        %3211 = vmatpush1.msra.mxu0 %v776
        %3212 = vmatprep.subr.mxu0 %v795
        %3213 = vmatpush1.msra.mxu0 %v794
        %3214 = vmatprep.subr.mxu0 %v813
        %3215 = vmatpush1.msra.mxu0 %v812
        %3216 = vmatprep.subr.mxu0 %v831
        %3217 = vmatpush1.msra.mxu0 %v830
        %3218 = vmatprep.subr.mxu0 %v849
        %3219 = vmatpush1.msra.mxu0 %v848
        %3220 = vmatprep.subr.mxu0 %v867
        %3221 = vmatpush1.msra.mxu0 %v866
        %3222 = vmatprep.subr.mxu0 %v885
        %3223 = vmatpush1.msra.mxu0 %v884
        %3224 = vmatprep.subr.mxu0 %v903
        %3225 = vmatpush1.msra.mxu0 %v902
        %3226 = vmatprep.subr.mxu0 %v921
        %3227 = vmatpush1.msra.mxu0 %v920
        %3228 = vmatprep.subr.mxu0 %v939
        %3229 = vmatpush1.msra.mxu0 %v938
        %3230 = vmatprep.subr.mxu0 %v957
        %3231 = vmatpush1.msra.mxu0 %v956
        %3232 = vmatprep.subr.mxu0 %v975
        %3233 = vmatpush1.msra.mxu0 %v974
        %3234 = vmatprep.subr.mxu0 %v993
        %3235 = vmatpush1.msra.mxu0 %v992
        %3236 = vmatprep.subr.mxu0 %v1011
        %3237 = vmatpush1.msra.mxu0 %v1010
        %3238 = vmatprep.subr.mxu0 %v1029
        %3239 = vmatpush1.msra.mxu0 %v1028
        %3240 = vmatprep.subr.mxu0 %v1047
        %3241 = vmatpush1.msra.mxu0 %v1046
        %3242 = vmatprep.subr.mxu0 %v1065
        %3243 = vmatpush1.msra.mxu0 %v1064
        %3244 = vmatprep.subr.mxu0 %v1083
        %3245 = vmatpush1.msra.mxu0 %v1082
        %3246 = vmatprep.subr.mxu0 %v1101
        %3247 = vmatpush1.msra.mxu0 %v1100
        %3248 = vmatprep.subr.mxu0 %v1119
        %3249 = vmatpush1.msra.mxu0 %v1118
        %3250 = vmatprep.subr.mxu0 %v1137
        %3251 = vmatpush1.msra.mxu0 %v1136
        %3252 = vmatprep.subr.mxu0 %v1155
        %3253 = vmatpush1.msra.mxu0 %v1154
        %3254 = vmatprep.subr.mxu0 %v1173
        %3255 = vmatpush1.msra.mxu0 %v1172
        %3256 = vmatprep.subr.mxu0 %v1191
        %3257 = vmatpush1.msra.mxu0 %v1190
        %3258 = vmatprep.subr.mxu0 %v1209
        %3259 = vmatpush1.msra.mxu0 %v1208
        %3260 = vmatprep.subr.mxu0 %v1227
        %3261 = vmatpush1.msra.mxu0 %v1226
        %3262 = vmatprep.subr.mxu0 %v1245
        %3263 = vmatpush1.msra.mxu0 %v1244
        %3264 = vmatprep.subr.mxu0 %v1263
        %3265 = vmatpush1.msra.mxu0 %v1262
        %3266 = vmatprep.subr.mxu0 %v1281
        %3267 = vmatpush1.msra.mxu0 %v1280
        %3268 = vmatprep.subr.mxu0 %v1299
        %3269 = vmatpush1.msra.mxu0 %v1298
        %3270 = vmatprep.mubr.f32.mxu0 %v2707
        %3271 = vmatmul.mubr.f32.gmra.mrb[0].mxu0 %v2705
        %v3272 = vpop.f32.mrb[0].mxu0
        %v3273 = vadd.f32 0.0, %v3272
        %v3274 = vpop.f32.mrb[0].mxu0
        %v3275 = vadd.f32 0.0, %v3274
        %3276 = vdwg.mxu0
        %3277 = vmatprep.subr.mxu0 %v743
        %3278 = vmatpush1.msra.mxu0 %v742
        %3279 = vmatprep.subr.mxu0 %v761
        %3280 = vmatpush1.msra.mxu0 %v760
        %3281 = vmatprep.subr.mxu0 %v779
        %3282 = vmatpush1.msra.mxu0 %v778
        %3283 = vmatprep.subr.mxu0 %v797
        %3284 = vmatpush1.msra.mxu0 %v796
        %3285 = vmatprep.subr.mxu0 %v815
        %3286 = vmatpush1.msra.mxu0 %v814
        %3287 = vmatprep.subr.mxu0 %v833
        %3288 = vmatpush1.msra.mxu0 %v832
        %3289 = vmatprep.subr.mxu0 %v851
        %3290 = vmatpush1.msra.mxu0 %v850
        %3291 = vmatprep.subr.mxu0 %v869
        %3292 = vmatpush1.msra.mxu0 %v868
        %3293 = vmatprep.subr.mxu0 %v887
        %3294 = vmatpush1.msra.mxu0 %v886
        %3295 = vmatprep.subr.mxu0 %v905
        %3296 = vmatpush1.msra.mxu0 %v904
        %3297 = vmatprep.subr.mxu0 %v923
        %3298 = vmatpush1.msra.mxu0 %v922
        %3299 = vmatprep.subr.mxu0 %v941
        %3300 = vmatpush1.msra.mxu0 %v940
        %3301 = vmatprep.subr.mxu0 %v959
        %3302 = vmatpush1.msra.mxu0 %v958
        %3303 = vmatprep.subr.mxu0 %v977
        %3304 = vmatpush1.msra.mxu0 %v976
        %3305 = vmatprep.subr.mxu0 %v995
        %3306 = vmatpush1.msra.mxu0 %v994
        %3307 = vmatprep.subr.mxu0 %v1013
        %3308 = vmatpush1.msra.mxu0 %v1012
        %3309 = vmatprep.subr.mxu0 %v1031
        %3310 = vmatpush1.msra.mxu0 %v1030
        %3311 = vmatprep.subr.mxu0 %v1049
        %3312 = vmatpush1.msra.mxu0 %v1048
        %3313 = vmatprep.subr.mxu0 %v1067
        %3314 = vmatpush1.msra.mxu0 %v1066
        %3315 = vmatprep.subr.mxu0 %v1085
        %3316 = vmatpush1.msra.mxu0 %v1084
        %3317 = vmatprep.subr.mxu0 %v1103
        %3318 = vmatpush1.msra.mxu0 %v1102
        %3319 = vmatprep.subr.mxu0 %v1121
        %3320 = vmatpush1.msra.mxu0 %v1120
        %3321 = vmatprep.subr.mxu0 %v1139
        %3322 = vmatpush1.msra.mxu0 %v1138
        %3323 = vmatprep.subr.mxu0 %v1157
        %3324 = vmatpush1.msra.mxu0 %v1156
        %3325 = vmatprep.subr.mxu0 %v1175
        %3326 = vmatpush1.msra.mxu0 %v1174
        %3327 = vmatprep.subr.mxu0 %v1193
        %3328 = vmatpush1.msra.mxu0 %v1192
        %3329 = vmatprep.subr.mxu0 %v1211
        %3330 = vmatpush1.msra.mxu0 %v1210
        %3331 = vmatprep.subr.mxu0 %v1229
        %3332 = vmatpush1.msra.mxu0 %v1228
        %3333 = vmatprep.subr.mxu0 %v1247
        %3334 = vmatpush1.msra.mxu0 %v1246
        %3335 = vmatprep.subr.mxu0 %v1265
        %3336 = vmatpush1.msra.mxu0 %v1264
        %3337 = vmatprep.subr.mxu0 %v1283
        %3338 = vmatpush1.msra.mxu0 %v1282
        %3339 = vmatprep.subr.mxu0 %v1301
        %3340 = vmatpush1.msra.mxu0 %v1300
        %3341 = vmatprep.mubr.f32.mxu0 %v2707
        %3342 = vmatmul.mubr.f32.gmra.mrb[0].mxu0 %v2705
        %v3343 = vpop.f32.mrb[0].mxu0
        %v3344 = vadd.f32 0.0, %v3343
        %v3345 = vpop.f32.mrb[0].mxu0
        %v3346 = vadd.f32 0.0, %v3345
        %3347 = vdwg.mxu0
        %v3348 = vld [vmem:[#allocation7] sm:$0xff]
        %s3349 = scalar_lea.vmem [#allocation7], 8
        %v3350 = vld [vmem:[%s3349] sm:$0xff]
        %v3352 = vsel %vm1947, %v3350, 0
        %v3355 = vsel %vm1951, %v2847, 0
        %v3358 = vsel %vm1951, %v2849, 0
        %3360 = vmatprep.subr.mxu0 %v3358
        %3361 = vmatpush1.msra.mxu0 %v3355
        %3362 = vmatprep.subr.mxu0 0.0
        %3363 = vmatpush1.msra.mxu0 0.0
        %3364 = vmatprep.subr.mxu0 0.0
        %3365 = vmatpush1.msra.mxu0 0.0
        %3366 = vmatprep.subr.mxu0 0.0
        %3367 = vmatpush1.msra.mxu0 0.0
        %3368 = vmatprep.subr.mxu0 0.0
        %3369 = vmatpush1.msra.mxu0 0.0
        %3370 = vmatprep.subr.mxu0 0.0
        %3371 = vmatpush1.msra.mxu0 0.0
        %3372 = vmatprep.subr.mxu0 0.0
        %3373 = vmatpush1.msra.mxu0 0.0
        %3374 = vmatprep.subr.mxu0 0.0
        %3375 = vmatpush1.msra.mxu0 0.0
        %3376 = vmatprep.subr.mxu0 0.0
        %3377 = vmatpush1.msra.mxu0 0.0
        %3378 = vmatprep.subr.mxu0 0.0
        %3379 = vmatpush1.msra.mxu0 0.0
        %3380 = vmatprep.subr.mxu0 0.0
        %3381 = vmatpush1.msra.mxu0 0.0
        %3382 = vmatprep.subr.mxu0 0.0
        %3383 = vmatpush1.msra.mxu0 0.0
        %3384 = vmatprep.subr.mxu0 0.0
        %3385 = vmatpush1.msra.mxu0 0.0
        %3386 = vmatprep.subr.mxu0 0.0
        %3387 = vmatpush1.msra.mxu0 0.0
        %3388 = vmatprep.subr.mxu0 0.0
        %3389 = vmatpush1.msra.mxu0 0.0
        %3390 = vmatprep.subr.mxu0 0.0
        %3391 = vmatpush1.msra.mxu0 0.0
        %3392 = vmatprep.subr.mxu0 0.0
        %3393 = vmatpush1.msra.mxu0 0.0
        %3394 = vmatprep.subr.mxu0 0.0
        %3395 = vmatpush1.msra.mxu0 0.0
        %3396 = vmatprep.subr.mxu0 0.0
        %3397 = vmatpush1.msra.mxu0 0.0
        %3398 = vmatprep.subr.mxu0 0.0
        %3399 = vmatpush1.msra.mxu0 0.0
        %3400 = vmatprep.subr.mxu0 0.0
        %3401 = vmatpush1.msra.mxu0 0.0
        %3402 = vmatprep.subr.mxu0 0.0
        %3403 = vmatpush1.msra.mxu0 0.0
        %3404 = vmatprep.subr.mxu0 0.0
        %3405 = vmatpush1.msra.mxu0 0.0
        %3406 = vmatprep.subr.mxu0 0.0
        %3407 = vmatpush1.msra.mxu0 0.0
        %3408 = vmatprep.subr.mxu0 0.0
        %3409 = vmatpush1.msra.mxu0 0.0
        %3410 = vmatprep.subr.mxu0 0.0
        %3411 = vmatpush1.msra.mxu0 0.0
        %3412 = vmatprep.subr.mxu0 0.0
        %3413 = vmatpush1.msra.mxu0 0.0
        %3414 = vmatprep.subr.mxu0 0.0
        %3415 = vmatpush1.msra.mxu0 0.0
        %3416 = vmatprep.subr.mxu0 0.0
        %3417 = vmatpush1.msra.mxu0 0.0
        %3418 = vmatprep.subr.mxu0 0.0
        %3419 = vmatpush1.msra.mxu0 0.0
        %3420 = vmatprep.subr.mxu0 0.0
        %3421 = vmatpush1.msra.mxu0 0.0
        %3422 = vmatprep.subr.mxu0 0.0
        %3423 = vmatpush1.msra.mxu0 0.0
        %3424 = vmatprep.mubr.f32.mxu0 0.0
        %3425 = vmatmul.mubr.f32.gmra.mrb[0].mxu0 %v3352
        %v3426 = vpop.f32.mrb[0].mxu0
        %v3427 = vadd.f32 0.0, %v3426
        %v3428 = vpop.f32.mrb[0].mxu0
        %v3429 = vadd.f32 0.0, %v3428
        %3430 = vdwg.mxu0
        %v3432 = vsel %vm1947, %v3348, 0
        %v3435 = vsel %vm1951, %v2776, 0
        %v3438 = vsel %vm1951, %v2778, 0
        %3440 = vmatprep.subr.mxu0 %v3438
        %3441 = vmatpush1.msra.mxu0 %v3435
        %3442 = vmatprep.subr.mxu0 0.0
        %3443 = vmatpush1.msra.mxu0 0.0
        %3444 = vmatprep.subr.mxu0 0.0
        %3445 = vmatpush1.msra.mxu0 0.0
        %3446 = vmatprep.subr.mxu0 0.0
        %3447 = vmatpush1.msra.mxu0 0.0
        %3448 = vmatprep.subr.mxu0 0.0
        %3449 = vmatpush1.msra.mxu0 0.0
        %3450 = vmatprep.subr.mxu0 0.0
        %3451 = vmatpush1.msra.mxu0 0.0
        %3452 = vmatprep.subr.mxu0 0.0
        %3453 = vmatpush1.msra.mxu0 0.0
        %3454 = vmatprep.subr.mxu0 0.0
        %3455 = vmatpush1.msra.mxu0 0.0
        %3456 = vmatprep.subr.mxu0 0.0
        %3457 = vmatpush1.msra.mxu0 0.0
        %3458 = vmatprep.subr.mxu0 0.0
        %3459 = vmatpush1.msra.mxu0 0.0
        %3460 = vmatprep.subr.mxu0 0.0
        %3461 = vmatpush1.msra.mxu0 0.0
        %3462 = vmatprep.subr.mxu0 0.0
        %3463 = vmatpush1.msra.mxu0 0.0
        %3464 = vmatprep.subr.mxu0 0.0
        %3465 = vmatpush1.msra.mxu0 0.0
        %3466 = vmatprep.subr.mxu0 0.0
        %3467 = vmatpush1.msra.mxu0 0.0
        %3468 = vmatprep.subr.mxu0 0.0
        %3469 = vmatpush1.msra.mxu0 0.0
        %3470 = vmatprep.subr.mxu0 0.0
        %3471 = vmatpush1.msra.mxu0 0.0
        %3472 = vmatprep.subr.mxu0 0.0
        %3473 = vmatpush1.msra.mxu0 0.0
        %3474 = vmatprep.subr.mxu0 0.0
        %3475 = vmatpush1.msra.mxu0 0.0
        %3476 = vmatprep.subr.mxu0 0.0
        %3477 = vmatpush1.msra.mxu0 0.0
        %3478 = vmatprep.subr.mxu0 0.0
        %3479 = vmatpush1.msra.mxu0 0.0
        %3480 = vmatprep.subr.mxu0 0.0
        %3481 = vmatpush1.msra.mxu0 0.0
        %3482 = vmatprep.subr.mxu0 0.0
        %3483 = vmatpush1.msra.mxu0 0.0
        %3484 = vmatprep.subr.mxu0 0.0
        %3485 = vmatpush1.msra.mxu0 0.0
        %3486 = vmatprep.subr.mxu0 0.0
        %3487 = vmatpush1.msra.mxu0 0.0
        %3488 = vmatprep.subr.mxu0 0.0
        %3489 = vmatpush1.msra.mxu0 0.0
        %3490 = vmatprep.subr.mxu0 0.0
        %3491 = vmatpush1.msra.mxu0 0.0
        %3492 = vmatprep.subr.mxu0 0.0
        %3493 = vmatpush1.msra.mxu0 0.0
        %3494 = vmatprep.subr.mxu0 0.0
        %3495 = vmatpush1.msra.mxu0 0.0
        %3496 = vmatprep.subr.mxu0 0.0
        %3497 = vmatpush1.msra.mxu0 0.0
        %3498 = vmatprep.subr.mxu0 0.0
        %3499 = vmatpush1.msra.mxu0 0.0
        %3500 = vmatprep.subr.mxu0 0.0
        %3501 = vmatpush1.msra.mxu0 0.0
        %3502 = vmatprep.subr.mxu0 0.0
        %3503 = vmatpush1.msra.mxu0 0.0
        %3504 = vmatprep.mubr.f32.mxu0 0.0
        %3505 = vmatmul.mubr.f32.gmra.mrb[0].mxu0 %v3432
        %v3506 = vpop.f32.mrb[0].mxu0
        %v3507 = vadd.f32 %v3427, %v3506
        %v3508 = vpop.f32.mrb[0].mxu0
        %v3509 = vadd.f32 %v3429, %v3508
        %3510 = vdwg.mxu0
        %s3511 = scalar_lea.vmem [#allocation7], 16
        %v3512 = vld [vmem:[%s3511] sm:$0xff]
        %v3514 = vsel %vm1947, %v3512, 0
        %v3517 = vsel %vm1951, %v2918, 0
        %v3520 = vsel %vm1951, %v2920, 0
        %3522 = vmatprep.subr.mxu0 %v3520
        %3523 = vmatpush1.msra.mxu0 %v3517
        %3524 = vmatprep.subr.mxu0 0.0
        %3525 = vmatpush1.msra.mxu0 0.0
        %3526 = vmatprep.subr.mxu0 0.0
        %3527 = vmatpush1.msra.mxu0 0.0
        %3528 = vmatprep.subr.mxu0 0.0
        %3529 = vmatpush1.msra.mxu0 0.0
        %3530 = vmatprep.subr.mxu0 0.0
        %3531 = vmatpush1.msra.mxu0 0.0
        %3532 = vmatprep.subr.mxu0 0.0
        %3533 = vmatpush1.msra.mxu0 0.0
        %3534 = vmatprep.subr.mxu0 0.0
        %3535 = vmatpush1.msra.mxu0 0.0
        %3536 = vmatprep.subr.mxu0 0.0
        %3537 = vmatpush1.msra.mxu0 0.0
        %3538 = vmatprep.subr.mxu0 0.0
        %3539 = vmatpush1.msra.mxu0 0.0
        %3540 = vmatprep.subr.mxu0 0.0
        %3541 = vmatpush1.msra.mxu0 0.0
        %3542 = vmatprep.subr.mxu0 0.0
        %3543 = vmatpush1.msra.mxu0 0.0
        %3544 = vmatprep.subr.mxu0 0.0
        %3545 = vmatpush1.msra.mxu0 0.0
        %3546 = vmatprep.subr.mxu0 0.0
        %3547 = vmatpush1.msra.mxu0 0.0
        %3548 = vmatprep.subr.mxu0 0.0
        %3549 = vmatpush1.msra.mxu0 0.0
        %3550 = vmatprep.subr.mxu0 0.0
        %3551 = vmatpush1.msra.mxu0 0.0
        %3552 = vmatprep.subr.mxu0 0.0
        %3553 = vmatpush1.msra.mxu0 0.0
        %3554 = vmatprep.subr.mxu0 0.0
        %3555 = vmatpush1.msra.mxu0 0.0
        %3556 = vmatprep.subr.mxu0 0.0
        %3557 = vmatpush1.msra.mxu0 0.0
        %3558 = vmatprep.subr.mxu0 0.0
        %3559 = vmatpush1.msra.mxu0 0.0
        %3560 = vmatprep.subr.mxu0 0.0
        %3561 = vmatpush1.msra.mxu0 0.0
        %3562 = vmatprep.subr.mxu0 0.0
        %3563 = vmatpush1.msra.mxu0 0.0
        %3564 = vmatprep.subr.mxu0 0.0
        %3565 = vmatpush1.msra.mxu0 0.0
        %3566 = vmatprep.subr.mxu0 0.0
        %3567 = vmatpush1.msra.mxu0 0.0
        %3568 = vmatprep.subr.mxu0 0.0
        %3569 = vmatpush1.msra.mxu0 0.0
        %3570 = vmatprep.subr.mxu0 0.0
        %3571 = vmatpush1.msra.mxu0 0.0
        %3572 = vmatprep.subr.mxu0 0.0
        %3573 = vmatpush1.msra.mxu0 0.0
        %3574 = vmatprep.subr.mxu0 0.0
        %3575 = vmatpush1.msra.mxu0 0.0
        %3576 = vmatprep.subr.mxu0 0.0
        %3577 = vmatpush1.msra.mxu0 0.0
        %3578 = vmatprep.subr.mxu0 0.0
        %3579 = vmatpush1.msra.mxu0 0.0
        %3580 = vmatprep.subr.mxu0 0.0
        %3581 = vmatpush1.msra.mxu0 0.0
        %3582 = vmatprep.subr.mxu0 0.0
        %3583 = vmatpush1.msra.mxu0 0.0
        %3584 = vmatprep.subr.mxu0 0.0
        %3585 = vmatpush1.msra.mxu0 0.0
        %3586 = vmatprep.mubr.f32.mxu0 0.0
        %3587 = vmatmul.mubr.f32.gmra.mrb[0].mxu0 %v3514
        %v3588 = vpop.f32.mrb[0].mxu0
        %v3589 = vadd.f32 0.0, %v3588
        %v3590 = vpop.f32.mrb[0].mxu0
        %v3591 = vadd.f32 0.0, %v3590
        %3592 = vdwg.mxu0
        %v3593 = vadd.f32 %v3507, %v3589
        %v3594 = vadd.f32 %v3509, %v3591
        %s3595 = scalar_lea.vmem [#allocation7], 24
        %v3596 = vld [vmem:[%s3595] sm:$0xff]
        %v3598 = vsel %vm1947, %v3596, 0
        %v3601 = vsel %vm1951, %v2989, 0
        %v3604 = vsel %vm1951, %v2991, 0
        %3606 = vmatprep.subr.mxu0 %v3604
        %3607 = vmatpush1.msra.mxu0 %v3601
        %3608 = vmatprep.subr.mxu0 0.0
        %3609 = vmatpush1.msra.mxu0 0.0
        %3610 = vmatprep.subr.mxu0 0.0
        %3611 = vmatpush1.msra.mxu0 0.0
        %3612 = vmatprep.subr.mxu0 0.0
        %3613 = vmatpush1.msra.mxu0 0.0
        %3614 = vmatprep.subr.mxu0 0.0
        %3615 = vmatpush1.msra.mxu0 0.0
        %3616 = vmatprep.subr.mxu0 0.0
        %3617 = vmatpush1.msra.mxu0 0.0
        %3618 = vmatprep.subr.mxu0 0.0
        %3619 = vmatpush1.msra.mxu0 0.0
        %3620 = vmatprep.subr.mxu0 0.0
        %3621 = vmatpush1.msra.mxu0 0.0
        %3622 = vmatprep.subr.mxu0 0.0
        %3623 = vmatpush1.msra.mxu0 0.0
        %3624 = vmatprep.subr.mxu0 0.0
        %3625 = vmatpush1.msra.mxu0 0.0
        %3626 = vmatprep.subr.mxu0 0.0
        %3627 = vmatpush1.msra.mxu0 0.0
        %3628 = vmatprep.subr.mxu0 0.0
        %3629 = vmatpush1.msra.mxu0 0.0
        %3630 = vmatprep.subr.mxu0 0.0
        %3631 = vmatpush1.msra.mxu0 0.0
        %3632 = vmatprep.subr.mxu0 0.0
        %3633 = vmatpush1.msra.mxu0 0.0
        %3634 = vmatprep.subr.mxu0 0.0
        %3635 = vmatpush1.msra.mxu0 0.0
        %3636 = vmatprep.subr.mxu0 0.0
        %3637 = vmatpush1.msra.mxu0 0.0
        %3638 = vmatprep.subr.mxu0 0.0
        %3639 = vmatpush1.msra.mxu0 0.0
        %3640 = vmatprep.subr.mxu0 0.0
        %3641 = vmatpush1.msra.mxu0 0.0
        %3642 = vmatprep.subr.mxu0 0.0
        %3643 = vmatpush1.msra.mxu0 0.0
        %3644 = vmatprep.subr.mxu0 0.0
        %3645 = vmatpush1.msra.mxu0 0.0
        %3646 = vmatprep.subr.mxu0 0.0
        %3647 = vmatpush1.msra.mxu0 0.0
        %3648 = vmatprep.subr.mxu0 0.0
        %3649 = vmatpush1.msra.mxu0 0.0
        %3650 = vmatprep.subr.mxu0 0.0
        %3651 = vmatpush1.msra.mxu0 0.0
        %3652 = vmatprep.subr.mxu0 0.0
        %3653 = vmatpush1.msra.mxu0 0.0
        %3654 = vmatprep.subr.mxu0 0.0
        %3655 = vmatpush1.msra.mxu0 0.0
        %3656 = vmatprep.subr.mxu0 0.0
        %3657 = vmatpush1.msra.mxu0 0.0
        %3658 = vmatprep.subr.mxu0 0.0
        %3659 = vmatpush1.msra.mxu0 0.0
        %3660 = vmatprep.subr.mxu0 0.0
        %3661 = vmatpush1.msra.mxu0 0.0
        %3662 = vmatprep.subr.mxu0 0.0
        %3663 = vmatpush1.msra.mxu0 0.0
        %3664 = vmatprep.subr.mxu0 0.0
        %3665 = vmatpush1.msra.mxu0 0.0
        %3666 = vmatprep.subr.mxu0 0.0
        %3667 = vmatpush1.msra.mxu0 0.0
        %3668 = vmatprep.subr.mxu0 0.0
        %3669 = vmatpush1.msra.mxu0 0.0
        %3670 = vmatprep.mubr.f32.mxu0 0.0
        %3671 = vmatmul.mubr.f32.gmra.mrb[0].mxu0 %v3598
        %v3672 = vpop.f32.mrb[0].mxu0
        %v3673 = vadd.f32 0.0, %v3672
        %v3674 = vpop.f32.mrb[0].mxu0
        %v3675 = vadd.f32 0.0, %v3674
        %3676 = vdwg.mxu0
        %v3677 = vadd.f32 %v3593, %v3673
        %v3678 = vadd.f32 %v3594, %v3675
        %s3679 = scalar_lea.vmem [#allocation7], 32
        %v3680 = vld [vmem:[%s3679] sm:$0xff]
        %v3682 = vsel %vm1947, %v3680, 0
        %v3685 = vsel %vm1951, %v3060, 0
        %v3688 = vsel %vm1951, %v3062, 0
        %3690 = vmatprep.subr.mxu0 %v3688
        %3691 = vmatpush1.msra.mxu0 %v3685
        %3692 = vmatprep.subr.mxu0 0.0
        %3693 = vmatpush1.msra.mxu0 0.0
        %3694 = vmatprep.subr.mxu0 0.0
        %3695 = vmatpush1.msra.mxu0 0.0
        %3696 = vmatprep.subr.mxu0 0.0
        %3697 = vmatpush1.msra.mxu0 0.0
        %3698 = vmatprep.subr.mxu0 0.0
        %3699 = vmatpush1.msra.mxu0 0.0
        %3700 = vmatprep.subr.mxu0 0.0
        %3701 = vmatpush1.msra.mxu0 0.0
        %3702 = vmatprep.subr.mxu0 0.0
        %3703 = vmatpush1.msra.mxu0 0.0
        %3704 = vmatprep.subr.mxu0 0.0
        %3705 = vmatpush1.msra.mxu0 0.0
        %3706 = vmatprep.subr.mxu0 0.0
        %3707 = vmatpush1.msra.mxu0 0.0
        %3708 = vmatprep.subr.mxu0 0.0
        %3709 = vmatpush1.msra.mxu0 0.0
        %3710 = vmatprep.subr.mxu0 0.0
        %3711 = vmatpush1.msra.mxu0 0.0
        %3712 = vmatprep.subr.mxu0 0.0
        %3713 = vmatpush1.msra.mxu0 0.0
        %3714 = vmatprep.subr.mxu0 0.0
        %3715 = vmatpush1.msra.mxu0 0.0
        %3716 = vmatprep.subr.mxu0 0.0
        %3717 = vmatpush1.msra.mxu0 0.0
        %3718 = vmatprep.subr.mxu0 0.0
        %3719 = vmatpush1.msra.mxu0 0.0
        %3720 = vmatprep.subr.mxu0 0.0
        %3721 = vmatpush1.msra.mxu0 0.0
        %3722 = vmatprep.subr.mxu0 0.0
        %3723 = vmatpush1.msra.mxu0 0.0
        %3724 = vmatprep.subr.mxu0 0.0
        %3725 = vmatpush1.msra.mxu0 0.0
        %3726 = vmatprep.subr.mxu0 0.0
        %3727 = vmatpush1.msra.mxu0 0.0
        %3728 = vmatprep.subr.mxu0 0.0
        %3729 = vmatpush1.msra.mxu0 0.0
        %3730 = vmatprep.subr.mxu0 0.0
        %3731 = vmatpush1.msra.mxu0 0.0
        %3732 = vmatprep.subr.mxu0 0.0
        %3733 = vmatpush1.msra.mxu0 0.0
        %3734 = vmatprep.subr.mxu0 0.0
        %3735 = vmatpush1.msra.mxu0 0.0
        %3736 = vmatprep.subr.mxu0 0.0
        %3737 = vmatpush1.msra.mxu0 0.0
        %3738 = vmatprep.subr.mxu0 0.0
        %3739 = vmatpush1.msra.mxu0 0.0
        %3740 = vmatprep.subr.mxu0 0.0
        %3741 = vmatpush1.msra.mxu0 0.0
        %3742 = vmatprep.subr.mxu0 0.0
        %3743 = vmatpush1.msra.mxu0 0.0
        %3744 = vmatprep.subr.mxu0 0.0
        %3745 = vmatpush1.msra.mxu0 0.0
        %3746 = vmatprep.subr.mxu0 0.0
        %3747 = vmatpush1.msra.mxu0 0.0
        %3748 = vmatprep.subr.mxu0 0.0
        %3749 = vmatpush1.msra.mxu0 0.0
        %3750 = vmatprep.subr.mxu0 0.0
        %3751 = vmatpush1.msra.mxu0 0.0
        %3752 = vmatprep.subr.mxu0 0.0
        %3753 = vmatpush1.msra.mxu0 0.0
        %3754 = vmatprep.mubr.f32.mxu0 0.0
        %3755 = vmatmul.mubr.f32.gmra.mrb[0].mxu0 %v3682
        %v3756 = vpop.f32.mrb[0].mxu0
        %v3757 = vadd.f32 0.0, %v3756
        %v3758 = vpop.f32.mrb[0].mxu0
        %v3759 = vadd.f32 0.0, %v3758
        %3760 = vdwg.mxu0
        %v3761 = vadd.f32 %v3677, %v3757
        %v3762 = vadd.f32 %v3678, %v3759
        %s3763 = scalar_lea.vmem [#allocation7], 40
        %v3764 = vld [vmem:[%s3763] sm:$0xff]
        %v3766 = vsel %vm1947, %v3764, 0
        %v3769 = vsel %vm1951, %v3131, 0
        %v3772 = vsel %vm1951, %v3133, 0
        %3774 = vmatprep.subr.mxu0 %v3772
        %3775 = vmatpush1.msra.mxu0 %v3769
        %3776 = vmatprep.subr.mxu0 0.0
        %3777 = vmatpush1.msra.mxu0 0.0
        %3778 = vmatprep.subr.mxu0 0.0
        %3779 = vmatpush1.msra.mxu0 0.0
        %3780 = vmatprep.subr.mxu0 0.0
        %3781 = vmatpush1.msra.mxu0 0.0
        %3782 = vmatprep.subr.mxu0 0.0
        %3783 = vmatpush1.msra.mxu0 0.0
        %3784 = vmatprep.subr.mxu0 0.0
        %3785 = vmatpush1.msra.mxu0 0.0
        %3786 = vmatprep.subr.mxu0 0.0
        %3787 = vmatpush1.msra.mxu0 0.0
        %3788 = vmatprep.subr.mxu0 0.0
        %3789 = vmatpush1.msra.mxu0 0.0
        %3790 = vmatprep.subr.mxu0 0.0
        %3791 = vmatpush1.msra.mxu0 0.0
        %3792 = vmatprep.subr.mxu0 0.0
        %3793 = vmatpush1.msra.mxu0 0.0
        %3794 = vmatprep.subr.mxu0 0.0
        %3795 = vmatpush1.msra.mxu0 0.0
        %3796 = vmatprep.subr.mxu0 0.0
        %3797 = vmatpush1.msra.mxu0 0.0
        %3798 = vmatprep.subr.mxu0 0.0
        %3799 = vmatpush1.msra.mxu0 0.0
        %3800 = vmatprep.subr.mxu0 0.0
        %3801 = vmatpush1.msra.mxu0 0.0
        %3802 = vmatprep.subr.mxu0 0.0
        %3803 = vmatpush1.msra.mxu0 0.0
        %3804 = vmatprep.subr.mxu0 0.0
        %3805 = vmatpush1.msra.mxu0 0.0
        %3806 = vmatprep.subr.mxu0 0.0
        %3807 = vmatpush1.msra.mxu0 0.0
        %3808 = vmatprep.subr.mxu0 0.0
        %3809 = vmatpush1.msra.mxu0 0.0
        %3810 = vmatprep.subr.mxu0 0.0
        %3811 = vmatpush1.msra.mxu0 0.0
        %3812 = vmatprep.subr.mxu0 0.0
        %3813 = vmatpush1.msra.mxu0 0.0
        %3814 = vmatprep.subr.mxu0 0.0
        %3815 = vmatpush1.msra.mxu0 0.0
        %3816 = vmatprep.subr.mxu0 0.0
        %3817 = vmatpush1.msra.mxu0 0.0
        %3818 = vmatprep.subr.mxu0 0.0
        %3819 = vmatpush1.msra.mxu0 0.0
        %3820 = vmatprep.subr.mxu0 0.0
        %3821 = vmatpush1.msra.mxu0 0.0
        %3822 = vmatprep.subr.mxu0 0.0
        %3823 = vmatpush1.msra.mxu0 0.0
        %3824 = vmatprep.subr.mxu0 0.0
        %3825 = vmatpush1.msra.mxu0 0.0
        %3826 = vmatprep.subr.mxu0 0.0
        %3827 = vmatpush1.msra.mxu0 0.0
        %3828 = vmatprep.subr.mxu0 0.0
        %3829 = vmatpush1.msra.mxu0 0.0
        %3830 = vmatprep.subr.mxu0 0.0
        %3831 = vmatpush1.msra.mxu0 0.0
        %3832 = vmatprep.subr.mxu0 0.0
        %3833 = vmatpush1.msra.mxu0 0.0
        %3834 = vmatprep.subr.mxu0 0.0
        %3835 = vmatpush1.msra.mxu0 0.0
        %3836 = vmatprep.subr.mxu0 0.0
        %3837 = vmatpush1.msra.mxu0 0.0
        %3838 = vmatprep.mubr.f32.mxu0 0.0
        %3839 = vmatmul.mubr.f32.gmra.mrb[0].mxu0 %v3766
        %v3840 = vpop.f32.mrb[0].mxu0
        %v3841 = vadd.f32 0.0, %v3840
        %v3842 = vpop.f32.mrb[0].mxu0
        %v3843 = vadd.f32 0.0, %v3842
        %3844 = vdwg.mxu0
        %v3845 = vadd.f32 %v3761, %v3841
        %v3846 = vadd.f32 %v3762, %v3843
        %s3847 = scalar_lea.vmem [#allocation7], 48
        %v3848 = vld [vmem:[%s3847] sm:$0xff]
        %v3850 = vsel %vm1947, %v3848, 0
        %v3853 = vsel %vm1951, %v3202, 0
        %v3856 = vsel %vm1951, %v3204, 0
        %3858 = vmatprep.subr.mxu0 %v3856
        %3859 = vmatpush1.msra.mxu0 %v3853
        %3860 = vmatprep.subr.mxu0 0.0
        %3861 = vmatpush1.msra.mxu0 0.0
        %3862 = vmatprep.subr.mxu0 0.0
        %3863 = vmatpush1.msra.mxu0 0.0
        %3864 = vmatprep.subr.mxu0 0.0
        %3865 = vmatpush1.msra.mxu0 0.0
        %3866 = vmatprep.subr.mxu0 0.0
        %3867 = vmatpush1.msra.mxu0 0.0
        %3868 = vmatprep.subr.mxu0 0.0
        %3869 = vmatpush1.msra.mxu0 0.0
        %3870 = vmatprep.subr.mxu0 0.0
        %3871 = vmatpush1.msra.mxu0 0.0
        %3872 = vmatprep.subr.mxu0 0.0
        %3873 = vmatpush1.msra.mxu0 0.0
        %3874 = vmatprep.subr.mxu0 0.0
        %3875 = vmatpush1.msra.mxu0 0.0
        %3876 = vmatprep.subr.mxu0 0.0
        %3877 = vmatpush1.msra.mxu0 0.0
        %3878 = vmatprep.subr.mxu0 0.0
        %3879 = vmatpush1.msra.mxu0 0.0
        %3880 = vmatprep.subr.mxu0 0.0
        %3881 = vmatpush1.msra.mxu0 0.0
        %3882 = vmatprep.subr.mxu0 0.0
        %3883 = vmatpush1.msra.mxu0 0.0
        %3884 = vmatprep.subr.mxu0 0.0
        %3885 = vmatpush1.msra.mxu0 0.0
        %3886 = vmatprep.subr.mxu0 0.0
        %3887 = vmatpush1.msra.mxu0 0.0
        %3888 = vmatprep.subr.mxu0 0.0
        %3889 = vmatpush1.msra.mxu0 0.0
        %3890 = vmatprep.subr.mxu0 0.0
        %3891 = vmatpush1.msra.mxu0 0.0
        %3892 = vmatprep.subr.mxu0 0.0
        %3893 = vmatpush1.msra.mxu0 0.0
        %3894 = vmatprep.subr.mxu0 0.0
        %3895 = vmatpush1.msra.mxu0 0.0
        %3896 = vmatprep.subr.mxu0 0.0
        %3897 = vmatpush1.msra.mxu0 0.0
        %3898 = vmatprep.subr.mxu0 0.0
        %3899 = vmatpush1.msra.mxu0 0.0
        %3900 = vmatprep.subr.mxu0 0.0
        %3901 = vmatpush1.msra.mxu0 0.0
        %3902 = vmatprep.subr.mxu0 0.0
        %3903 = vmatpush1.msra.mxu0 0.0
        %3904 = vmatprep.subr.mxu0 0.0
        %3905 = vmatpush1.msra.mxu0 0.0
        %3906 = vmatprep.subr.mxu0 0.0
        %3907 = vmatpush1.msra.mxu0 0.0
        %3908 = vmatprep.subr.mxu0 0.0
        %3909 = vmatpush1.msra.mxu0 0.0
        %3910 = vmatprep.subr.mxu0 0.0
        %3911 = vmatpush1.msra.mxu0 0.0
        %3912 = vmatprep.subr.mxu0 0.0
        %3913 = vmatpush1.msra.mxu0 0.0
        %3914 = vmatprep.subr.mxu0 0.0
        %3915 = vmatpush1.msra.mxu0 0.0
        %3916 = vmatprep.subr.mxu0 0.0
        %3917 = vmatpush1.msra.mxu0 0.0
        %3918 = vmatprep.subr.mxu0 0.0
        %3919 = vmatpush1.msra.mxu0 0.0
        %3920 = vmatprep.subr.mxu0 0.0
        %3921 = vmatpush1.msra.mxu0 0.0
        %3922 = vmatprep.mubr.f32.mxu0 0.0
        %3923 = vmatmul.mubr.f32.gmra.mrb[0].mxu0 %v3850
        %v3924 = vpop.f32.mrb[0].mxu0
        %v3925 = vadd.f32 0.0, %v3924
        %v3926 = vpop.f32.mrb[0].mxu0
        %v3927 = vadd.f32 0.0, %v3926
        %3928 = vdwg.mxu0
        %v3929 = vadd.f32 %v3845, %v3925
        %v3930 = vadd.f32 %v3846, %v3927
        %s3931 = scalar_lea.vmem [#allocation7], 56
        %v3932 = vld [vmem:[%s3931] sm:$0xff]
        %v3934 = vsel %vm1947, %v3932, 0
        %v3937 = vsel %vm1951, %v3273, 0
        %v3940 = vsel %vm1951, %v3275, 0
        %3942 = vmatprep.subr.mxu0 %v3940
        %3943 = vmatpush1.msra.mxu0 %v3937
        %3944 = vmatprep.subr.mxu0 0.0
        %3945 = vmatpush1.msra.mxu0 0.0
        %3946 = vmatprep.subr.mxu0 0.0
        %3947 = vmatpush1.msra.mxu0 0.0
        %3948 = vmatprep.subr.mxu0 0.0
        %3949 = vmatpush1.msra.mxu0 0.0
        %3950 = vmatprep.subr.mxu0 0.0
        %3951 = vmatpush1.msra.mxu0 0.0
        %3952 = vmatprep.subr.mxu0 0.0
        %3953 = vmatpush1.msra.mxu0 0.0
        %3954 = vmatprep.subr.mxu0 0.0
        %3955 = vmatpush1.msra.mxu0 0.0
        %3956 = vmatprep.subr.mxu0 0.0
        %3957 = vmatpush1.msra.mxu0 0.0
        %3958 = vmatprep.subr.mxu0 0.0
        %3959 = vmatpush1.msra.mxu0 0.0
        %3960 = vmatprep.subr.mxu0 0.0
        %3961 = vmatpush1.msra.mxu0 0.0
        %3962 = vmatprep.subr.mxu0 0.0
        %3963 = vmatpush1.msra.mxu0 0.0
        %3964 = vmatprep.subr.mxu0 0.0
        %3965 = vmatpush1.msra.mxu0 0.0
        %3966 = vmatprep.subr.mxu0 0.0
        %3967 = vmatpush1.msra.mxu0 0.0
        %3968 = vmatprep.subr.mxu0 0.0
        %3969 = vmatpush1.msra.mxu0 0.0
        %3970 = vmatprep.subr.mxu0 0.0
        %3971 = vmatpush1.msra.mxu0 0.0
        %3972 = vmatprep.subr.mxu0 0.0
        %3973 = vmatpush1.msra.mxu0 0.0
        %3974 = vmatprep.subr.mxu0 0.0
        %3975 = vmatpush1.msra.mxu0 0.0
        %3976 = vmatprep.subr.mxu0 0.0
        %3977 = vmatpush1.msra.mxu0 0.0
        %3978 = vmatprep.subr.mxu0 0.0
        %3979 = vmatpush1.msra.mxu0 0.0
        %3980 = vmatprep.subr.mxu0 0.0
        %3981 = vmatpush1.msra.mxu0 0.0
        %3982 = vmatprep.subr.mxu0 0.0
        %3983 = vmatpush1.msra.mxu0 0.0
        %3984 = vmatprep.subr.mxu0 0.0
        %3985 = vmatpush1.msra.mxu0 0.0
        %3986 = vmatprep.subr.mxu0 0.0
        %3987 = vmatpush1.msra.mxu0 0.0
        %3988 = vmatprep.subr.mxu0 0.0
        %3989 = vmatpush1.msra.mxu0 0.0
        %3990 = vmatprep.subr.mxu0 0.0
        %3991 = vmatpush1.msra.mxu0 0.0
        %3992 = vmatprep.subr.mxu0 0.0
        %3993 = vmatpush1.msra.mxu0 0.0
        %3994 = vmatprep.subr.mxu0 0.0
        %3995 = vmatpush1.msra.mxu0 0.0
        %3996 = vmatprep.subr.mxu0 0.0
        %3997 = vmatpush1.msra.mxu0 0.0
        %3998 = vmatprep.subr.mxu0 0.0
        %3999 = vmatpush1.msra.mxu0 0.0
        %4000 = vmatprep.subr.mxu0 0.0
        %4001 = vmatpush1.msra.mxu0 0.0
        %4002 = vmatprep.subr.mxu0 0.0
        %4003 = vmatpush1.msra.mxu0 0.0
        %4004 = vmatprep.subr.mxu0 0.0
        %4005 = vmatpush1.msra.mxu0 0.0
        %4006 = vmatprep.mubr.f32.mxu0 0.0
        %4007 = vmatmul.mubr.f32.gmra.mrb[0].mxu0 %v3934
        %v4008 = vpop.f32.mrb[0].mxu0
        %v4009 = vadd.f32 0.0, %v4008
        %v4010 = vpop.f32.mrb[0].mxu0
        %v4011 = vadd.f32 0.0, %v4010
        %4012 = vdwg.mxu0
        %v4013 = vadd.f32 %v3929, %v4009
        %v4014 = vadd.f32 %v3930, %v4011
        %s4015 = scalar_lea.vmem [#allocation7], 64
        %v4016 = vld [vmem:[%s4015] sm:$0xff]
        %v4018 = vsel %vm1947, %v4016, 0
        %v4021 = vsel %vm1951, %v3344, 0
        %v4024 = vsel %vm1951, %v3346, 0
        %4026 = vmatprep.subr.mxu0 %v4024
        %4027 = vmatpush1.msra.mxu0 %v4021
        %4028 = vmatprep.subr.mxu0 0.0
        %4029 = vmatpush1.msra.mxu0 0.0
        %4030 = vmatprep.subr.mxu0 0.0
        %4031 = vmatpush1.msra.mxu0 0.0
        %4032 = vmatprep.subr.mxu0 0.0
        %4033 = vmatpush1.msra.mxu0 0.0
        %4034 = vmatprep.subr.mxu0 0.0
        %4035 = vmatpush1.msra.mxu0 0.0
        %4036 = vmatprep.subr.mxu0 0.0
        %4037 = vmatpush1.msra.mxu0 0.0
        %4038 = vmatprep.subr.mxu0 0.0
        %4039 = vmatpush1.msra.mxu0 0.0
        %4040 = vmatprep.subr.mxu0 0.0
        %4041 = vmatpush1.msra.mxu0 0.0
        %4042 = vmatprep.subr.mxu0 0.0
        %4043 = vmatpush1.msra.mxu0 0.0
        %4044 = vmatprep.subr.mxu0 0.0
        %4045 = vmatpush1.msra.mxu0 0.0
        %4046 = vmatprep.subr.mxu0 0.0
        %4047 = vmatpush1.msra.mxu0 0.0
        %4048 = vmatprep.subr.mxu0 0.0
        %4049 = vmatpush1.msra.mxu0 0.0
        %4050 = vmatprep.subr.mxu0 0.0
        %4051 = vmatpush1.msra.mxu0 0.0
        %4052 = vmatprep.subr.mxu0 0.0
        %4053 = vmatpush1.msra.mxu0 0.0
        %4054 = vmatprep.subr.mxu0 0.0
        %4055 = vmatpush1.msra.mxu0 0.0
        %4056 = vmatprep.subr.mxu0 0.0
        %4057 = vmatpush1.msra.mxu0 0.0
        %4058 = vmatprep.subr.mxu0 0.0
        %4059 = vmatpush1.msra.mxu0 0.0
        %4060 = vmatprep.subr.mxu0 0.0
        %4061 = vmatpush1.msra.mxu0 0.0
        %4062 = vmatprep.subr.mxu0 0.0
        %4063 = vmatpush1.msra.mxu0 0.0
        %4064 = vmatprep.subr.mxu0 0.0
        %4065 = vmatpush1.msra.mxu0 0.0
        %4066 = vmatprep.subr.mxu0 0.0
        %4067 = vmatpush1.msra.mxu0 0.0
        %4068 = vmatprep.subr.mxu0 0.0
        %4069 = vmatpush1.msra.mxu0 0.0
        %4070 = vmatprep.subr.mxu0 0.0
        %4071 = vmatpush1.msra.mxu0 0.0
        %4072 = vmatprep.subr.mxu0 0.0
        %4073 = vmatpush1.msra.mxu0 0.0
        %4074 = vmatprep.subr.mxu0 0.0
        %4075 = vmatpush1.msra.mxu0 0.0
        %4076 = vmatprep.subr.mxu0 0.0
        %4077 = vmatpush1.msra.mxu0 0.0
        %4078 = vmatprep.subr.mxu0 0.0
        %4079 = vmatpush1.msra.mxu0 0.0
        %4080 = vmatprep.subr.mxu0 0.0
        %4081 = vmatpush1.msra.mxu0 0.0
        %4082 = vmatprep.subr.mxu0 0.0
        %4083 = vmatpush1.msra.mxu0 0.0
        %4084 = vmatprep.subr.mxu0 0.0
        %4085 = vmatpush1.msra.mxu0 0.0
        %4086 = vmatprep.subr.mxu0 0.0
        %4087 = vmatpush1.msra.mxu0 0.0
        %4088 = vmatprep.subr.mxu0 0.0
        %4089 = vmatpush1.msra.mxu0 0.0
        %4090 = vmatprep.mubr.f32.mxu0 0.0
        %4091 = vmatmul.mubr.f32.gmra.mrb[0].mxu0 %v4018
        %v4092 = vpop.f32.mrb[0].mxu0
        %v4093 = vadd.f32 0.0, %v4092
        %v4094 = vpop.f32.mrb[0].mxu0
        %v4095 = vadd.f32 0.0, %v4094
        %4096 = vdwg.mxu0
        %v4097 = vadd.f32 %v4013, %v4093
        %v4098 = vadd.f32 %v4014, %v4095
        %v4099 = vld [vmem:[#allocation9] sm:$0xff]
        %4101 = vset.pattern.permute.xlu0 0
        %4102 = vperm.xlu0 %4101, %v4099
        %v4103 = vpop.permute.xlu0 %4102
        %v4105 = vadd.f32 %v4097, %v4103
        %v4106 = vadd.f32 %v4098, %v4103
        %v4107 = vmin.f32 %v4105, 20.0
        %v4108 = vmin.f32 %v4106, 20.0
        %v4109 = vmul.f32 %v4107, 0.5
        %v4110 = vmul.f32 %v4108, 0.5
        %v4111 = vmul.f32 %v4109, 1.442695
        %v4112 = vpow.pop %v4111
        %v4113 = vmul.f32 %v4110, 1.442695
        %v4114 = vpow.pop %v4113
        %v4115 = vadd.f32 %v4112, 1e-10
        %v4116 = vadd.f32 %v4114, 1e-10
        %v4117 = vld [vmem:[%s692] sm:$0xff]
        %v4119 = vcombine.low %v4117, %v4117
        %v4121 = vmul.f32 %v4115, %v4119
        %v4122 = vmul.f32 %v4116, %v4117
        %v4125 = vrot.slane %v4121, 4
        %v4126 = vrot.slane %v4122, 4
        %v4129 = vadd.f32 %v4105, %v4125
        %v4130 = vadd.f32 %v4106, %v4126
        %v4131 = vsub.f32 0.0, %v2703
        %v4132 = vsub.f32 0.0, %v2704
        %v4133 = vmul.f32 %v4131, 1.442695
        %v4134 = vpow.pop %v4133
        %v4135 = vmul.f32 %v4132, 1.442695
        %v4136 = vpow.pop %v4135
        %v4137 = vsub.f32 0.0, %v4107
        %v4138 = vsub.f32 0.0, %v4108
        %v4139 = vmul.f32 %v4137, 1.442695
        %v4140 = vpow.pop %v4139
        %v4141 = vmul.f32 %v4138, 1.442695
        %v4142 = vpow.pop %v4141
        %v4143 = vmul.f32 %v2703, 0.5
        %v4144 = vmul.f32 %v2704, 0.5
        %v4145 = vsub.f32 %v4129, %v2703
        %v4146 = vsub.f32 %v4130, %v2704
        %v4147 = vsub.f32 %v4129, %v4105
        %v4148 = vsub.f32 %v4130, %v4106
        %v4149 = vmul.f32 %v4145, -0.5
        %v4150 = vmul.f32 %v4146, -0.5
        %v4151 = vmul.f32 %v4149, %v4145
        %v4152 = vmul.f32 %v4150, %v4146
        %v4155 = vrot.slane %v4134, 4
        %v4156 = vrot.slane %v4136, 4
        %v4159 = vmul.f32 %v4151, %v4155
        %v4160 = vmul.f32 %v4152, %v4156
        %v4163 = vrot.slane %v4143, 4
        %v4164 = vrot.slane %v4144, 4
        %v4167 = vsub.f32 %v4159, %v4163
        %v4168 = vsub.f32 %v4160, %v4164
        %v4169 = vsub.f32 %v4167, 0.9189385
        %v4170 = vsub.f32 %v4168, 0.9189385
        %v4171 = vmul.f32 %v4147, -0.5
        %v4172 = vmul.f32 %v4148, -0.5
        %v4173 = vmul.f32 %v4171, %v4147
        %v4174 = vmul.f32 %v4172, %v4148
        %v4177 = vrot.slane %v4140, 4
        %v4178 = vrot.slane %v4142, 4
        %v4181 = vmul.f32 %v4173, %v4177
        %v4182 = vmul.f32 %v4174, %v4178
        %v4185 = vrot.slane %v4109, 4
        %v4186 = vrot.slane %v4110, 4
        %v4189 = vsub.f32 %v4181, %v4185
        %v4190 = vsub.f32 %v4182, %v4186
        %v4191 = vsub.f32 %v4189, 0.9189385
        %v4192 = vsub.f32 %v4190, 0.9189385
        %v4193 = vsub.f32 %v4105, %v2703
        %v4194 = vsub.f32 %v4106, %v2704
        %v4195 = vsub.f32 %v4143, %v4109
        %v4196 = vsub.f32 %v4144, %v4110
        %v4197 = vmul.f32 %v4115, %v4115
        %v4198 = vmul.f32 %v4116, %v4116
        %v4199 = vmul.f32 %v4193, %v4193
        %v4200 = vmul.f32 %v4194, %v4194
        %v4203 = vrot.slane %v4199, 4
        %v4204 = vrot.slane %v4200, 4
        %v4207 = vadd.f32 %v4197, %v4203
        %v4208 = vadd.f32 %v4198, %v4204
        %v4209 = vmul.f32 %v4207, 0.5
        %v4210 = vmul.f32 %v4208, 0.5
        %v4211 = vmul.f32 %v4209, %v4134
        %v4212 = vmul.f32 %v4210, %v4136
        %v4213 = vadd.f32 %v4195, %v4211
        %v4214 = vadd.f32 %v4196, %v4212
        %v4215 = vsub.f32 %v4213, 0.5
        %v4216 = vsub.f32 %v4214, 0.5
        %vm4217 = vcmp.gt.f32.partialorder %v2703, 20.0
        %vm4218 = vcmp.gt.f32.partialorder %v2704, 20.0
        %v4219 = vsel %vm4217, 2.0611537e-09, %v4134
        %v4220 = vsel %vm4218, 2.0611537e-09, %v4136
        %v4221 = vsel %vm4217, 10.0, %v4143
        %v4222 = vsel %vm4218, 10.0, %v4144
        %v4225 = vrot.slane %v4219, 4
        %v4226 = vrot.slane %v4220, 4
        %v4229 = vmul.f32 %v4151, %v4225
        %v4230 = vmul.f32 %v4152, %v4226
        %v4233 = vrot.slane %v4221, 4
        %v4234 = vrot.slane %v4222, 4
        %v4237 = vsub.f32 %v4229, %v4233
        %v4238 = vsub.f32 %v4230, %v4234
        %v4239 = vsub.f32 %v4237, 0.9189385
        %v4240 = vsub.f32 %v4238, 0.9189385
        %v4241 = vsub.f32 %v4191, %v4239
        %v4242 = vsub.f32 %v4192, %v4240
        %4243 = vmatprep.subr.mxu0 %v727
        %4244 = vmatpush1.msra.mxu0 %v726
        %4245 = vmatprep.subr.mxu0 %v745
        %4246 = vmatpush1.msra.mxu0 %v744
        %4247 = vmatprep.subr.mxu0 %v763
        %4248 = vmatpush1.msra.mxu0 %v762
        %4249 = vmatprep.subr.mxu0 %v781
        %4250 = vmatpush1.msra.mxu0 %v780
        %4251 = vmatprep.subr.mxu0 %v799
        %4252 = vmatpush1.msra.mxu0 %v798
        %4253 = vmatprep.subr.mxu0 %v817
        %4254 = vmatpush1.msra.mxu0 %v816
        %4255 = vmatprep.subr.mxu0 %v835
        %4256 = vmatpush1.msra.mxu0 %v834
        %4257 = vmatprep.subr.mxu0 %v853
        %4258 = vmatpush1.msra.mxu0 %v852
        %4259 = vmatprep.subr.mxu0 %v871
        %4260 = vmatpush1.msra.mxu0 %v870
        %4261 = vmatprep.subr.mxu0 %v889
        %4262 = vmatpush1.msra.mxu0 %v888
        %4263 = vmatprep.subr.mxu0 %v907
        %4264 = vmatpush1.msra.mxu0 %v906
        %4265 = vmatprep.subr.mxu0 %v925
        %4266 = vmatpush1.msra.mxu0 %v924
        %4267 = vmatprep.subr.mxu0 %v943
        %4268 = vmatpush1.msra.mxu0 %v942
        %4269 = vmatprep.subr.mxu0 %v961
        %4270 = vmatpush1.msra.mxu0 %v960
        %4271 = vmatprep.subr.mxu0 %v979
        %4272 = vmatpush1.msra.mxu0 %v978
        %4273 = vmatprep.subr.mxu0 %v997
        %4274 = vmatpush1.msra.mxu0 %v996
        %4275 = vmatprep.subr.mxu0 %v1015
        %4276 = vmatpush1.msra.mxu0 %v1014
        %4277 = vmatprep.subr.mxu0 %v1033
        %4278 = vmatpush1.msra.mxu0 %v1032
        %4279 = vmatprep.subr.mxu0 %v1051
        %4280 = vmatpush1.msra.mxu0 %v1050
        %4281 = vmatprep.subr.mxu0 %v1069
        %4282 = vmatpush1.msra.mxu0 %v1068
        %4283 = vmatprep.subr.mxu0 %v1087
        %4284 = vmatpush1.msra.mxu0 %v1086
        %4285 = vmatprep.subr.mxu0 %v1105
        %4286 = vmatpush1.msra.mxu0 %v1104
        %4287 = vmatprep.subr.mxu0 %v1123
        %4288 = vmatpush1.msra.mxu0 %v1122
        %4289 = vmatprep.subr.mxu0 %v1141
        %4290 = vmatpush1.msra.mxu0 %v1140
        %4291 = vmatprep.subr.mxu0 %v1159
        %4292 = vmatpush1.msra.mxu0 %v1158
        %4293 = vmatprep.subr.mxu0 %v1177
        %4294 = vmatpush1.msra.mxu0 %v1176
        %4295 = vmatprep.subr.mxu0 %v1195
        %4296 = vmatpush1.msra.mxu0 %v1194
        %4297 = vmatprep.subr.mxu0 %v1213
        %4298 = vmatpush1.msra.mxu0 %v1212
        %4299 = vmatprep.subr.mxu0 %v1231
        %4300 = vmatpush1.msra.mxu0 %v1230
        %4301 = vmatprep.subr.mxu0 %v1249
        %4302 = vmatpush1.msra.mxu0 %v1248
        %4303 = vmatprep.subr.mxu0 %v1267
        %4304 = vmatpush1.msra.mxu0 %v1266
        %4305 = vmatprep.subr.mxu0 %v1285
        %4306 = vmatpush1.msra.mxu0 %v1284
        %4307 = vmatprep.mubr.f32.mxu0 %v4130
        %4308 = vmatmul.mubr.f32.gmra.mrb[0].mxu0 %v4129
        %v4309 = vpop.f32.mrb[0].mxu0
        %v4310 = vadd.f32 0.0, %v4309
        %v4311 = vpop.f32.mrb[0].mxu0
        %v4312 = vadd.f32 0.0, %v4311
        %4313 = vdwg.mxu0
        %4314 = vmatprep.subr.mxu0 %v729
        %4315 = vmatpush1.msra.mxu0 %v728
        %4316 = vmatprep.subr.mxu0 %v747
        %4317 = vmatpush1.msra.mxu0 %v746
        %4318 = vmatprep.subr.mxu0 %v765
        %4319 = vmatpush1.msra.mxu0 %v764
        %4320 = vmatprep.subr.mxu0 %v783
        %4321 = vmatpush1.msra.mxu0 %v782
        %4322 = vmatprep.subr.mxu0 %v801
        %4323 = vmatpush1.msra.mxu0 %v800
        %4324 = vmatprep.subr.mxu0 %v819
        %4325 = vmatpush1.msra.mxu0 %v818
        %4326 = vmatprep.subr.mxu0 %v837
        %4327 = vmatpush1.msra.mxu0 %v836
        %4328 = vmatprep.subr.mxu0 %v855
        %4329 = vmatpush1.msra.mxu0 %v854
        %4330 = vmatprep.subr.mxu0 %v873
        %4331 = vmatpush1.msra.mxu0 %v872
        %4332 = vmatprep.subr.mxu0 %v891
        %4333 = vmatpush1.msra.mxu0 %v890
        %4334 = vmatprep.subr.mxu0 %v909
        %4335 = vmatpush1.msra.mxu0 %v908
        %4336 = vmatprep.subr.mxu0 %v927
        %4337 = vmatpush1.msra.mxu0 %v926
        %4338 = vmatprep.subr.mxu0 %v945
        %4339 = vmatpush1.msra.mxu0 %v944
        %4340 = vmatprep.subr.mxu0 %v963
        %4341 = vmatpush1.msra.mxu0 %v962
        %4342 = vmatprep.subr.mxu0 %v981
        %4343 = vmatpush1.msra.mxu0 %v980
        %4344 = vmatprep.subr.mxu0 %v999
        %4345 = vmatpush1.msra.mxu0 %v998
        %4346 = vmatprep.subr.mxu0 %v1017
        %4347 = vmatpush1.msra.mxu0 %v1016
        %4348 = vmatprep.subr.mxu0 %v1035
        %4349 = vmatpush1.msra.mxu0 %v1034
        %4350 = vmatprep.subr.mxu0 %v1053
        %4351 = vmatpush1.msra.mxu0 %v1052
        %4352 = vmatprep.subr.mxu0 %v1071
        %4353 = vmatpush1.msra.mxu0 %v1070
        %4354 = vmatprep.subr.mxu0 %v1089
        %4355 = vmatpush1.msra.mxu0 %v1088
        %4356 = vmatprep.subr.mxu0 %v1107
        %4357 = vmatpush1.msra.mxu0 %v1106
        %4358 = vmatprep.subr.mxu0 %v1125
        %4359 = vmatpush1.msra.mxu0 %v1124
        %4360 = vmatprep.subr.mxu0 %v1143
        %4361 = vmatpush1.msra.mxu0 %v1142
        %4362 = vmatprep.subr.mxu0 %v1161
        %4363 = vmatpush1.msra.mxu0 %v1160
        %4364 = vmatprep.subr.mxu0 %v1179
        %4365 = vmatpush1.msra.mxu0 %v1178
        %4366 = vmatprep.subr.mxu0 %v1197
        %4367 = vmatpush1.msra.mxu0 %v1196
        %4368 = vmatprep.subr.mxu0 %v1215
        %4369 = vmatpush1.msra.mxu0 %v1214
        %4370 = vmatprep.subr.mxu0 %v1233
        %4371 = vmatpush1.msra.mxu0 %v1232
        %4372 = vmatprep.subr.mxu0 %v1251
        %4373 = vmatpush1.msra.mxu0 %v1250
        %4374 = vmatprep.subr.mxu0 %v1269
        %4375 = vmatpush1.msra.mxu0 %v1268
        %4376 = vmatprep.subr.mxu0 %v1287
        %4377 = vmatpush1.msra.mxu0 %v1286
        %4378 = vmatprep.mubr.f32.mxu0 %v4130
        %4379 = vmatmul.mubr.f32.gmra.mrb[0].mxu0 %v4129
        %v4380 = vpop.f32.mrb[0].mxu0
        %v4381 = vadd.f32 0.0, %v4380
        %v4382 = vpop.f32.mrb[0].mxu0
        %v4383 = vadd.f32 0.0, %v4382
        %4384 = vdwg.mxu0
        %4385 = vmatprep.subr.mxu0 %v731
        %4386 = vmatpush1.msra.mxu0 %v730
        %4387 = vmatprep.subr.mxu0 %v749
        %4388 = vmatpush1.msra.mxu0 %v748
        %4389 = vmatprep.subr.mxu0 %v767
        %4390 = vmatpush1.msra.mxu0 %v766
        %4391 = vmatprep.subr.mxu0 %v785
        %4392 = vmatpush1.msra.mxu0 %v784
        %4393 = vmatprep.subr.mxu0 %v803
        %4394 = vmatpush1.msra.mxu0 %v802
        %4395 = vmatprep.subr.mxu0 %v821
        %4396 = vmatpush1.msra.mxu0 %v820
        %4397 = vmatprep.subr.mxu0 %v839
        %4398 = vmatpush1.msra.mxu0 %v838
        %4399 = vmatprep.subr.mxu0 %v857
        %4400 = vmatpush1.msra.mxu0 %v856
        %4401 = vmatprep.subr.mxu0 %v875
        %4402 = vmatpush1.msra.mxu0 %v874
        %4403 = vmatprep.subr.mxu0 %v893
        %4404 = vmatpush1.msra.mxu0 %v892
        %4405 = vmatprep.subr.mxu0 %v911
        %4406 = vmatpush1.msra.mxu0 %v910
        %4407 = vmatprep.subr.mxu0 %v929
        %4408 = vmatpush1.msra.mxu0 %v928
        %4409 = vmatprep.subr.mxu0 %v947
        %4410 = vmatpush1.msra.mxu0 %v946
        %4411 = vmatprep.subr.mxu0 %v965
        %4412 = vmatpush1.msra.mxu0 %v964
        %4413 = vmatprep.subr.mxu0 %v983
        %4414 = vmatpush1.msra.mxu0 %v982
        %4415 = vmatprep.subr.mxu0 %v1001
        %4416 = vmatpush1.msra.mxu0 %v1000
        %4417 = vmatprep.subr.mxu0 %v1019
        %4418 = vmatpush1.msra.mxu0 %v1018
        %4419 = vmatprep.subr.mxu0 %v1037
        %4420 = vmatpush1.msra.mxu0 %v1036
        %4421 = vmatprep.subr.mxu0 %v1055
        %4422 = vmatpush1.msra.mxu0 %v1054
        %4423 = vmatprep.subr.mxu0 %v1073
        %4424 = vmatpush1.msra.mxu0 %v1072
        %4425 = vmatprep.subr.mxu0 %v1091
        %4426 = vmatpush1.msra.mxu0 %v1090
        %4427 = vmatprep.subr.mxu0 %v1109
        %4428 = vmatpush1.msra.mxu0 %v1108
        %4429 = vmatprep.subr.mxu0 %v1127
        %4430 = vmatpush1.msra.mxu0 %v1126
        %4431 = vmatprep.subr.mxu0 %v1145
        %4432 = vmatpush1.msra.mxu0 %v1144
        %4433 = vmatprep.subr.mxu0 %v1163
        %4434 = vmatpush1.msra.mxu0 %v1162
        %4435 = vmatprep.subr.mxu0 %v1181
        %4436 = vmatpush1.msra.mxu0 %v1180
        %4437 = vmatprep.subr.mxu0 %v1199
        %4438 = vmatpush1.msra.mxu0 %v1198
        %4439 = vmatprep.subr.mxu0 %v1217
        %4440 = vmatpush1.msra.mxu0 %v1216
        %4441 = vmatprep.subr.mxu0 %v1235
        %4442 = vmatpush1.msra.mxu0 %v1234
        %4443 = vmatprep.subr.mxu0 %v1253
        %4444 = vmatpush1.msra.mxu0 %v1252
        %4445 = vmatprep.subr.mxu0 %v1271
        %4446 = vmatpush1.msra.mxu0 %v1270
        %4447 = vmatprep.subr.mxu0 %v1289
        %4448 = vmatpush1.msra.mxu0 %v1288
        %4449 = vmatprep.mubr.f32.mxu0 %v4130
        %4450 = vmatmul.mubr.f32.gmra.mrb[0].mxu0 %v4129
        %v4451 = vpop.f32.mrb[0].mxu0
        %v4452 = vadd.f32 0.0, %v4451
        %v4453 = vpop.f32.mrb[0].mxu0
        %v4454 = vadd.f32 0.0, %v4453
        %4455 = vdwg.mxu0
        %4456 = vmatprep.subr.mxu0 %v733
        %4457 = vmatpush1.msra.mxu0 %v732
        %4458 = vmatprep.subr.mxu0 %v751
        %4459 = vmatpush1.msra.mxu0 %v750
        %4460 = vmatprep.subr.mxu0 %v769
        %4461 = vmatpush1.msra.mxu0 %v768
        %4462 = vmatprep.subr.mxu0 %v787
        %4463 = vmatpush1.msra.mxu0 %v786
        %4464 = vmatprep.subr.mxu0 %v805
        %4465 = vmatpush1.msra.mxu0 %v804
        %4466 = vmatprep.subr.mxu0 %v823
        %4467 = vmatpush1.msra.mxu0 %v822
        %4468 = vmatprep.subr.mxu0 %v841
        %4469 = vmatpush1.msra.mxu0 %v840
        %4470 = vmatprep.subr.mxu0 %v859
        %4471 = vmatpush1.msra.mxu0 %v858
        %4472 = vmatprep.subr.mxu0 %v877
        %4473 = vmatpush1.msra.mxu0 %v876
        %4474 = vmatprep.subr.mxu0 %v895
        %4475 = vmatpush1.msra.mxu0 %v894
        %4476 = vmatprep.subr.mxu0 %v913
        %4477 = vmatpush1.msra.mxu0 %v912
        %4478 = vmatprep.subr.mxu0 %v931
        %4479 = vmatpush1.msra.mxu0 %v930
        %4480 = vmatprep.subr.mxu0 %v949
        %4481 = vmatpush1.msra.mxu0 %v948
        %4482 = vmatprep.subr.mxu0 %v967
        %4483 = vmatpush1.msra.mxu0 %v966
        %4484 = vmatprep.subr.mxu0 %v985
        %4485 = vmatpush1.msra.mxu0 %v984
        %4486 = vmatprep.subr.mxu0 %v1003
        %4487 = vmatpush1.msra.mxu0 %v1002
        %4488 = vmatprep.subr.mxu0 %v1021
        %4489 = vmatpush1.msra.mxu0 %v1020
        %4490 = vmatprep.subr.mxu0 %v1039
        %4491 = vmatpush1.msra.mxu0 %v1038
        %4492 = vmatprep.subr.mxu0 %v1057
        %4493 = vmatpush1.msra.mxu0 %v1056
        %4494 = vmatprep.subr.mxu0 %v1075
        %4495 = vmatpush1.msra.mxu0 %v1074
        %4496 = vmatprep.subr.mxu0 %v1093
        %4497 = vmatpush1.msra.mxu0 %v1092
        %4498 = vmatprep.subr.mxu0 %v1111
        %4499 = vmatpush1.msra.mxu0 %v1110
        %4500 = vmatprep.subr.mxu0 %v1129
        %4501 = vmatpush1.msra.mxu0 %v1128
        %4502 = vmatprep.subr.mxu0 %v1147
        %4503 = vmatpush1.msra.mxu0 %v1146
        %4504 = vmatprep.subr.mxu0 %v1165
        %4505 = vmatpush1.msra.mxu0 %v1164
        %4506 = vmatprep.subr.mxu0 %v1183
        %4507 = vmatpush1.msra.mxu0 %v1182
        %4508 = vmatprep.subr.mxu0 %v1201
        %4509 = vmatpush1.msra.mxu0 %v1200
        %4510 = vmatprep.subr.mxu0 %v1219
        %4511 = vmatpush1.msra.mxu0 %v1218
        %4512 = vmatprep.subr.mxu0 %v1237
        %4513 = vmatpush1.msra.mxu0 %v1236
        %4514 = vmatprep.subr.mxu0 %v1255
        %4515 = vmatpush1.msra.mxu0 %v1254
        %4516 = vmatprep.subr.mxu0 %v1273
        %4517 = vmatpush1.msra.mxu0 %v1272
        %4518 = vmatprep.subr.mxu0 %v1291
        %4519 = vmatpush1.msra.mxu0 %v1290
        %4520 = vmatprep.mubr.f32.mxu0 %v4130
        %4521 = vmatmul.mubr.f32.gmra.mrb[0].mxu0 %v4129
        %v4522 = vpop.f32.mrb[0].mxu0
        %v4523 = vadd.f32 0.0, %v4522
        %v4524 = vpop.f32.mrb[0].mxu0
        %v4525 = vadd.f32 0.0, %v4524
        %4526 = vdwg.mxu0
        %4527 = vmatprep.subr.mxu0 %v735
        %4528 = vmatpush1.msra.mxu0 %v734
        %4529 = vmatprep.subr.mxu0 %v753
        %4530 = vmatpush1.msra.mxu0 %v752
        %4531 = vmatprep.subr.mxu0 %v771
        %4532 = vmatpush1.msra.mxu0 %v770
        %4533 = vmatprep.subr.mxu0 %v789
        %4534 = vmatpush1.msra.mxu0 %v788
        %4535 = vmatprep.subr.mxu0 %v807
        %4536 = vmatpush1.msra.mxu0 %v806
        %4537 = vmatprep.subr.mxu0 %v825
        %4538 = vmatpush1.msra.mxu0 %v824
        %4539 = vmatprep.subr.mxu0 %v843
        %4540 = vmatpush1.msra.mxu0 %v842
        %4541 = vmatprep.subr.mxu0 %v861
        %4542 = vmatpush1.msra.mxu0 %v860
        %4543 = vmatprep.subr.mxu0 %v879
        %4544 = vmatpush1.msra.mxu0 %v878
        %4545 = vmatprep.subr.mxu0 %v897
        %4546 = vmatpush1.msra.mxu0 %v896
        %4547 = vmatprep.subr.mxu0 %v915
        %4548 = vmatpush1.msra.mxu0 %v914
        %4549 = vmatprep.subr.mxu0 %v933
        %4550 = vmatpush1.msra.mxu0 %v932
        %4551 = vmatprep.subr.mxu0 %v951
        %4552 = vmatpush1.msra.mxu0 %v950
        %4553 = vmatprep.subr.mxu0 %v969
        %4554 = vmatpush1.msra.mxu0 %v968
        %4555 = vmatprep.subr.mxu0 %v987
        %4556 = vmatpush1.msra.mxu0 %v986
        %4557 = vmatprep.subr.mxu0 %v1005
        %4558 = vmatpush1.msra.mxu0 %v1004
        %4559 = vmatprep.subr.mxu0 %v1023
        %4560 = vmatpush1.msra.mxu0 %v1022
        %4561 = vmatprep.subr.mxu0 %v1041
        %4562 = vmatpush1.msra.mxu0 %v1040
        %4563 = vmatprep.subr.mxu0 %v1059
        %4564 = vmatpush1.msra.mxu0 %v1058
        %4565 = vmatprep.subr.mxu0 %v1077
        %4566 = vmatpush1.msra.mxu0 %v1076
        %4567 = vmatprep.subr.mxu0 %v1095
        %4568 = vmatpush1.msra.mxu0 %v1094
        %4569 = vmatprep.subr.mxu0 %v1113
        %4570 = vmatpush1.msra.mxu0 %v1112
        %4571 = vmatprep.subr.mxu0 %v1131
        %4572 = vmatpush1.msra.mxu0 %v1130
        %4573 = vmatprep.subr.mxu0 %v1149
        %4574 = vmatpush1.msra.mxu0 %v1148
        %4575 = vmatprep.subr.mxu0 %v1167
        %4576 = vmatpush1.msra.mxu0 %v1166
        %4577 = vmatprep.subr.mxu0 %v1185
        %4578 = vmatpush1.msra.mxu0 %v1184
        %4579 = vmatprep.subr.mxu0 %v1203
        %4580 = vmatpush1.msra.mxu0 %v1202
        %4581 = vmatprep.subr.mxu0 %v1221
        %4582 = vmatpush1.msra.mxu0 %v1220
        %4583 = vmatprep.subr.mxu0 %v1239
        %4584 = vmatpush1.msra.mxu0 %v1238
        %4585 = vmatprep.subr.mxu0 %v1257
        %4586 = vmatpush1.msra.mxu0 %v1256
        %4587 = vmatprep.subr.mxu0 %v1275
        %4588 = vmatpush1.msra.mxu0 %v1274
        %4589 = vmatprep.subr.mxu0 %v1293
        %4590 = vmatpush1.msra.mxu0 %v1292
        %4591 = vmatprep.mubr.f32.mxu0 %v4130
        %4592 = vmatmul.mubr.f32.gmra.mrb[0].mxu0 %v4129
        %v4593 = vpop.f32.mrb[0].mxu0
        %v4594 = vadd.f32 0.0, %v4593
        %v4595 = vpop.f32.mrb[0].mxu0
        %v4596 = vadd.f32 0.0, %v4595
        %4597 = vdwg.mxu0
        %4598 = vmatprep.subr.mxu0 %v737
        %4599 = vmatpush1.msra.mxu0 %v736
        %4600 = vmatprep.subr.mxu0 %v755
        %4601 = vmatpush1.msra.mxu0 %v754
        %4602 = vmatprep.subr.mxu0 %v773
        %4603 = vmatpush1.msra.mxu0 %v772
        %4604 = vmatprep.subr.mxu0 %v791
        %4605 = vmatpush1.msra.mxu0 %v790
        %4606 = vmatprep.subr.mxu0 %v809
        %4607 = vmatpush1.msra.mxu0 %v808
        %4608 = vmatprep.subr.mxu0 %v827
        %4609 = vmatpush1.msra.mxu0 %v826
        %4610 = vmatprep.subr.mxu0 %v845
        %4611 = vmatpush1.msra.mxu0 %v844
        %4612 = vmatprep.subr.mxu0 %v863
        %4613 = vmatpush1.msra.mxu0 %v862
        %4614 = vmatprep.subr.mxu0 %v881
        %4615 = vmatpush1.msra.mxu0 %v880
        %4616 = vmatprep.subr.mxu0 %v899
        %4617 = vmatpush1.msra.mxu0 %v898
        %4618 = vmatprep.subr.mxu0 %v917
        %4619 = vmatpush1.msra.mxu0 %v916
        %4620 = vmatprep.subr.mxu0 %v935
        %4621 = vmatpush1.msra.mxu0 %v934
        %4622 = vmatprep.subr.mxu0 %v953
        %4623 = vmatpush1.msra.mxu0 %v952
        %4624 = vmatprep.subr.mxu0 %v971
        %4625 = vmatpush1.msra.mxu0 %v970
        %4626 = vmatprep.subr.mxu0 %v989
        %4627 = vmatpush1.msra.mxu0 %v988
        %4628 = vmatprep.subr.mxu0 %v1007
        %4629 = vmatpush1.msra.mxu0 %v1006
        %4630 = vmatprep.subr.mxu0 %v1025
        %4631 = vmatpush1.msra.mxu0 %v1024
        %4632 = vmatprep.subr.mxu0 %v1043
        %4633 = vmatpush1.msra.mxu0 %v1042
        %4634 = vmatprep.subr.mxu0 %v1061
        %4635 = vmatpush1.msra.mxu0 %v1060
        %4636 = vmatprep.subr.mxu0 %v1079
        %4637 = vmatpush1.msra.mxu0 %v1078
        %4638 = vmatprep.subr.mxu0 %v1097
        %4639 = vmatpush1.msra.mxu0 %v1096
        %4640 = vmatprep.subr.mxu0 %v1115
        %4641 = vmatpush1.msra.mxu0 %v1114
        %4642 = vmatprep.subr.mxu0 %v1133
        %4643 = vmatpush1.msra.mxu0 %v1132
        %4644 = vmatprep.subr.mxu0 %v1151
        %4645 = vmatpush1.msra.mxu0 %v1150
        %4646 = vmatprep.subr.mxu0 %v1169
        %4647 = vmatpush1.msra.mxu0 %v1168
        %4648 = vmatprep.subr.mxu0 %v1187
        %4649 = vmatpush1.msra.mxu0 %v1186
        %4650 = vmatprep.subr.mxu0 %v1205
        %4651 = vmatpush1.msra.mxu0 %v1204
        %4652 = vmatprep.subr.mxu0 %v1223
        %4653 = vmatpush1.msra.mxu0 %v1222
        %4654 = vmatprep.subr.mxu0 %v1241
        %4655 = vmatpush1.msra.mxu0 %v1240
        %4656 = vmatprep.subr.mxu0 %v1259
        %4657 = vmatpush1.msra.mxu0 %v1258
        %4658 = vmatprep.subr.mxu0 %v1277
        %4659 = vmatpush1.msra.mxu0 %v1276
        %4660 = vmatprep.subr.mxu0 %v1295
        %4661 = vmatpush1.msra.mxu0 %v1294
        %4662 = vmatprep.mubr.f32.mxu0 %v4130
        %4663 = vmatmul.mubr.f32.gmra.mrb[0].mxu0 %v4129
        %v4664 = vpop.f32.mrb[0].mxu0
        %v4665 = vadd.f32 0.0, %v4664
        %v4666 = vpop.f32.mrb[0].mxu0
        %v4667 = vadd.f32 0.0, %v4666
        %4668 = vdwg.mxu0
        %4669 = vmatprep.subr.mxu0 %v739
        %4670 = vmatpush1.msra.mxu0 %v738
        %4671 = vmatprep.subr.mxu0 %v757
        %4672 = vmatpush1.msra.mxu0 %v756
        %4673 = vmatprep.subr.mxu0 %v775
        %4674 = vmatpush1.msra.mxu0 %v774
        %4675 = vmatprep.subr.mxu0 %v793
        %4676 = vmatpush1.msra.mxu0 %v792
        %4677 = vmatprep.subr.mxu0 %v811
        %4678 = vmatpush1.msra.mxu0 %v810
        %4679 = vmatprep.subr.mxu0 %v829
        %4680 = vmatpush1.msra.mxu0 %v828
        %4681 = vmatprep.subr.mxu0 %v847
        %4682 = vmatpush1.msra.mxu0 %v846
        %4683 = vmatprep.subr.mxu0 %v865
        %4684 = vmatpush1.msra.mxu0 %v864
        %4685 = vmatprep.subr.mxu0 %v883
        %4686 = vmatpush1.msra.mxu0 %v882
        %4687 = vmatprep.subr.mxu0 %v901
        %4688 = vmatpush1.msra.mxu0 %v900
        %4689 = vmatprep.subr.mxu0 %v919
        %4690 = vmatpush1.msra.mxu0 %v918
        %4691 = vmatprep.subr.mxu0 %v937
        %4692 = vmatpush1.msra.mxu0 %v936
        %4693 = vmatprep.subr.mxu0 %v955
        %4694 = vmatpush1.msra.mxu0 %v954
        %4695 = vmatprep.subr.mxu0 %v973
        %4696 = vmatpush1.msra.mxu0 %v972
        %4697 = vmatprep.subr.mxu0 %v991
        %4698 = vmatpush1.msra.mxu0 %v990
        %4699 = vmatprep.subr.mxu0 %v1009
        %4700 = vmatpush1.msra.mxu0 %v1008
        %4701 = vmatprep.subr.mxu0 %v1027
        %4702 = vmatpush1.msra.mxu0 %v1026
        %4703 = vmatprep.subr.mxu0 %v1045
        %4704 = vmatpush1.msra.mxu0 %v1044
        %4705 = vmatprep.subr.mxu0 %v1063
        %4706 = vmatpush1.msra.mxu0 %v1062
        %4707 = vmatprep.subr.mxu0 %v1081
        %4708 = vmatpush1.msra.mxu0 %v1080
        %4709 = vmatprep.subr.mxu0 %v1099
        %4710 = vmatpush1.msra.mxu0 %v1098
        %4711 = vmatprep.subr.mxu0 %v1117
        %4712 = vmatpush1.msra.mxu0 %v1116
        %4713 = vmatprep.subr.mxu0 %v1135
        %4714 = vmatpush1.msra.mxu0 %v1134
        %4715 = vmatprep.subr.mxu0 %v1153
        %4716 = vmatpush1.msra.mxu0 %v1152
        %4717 = vmatprep.subr.mxu0 %v1171
        %4718 = vmatpush1.msra.mxu0 %v1170
        %4719 = vmatprep.subr.mxu0 %v1189
        %4720 = vmatpush1.msra.mxu0 %v1188
        %4721 = vmatprep.subr.mxu0 %v1207
        %4722 = vmatpush1.msra.mxu0 %v1206
        %4723 = vmatprep.subr.mxu0 %v1225
        %4724 = vmatpush1.msra.mxu0 %v1224
        %4725 = vmatprep.subr.mxu0 %v1243
        %4726 = vmatpush1.msra.mxu0 %v1242
        %4727 = vmatprep.subr.mxu0 %v1261
        %4728 = vmatpush1.msra.mxu0 %v1260
        %4729 = vmatprep.subr.mxu0 %v1279
        %4730 = vmatpush1.msra.mxu0 %v1278
        %4731 = vmatprep.subr.mxu0 %v1297
        %4732 = vmatpush1.msra.mxu0 %v1296
        %4733 = vmatprep.mubr.f32.mxu0 %v4130
        %4734 = vmatmul.mubr.f32.gmra.mrb[0].mxu0 %v4129
        %v4735 = vpop.f32.mrb[0].mxu0
        %v4736 = vadd.f32 0.0, %v4735
        %v4737 = vpop.f32.mrb[0].mxu0
        %v4738 = vadd.f32 0.0, %v4737
        %4739 = vdwg.mxu0
        %4740 = vmatprep.subr.mxu0 %v741
        %4741 = vmatpush1.msra.mxu0 %v740
        %4742 = vmatprep.subr.mxu0 %v759
        %4743 = vmatpush1.msra.mxu0 %v758
        %4744 = vmatprep.subr.mxu0 %v777
        %4745 = vmatpush1.msra.mxu0 %v776
        %4746 = vmatprep.subr.mxu0 %v795
        %4747 = vmatpush1.msra.mxu0 %v794
        %4748 = vmatprep.subr.mxu0 %v813
        %4749 = vmatpush1.msra.mxu0 %v812
        %4750 = vmatprep.subr.mxu0 %v831
        %4751 = vmatpush1.msra.mxu0 %v830
        %4752 = vmatprep.subr.mxu0 %v849
        %4753 = vmatpush1.msra.mxu0 %v848
        %4754 = vmatprep.subr.mxu0 %v867
        %4755 = vmatpush1.msra.mxu0 %v866
        %4756 = vmatprep.subr.mxu0 %v885
        %4757 = vmatpush1.msra.mxu0 %v884
        %4758 = vmatprep.subr.mxu0 %v903
        %4759 = vmatpush1.msra.mxu0 %v902
        %4760 = vmatprep.subr.mxu0 %v921
        %4761 = vmatpush1.msra.mxu0 %v920
        %4762 = vmatprep.subr.mxu0 %v939
        %4763 = vmatpush1.msra.mxu0 %v938
        %4764 = vmatprep.subr.mxu0 %v957
        %4765 = vmatpush1.msra.mxu0 %v956
        %4766 = vmatprep.subr.mxu0 %v975
        %4767 = vmatpush1.msra.mxu0 %v974
        %4768 = vmatprep.subr.mxu0 %v993
        %4769 = vmatpush1.msra.mxu0 %v992
        %4770 = vmatprep.subr.mxu0 %v1011
        %4771 = vmatpush1.msra.mxu0 %v1010
        %4772 = vmatprep.subr.mxu0 %v1029
        %4773 = vmatpush1.msra.mxu0 %v1028
        %4774 = vmatprep.subr.mxu0 %v1047
        %4775 = vmatpush1.msra.mxu0 %v1046
        %4776 = vmatprep.subr.mxu0 %v1065
        %4777 = vmatpush1.msra.mxu0 %v1064
        %4778 = vmatprep.subr.mxu0 %v1083
        %4779 = vmatpush1.msra.mxu0 %v1082
        %4780 = vmatprep.subr.mxu0 %v1101
        %4781 = vmatpush1.msra.mxu0 %v1100
        %4782 = vmatprep.subr.mxu0 %v1119
        %4783 = vmatpush1.msra.mxu0 %v1118
        %4784 = vmatprep.subr.mxu0 %v1137
        %4785 = vmatpush1.msra.mxu0 %v1136
        %4786 = vmatprep.subr.mxu0 %v1155
        %4787 = vmatpush1.msra.mxu0 %v1154
        %4788 = vmatprep.subr.mxu0 %v1173
        %4789 = vmatpush1.msra.mxu0 %v1172
        %4790 = vmatprep.subr.mxu0 %v1191
        %4791 = vmatpush1.msra.mxu0 %v1190
        %4792 = vmatprep.subr.mxu0 %v1209
        %4793 = vmatpush1.msra.mxu0 %v1208
        %4794 = vmatprep.subr.mxu0 %v1227
        %4795 = vmatpush1.msra.mxu0 %v1226
        %4796 = vmatprep.subr.mxu0 %v1245
        %4797 = vmatpush1.msra.mxu0 %v1244
        %4798 = vmatprep.subr.mxu0 %v1263
        %4799 = vmatpush1.msra.mxu0 %v1262
        %4800 = vmatprep.subr.mxu0 %v1281
        %4801 = vmatpush1.msra.mxu0 %v1280
        %4802 = vmatprep.subr.mxu0 %v1299
        %4803 = vmatpush1.msra.mxu0 %v1298
        %4804 = vmatprep.mubr.f32.mxu0 %v4130
        %4805 = vmatmul.mubr.f32.gmra.mrb[0].mxu0 %v4129
        %v4806 = vpop.f32.mrb[0].mxu0
        %v4807 = vadd.f32 0.0, %v4806
        %v4808 = vpop.f32.mrb[0].mxu0
        %v4809 = vadd.f32 0.0, %v4808
        %4810 = vdwg.mxu0
        %4811 = vmatprep.subr.mxu0 %v743
        %4812 = vmatpush1.msra.mxu0 %v742
        %4813 = vmatprep.subr.mxu0 %v761
        %4814 = vmatpush1.msra.mxu0 %v760
        %4815 = vmatprep.subr.mxu0 %v779
        %4816 = vmatpush1.msra.mxu0 %v778
        %4817 = vmatprep.subr.mxu0 %v797
        %4818 = vmatpush1.msra.mxu0 %v796
        %4819 = vmatprep.subr.mxu0 %v815
        %4820 = vmatpush1.msra.mxu0 %v814
        %4821 = vmatprep.subr.mxu0 %v833
        %4822 = vmatpush1.msra.mxu0 %v832
        %4823 = vmatprep.subr.mxu0 %v851
        %4824 = vmatpush1.msra.mxu0 %v850
        %4825 = vmatprep.subr.mxu0 %v869
        %4826 = vmatpush1.msra.mxu0 %v868
        %4827 = vmatprep.subr.mxu0 %v887
        %4828 = vmatpush1.msra.mxu0 %v886
        %4829 = vmatprep.subr.mxu0 %v905
        %4830 = vmatpush1.msra.mxu0 %v904
        %4831 = vmatprep.subr.mxu0 %v923
        %4832 = vmatpush1.msra.mxu0 %v922
        %4833 = vmatprep.subr.mxu0 %v941
        %4834 = vmatpush1.msra.mxu0 %v940
        %4835 = vmatprep.subr.mxu0 %v959
        %4836 = vmatpush1.msra.mxu0 %v958
        %4837 = vmatprep.subr.mxu0 %v977
        %4838 = vmatpush1.msra.mxu0 %v976
        %4839 = vmatprep.subr.mxu0 %v995
        %4840 = vmatpush1.msra.mxu0 %v994
        %4841 = vmatprep.subr.mxu0 %v1013
        %4842 = vmatpush1.msra.mxu0 %v1012
        %4843 = vmatprep.subr.mxu0 %v1031
        %4844 = vmatpush1.msra.mxu0 %v1030
        %4845 = vmatprep.subr.mxu0 %v1049
        %4846 = vmatpush1.msra.mxu0 %v1048
        %4847 = vmatprep.subr.mxu0 %v1067
        %4848 = vmatpush1.msra.mxu0 %v1066
        %4849 = vmatprep.subr.mxu0 %v1085
        %4850 = vmatpush1.msra.mxu0 %v1084
        %4851 = vmatprep.subr.mxu0 %v1103
        %4852 = vmatpush1.msra.mxu0 %v1102
        %4853 = vmatprep.subr.mxu0 %v1121
        %4854 = vmatpush1.msra.mxu0 %v1120
        %4855 = vmatprep.subr.mxu0 %v1139
        %4856 = vmatpush1.msra.mxu0 %v1138
        %4857 = vmatprep.subr.mxu0 %v1157
        %4858 = vmatpush1.msra.mxu0 %v1156
        %4859 = vmatprep.subr.mxu0 %v1175
        %4860 = vmatpush1.msra.mxu0 %v1174
        %4861 = vmatprep.subr.mxu0 %v1193
        %4862 = vmatpush1.msra.mxu0 %v1192
        %4863 = vmatprep.subr.mxu0 %v1211
        %4864 = vmatpush1.msra.mxu0 %v1210
        %4865 = vmatprep.subr.mxu0 %v1229
        %4866 = vmatpush1.msra.mxu0 %v1228
        %4867 = vmatprep.subr.mxu0 %v1247
        %4868 = vmatpush1.msra.mxu0 %v1246
        %4869 = vmatprep.subr.mxu0 %v1265
        %4870 = vmatpush1.msra.mxu0 %v1264
        %4871 = vmatprep.subr.mxu0 %v1283
        %4872 = vmatpush1.msra.mxu0 %v1282
        %4873 = vmatprep.subr.mxu0 %v1301
        %4874 = vmatpush1.msra.mxu0 %v1300
        %4875 = vmatprep.mubr.f32.mxu0 %v4130
        %4876 = vmatmul.mubr.f32.gmra.mrb[0].mxu0 %v4129
        %v4877 = vpop.f32.mrb[0].mxu0
        %v4878 = vadd.f32 0.0, %v4877
        %v4879 = vpop.f32.mrb[0].mxu0
        %v4880 = vadd.f32 0.0, %v4879
        %4881 = vdwg.mxu0
        %v4882 = vld [vmem:[#allocation10] sm:$0xf]
        %s4883 = scalar_lea.vmem [#allocation10], 4
        %v4884 = vld [vmem:[%s4883] sm:$0xf]
        %v4886 = vsel %vm1947, %v4884, 0
        %v4889 = vsel %vm1951, %v4381, 0
        %v4892 = vsel %vm1951, %v4383, 0
        %4894 = vmatprep.subr.mxu0 %v4892
        %4895 = vmatpush1.msra.mxu0 %v4889
        %4896 = vmatprep.subr.mxu0 0.0
        %4897 = vmatpush1.msra.mxu0 0.0
        %4898 = vmatprep.subr.mxu0 0.0
        %4899 = vmatpush1.msra.mxu0 0.0
        %4900 = vmatprep.subr.mxu0 0.0
        %4901 = vmatpush1.msra.mxu0 0.0
        %4902 = vmatprep.subr.mxu0 0.0
        %4903 = vmatpush1.msra.mxu0 0.0
        %4904 = vmatprep.subr.mxu0 0.0
        %4905 = vmatpush1.msra.mxu0 0.0
        %4906 = vmatprep.subr.mxu0 0.0
        %4907 = vmatpush1.msra.mxu0 0.0
        %4908 = vmatprep.subr.mxu0 0.0
        %4909 = vmatpush1.msra.mxu0 0.0
        %4910 = vmatprep.subr.mxu0 0.0
        %4911 = vmatpush1.msra.mxu0 0.0
        %4912 = vmatprep.subr.mxu0 0.0
        %4913 = vmatpush1.msra.mxu0 0.0
        %4914 = vmatprep.subr.mxu0 0.0
        %4915 = vmatpush1.msra.mxu0 0.0
        %4916 = vmatprep.subr.mxu0 0.0
        %4917 = vmatpush1.msra.mxu0 0.0
        %4918 = vmatprep.subr.mxu0 0.0
        %4919 = vmatpush1.msra.mxu0 0.0
        %4920 = vmatprep.subr.mxu0 0.0
        %4921 = vmatpush1.msra.mxu0 0.0
        %4922 = vmatprep.subr.mxu0 0.0
        %4923 = vmatpush1.msra.mxu0 0.0
        %4924 = vmatprep.subr.mxu0 0.0
        %4925 = vmatpush1.msra.mxu0 0.0
        %4926 = vmatprep.subr.mxu0 0.0
        %4927 = vmatpush1.msra.mxu0 0.0
        %4928 = vmatprep.subr.mxu0 0.0
        %4929 = vmatpush1.msra.mxu0 0.0
        %4930 = vmatprep.subr.mxu0 0.0
        %4931 = vmatpush1.msra.mxu0 0.0
        %4932 = vmatprep.subr.mxu0 0.0
        %4933 = vmatpush1.msra.mxu0 0.0
        %4934 = vmatprep.subr.mxu0 0.0
        %4935 = vmatpush1.msra.mxu0 0.0
        %4936 = vmatprep.subr.mxu0 0.0
        %4937 = vmatpush1.msra.mxu0 0.0
        %4938 = vmatprep.subr.mxu0 0.0
        %4939 = vmatpush1.msra.mxu0 0.0
        %4940 = vmatprep.subr.mxu0 0.0
        %4941 = vmatpush1.msra.mxu0 0.0
        %4942 = vmatprep.subr.mxu0 0.0
        %4943 = vmatpush1.msra.mxu0 0.0
        %4944 = vmatprep.subr.mxu0 0.0
        %4945 = vmatpush1.msra.mxu0 0.0
        %4946 = vmatprep.subr.mxu0 0.0
        %4947 = vmatpush1.msra.mxu0 0.0
        %4948 = vmatprep.subr.mxu0 0.0
        %4949 = vmatpush1.msra.mxu0 0.0
        %4950 = vmatprep.subr.mxu0 0.0
        %4951 = vmatpush1.msra.mxu0 0.0
        %4952 = vmatprep.subr.mxu0 0.0
        %4953 = vmatpush1.msra.mxu0 0.0
        %4954 = vmatprep.subr.mxu0 0.0
        %4955 = vmatpush1.msra.mxu0 0.0
        %4956 = vmatprep.subr.mxu0 0.0
        %4957 = vmatpush1.msra.mxu0 0.0
        %4958 = vmatprep.mubr.f32.mxu0 0.0
        %4959 = vmatmul.mubr.f32.gmra.mrb[0].mxu0 %v4886
        %v4960 = vpop.f32.mrb[0].mxu0
        %v4961 = vadd.f32 0.0, %v4960
        %v4962 = vpop.f32.mrb[0].mxu0
        %v4963 = vadd.f32 0.0, %v4962
        %4964 = vdwg.mxu0
        %v4966 = vsel %vm1947, %v4882, 0
        %v4969 = vsel %vm1951, %v4310, 0
        %v4972 = vsel %vm1951, %v4312, 0
        %4974 = vmatprep.subr.mxu0 %v4972
        %4975 = vmatpush1.msra.mxu0 %v4969
        %4976 = vmatprep.subr.mxu0 0.0
        %4977 = vmatpush1.msra.mxu0 0.0
        %4978 = vmatprep.subr.mxu0 0.0
        %4979 = vmatpush1.msra.mxu0 0.0
        %4980 = vmatprep.subr.mxu0 0.0
        %4981 = vmatpush1.msra.mxu0 0.0
        %4982 = vmatprep.subr.mxu0 0.0
        %4983 = vmatpush1.msra.mxu0 0.0
        %4984 = vmatprep.subr.mxu0 0.0
        %4985 = vmatpush1.msra.mxu0 0.0
        %4986 = vmatprep.subr.mxu0 0.0
        %4987 = vmatpush1.msra.mxu0 0.0
        %4988 = vmatprep.subr.mxu0 0.0
        %4989 = vmatpush1.msra.mxu0 0.0
        %4990 = vmatprep.subr.mxu0 0.0
        %4991 = vmatpush1.msra.mxu0 0.0
        %4992 = vmatprep.subr.mxu0 0.0
        %4993 = vmatpush1.msra.mxu0 0.0
        %4994 = vmatprep.subr.mxu0 0.0
        %4995 = vmatpush1.msra.mxu0 0.0
        %4996 = vmatprep.subr.mxu0 0.0
        %4997 = vmatpush1.msra.mxu0 0.0
        %4998 = vmatprep.subr.mxu0 0.0
        %4999 = vmatpush1.msra.mxu0 0.0
        %5000 = vmatprep.subr.mxu0 0.0
        %5001 = vmatpush1.msra.mxu0 0.0
        %5002 = vmatprep.subr.mxu0 0.0
        %5003 = vmatpush1.msra.mxu0 0.0
        %5004 = vmatprep.subr.mxu0 0.0
        %5005 = vmatpush1.msra.mxu0 0.0
        %5006 = vmatprep.subr.mxu0 0.0
        %5007 = vmatpush1.msra.mxu0 0.0
        %5008 = vmatprep.subr.mxu0 0.0
        %5009 = vmatpush1.msra.mxu0 0.0
        %5010 = vmatprep.subr.mxu0 0.0
        %5011 = vmatpush1.msra.mxu0 0.0
        %5012 = vmatprep.subr.mxu0 0.0
        %5013 = vmatpush1.msra.mxu0 0.0
        %5014 = vmatprep.subr.mxu0 0.0
        %5015 = vmatpush1.msra.mxu0 0.0
        %5016 = vmatprep.subr.mxu0 0.0
        %5017 = vmatpush1.msra.mxu0 0.0
        %5018 = vmatprep.subr.mxu0 0.0
        %5019 = vmatpush1.msra.mxu0 0.0
        %5020 = vmatprep.subr.mxu0 0.0
        %5021 = vmatpush1.msra.mxu0 0.0
        %5022 = vmatprep.subr.mxu0 0.0
        %5023 = vmatpush1.msra.mxu0 0.0
        %5024 = vmatprep.subr.mxu0 0.0
        %5025 = vmatpush1.msra.mxu0 0.0
        %5026 = vmatprep.subr.mxu0 0.0
        %5027 = vmatpush1.msra.mxu0 0.0
        %5028 = vmatprep.subr.mxu0 0.0
        %5029 = vmatpush1.msra.mxu0 0.0
        %5030 = vmatprep.subr.mxu0 0.0
        %5031 = vmatpush1.msra.mxu0 0.0
        %5032 = vmatprep.subr.mxu0 0.0
        %5033 = vmatpush1.msra.mxu0 0.0
        %5034 = vmatprep.subr.mxu0 0.0
        %5035 = vmatpush1.msra.mxu0 0.0
        %5036 = vmatprep.subr.mxu0 0.0
        %5037 = vmatpush1.msra.mxu0 0.0
        %5038 = vmatprep.mubr.f32.mxu0 0.0
        %5039 = vmatmul.mubr.f32.gmra.mrb[0].mxu0 %v4966
        %v5040 = vpop.f32.mrb[0].mxu0
        %v5041 = vadd.f32 %v4961, %v5040
        %v5042 = vpop.f32.mrb[0].mxu0
        %v5043 = vadd.f32 %v4963, %v5042
        %5044 = vdwg.mxu0
        %s5045 = scalar_lea.vmem [#allocation10], 8
        %v5046 = vld [vmem:[%s5045] sm:$0xf]
        %v5048 = vsel %vm1947, %v5046, 0
        %v5051 = vsel %vm1951, %v4452, 0
        %v5054 = vsel %vm1951, %v4454, 0
        %5056 = vmatprep.subr.mxu0 %v5054
        %5057 = vmatpush1.msra.mxu0 %v5051
        %5058 = vmatprep.subr.mxu0 0.0
        %5059 = vmatpush1.msra.mxu0 0.0
        %5060 = vmatprep.subr.mxu0 0.0
        %5061 = vmatpush1.msra.mxu0 0.0
        %5062 = vmatprep.subr.mxu0 0.0
        %5063 = vmatpush1.msra.mxu0 0.0
        %5064 = vmatprep.subr.mxu0 0.0
        %5065 = vmatpush1.msra.mxu0 0.0
        %5066 = vmatprep.subr.mxu0 0.0
        %5067 = vmatpush1.msra.mxu0 0.0
        %5068 = vmatprep.subr.mxu0 0.0
        %5069 = vmatpush1.msra.mxu0 0.0
        %5070 = vmatprep.subr.mxu0 0.0
        %5071 = vmatpush1.msra.mxu0 0.0
        %5072 = vmatprep.subr.mxu0 0.0
        %5073 = vmatpush1.msra.mxu0 0.0
        %5074 = vmatprep.subr.mxu0 0.0
        %5075 = vmatpush1.msra.mxu0 0.0
        %5076 = vmatprep.subr.mxu0 0.0
        %5077 = vmatpush1.msra.mxu0 0.0
        %5078 = vmatprep.subr.mxu0 0.0
        %5079 = vmatpush1.msra.mxu0 0.0
        %5080 = vmatprep.subr.mxu0 0.0
        %5081 = vmatpush1.msra.mxu0 0.0
        %5082 = vmatprep.subr.mxu0 0.0
        %5083 = vmatpush1.msra.mxu0 0.0
        %5084 = vmatprep.subr.mxu0 0.0
        %5085 = vmatpush1.msra.mxu0 0.0
        %5086 = vmatprep.subr.mxu0 0.0
        %5087 = vmatpush1.msra.mxu0 0.0
        %5088 = vmatprep.subr.mxu0 0.0
        %5089 = vmatpush1.msra.mxu0 0.0
        %5090 = vmatprep.subr.mxu0 0.0
        %5091 = vmatpush1.msra.mxu0 0.0
        %5092 = vmatprep.subr.mxu0 0.0
        %5093 = vmatpush1.msra.mxu0 0.0
        %5094 = vmatprep.subr.mxu0 0.0
        %5095 = vmatpush1.msra.mxu0 0.0
        %5096 = vmatprep.subr.mxu0 0.0
        %5097 = vmatpush1.msra.mxu0 0.0
        %5098 = vmatprep.subr.mxu0 0.0
        %5099 = vmatpush1.msra.mxu0 0.0
        %5100 = vmatprep.subr.mxu0 0.0
        %5101 = vmatpush1.msra.mxu0 0.0
        %5102 = vmatprep.subr.mxu0 0.0
        %5103 = vmatpush1.msra.mxu0 0.0
        %5104 = vmatprep.subr.mxu0 0.0
        %5105 = vmatpush1.msra.mxu0 0.0
        %5106 = vmatprep.subr.mxu0 0.0
        %5107 = vmatpush1.msra.mxu0 0.0
        %5108 = vmatprep.subr.mxu0 0.0
        %5109 = vmatpush1.msra.mxu0 0.0
        %5110 = vmatprep.subr.mxu0 0.0
        %5111 = vmatpush1.msra.mxu0 0.0
        %5112 = vmatprep.subr.mxu0 0.0
        %5113 = vmatpush1.msra.mxu0 0.0
        %5114 = vmatprep.subr.mxu0 0.0
        %5115 = vmatpush1.msra.mxu0 0.0
        %5116 = vmatprep.subr.mxu0 0.0
        %5117 = vmatpush1.msra.mxu0 0.0
        %5118 = vmatprep.subr.mxu0 0.0
        %5119 = vmatpush1.msra.mxu0 0.0
        %5120 = vmatprep.mubr.f32.mxu0 0.0
        %5121 = vmatmul.mubr.f32.gmra.mrb[0].mxu0 %v5048
        %v5122 = vpop.f32.mrb[0].mxu0
        %v5123 = vadd.f32 0.0, %v5122
        %v5124 = vpop.f32.mrb[0].mxu0
        %v5125 = vadd.f32 0.0, %v5124
        %5126 = vdwg.mxu0
        %v5127 = vadd.f32 %v5041, %v5123
        %v5128 = vadd.f32 %v5043, %v5125
        %s5129 = scalar_lea.vmem [#allocation10], 12
        %v5130 = vld [vmem:[%s5129] sm:$0xf]
        %v5132 = vsel %vm1947, %v5130, 0
        %v5135 = vsel %vm1951, %v4523, 0
        %v5138 = vsel %vm1951, %v4525, 0
        %5140 = vmatprep.subr.mxu0 %v5138
        %5141 = vmatpush1.msra.mxu0 %v5135
        %5142 = vmatprep.subr.mxu0 0.0
        %5143 = vmatpush1.msra.mxu0 0.0
        %5144 = vmatprep.subr.mxu0 0.0
        %5145 = vmatpush1.msra.mxu0 0.0
        %5146 = vmatprep.subr.mxu0 0.0
        %5147 = vmatpush1.msra.mxu0 0.0
        %5148 = vmatprep.subr.mxu0 0.0
        %5149 = vmatpush1.msra.mxu0 0.0
        %5150 = vmatprep.subr.mxu0 0.0
        %5151 = vmatpush1.msra.mxu0 0.0
        %5152 = vmatprep.subr.mxu0 0.0
        %5153 = vmatpush1.msra.mxu0 0.0
        %5154 = vmatprep.subr.mxu0 0.0
        %5155 = vmatpush1.msra.mxu0 0.0
        %5156 = vmatprep.subr.mxu0 0.0
        %5157 = vmatpush1.msra.mxu0 0.0
        %5158 = vmatprep.subr.mxu0 0.0
        %5159 = vmatpush1.msra.mxu0 0.0
        %5160 = vmatprep.subr.mxu0 0.0
        %5161 = vmatpush1.msra.mxu0 0.0
        %5162 = vmatprep.subr.mxu0 0.0
        %5163 = vmatpush1.msra.mxu0 0.0
        %5164 = vmatprep.subr.mxu0 0.0
        %5165 = vmatpush1.msra.mxu0 0.0
        %5166 = vmatprep.subr.mxu0 0.0
        %5167 = vmatpush1.msra.mxu0 0.0
        %5168 = vmatprep.subr.mxu0 0.0
        %5169 = vmatpush1.msra.mxu0 0.0
        %5170 = vmatprep.subr.mxu0 0.0
        %5171 = vmatpush1.msra.mxu0 0.0
        %5172 = vmatprep.subr.mxu0 0.0
        %5173 = vmatpush1.msra.mxu0 0.0
        %5174 = vmatprep.subr.mxu0 0.0
        %5175 = vmatpush1.msra.mxu0 0.0
        %5176 = vmatprep.subr.mxu0 0.0
        %5177 = vmatpush1.msra.mxu0 0.0
        %5178 = vmatprep.subr.mxu0 0.0
        %5179 = vmatpush1.msra.mxu0 0.0
        %5180 = vmatprep.subr.mxu0 0.0
        %5181 = vmatpush1.msra.mxu0 0.0
        %5182 = vmatprep.subr.mxu0 0.0
        %5183 = vmatpush1.msra.mxu0 0.0
        %5184 = vmatprep.subr.mxu0 0.0
        %5185 = vmatpush1.msra.mxu0 0.0
        %5186 = vmatprep.subr.mxu0 0.0
        %5187 = vmatpush1.msra.mxu0 0.0
        %5188 = vmatprep.subr.mxu0 0.0
        %5189 = vmatpush1.msra.mxu0 0.0
        %5190 = vmatprep.subr.mxu0 0.0
        %5191 = vmatpush1.msra.mxu0 0.0
        %5192 = vmatprep.subr.mxu0 0.0
        %5193 = vmatpush1.msra.mxu0 0.0
        %5194 = vmatprep.subr.mxu0 0.0
        %5195 = vmatpush1.msra.mxu0 0.0
        %5196 = vmatprep.subr.mxu0 0.0
        %5197 = vmatpush1.msra.mxu0 0.0
        %5198 = vmatprep.subr.mxu0 0.0
        %5199 = vmatpush1.msra.mxu0 0.0
        %5200 = vmatprep.subr.mxu0 0.0
        %5201 = vmatpush1.msra.mxu0 0.0
        %5202 = vmatprep.subr.mxu0 0.0
        %5203 = vmatpush1.msra.mxu0 0.0
        %5204 = vmatprep.mubr.f32.mxu0 0.0
        %5205 = vmatmul.mubr.f32.gmra.mrb[0].mxu0 %v5132
        %v5206 = vpop.f32.mrb[0].mxu0
        %v5207 = vadd.f32 0.0, %v5206
        %v5208 = vpop.f32.mrb[0].mxu0
        %v5209 = vadd.f32 0.0, %v5208
        %5210 = vdwg.mxu0
        %v5211 = vadd.f32 %v5127, %v5207
        %v5212 = vadd.f32 %v5128, %v5209
        %s5213 = scalar_lea.vmem [#allocation10], 16
        %v5214 = vld [vmem:[%s5213] sm:$0xf]
        %v5216 = vsel %vm1947, %v5214, 0
        %v5219 = vsel %vm1951, %v4594, 0
        %v5222 = vsel %vm1951, %v4596, 0
        %5224 = vmatprep.subr.mxu0 %v5222
        %5225 = vmatpush1.msra.mxu0 %v5219
        %5226 = vmatprep.subr.mxu0 0.0
        %5227 = vmatpush1.msra.mxu0 0.0
        %5228 = vmatprep.subr.mxu0 0.0
        %5229 = vmatpush1.msra.mxu0 0.0
        %5230 = vmatprep.subr.mxu0 0.0
        %5231 = vmatpush1.msra.mxu0 0.0
        %5232 = vmatprep.subr.mxu0 0.0
        %5233 = vmatpush1.msra.mxu0 0.0
        %5234 = vmatprep.subr.mxu0 0.0
        %5235 = vmatpush1.msra.mxu0 0.0
        %5236 = vmatprep.subr.mxu0 0.0
        %5237 = vmatpush1.msra.mxu0 0.0
        %5238 = vmatprep.subr.mxu0 0.0
        %5239 = vmatpush1.msra.mxu0 0.0
        %5240 = vmatprep.subr.mxu0 0.0
        %5241 = vmatpush1.msra.mxu0 0.0
        %5242 = vmatprep.subr.mxu0 0.0
        %5243 = vmatpush1.msra.mxu0 0.0
        %5244 = vmatprep.subr.mxu0 0.0
        %5245 = vmatpush1.msra.mxu0 0.0
        %5246 = vmatprep.subr.mxu0 0.0
        %5247 = vmatpush1.msra.mxu0 0.0
        %5248 = vmatprep.subr.mxu0 0.0
        %5249 = vmatpush1.msra.mxu0 0.0
        %5250 = vmatprep.subr.mxu0 0.0
        %5251 = vmatpush1.msra.mxu0 0.0
        %5252 = vmatprep.subr.mxu0 0.0
        %5253 = vmatpush1.msra.mxu0 0.0
        %5254 = vmatprep.subr.mxu0 0.0
        %5255 = vmatpush1.msra.mxu0 0.0
        %5256 = vmatprep.subr.mxu0 0.0
        %5257 = vmatpush1.msra.mxu0 0.0
        %5258 = vmatprep.subr.mxu0 0.0
        %5259 = vmatpush1.msra.mxu0 0.0
        %5260 = vmatprep.subr.mxu0 0.0
        %5261 = vmatpush1.msra.mxu0 0.0
        %5262 = vmatprep.subr.mxu0 0.0
        %5263 = vmatpush1.msra.mxu0 0.0
        %5264 = vmatprep.subr.mxu0 0.0
        %5265 = vmatpush1.msra.mxu0 0.0
        %5266 = vmatprep.subr.mxu0 0.0
        %5267 = vmatpush1.msra.mxu0 0.0
        %5268 = vmatprep.subr.mxu0 0.0
        %5269 = vmatpush1.msra.mxu0 0.0
        %5270 = vmatprep.subr.mxu0 0.0
        %5271 = vmatpush1.msra.mxu0 0.0
        %5272 = vmatprep.subr.mxu0 0.0
        %5273 = vmatpush1.msra.mxu0 0.0
        %5274 = vmatprep.subr.mxu0 0.0
        %5275 = vmatpush1.msra.mxu0 0.0
        %5276 = vmatprep.subr.mxu0 0.0
        %5277 = vmatpush1.msra.mxu0 0.0
        %5278 = vmatprep.subr.mxu0 0.0
        %5279 = vmatpush1.msra.mxu0 0.0
        %5280 = vmatprep.subr.mxu0 0.0
        %5281 = vmatpush1.msra.mxu0 0.0
        %5282 = vmatprep.subr.mxu0 0.0
        %5283 = vmatpush1.msra.mxu0 0.0
        %5284 = vmatprep.subr.mxu0 0.0
        %5285 = vmatpush1.msra.mxu0 0.0
        %5286 = vmatprep.subr.mxu0 0.0
        %5287 = vmatpush1.msra.mxu0 0.0
        %5288 = vmatprep.mubr.f32.mxu0 0.0
        %5289 = vmatmul.mubr.f32.gmra.mrb[0].mxu0 %v5216
        %v5290 = vpop.f32.mrb[0].mxu0
        %v5291 = vadd.f32 0.0, %v5290
        %v5292 = vpop.f32.mrb[0].mxu0
        %v5293 = vadd.f32 0.0, %v5292
        %5294 = vdwg.mxu0
        %v5295 = vadd.f32 %v5211, %v5291
        %v5296 = vadd.f32 %v5212, %v5293
        %s5297 = scalar_lea.vmem [#allocation10], 20
        %v5298 = vld [vmem:[%s5297] sm:$0xf]
        %v5300 = vsel %vm1947, %v5298, 0
        %v5303 = vsel %vm1951, %v4665, 0
        %v5306 = vsel %vm1951, %v4667, 0
        %5308 = vmatprep.subr.mxu0 %v5306
        %5309 = vmatpush1.msra.mxu0 %v5303
        %5310 = vmatprep.subr.mxu0 0.0
        %5311 = vmatpush1.msra.mxu0 0.0
        %5312 = vmatprep.subr.mxu0 0.0
        %5313 = vmatpush1.msra.mxu0 0.0
        %5314 = vmatprep.subr.mxu0 0.0
        %5315 = vmatpush1.msra.mxu0 0.0
        %5316 = vmatprep.subr.mxu0 0.0
        %5317 = vmatpush1.msra.mxu0 0.0
        %5318 = vmatprep.subr.mxu0 0.0
        %5319 = vmatpush1.msra.mxu0 0.0
        %5320 = vmatprep.subr.mxu0 0.0
        %5321 = vmatpush1.msra.mxu0 0.0
        %5322 = vmatprep.subr.mxu0 0.0
        %5323 = vmatpush1.msra.mxu0 0.0
        %5324 = vmatprep.subr.mxu0 0.0
        %5325 = vmatpush1.msra.mxu0 0.0
        %5326 = vmatprep.subr.mxu0 0.0
        %5327 = vmatpush1.msra.mxu0 0.0
        %5328 = vmatprep.subr.mxu0 0.0
        %5329 = vmatpush1.msra.mxu0 0.0
        %5330 = vmatprep.subr.mxu0 0.0
        %5331 = vmatpush1.msra.mxu0 0.0
        %5332 = vmatprep.subr.mxu0 0.0
        %5333 = vmatpush1.msra.mxu0 0.0
        %5334 = vmatprep.subr.mxu0 0.0
        %5335 = vmatpush1.msra.mxu0 0.0
        %5336 = vmatprep.subr.mxu0 0.0
        %5337 = vmatpush1.msra.mxu0 0.0
        %5338 = vmatprep.subr.mxu0 0.0
        %5339 = vmatpush1.msra.mxu0 0.0
        %5340 = vmatprep.subr.mxu0 0.0
        %5341 = vmatpush1.msra.mxu0 0.0
        %5342 = vmatprep.subr.mxu0 0.0
        %5343 = vmatpush1.msra.mxu0 0.0
        %5344 = vmatprep.subr.mxu0 0.0
        %5345 = vmatpush1.msra.mxu0 0.0
        %5346 = vmatprep.subr.mxu0 0.0
        %5347 = vmatpush1.msra.mxu0 0.0
        %5348 = vmatprep.subr.mxu0 0.0
        %5349 = vmatpush1.msra.mxu0 0.0
        %5350 = vmatprep.subr.mxu0 0.0
        %5351 = vmatpush1.msra.mxu0 0.0
        %5352 = vmatprep.subr.mxu0 0.0
        %5353 = vmatpush1.msra.mxu0 0.0
        %5354 = vmatprep.subr.mxu0 0.0
        %5355 = vmatpush1.msra.mxu0 0.0
        %5356 = vmatprep.subr.mxu0 0.0
        %5357 = vmatpush1.msra.mxu0 0.0
        %5358 = vmatprep.subr.mxu0 0.0
        %5359 = vmatpush1.msra.mxu0 0.0
        %5360 = vmatprep.subr.mxu0 0.0
        %5361 = vmatpush1.msra.mxu0 0.0
        %5362 = vmatprep.subr.mxu0 0.0
        %5363 = vmatpush1.msra.mxu0 0.0
        %5364 = vmatprep.subr.mxu0 0.0
        %5365 = vmatpush1.msra.mxu0 0.0
        %5366 = vmatprep.subr.mxu0 0.0
        %5367 = vmatpush1.msra.mxu0 0.0
        %5368 = vmatprep.subr.mxu0 0.0
        %5369 = vmatpush1.msra.mxu0 0.0
        %5370 = vmatprep.subr.mxu0 0.0
        %5371 = vmatpush1.msra.mxu0 0.0
        %5372 = vmatprep.mubr.f32.mxu0 0.0
        %5373 = vmatmul.mubr.f32.gmra.mrb[0].mxu0 %v5300
        %v5374 = vpop.f32.mrb[0].mxu0
        %v5375 = vadd.f32 0.0, %v5374
        %v5376 = vpop.f32.mrb[0].mxu0
        %v5377 = vadd.f32 0.0, %v5376
        %5378 = vdwg.mxu0
        %v5379 = vadd.f32 %v5295, %v5375
        %v5380 = vadd.f32 %v5296, %v5377
        %s5381 = scalar_lea.vmem [#allocation10], 24
        %v5382 = vld [vmem:[%s5381] sm:$0xf]
        %v5384 = vsel %vm1947, %v5382, 0
        %v5387 = vsel %vm1951, %v4736, 0
        %v5390 = vsel %vm1951, %v4738, 0
        %5392 = vmatprep.subr.mxu0 %v5390
        %5393 = vmatpush1.msra.mxu0 %v5387
        %5394 = vmatprep.subr.mxu0 0.0
        %5395 = vmatpush1.msra.mxu0 0.0
        %5396 = vmatprep.subr.mxu0 0.0
        %5397 = vmatpush1.msra.mxu0 0.0
        %5398 = vmatprep.subr.mxu0 0.0
        %5399 = vmatpush1.msra.mxu0 0.0
        %5400 = vmatprep.subr.mxu0 0.0
        %5401 = vmatpush1.msra.mxu0 0.0
        %5402 = vmatprep.subr.mxu0 0.0
        %5403 = vmatpush1.msra.mxu0 0.0
        %5404 = vmatprep.subr.mxu0 0.0
        %5405 = vmatpush1.msra.mxu0 0.0
        %5406 = vmatprep.subr.mxu0 0.0
        %5407 = vmatpush1.msra.mxu0 0.0
        %5408 = vmatprep.subr.mxu0 0.0
        %5409 = vmatpush1.msra.mxu0 0.0
        %5410 = vmatprep.subr.mxu0 0.0
        %5411 = vmatpush1.msra.mxu0 0.0
        %5412 = vmatprep.subr.mxu0 0.0
        %5413 = vmatpush1.msra.mxu0 0.0
        %5414 = vmatprep.subr.mxu0 0.0
        %5415 = vmatpush1.msra.mxu0 0.0
        %5416 = vmatprep.subr.mxu0 0.0
        %5417 = vmatpush1.msra.mxu0 0.0
        %5418 = vmatprep.subr.mxu0 0.0
        %5419 = vmatpush1.msra.mxu0 0.0
        %5420 = vmatprep.subr.mxu0 0.0
        %5421 = vmatpush1.msra.mxu0 0.0
        %5422 = vmatprep.subr.mxu0 0.0
        %5423 = vmatpush1.msra.mxu0 0.0
        %5424 = vmatprep.subr.mxu0 0.0
        %5425 = vmatpush1.msra.mxu0 0.0
        %5426 = vmatprep.subr.mxu0 0.0
        %5427 = vmatpush1.msra.mxu0 0.0
        %5428 = vmatprep.subr.mxu0 0.0
        %5429 = vmatpush1.msra.mxu0 0.0
        %5430 = vmatprep.subr.mxu0 0.0
        %5431 = vmatpush1.msra.mxu0 0.0
        %5432 = vmatprep.subr.mxu0 0.0
        %5433 = vmatpush1.msra.mxu0 0.0
        %5434 = vmatprep.subr.mxu0 0.0
        %5435 = vmatpush1.msra.mxu0 0.0
        %5436 = vmatprep.subr.mxu0 0.0
        %5437 = vmatpush1.msra.mxu0 0.0
        %5438 = vmatprep.subr.mxu0 0.0
        %5439 = vmatpush1.msra.mxu0 0.0
        %5440 = vmatprep.subr.mxu0 0.0
        %5441 = vmatpush1.msra.mxu0 0.0
        %5442 = vmatprep.subr.mxu0 0.0
        %5443 = vmatpush1.msra.mxu0 0.0
        %5444 = vmatprep.subr.mxu0 0.0
        %5445 = vmatpush1.msra.mxu0 0.0
        %5446 = vmatprep.subr.mxu0 0.0
        %5447 = vmatpush1.msra.mxu0 0.0
        %5448 = vmatprep.subr.mxu0 0.0
        %5449 = vmatpush1.msra.mxu0 0.0
        %5450 = vmatprep.subr.mxu0 0.0
        %5451 = vmatpush1.msra.mxu0 0.0
        %5452 = vmatprep.subr.mxu0 0.0
        %5453 = vmatpush1.msra.mxu0 0.0
        %5454 = vmatprep.subr.mxu0 0.0
        %5455 = vmatpush1.msra.mxu0 0.0
        %5456 = vmatprep.mubr.f32.mxu0 0.0
        %5457 = vmatmul.mubr.f32.gmra.mrb[0].mxu0 %v5384
        %v5458 = vpop.f32.mrb[0].mxu0
        %v5459 = vadd.f32 0.0, %v5458
        %v5460 = vpop.f32.mrb[0].mxu0
        %v5461 = vadd.f32 0.0, %v5460
        %5462 = vdwg.mxu0
        %v5463 = vadd.f32 %v5379, %v5459
        %v5464 = vadd.f32 %v5380, %v5461
        %s5465 = scalar_lea.vmem [#allocation10], 28
        %v5466 = vld [vmem:[%s5465] sm:$0xf]
        %v5468 = vsel %vm1947, %v5466, 0
        %v5471 = vsel %vm1951, %v4807, 0
        %v5474 = vsel %vm1951, %v4809, 0
        %5476 = vmatprep.subr.mxu0 %v5474
        %5477 = vmatpush1.msra.mxu0 %v5471
        %5478 = vmatprep.subr.mxu0 0.0
        %5479 = vmatpush1.msra.mxu0 0.0
        %5480 = vmatprep.subr.mxu0 0.0
        %5481 = vmatpush1.msra.mxu0 0.0
        %5482 = vmatprep.subr.mxu0 0.0
        %5483 = vmatpush1.msra.mxu0 0.0
        %5484 = vmatprep.subr.mxu0 0.0
        %5485 = vmatpush1.msra.mxu0 0.0
        %5486 = vmatprep.subr.mxu0 0.0
        %5487 = vmatpush1.msra.mxu0 0.0
        %5488 = vmatprep.subr.mxu0 0.0
        %5489 = vmatpush1.msra.mxu0 0.0
        %5490 = vmatprep.subr.mxu0 0.0
        %5491 = vmatpush1.msra.mxu0 0.0
        %5492 = vmatprep.subr.mxu0 0.0
        %5493 = vmatpush1.msra.mxu0 0.0
        %5494 = vmatprep.subr.mxu0 0.0
        %5495 = vmatpush1.msra.mxu0 0.0
        %5496 = vmatprep.subr.mxu0 0.0
        %5497 = vmatpush1.msra.mxu0 0.0
        %5498 = vmatprep.subr.mxu0 0.0
        %5499 = vmatpush1.msra.mxu0 0.0
        %5500 = vmatprep.subr.mxu0 0.0
        %5501 = vmatpush1.msra.mxu0 0.0
        %5502 = vmatprep.subr.mxu0 0.0
        %5503 = vmatpush1.msra.mxu0 0.0
        %5504 = vmatprep.subr.mxu0 0.0
        %5505 = vmatpush1.msra.mxu0 0.0
        %5506 = vmatprep.subr.mxu0 0.0
        %5507 = vmatpush1.msra.mxu0 0.0
        %5508 = vmatprep.subr.mxu0 0.0
        %5509 = vmatpush1.msra.mxu0 0.0
        %5510 = vmatprep.subr.mxu0 0.0
        %5511 = vmatpush1.msra.mxu0 0.0
        %5512 = vmatprep.subr.mxu0 0.0
        %5513 = vmatpush1.msra.mxu0 0.0
        %5514 = vmatprep.subr.mxu0 0.0
        %5515 = vmatpush1.msra.mxu0 0.0
        %5516 = vmatprep.subr.mxu0 0.0
        %5517 = vmatpush1.msra.mxu0 0.0
        %5518 = vmatprep.subr.mxu0 0.0
        %5519 = vmatpush1.msra.mxu0 0.0
        %5520 = vmatprep.subr.mxu0 0.0
        %5521 = vmatpush1.msra.mxu0 0.0
        %5522 = vmatprep.subr.mxu0 0.0
        %5523 = vmatpush1.msra.mxu0 0.0
        %5524 = vmatprep.subr.mxu0 0.0
        %5525 = vmatpush1.msra.mxu0 0.0
        %5526 = vmatprep.subr.mxu0 0.0
        %5527 = vmatpush1.msra.mxu0 0.0
        %5528 = vmatprep.subr.mxu0 0.0
        %5529 = vmatpush1.msra.mxu0 0.0
        %5530 = vmatprep.subr.mxu0 0.0
        %5531 = vmatpush1.msra.mxu0 0.0
        %5532 = vmatprep.subr.mxu0 0.0
        %5533 = vmatpush1.msra.mxu0 0.0
        %5534 = vmatprep.subr.mxu0 0.0
        %5535 = vmatpush1.msra.mxu0 0.0
        %5536 = vmatprep.subr.mxu0 0.0
        %5537 = vmatpush1.msra.mxu0 0.0
        %5538 = vmatprep.subr.mxu0 0.0
        %5539 = vmatpush1.msra.mxu0 0.0
        %5540 = vmatprep.mubr.f32.mxu0 0.0
        %5541 = vmatmul.mubr.f32.gmra.mrb[0].mxu0 %v5468
        %v5542 = vpop.f32.mrb[0].mxu0
        %v5543 = vadd.f32 0.0, %v5542
        %v5544 = vpop.f32.mrb[0].mxu0
        %v5545 = vadd.f32 0.0, %v5544
        %5546 = vdwg.mxu0
        %v5547 = vadd.f32 %v5463, %v5543
        %v5548 = vadd.f32 %v5464, %v5545
        %s5549 = scalar_lea.vmem [#allocation10], 32
        %v5550 = vld [vmem:[%s5549] sm:$0xf]
        %v5552 = vsel %vm1947, %v5550, 0
        %v5555 = vsel %vm1951, %v4878, 0
        %v5558 = vsel %vm1951, %v4880, 0
        %5560 = vmatprep.subr.mxu0 %v5558
        %5561 = vmatpush1.msra.mxu0 %v5555
        %5562 = vmatprep.subr.mxu0 0.0
        %5563 = vmatpush1.msra.mxu0 0.0
        %5564 = vmatprep.subr.mxu0 0.0
        %5565 = vmatpush1.msra.mxu0 0.0
        %5566 = vmatprep.subr.mxu0 0.0
        %5567 = vmatpush1.msra.mxu0 0.0
        %5568 = vmatprep.subr.mxu0 0.0
        %5569 = vmatpush1.msra.mxu0 0.0
        %5570 = vmatprep.subr.mxu0 0.0
        %5571 = vmatpush1.msra.mxu0 0.0
        %5572 = vmatprep.subr.mxu0 0.0
        %5573 = vmatpush1.msra.mxu0 0.0
        %5574 = vmatprep.subr.mxu0 0.0
        %5575 = vmatpush1.msra.mxu0 0.0
        %5576 = vmatprep.subr.mxu0 0.0
        %5577 = vmatpush1.msra.mxu0 0.0
        %5578 = vmatprep.subr.mxu0 0.0
        %5579 = vmatpush1.msra.mxu0 0.0
        %5580 = vmatprep.subr.mxu0 0.0
        %5581 = vmatpush1.msra.mxu0 0.0
        %5582 = vmatprep.subr.mxu0 0.0
        %5583 = vmatpush1.msra.mxu0 0.0
        %5584 = vmatprep.subr.mxu0 0.0
        %5585 = vmatpush1.msra.mxu0 0.0
        %5586 = vmatprep.subr.mxu0 0.0
        %5587 = vmatpush1.msra.mxu0 0.0
        %5588 = vmatprep.subr.mxu0 0.0
        %5589 = vmatpush1.msra.mxu0 0.0
        %5590 = vmatprep.subr.mxu0 0.0
        %5591 = vmatpush1.msra.mxu0 0.0
        %5592 = vmatprep.subr.mxu0 0.0
        %5593 = vmatpush1.msra.mxu0 0.0
        %5594 = vmatprep.subr.mxu0 0.0
        %5595 = vmatpush1.msra.mxu0 0.0
        %5596 = vmatprep.subr.mxu0 0.0
        %5597 = vmatpush1.msra.mxu0 0.0
        %5598 = vmatprep.subr.mxu0 0.0
        %5599 = vmatpush1.msra.mxu0 0.0
        %5600 = vmatprep.subr.mxu0 0.0
        %5601 = vmatpush1.msra.mxu0 0.0
        %5602 = vmatprep.subr.mxu0 0.0
        %5603 = vmatpush1.msra.mxu0 0.0
        %5604 = vmatprep.subr.mxu0 0.0
        %5605 = vmatpush1.msra.mxu0 0.0
        %5606 = vmatprep.subr.mxu0 0.0
        %5607 = vmatpush1.msra.mxu0 0.0
        %5608 = vmatprep.subr.mxu0 0.0
        %5609 = vmatpush1.msra.mxu0 0.0
        %5610 = vmatprep.subr.mxu0 0.0
        %5611 = vmatpush1.msra.mxu0 0.0
        %5612 = vmatprep.subr.mxu0 0.0
        %5613 = vmatpush1.msra.mxu0 0.0
        %5614 = vmatprep.subr.mxu0 0.0
        %5615 = vmatpush1.msra.mxu0 0.0
        %5616 = vmatprep.subr.mxu0 0.0
        %5617 = vmatpush1.msra.mxu0 0.0
        %5618 = vmatprep.subr.mxu0 0.0
        %5619 = vmatpush1.msra.mxu0 0.0
        %5620 = vmatprep.subr.mxu0 0.0
        %5621 = vmatpush1.msra.mxu0 0.0
        %5622 = vmatprep.subr.mxu0 0.0
        %5623 = vmatpush1.msra.mxu0 0.0
        %5624 = vmatprep.mubr.f32.mxu0 0.0
        %5625 = vmatmul.mubr.f32.gmra.mrb[0].mxu0 %v5552
        %v5626 = vpop.f32.mrb[0].mxu0
        %v5627 = vadd.f32 0.0, %v5626
        %v5628 = vpop.f32.mrb[0].mxu0
        %v5629 = vadd.f32 0.0, %v5628
        %5630 = vdwg.mxu0
        %v5631 = vadd.f32 %v5547, %v5627
        %v5632 = vadd.f32 %v5548, %v5629
        %v5633 = vld [vmem:[#allocation12] sm:$0xf]
        %5635 = vset.pattern.permute.xlu0 0
        %5636 = vperm.xlu0 %5635, %v5633
        %v5637 = vpop.permute.xlu0 %5636
        %v5639 = vadd.f32 %v5631, %v5637
        %v5640 = vadd.f32 %v5632, %v5637
        %v5643 = vcombine.low %v5639, %v5640
        %5645 = vst [vmem:[%s697] sm:$0xff] %v5643
        %v5648 = vcombine.low %v4129, %v4130
        %5650 = vst [vmem:[%s702] sm:$0xff] %v5648
        %5651 = vst [vmem:[%s707] sm:$0xff] %v2703
        %5652 = vst [vmem:[%s707 + $0x8] sm:$0xff] %v2704
        %5653 = vst [vmem:[%s712] sm:$0xff] %v4105
        %5654 = vst [vmem:[%s712 + $0x8] sm:$0xff] %v4106
        %v5657 = vcombine.low %v4241, %v4242
        %5659 = vst [vmem:[%s717] sm:$0xff] %v5657
        %v5662 = vrot.slane %v4215, 4
        %v5663 = vrot.slane %v4216, 4
        %v5666 = vsel %vm1951, %v5662, 0.0
        %v5667 = vrot.slane %v5666, 4
        %v5668 = vadd.f32 %v5666, %v5667
        %v5669 = vrot.slane %v5668, 2
        %v5670 = vadd.f32 %v5668, %v5669
        %v5671 = vrot.slane %v5670, 1
        %v5672 = vadd.f32 %v5670, %v5671
        %v5673 = vsel %vm1951, %v5663, 0.0
        %v5674 = vrot.slane %v5673, 4
        %v5675 = vadd.f32 %v5673, %v5674
        %v5676 = vrot.slane %v5675, 2
        %v5677 = vadd.f32 %v5675, %v5676
        %v5678 = vrot.slane %v5677, 1
        %v5679 = vadd.f32 %v5677, %v5678
        %v5682 = vcombine.low %v5672, %v5679
        %v5684 = vunpack.c.l.s4 1966171168
        %v5685 = vunpack.c.0.s8 %v5684
        %v5686 = vlaneseq
        %v5687 = vshrl.u32 %v5686, 7
        %v5688 = vsub.s32 %v5685, %v5687
        %v5689 = vrot.slane %v5682, %v5688
        %v5691 = vunpack.c.l.s4 1966171168
        %v5692 = vunpack.c.0.s8 %v5691
        %v5693 = vlaneseq
        %v5694 = vshrl.u32 %v5693, 7
        %v5695 = vsub.s32 %v5692, %v5694
        %v5696 = vrot.slane %v5689, %v5695
        %v5698 = vlaneseq
        %vm5699 = vcmp.ge.s32.totalorder %v5698, 0
        %vm5700 = vcmp.lt.s32.totalorder %v5698, 256
        %vm5701 = vmand %vm5699, %vm5700
        %5702 = vst.msk [vmem:[%s721] sm:$0x3] %vm5701, %v5696
        %v5703 = vlaneseq
        %v5704 = vand.u32 %v5703, 127
        %vm5705 = vcmp.eq.s32.totalorder %v5704, 0
        %v5706 = vsel %vm1951, %v4169, 0.0
        %v5707 = vsel %vm1951, %v4170, 0.0
        %v5708 = vadd.f32 %v5706, %v5707
        %5709 = vadd.xlane.f32.xlu0 %v5708
        %v5710 = vpop.xlane.xlu0 %5709
        %v5711 = vrot.slane %v5710, 4
        %v5712 = vadd.f32 %v5710, %v5711
        %v5713 = vrot.slane %v5712, 2
        %v5714 = vadd.f32 %v5712, %v5713
        %v5715 = vrot.slane %v5714, 1
        %v5716 = vadd.f32 %v5714, %v5715
        %s5717 = vtos %v5716
        %v5718 = vstv %s5717
        %v5719 = vsel %vm5705, %v5718, 0.0
        %vm5720 = vcmp.eq.s32.totalorder %v5704, 1
        %v5721 = vsel %vm1951, %v4191, 0.0
        %v5722 = vsel %vm1951, %v4192, 0.0
        %v5723 = vadd.f32 %v5721, %v5722
        %5724 = vadd.xlane.f32.xlu0 %v5723
        %v5725 = vpop.xlane.xlu0 %5724
        %v5726 = vrot.slane %v5725, 4
        %v5727 = vadd.f32 %v5725, %v5726
        %v5728 = vrot.slane %v5727, 2
        %v5729 = vadd.f32 %v5727, %v5728
        %v5730 = vrot.slane %v5729, 1
        %v5731 = vadd.f32 %v5729, %v5730
        %s5732 = vtos %v5731
        %v5733 = vstv %s5732
        %v5734 = vsel %vm5720, %v5733, 0.0
        %v5735 = vadd.f32 %v5719, %v5734
        %vm5736 = vcmp.eq.s32.totalorder %v5704, 2
        %v5737 = vsel %vm1951, %v4241, 0.0
        %v5738 = vsel %vm1951, %v4242, 0.0
        %v5739 = vadd.f32 %v5737, %v5738
        %5740 = vadd.xlane.f32.xlu0 %v5739
        %v5741 = vpop.xlane.xlu0 %5740
        %v5742 = vrot.slane %v5741, 4
        %v5743 = vadd.f32 %v5741, %v5742
        %v5744 = vrot.slane %v5743, 2
        %v5745 = vadd.f32 %v5743, %v5744
        %v5746 = vrot.slane %v5745, 1
        %v5747 = vadd.f32 %v5745, %v5746
        %s5748 = vtos %v5747
        %v5749 = vstv %s5748
        %v5750 = vsel %vm5736, %v5749, 0.0
        %v5751 = vadd.f32 %v5735, %v5750
        %5752 = vst [vmem:[%s724] sm:$0x1] %v5751
        %p5753 = scmp.lt.s32.totalorder %s32, 1
        %s5754 = scalar_select %p5753, %s32, 1
        %s5755 = smul.addr %s5754, 2
        %s5756 = smul.addr %s5755, 4
        %s5757 = scalar_lea.vmem %s10, %s5756
        %p5758 = scmp.lt.s32.totalorder %s32, 1
        %s5759 = scalar_select %p5758, %s32, 1
        %s5760 = smul.addr %s5759, 2
        %s5761 = smul.addr %s5760, 4
        %s5762 = scalar_lea.vmem %s11, %s5761
        %p5763 = scmp.lt.s32.totalorder %s32, 1
        %s5764 = scalar_select %p5763, %s32, 1
        %s5765 = smul.addr %s5764, 2
        %s5766 = smul.addr %s5765, 8
        %s5767 = scalar_lea.vmem %s12, %s5766
        %p5768 = scmp.lt.s32.totalorder %s32, 1
        %s5769 = scalar_select %p5768, %s32, 1
        %s5770 = smul.addr %s5769, 2
        %s5771 = smul.addr %s5770, 8
        %s5772 = scalar_lea.vmem %s13, %s5771
        %p5773 = scmp.lt.s32.totalorder %s32, 1
        %s5774 = scalar_select %p5773, %s32, 1
        %s5775 = smul.addr %s5774, 2
        %s5776 = smul.addr %s5775, 4
        %s5777 = scalar_lea.vmem %s14, %s5776
        %p5778 = scmp.lt.s32.totalorder %s32, 1
        %s5779 = scalar_select %p5778, %s32, 1
        %s5780 = smul.addr %s5779, 2
        %s5781 = scalar_lea.vmem %s15, %s5780
        %p5782 = scmp.lt.s32.totalorder %s32, 1
        %s5783 = scalar_select %p5782, %s32, 1
        %s5784 = scalar_lea.vmem %s16, %s5783
        // Predicated region
        $region89: #{normal_stochastic_block_2d.1} parent=59 // pred_check
          %p5785 = pneg %p275
        $region90: #{normal_stochastic_block_2d.1} parent=59 // pred_check_branch
          %5787 = sbr.rel (%p5785) target = $region92
        $region91: #{normal_stochastic_block_2d.1} parent=59 // pred_region
          _
        $region92: #{normal_stochastic_block_2d.1} parent=59 // pred_fallthru
          _
        // Predicated region
        $region93: #{normal_stochastic_block_2d.1} parent=59 // pred_check
          %p5788 = pneg %p301
        $region94: #{normal_stochastic_block_2d.1} parent=59 // pred_check_branch
          %5790 = sbr.rel (%p5788) target = $region96
        $region95: #{normal_stochastic_block_2d.1} parent=59 // pred_region
          _
        $region96: #{normal_stochastic_block_2d.1} parent=59 // pred_fallthru
          _
        // Predicated region
        $region97: #{normal_stochastic_block_2d.1} parent=59 // pred_check
          %p5791 = pneg %p327
        $region98: #{normal_stochastic_block_2d.1} parent=59 // pred_check_branch
          %5793 = sbr.rel (%p5791) target = $region100
        $region99: #{normal_stochastic_block_2d.1} parent=59 // pred_region
          _
        $region100: #{normal_stochastic_block_2d.1} parent=59 // pred_fallthru
          _
        // Predicated region
        $region101: #{normal_stochastic_block_2d.1} parent=59 // pred_check
          %p5794 = pneg %p353
        $region102: #{normal_stochastic_block_2d.1} parent=59 // pred_check_branch
          %5796 = sbr.rel (%p5794) target = $region104
        $region103: #{normal_stochastic_block_2d.1} parent=59 // pred_region
          _
        $region104: #{normal_stochastic_block_2d.1} parent=59 // pred_fallthru
          _
        // Predicated region
        $region105: #{normal_stochastic_block_2d.1} parent=59 // pred_check
          %p5797 = pneg %p379
        $region106: #{normal_stochastic_block_2d.1} parent=59 // pred_check_branch
          %5799 = sbr.rel (%p5797) target = $region108
        $region107: #{normal_stochastic_block_2d.1} parent=59 // pred_region
          _
        $region108: #{normal_stochastic_block_2d.1} parent=59 // pred_fallthru
          _
        // Predicated region
        $region109: #{normal_stochastic_block_2d.1} parent=59 // pred_check
          %p5800 = pneg %p405
        $region110: #{normal_stochastic_block_2d.1} parent=59 // pred_check_branch
          %5802 = sbr.rel (%p5800) target = $region112
        $region111: #{normal_stochastic_block_2d.1} parent=59 // pred_region
          _
        $region112: #{normal_stochastic_block_2d.1} parent=59 // pred_fallthru
          _
        // Predicated region
        $region113: #{normal_stochastic_block_2d.1} parent=59 // pred_check
          %p5803 = pneg %p431
        $region114: #{normal_stochastic_block_2d.1} parent=59 // pred_check_branch
          %5805 = sbr.rel (%p5803) target = $region116
        $region115: #{normal_stochastic_block_2d.1} parent=59 // pred_region
          _
        $region116: #{normal_stochastic_block_2d.1} parent=59 // pred_fallthru
          _
      $region60: #{normal_stochastic_block_2d.1} parent=5 // pred_fallthru
        _
      %p5806 = scmp.le.s32.totalorder 2, %s27
      // Predicated region
      $region117: #{normal_stochastic_block_2d.1} parent=5 // pred_check
        %p5807 = pneg %p5806
      $region118: #{normal_stochastic_block_2d.1} parent=5 // pred_check_branch
        %5809 = sbr.rel (%p5807) target = $region120
      $region119: #{normal_stochastic_block_2d.1} parent=5 // pred_region
        %s5810 = ssub.s32 %s27, 2
        // Predicated region
        $region121: #{normal_stochastic_block_2d.1} parent=119 // pred_check
          %p5811 = pneg %p281
        $region122: #{normal_stochastic_block_2d.1} parent=119 // pred_check_branch
          %5813 = sbr.rel (%p5811) target = $region124
        $region123: #{normal_stochastic_block_2d.1} parent=119 // pred_region
          %p5814 = scmp.lt.s32.totalorder %s33, 1
          %s5815 = scalar_select %p5814, %s33, 1
          %s5816 = smul.addr %s5815, 2
          %s5817 = smul.addr %s5816, 4
          %s5818 = scalar_lea.vmem %s10, %s5817
        $region124: #{normal_stochastic_block_2d.1} parent=119 // pred_fallthru
          _
        // Predicated region
        $region125: #{normal_stochastic_block_2d.1} parent=119 // pred_check
          %p5819 = pneg %p307
        $region126: #{normal_stochastic_block_2d.1} parent=119 // pred_check_branch
          %5821 = sbr.rel (%p5819) target = $region128
        $region127: #{normal_stochastic_block_2d.1} parent=119 // pred_region
          %p5822 = scmp.lt.s32.totalorder %s33, 1
          %s5823 = scalar_select %p5822, %s33, 1
          %s5824 = smul.addr %s5823, 2
          %s5825 = smul.addr %s5824, 4
          %s5826 = scalar_lea.vmem %s11, %s5825
        $region128: #{normal_stochastic_block_2d.1} parent=119 // pred_fallthru
          _
        // Predicated region
        $region129: #{normal_stochastic_block_2d.1} parent=119 // pred_check
          %p5827 = pneg %p333
        $region130: #{normal_stochastic_block_2d.1} parent=119 // pred_check_branch
          %5829 = sbr.rel (%p5827) target = $region132
        $region131: #{normal_stochastic_block_2d.1} parent=119 // pred_region
          %p5830 = scmp.lt.s32.totalorder %s33, 1
          %s5831 = scalar_select %p5830, %s33, 1
          %s5832 = smul.addr %s5831, 2
          %s5833 = smul.addr %s5832, 8
          %s5834 = scalar_lea.vmem %s12, %s5833
        $region132: #{normal_stochastic_block_2d.1} parent=119 // pred_fallthru
          _
        // Predicated region
        $region133: #{normal_stochastic_block_2d.1} parent=119 // pred_check
          %p5835 = pneg %p359
        $region134: #{normal_stochastic_block_2d.1} parent=119 // pred_check_branch
          %5837 = sbr.rel (%p5835) target = $region136
        $region135: #{normal_stochastic_block_2d.1} parent=119 // pred_region
          %p5838 = scmp.lt.s32.totalorder %s33, 1
          %s5839 = scalar_select %p5838, %s33, 1
          %s5840 = smul.addr %s5839, 2
          %s5841 = smul.addr %s5840, 8
          %s5842 = scalar_lea.vmem %s13, %s5841
        $region136: #{normal_stochastic_block_2d.1} parent=119 // pred_fallthru
          _
        // Predicated region
        $region137: #{normal_stochastic_block_2d.1} parent=119 // pred_check
          %p5843 = pneg %p385
        $region138: #{normal_stochastic_block_2d.1} parent=119 // pred_check_branch
          %5845 = sbr.rel (%p5843) target = $region140
        $region139: #{normal_stochastic_block_2d.1} parent=119 // pred_region
          %p5846 = scmp.lt.s32.totalorder %s33, 1
          %s5847 = scalar_select %p5846, %s33, 1
          %s5848 = smul.addr %s5847, 2
          %s5849 = smul.addr %s5848, 4
          %s5850 = scalar_lea.vmem %s14, %s5849
        $region140: #{normal_stochastic_block_2d.1} parent=119 // pred_fallthru
          _
        // Predicated region
        $region141: #{normal_stochastic_block_2d.1} parent=119 // pred_check
          %p5851 = pneg %p411
        $region142: #{normal_stochastic_block_2d.1} parent=119 // pred_check_branch
          %5853 = sbr.rel (%p5851) target = $region144
        $region143: #{normal_stochastic_block_2d.1} parent=119 // pred_region
          %p5854 = scmp.lt.s32.totalorder %s33, 1
          %s5855 = scalar_select %p5854, %s33, 1
          %s5856 = smul.addr %s5855, 2
          %s5857 = scalar_lea.vmem %s15, %s5856
        $region144: #{normal_stochastic_block_2d.1} parent=119 // pred_fallthru
          _
        // Predicated region
        $region145: #{normal_stochastic_block_2d.1} parent=119 // pred_check
          %p5858 = pneg %p437
        $region146: #{normal_stochastic_block_2d.1} parent=119 // pred_check_branch
          %5860 = sbr.rel (%p5858) target = $region148
        $region147: #{normal_stochastic_block_2d.1} parent=119 // pred_region
          %p5861 = scmp.lt.s32.totalorder %s33, 1
          %s5862 = scalar_select %p5861, %s33, 1
          %s5863 = scalar_lea.vmem %s16, %s5862
        $region148: #{normal_stochastic_block_2d.1} parent=119 // pred_fallthru
          _
      $region120: #{normal_stochastic_block_2d.1} parent=5 // pred_fallthru
        _
    $region6: #{normal_stochastic_block_2d.1} parent=1 // loop_footer
      %s31 = sadd.s32 1, %s27
    $region7: #{normal_stochastic_block_2d.1} parent=1 // loop_footer_branch
      %26 = sbr.rel target = $region3
    $region8: #{normal_stochastic_block_2d.1} parent=1 // loop_exit
      _
    %5864 = vsyncpa [#allocation3], 1
    %s5865 = scalar_lea.sflag [#allocation3], 1
    %5866 = vsyncpa %s5865, 1
    %5867 = vsyncpa [#allocation5], 1
    %5868 = vsyncpa [#allocation8], 1
    %5869 = vsyncpa [#allocation11], 1

</llo_original>
